<compile_context>
chip_gen: v7x
topology: tpu7x:2x2x1
jax: 0.10.0
libtpu: 0.0.40
codegen_flags: <defaults>
</compile_context>

<pallas_src>
import jax
import jax.numpy as jnp
from jax.experimental import pallas as pl
from jax.experimental.pallas import tpu as pltpu  # noqa: F401  (kept for TPU-specific params if tiled later)


def _round_up(x, m):
    return (x + m - 1) // m * m


# ------------------------------ Pallas kernels ------------------------------

def _conv_bn_relu_pool_kernel(p_ref, w_ref, s_ref, sh_ref, o_ref):
    """Fused Conv(im2col matmul) + BN + ReLU + MaxPool2x2.

    p_ref: (4, M, K) bf16 — one im2col patch matrix per 2x2 pool position.
    w_ref: (K, C) bf16; s_ref/sh_ref: (1, C) f32 folded BN; o_ref: (M, C) bf16.
    """
    w = w_ref[...]
    s = s_ref[...]
    sh = sh_ref[...]
    z = jnp.dot(p_ref[0], w, preferred_element_type=jnp.float32) * s + sh
    for d in range(1, 4):
        z = jnp.maximum(z, jnp.dot(p_ref[d], w,
                                   preferred_element_type=jnp.float32) * s + sh)
    o_ref[...] = jnp.maximum(z, 0.0).astype(o_ref.dtype)


def _conv_bn_relu_pool_fc_kernel(p_ref, w_ref, s_ref, sh_ref, fcw_ref, fcb_ref, o_ref):
    """Stage-2 fusion: Conv+BN+ReLU+MaxPool, then the fused fc2∘fc1.

    The FC mixes the per-batch spatial positions (rows); channels stay lane
    dense.  fcw_ref is block-diagonal over the batch: (B*S, B*S) f32,
    fcb_ref: (B*S, 1) f32.  o_ref: (B*S, C) bf16 == fc_atten in NHWC rows.
    """
    w = w_ref[...]
    s = s_ref[...]
    sh = sh_ref[...]
    z = jnp.dot(p_ref[0], w, preferred_element_type=jnp.float32) * s + sh
    for d in range(1, 4):
        z = jnp.maximum(z, jnp.dot(p_ref[d], w,
                                   preferred_element_type=jnp.float32) * s + sh)
    x1 = jnp.maximum(z, 0.0)                                   # (B*S, C) f32
    o_ref[...] = (jnp.dot(fcw_ref[...], x1, preferred_element_type=jnp.float32)
                  + fcb_ref[...]).astype(o_ref.dtype)


def _deconv1_cnn11_bn_kernel(pd_ref, wd_ref, bd_ref, xp_ref, wc_ref, bc_ref,
                             s_ref, sh_ref, o_ref):
    """Fused relu(deconv1) + cnn_1_1 + add + bn1, phase-decomposed deconv.

    pd_ref: (4, M, 4*Cin) bf16 deconv1 phase patches; wd_ref: (4, 4*Cin, 64).
    xp_ref: (4, M, 256) bf16 phase-sliced x0; wc_ref: (256, 64).
    o_ref:  (4, M, 64) bf16 phase-major score.
    """
    wc = wc_ref[...]
    bd = bd_ref[...]
    bc = bc_ref[...]
    s = s_ref[...]
    sh = sh_ref[...]
    for d in range(4):
        dec = jnp.dot(pd_ref[d], wd_ref[d], preferred_element_type=jnp.float32) + bd
        dec = jnp.maximum(dec, 0.0)
        c11 = jnp.dot(xp_ref[d], wc, preferred_element_type=jnp.float32) + bc
        o_ref[d] = ((dec + c11) * s + sh).astype(o_ref.dtype)


def _deconv2_sigmoid_bmm_kernel(pd_ref, wd_ref, bd_ref, xt_ref, o_ref):
    """Fused sigmoid(deconv2) + bmm(input), phase-decomposed.

    pd_ref: (4, M, 4*64) bf16; wd_ref: (4, 4*64, K) bf16; bd_ref: (1, K) f32.
    xt_ref: (4, B*nc, M) f32 — per-phase block-diagonal (per batch) transposed
            input, so a single plain matmul performs the batched bmm.
    o_ref:  (B*nc, K) f32.
    """
    bd = bd_ref[...]
    acc = jnp.zeros(o_ref.shape, jnp.float32)
    for d in range(4):
        z = jnp.dot(pd_ref[d], wd_ref[d], preferred_element_type=jnp.float32) + bd
        a = jax.nn.sigmoid(z)                                  # (M, K) f32
        acc = acc + jnp.dot(xt_ref[d], a, preferred_element_type=jnp.float32)
    o_ref[...] = acc


# ------------------------------ XLA-side glue -------------------------------

def conv_pool_phase_patches(x):
    """All four 2x2-pool-phase im2col patch matrices for a 3x3 'same' conv.

    x: NHWC. Returns (4, B*(H//2)*(W//2), 9*C); phase d = dy*2+dx is the conv
    output pixel (2*py+dy, 2*px+dx) inside each pool window.
    """
    B, H, W, C = x.shape
    Ho, Wo = H // 2, W // 2
    xp = jnp.pad(x, ((0, 0), (1, 1), (1, 1), (0, 0)))
    phases = []
    for dy in range(2):
        for dx in range(2):
            taps = [xp[:, dy + i:dy + i + H:2, dx + j:dx + j + W:2, :]
                    for i in range(3) for j in range(3)]
            phases.append(jnp.concatenate(taps, -1).reshape(B * Ho * Wo, 9 * C))
    return jnp.stack(phases)


def deconv_phase_patches(x):
    """All four output-parity-phase patch matrices for ConvTranspose2d(4,2,1).

    x: NHWC (B,H,W,C). Returns (4, B*H*W, 4*C); phase d = py*2+px covers the
    output pixels (2*jy+py, 2*jx+px).  Only the 2x2 genuinely contributing
    taps are gathered (no inserted zeros).
    """
    B, H, W, C = x.shape
    xp = jnp.pad(x, ((0, 0), (1, 1), (1, 1), (0, 0)))
    phases = []
    for py in range(2):
        for px in range(2):
            taps = [xp[:, py + u:py + u + H, px + v:px + v + W, :]
                    for u in range(2) for v in range(2)]
            phases.append(jnp.concatenate(taps, -1).reshape(B * H * W, 4 * C))
    return jnp.stack(phases)


def deconv_phase_weights(w_hwio):
    """Per-phase (4*Cin, Cout) weight matrices for ConvTranspose2d(4,2,1).

    w_hwio: (4, 4, Cin, Cout) == PyTorch ConvTranspose2d weight (Cin,Cout,kH,kW)
    transposed to (kH, kW, Cin, Cout).  Phase (py,px), tap (u,v) uses kernel
    index ky = 3-py-2u, kx = 3-px-2v (direct transposed-conv relation).
    """
    _, _, cin, cout = w_hwio.shape
    phases = []
    for py in range(2):
        for px in range(2):
            taps = [w_hwio[3 - py - 2 * u, 3 - px - 2 * v]
                    for u in range(2) for v in range(2)]
            phases.append(jnp.concatenate(taps, axis=0))        # (4*Cin, Cout)
    return jnp.stack(phases)                                    # (4, 4*Cin, Cout)


def bmm_lhs_phase_blocks(x):
    """Per-phase (B*nc, B*Hp*Wp) block-diagonal transposed input for the bmm.

    Row (b,c), column (b',m) = x[b, phase-pixel m, c] if b == b' else 0, so
    one plain matmul against the sigmoid(deconv2) phase output computes the
    per-batch contraction of torch.bmm.
    """
    B, H, W, C = x.shape
    Hp, Wp = H // 2, W // 2
    eye = jnp.eye(B, dtype=jnp.float32)
    blocks = []
    for py in range(2):
        for px in range(2):
            sl = x[:, py::2, px::2, :].reshape(B, Hp * Wp, C).astype(jnp.float32)
            blk = jnp.einsum('bmc,bd->bcdm', sl, eye).reshape(B * C, B * Hp * Wp)
            blocks.append(blk)
    return jnp.stack(blocks)


# --------------------------- parameter preparation --------------------------

def prepare_params(params, batch, eps=1e-5):
    """One-time fold: BN->scale/shift, fc2∘fc1 fusion, phase deconv weights,
    weight reshapes and bf16 casts (no per-forward weight padding)."""
    f32, bf16 = jnp.float32, jnp.bfloat16

    def bn_fold(bias, bn):
        s = bn["gamma"] / jnp.sqrt(bn["var"] + eps)
        sh = (bias - bn["mean"]) * s + bn["beta"]
        return s.reshape(1, -1).astype(f32), sh.reshape(1, -1).astype(f32)

    p = {}
    # stage 1: conv0 + bn_a0 (+relu+pool in-kernel)
    s0, sh0 = bn_fold(params["conv0_b"], params["bn_a0"])
    w0 = params["conv0_w"].reshape(-1, params["conv0_w"].shape[-1])
    kp = _round_up(w0.shape[0], 128)
    p["w0"] = jnp.pad(w0, ((0, kp - w0.shape[0]), (0, 0))).astype(bf16)
    p["s0"], p["sh0"] = s0, sh0
    # stage 2: conv1 + bn_a1 (+relu+pool+fc in-kernel)
    s1, sh1 = bn_fold(params["conv1_b"], params["bn_a1"])
    p["w1"] = params["conv1_w"].reshape(-1, params["conv1_w"].shape[-1]).astype(bf16)
    p["s1"], p["sh1"] = s1, sh1
    # fc2∘fc1 fused into a single matmul (no nonlinearity between them),
    # block-diagonal over the batch so channels stay lane-dense in-kernel.
    wf = params["fc1_w"] @ params["fc2_w"]
    bf_ = params["fc1_b"] @ params["fc2_w"] + params["fc2_b"]
    p["fc_wT"] = jnp.kron(jnp.eye(batch, dtype=f32), wf.T).astype(f32)
    p["fc_b"] = jnp.tile(bf_, batch).reshape(-1, 1).astype(f32)
    # stage 3: deconv1 + cnn_1_1 + bn1
    p["wd1"] = deconv_phase_weights(params["deconv1_w"]).astype(bf16)
    p["bd1"] = params["deconv1_b"].reshape(1, -1).astype(f32)
    p["wc11"] = params["cnn11_w"].astype(bf16)
    p["bc11"] = params["cnn11_b"].reshape(1, -1).astype(f32)
    sb, shb = bn_fold(jnp.zeros_like(params["bn_s"]["mean"]), params["bn_s"])
    p["s_bn1"], p["sh_bn1"] = sb, shb
    # stage 4: deconv2
    p["wd2"] = deconv_phase_weights(params["deconv2_w"]).astype(bf16)
    p["bd2"] = params["deconv2_b"].reshape(1, -1).astype(f32)
    return p


# -------------------------------- forward pass ------------------------------

def attention_forward(prep, x_nchw):
    B, nc, H, W = x_nchw.shape
    H0, W0 = H // 2, W // 2
    H1, W1 = H0 // 2, W0 // 2
    x = jnp.transpose(x_nchw, (0, 2, 3, 1)).astype(jnp.float32)       # NHWC

    # ---- stage 1: conv0 3x3 + BN + ReLU + MaxPool2 (one kernel) ----
    pa = conv_pool_phase_patches(x.astype(jnp.bfloat16))              # (4, B*H0*W0, 9*nc)
    pa = jnp.pad(pa, ((0, 0), (0, 0), (0, prep["w0"].shape[0] - pa.shape[-1])))
    c0 = prep["w0"].shape[1]
    x0 = pl.pallas_call(
        _conv_bn_relu_pool_kernel,
        out_shape=jax.ShapeDtypeStruct((B * H0 * W0, c0), jnp.bfloat16),
    )(pa, prep["w0"], prep["s0"], prep["sh0"])
    x0_img = x0.reshape(B, H0, W0, c0)

    # ---- stage 2: conv1 3x3 + BN + ReLU + MaxPool2 + fused fc2∘fc1 ----
    pb = conv_pool_phase_patches(x0_img)                              # (4, B*H1*W1, 9*c0)
    c1 = prep["w1"].shape[1]
    assert prep["fc_b"].shape[0] == B * H1 * W1, "fc_dim mismatch with input spatial size"
    fc_atten = pl.pallas_call(
        _conv_bn_relu_pool_fc_kernel,
        out_shape=jax.ShapeDtypeStruct((B * H1 * W1, c1), jnp.bfloat16),
    )(pb, prep["w1"], prep["s1"], prep["sh1"], prep["fc_wT"], prep["fc_b"])
    fc_img = fc_atten.reshape(B, H1, W1, c1)

    # ---- stage 3: relu(deconv1) + cnn_1_1 + add + bn1 (one kernel) ----
    pd = deconv_phase_patches(fc_img)                                 # (4, B*H1*W1, 4*c1)
    x0p = jnp.stack([x0_img[:, py::2, px::2, :].reshape(B * H1 * W1, c0)
                     for py in range(2) for px in range(2)])          # (4, B*H1*W1, c0)
    c3 = prep["wc11"].shape[1]
    score_ph = pl.pallas_call(
        _deconv1_cnn11_bn_kernel,
        out_shape=jax.ShapeDtypeStruct((4, B * H1 * W1, c3), jnp.bfloat16),
    )(pd, prep["wd1"], prep["bd1"], x0p, prep["wc11"], prep["bc11"],
      prep["s_bn1"], prep["sh_bn1"])
    # phase-major -> NHWC score (tiny relayout)
    score = (score_ph.reshape(2, 2, B, H1, W1, c3)
             .transpose(2, 3, 0, 4, 1, 5).reshape(B, H0, W0, c3))

    # ---- stage 4: sigmoid(deconv2) + bmm(input) (one kernel, lane-dense out) ----
    pe = deconv_phase_patches(score)                                  # (4, B*H0*W0, 4*c3)
    xt = bmm_lhs_phase_blocks(x)                                      # (4, B*nc, B*H0*W0)
    kout = prep["wd2"].shape[-1]
    out_t = pl.pallas_call(
        _deconv2_sigmoid_bmm_kernel,
        out_shape=jax.ShapeDtypeStruct((B * nc, kout), jnp.float32),
    )(pe, prep["wd2"], prep["bd2"], xt)
    return out_t.reshape(B, nc, kout).transpose(0, 2, 1)              # (B, K, nc)


# ----------------------------- deterministic init ---------------------------

def init_params(key, nc, K, fc_dim):
    ks = iter(jax.random.split(key, 40))

    def nrm(shape, scale=0.05):
        return (scale * jax.random.normal(next(ks), shape)).astype(jnp.float32)

    def bn(c):
        return {"gamma": (1.0 + 0.1 * jax.random.normal(next(ks), (c,))).astype(jnp.float32),
                "beta": nrm((c,), 0.1),
                "mean": nrm((c,), 0.1),
                "var": (1.0 + 0.1 * jax.random.uniform(next(ks), (c,))).astype(jnp.float32)}

    # Conv weights are HWIO; deconv weights are (kH, kW, Cin, Cout).
    # TODO(synk): loading real PyTorch weights requires permuting
    #   Conv2d (Cout,Cin,kH,kW) -> (kH,kW,Cin,Cout) and
    #   ConvTranspose2d (Cin,Cout,kH,kW) -> (kH,kW,Cin,Cout) first.
    return {
        "conv0_w": nrm((3, 3, nc, 256)), "conv0_b": nrm((256,), 0.1), "bn_a0": bn(256),
        "conv1_w": nrm((3, 3, 256, 128)), "conv1_b": nrm((128,), 0.1), "bn_a1": bn(128),
        "fc1_w": nrm((fc_dim, fc_dim), 0.2), "fc1_b": nrm((fc_dim,), 0.1),
        "fc2_w": nrm((fc_dim, fc_dim), 0.2), "fc2_b": nrm((fc_dim,), 0.1),
        "cnn11_w": nrm((256, 64)), "cnn11_b": nrm((64,), 0.1),
        "deconv1_w": nrm((4, 4, 128, 64)), "deconv1_b": nrm((64,), 0.1),
        "deconv2_w": nrm((4, 4, 64, K)), "deconv2_b": nrm((K,), 0.1),
        "bn_s": bn(64),
    }


if __name__ == "__main__":
    nc, K, downsample, w, h = 4, 8, 4, 96, 32
    fc_dim = int(w * h / downsample / downsample / 16)     # 12
    B = 2
    Hin, Win = h // downsample, w // downsample            # (8, 24): spatial that gives
    # H/4 * W/4 == fc_dim after the two MaxPool(2) stages, as the forward implies.

    key = jax.random.PRNGKey(0)
    pkey, xkey = jax.random.split(key)
    params = init_params(pkey, nc, K, fc_dim)
    x = jax.random.normal(xkey, (B, nc, Hin, Win), jnp.float32)

    prep = prepare_params(params, B)
    fwd = jax.jit(attention_forward)
    out = jax.block_until_ready(fwd(prep, x))
    assert out.shape == (B, K, nc), out.shape
    assert bool(jnp.all(jnp.isfinite(out)))
    print("KERNEL_OK")
</pallas_src>

<mosaic_0001>
module attributes {stable_mosaic.version = 11 : i64} {
  func.func @_conv_bn_relu_pool_kernel(%arg0: memref<4x96x128xbf16, #tpu.memory_space<vmem>>, %arg1: memref<128x256xbf16, #tpu.memory_space<vmem>>, %arg2: memref<1x256xf32, #tpu.memory_space<vmem>>, %arg3: memref<1x256xf32, #tpu.memory_space<vmem>>, %arg4: memref<96x256xbf16, #tpu.memory_space<vmem>>) attributes {dimension_semantics = [], scalar_prefetch = 0 : i64, scratch_operands = 0 : i64, tpu.core_type = #tpu.core_type<tc>} {
    %c0 = arith.constant 0 : index
    %c0_0 = arith.constant 0 : index
    %0 = vector.load %arg1[%c0, %c0_0] : memref<128x256xbf16, #tpu.memory_space<vmem>>, vector<128x256xbf16>
    %c0_1 = arith.constant 0 : index
    %c0_2 = arith.constant 0 : index
    %1 = vector.load %arg2[%c0_1, %c0_2] : memref<1x256xf32, #tpu.memory_space<vmem>>, vector<1x256xf32>
    %c0_3 = arith.constant 0 : index
    %c0_4 = arith.constant 0 : index
    %2 = vector.load %arg3[%c0_3, %c0_4] : memref<1x256xf32, #tpu.memory_space<vmem>>, vector<1x256xf32>
    %c0_5 = arith.constant 0 : index
    %c0_6 = arith.constant 0 : index
    %c0_7 = arith.constant 0 : index
    %3 = vector.load %arg0[%c0_5, %c0_6, %c0_7] : memref<4x96x128xbf16, #tpu.memory_space<vmem>>, vector<1x96x128xbf16>
    %4 = vector.shape_cast %3 : vector<1x96x128xbf16> to vector<96x128xbf16>
    %cst = arith.constant dense<0.000000e+00> : vector<96x256xf32>
    %5 = tpu.matmul %4, %0, %cst {dimension_numbers = #tpu.dot_dimension_numbers<[1], [0], [0], [1], [0, 0, 1, 1], [], []>} : vector<96x128xbf16>, vector<128x256xbf16>, vector<96x256xf32> -> vector<96x256xf32>
    %6 = vector.broadcast %1 : vector<1x256xf32> to vector<96x256xf32>
    %7 = arith.mulf %5, %6 : vector<96x256xf32>
    %8 = vector.broadcast %2 : vector<1x256xf32> to vector<96x256xf32>
    %9 = arith.addf %7, %8 : vector<96x256xf32>
    %c1 = arith.constant 1 : index
    %c0_8 = arith.constant 0 : index
    %c0_9 = arith.constant 0 : index
    %10 = vector.load %arg0[%c1, %c0_8, %c0_9] : memref<4x96x128xbf16, #tpu.memory_space<vmem>>, vector<1x96x128xbf16>
    %11 = vector.shape_cast %10 : vector<1x96x128xbf16> to vector<96x128xbf16>
    %cst_10 = arith.constant dense<0.000000e+00> : vector<96x256xf32>
    %12 = tpu.matmul %11, %0, %cst_10 {dimension_numbers = #tpu.dot_dimension_numbers<[1], [0], [0], [1], [0, 0, 1, 1], [], []>} : vector<96x128xbf16>, vector<128x256xbf16>, vector<96x256xf32> -> vector<96x256xf32>
    %13 = vector.broadcast %1 : vector<1x256xf32> to vector<96x256xf32>
    %14 = arith.mulf %12, %13 : vector<96x256xf32>
    %15 = vector.broadcast %2 : vector<1x256xf32> to vector<96x256xf32>
    %16 = arith.addf %14, %15 : vector<96x256xf32>
    %17 = arith.maximumf %9, %16 : vector<96x256xf32>
    %c2 = arith.constant 2 : index
    %c0_11 = arith.constant 0 : index
    %c0_12 = arith.constant 0 : index
    %18 = vector.load %arg0[%c2, %c0_11, %c0_12] : memref<4x96x128xbf16, #tpu.memory_space<vmem>>, vector<1x96x128xbf16>
    %19 = vector.shape_cast %18 : vector<1x96x128xbf16> to vector<96x128xbf16>
    %cst_13 = arith.constant dense<0.000000e+00> : vector<96x256xf32>
    %20 = tpu.matmul %19, %0, %cst_13 {dimension_numbers = #tpu.dot_dimension_numbers<[1], [0], [0], [1], [0, 0, 1, 1], [], []>} : vector<96x128xbf16>, vector<128x256xbf16>, vector<96x256xf32> -> vector<96x256xf32>
    %21 = vector.broadcast %1 : vector<1x256xf32> to vector<96x256xf32>
    %22 = arith.mulf %20, %21 : vector<96x256xf32>
    %23 = vector.broadcast %2 : vector<1x256xf32> to vector<96x256xf32>
    %24 = arith.addf %22, %23 : vector<96x256xf32>
    %25 = arith.maximumf %17, %24 : vector<96x256xf32>
    %c3 = arith.constant 3 : index
    %c0_14 = arith.constant 0 : index
    %c0_15 = arith.constant 0 : index
    %26 = vector.load %arg0[%c3, %c0_14, %c0_15] : memref<4x96x128xbf16, #tpu.memory_space<vmem>>, vector<1x96x128xbf16>
    %27 = vector.shape_cast %26 : vector<1x96x128xbf16> to vector<96x128xbf16>
    %cst_16 = arith.constant dense<0.000000e+00> : vector<96x256xf32>
    %28 = tpu.matmul %27, %0, %cst_16 {dimension_numbers = #tpu.dot_dimension_numbers<[1], [0], [0], [1], [0, 0, 1, 1], [], []>} : vector<96x128xbf16>, vector<128x256xbf16>, vector<96x256xf32> -> vector<96x256xf32>
    %29 = vector.broadcast %1 : vector<1x256xf32> to vector<96x256xf32>
    %30 = arith.mulf %28, %29 : vector<96x256xf32>
    %31 = vector.broadcast %2 : vector<1x256xf32> to vector<96x256xf32>
    %32 = arith.addf %30, %31 : vector<96x256xf32>
    %33 = arith.maximumf %25, %32 : vector<96x256xf32>
    %cst_17 = arith.constant 0.000000e+00 : f32
    %34 = vector.broadcast %cst_17 : f32 to vector<96x256xf32>
    %35 = arith.maximumf %33, %34 : vector<96x256xf32>
    %36 = arith.truncf %35 : vector<96x256xf32> to vector<96x256xbf16>
    %c0_18 = arith.constant 0 : index
    %c0_19 = arith.constant 0 : index
    %37 = vector.load %arg4[%c0_18, %c0_19] : memref<96x256xbf16, #tpu.memory_space<vmem>>, vector<96x256xbf16>
    tpu.vector_store %arg4[%c0_18, %c0_19], %36 {strides = array<i32>} : memref<96x256xbf16, #tpu.memory_space<vmem>>, vector<96x256xbf16>,
    return
  }
}

module attributes {stable_mosaic.version = 11 : i64} {
  func.func @_conv_bn_relu_pool_fc_kernel(%arg0: memref<4x24x2304xbf16, #tpu.memory_space<vmem>>, %arg1: memref<2304x128xbf16, #tpu.memory_space<vmem>>, %arg2: memref<1x128xf32, #tpu.memory_space<vmem>>, %arg3: memref<1x128xf32, #tpu.memory_space<vmem>>, %arg4: memref<24x24xf32, #tpu.memory_space<vmem>>, %arg5: memref<24x1xf32, #tpu.memory_space<vmem>>, %arg6: memref<24x128xbf16, #tpu.memory_space<vmem>>) attributes {dimension_semantics = [], scalar_prefetch = 0 : i64, scratch_operands = 0 : i64, tpu.core_type = #tpu.core_type<tc>} {
    %c0 = arith.constant 0 : index
    %c0_0 = arith.constant 0 : index
    %0 = vector.load %arg1[%c0, %c0_0] : memref<2304x128xbf16, #tpu.memory_space<vmem>>, vector<2304x128xbf16>
    %c0_1 = arith.constant 0 : index
    %c0_2 = arith.constant 0 : index
    %1 = vector.load %arg2[%c0_1, %c0_2] : memref<1x128xf32, #tpu.memory_space<vmem>>, vector<1x128xf32>
    %c0_3 = arith.constant 0 : index
    %c0_4 = arith.constant 0 : index
    %2 = vector.load %arg3[%c0_3, %c0_4] : memref<1x128xf32, #tpu.memory_space<vmem>>, vector<1x128xf32>
    %c0_5 = arith.constant 0 : index
    %c0_6 = arith.constant 0 : index
    %c0_7 = arith.constant 0 : index
    %3 = vector.load %arg0[%c0_5, %c0_6, %c0_7] : memref<4x24x2304xbf16, #tpu.memory_space<vmem>>, vector<1x24x2304xbf16>
    %4 = vector.shape_cast %3 : vector<1x24x2304xbf16> to vector<24x2304xbf16>
    %cst = arith.constant dense<0.000000e+00> : vector<24x128xf32>
    %5 = tpu.matmul %4, %0, %cst {dimension_numbers = #tpu.dot_dimension_numbers<[1], [0], [0], [1], [0, 0, 1, 1], [], []>} : vector<24x2304xbf16>, vector<2304x128xbf16>, vector<24x128xf32> -> vector<24x128xf32>
    %6 = vector.broadcast %1 : vector<1x128xf32> to vector<24x128xf32>
    %7 = arith.mulf %5, %6 : vector<24x128xf32>
    %8 = vector.broadcast %2 : vector<1x128xf32> to vector<24x128xf32>
    %9 = arith.addf %7, %8 : vector<24x128xf32>
    %c1 = arith.constant 1 : index
    %c0_8 = arith.constant 0 : index
    %c0_9 = arith.constant 0 : index
    %10 = vector.load %arg0[%c1, %c0_8, %c0_9] : memref<4x24x2304xbf16, #tpu.memory_space<vmem>>, vector<1x24x2304xbf16>
    %11 = vector.shape_cast %10 : vector<1x24x2304xbf16> to vector<24x2304xbf16>
    %cst_10 = arith.constant dense<0.000000e+00> : vector<24x128xf32>
    %12 = tpu.matmul %11, %0, %cst_10 {dimension_numbers = #tpu.dot_dimension_numbers<[1], [0], [0], [1], [0, 0, 1, 1], [], []>} : vector<24x2304xbf16>, vector<2304x128xbf16>, vector<24x128xf32> -> vector<24x128xf32>
    %13 = vector.broadcast %1 : vector<1x128xf32> to vector<24x128xf32>
    %14 = arith.mulf %12, %13 : vector<24x128xf32>
    %15 = vector.broadcast %2 : vector<1x128xf32> to vector<24x128xf32>
    %16 = arith.addf %14, %15 : vector<24x128xf32>
    %17 = arith.maximumf %9, %16 : vector<24x128xf32>
    %c2 = arith.constant 2 : index
    %c0_11 = arith.constant 0 : index
    %c0_12 = arith.constant 0 : index
    %18 = vector.load %arg0[%c2, %c0_11, %c0_12] : memref<4x24x2304xbf16, #tpu.memory_space<vmem>>, vector<1x24x2304xbf16>
    %19 = vector.shape_cast %18 : vector<1x24x2304xbf16> to vector<24x2304xbf16>
    %cst_13 = arith.constant dense<0.000000e+00> : vector<24x128xf32>
    %20 = tpu.matmul %19, %0, %cst_13 {dimension_numbers = #tpu.dot_dimension_numbers<[1], [0], [0], [1], [0, 0, 1, 1], [], []>} : vector<24x2304xbf16>, vector<2304x128xbf16>, vector<24x128xf32> -> vector<24x128xf32>
    %21 = vector.broadcast %1 : vector<1x128xf32> to vector<24x128xf32>
    %22 = arith.mulf %20, %21 : vector<24x128xf32>
    %23 = vector.broadcast %2 : vector<1x128xf32> to vector<24x128xf32>
    %24 = arith.addf %22, %23 : vector<24x128xf32>
    %25 = arith.maximumf %17, %24 : vector<24x128xf32>
    %c3 = arith.constant 3 : index
    %c0_14 = arith.constant 0 : index
    %c0_15 = arith.constant 0 : index
    %26 = vector.load %arg0[%c3, %c0_14, %c0_15] : memref<4x24x2304xbf16, #tpu.memory_space<vmem>>, vector<1x24x2304xbf16>
    %27 = vector.shape_cast %26 : vector<1x24x2304xbf16> to vector<24x2304xbf16>
    %cst_16 = arith.constant dense<0.000000e+00> : vector<24x128xf32>
    %28 = tpu.matmul %27, %0, %cst_16 {dimension_numbers = #tpu.dot_dimension_numbers<[1], [0], [0], [1], [0, 0, 1, 1], [], []>} : vector<24x2304xbf16>, vector<2304x128xbf16>, vector<24x128xf32> -> vector<24x128xf32>
    %29 = vector.broadcast %1 : vector<1x128xf32> to vector<24x128xf32>
    %30 = arith.mulf %28, %29 : vector<24x128xf32>
    %31 = vector.broadcast %2 : vector<1x128xf32> to vector<24x128xf32>
    %32 = arith.addf %30, %31 : vector<24x128xf32>
    %33 = arith.maximumf %25, %32 : vector<24x128xf32>
    %cst_17 = arith.constant 0.000000e+00 : f32
    %34 = vector.broadcast %cst_17 : f32 to vector<24x128xf32>
    %35 = arith.maximumf %33, %34 : vector<24x128xf32>
    %c0_18 = arith.constant 0 : index
    %c0_19 = arith.constant 0 : index
    %36 = vector.load %arg4[%c0_18, %c0_19] : memref<24x24xf32, #tpu.memory_space<vmem>>, vector<24x24xf32>
    %cst_20 = arith.constant dense<0.000000e+00> : vector<24x128xf32>
    %37 = tpu.matmul %36, %35, %cst_20 {dimension_numbers = #tpu.dot_dimension_numbers<[1], [0], [0], [1], [0, 0, 1, 1], [], []>} : vector<24x24xf32>, vector<24x128xf32>, vector<24x128xf32> -> vector<24x128xf32>
    %c0_21 = arith.constant 0 : index
    %c0_22 = arith.constant 0 : index
    %38 = vector.load %arg5[%c0_21, %c0_22] : memref<24x1xf32, #tpu.memory_space<vmem>>, vector<24x1xf32>
    %39 = vector.broadcast %38 : vector<24x1xf32> to vector<24x128xf32>
    %40 = arith.addf %37, %39 : vector<24x128xf32>
    %41 = arith.truncf %40 : vector<24x128xf32> to vector<24x128xbf16>
    %c0_23 = arith.constant 0 : index
    %c0_24 = arith.constant 0 : index
    %42 = vector.load %arg6[%c0_23, %c0_24] : memref<24x128xbf16, #tpu.memory_space<vmem>>, vector<24x128xbf16>
    tpu.vector_store %arg6[%c0_23, %c0_24], %41 {strides = array<i32>} : memref<24x128xbf16, #tpu.memory_space<vmem>>, vector<24x128xbf16>,
    return
  }
}

module attributes {stable_mosaic.version = 11 : i64} {
  func.func @_deconv1_cnn11_bn_kernel(%arg0: memref<4x24x512xbf16, #tpu.memory_space<vmem>>, %arg1: memref<4x512x64xbf16, #tpu.memory_space<vmem>>, %arg2: memref<1x64xf32, #tpu.memory_space<vmem>>, %arg3: memref<4x24x256xbf16, #tpu.memory_space<vmem>>, %arg4: memref<256x64xbf16, #tpu.memory_space<vmem>>, %arg5: memref<1x64xf32, #tpu.memory_space<vmem>>, %arg6: memref<1x64xf32, #tpu.memory_space<vmem>>, %arg7: memref<1x64xf32, #tpu.memory_space<vmem>>, %arg8: memref<4x24x64xbf16, #tpu.memory_space<vmem>>) attributes {dimension_semantics = [], scalar_prefetch = 0 : i64, scratch_operands = 0 : i64, tpu.core_type = #tpu.core_type<tc>} {
    %c0 = arith.constant 0 : index
    %c0_0 = arith.constant 0 : index
    %0 = vector.load %arg4[%c0, %c0_0] : memref<256x64xbf16, #tpu.memory_space<vmem>>, vector<256x64xbf16>
    %c0_1 = arith.constant 0 : index
    %c0_2 = arith.constant 0 : index
    %1 = vector.load %arg2[%c0_1, %c0_2] : memref<1x64xf32, #tpu.memory_space<vmem>>, vector<1x64xf32>
    %c0_3 = arith.constant 0 : index
    %c0_4 = arith.constant 0 : index
    %2 = vector.load %arg5[%c0_3, %c0_4] : memref<1x64xf32, #tpu.memory_space<vmem>>, vector<1x64xf32>
    %c0_5 = arith.constant 0 : index
    %c0_6 = arith.constant 0 : index
    %3 = vector.load %arg6[%c0_5, %c0_6] : memref<1x64xf32, #tpu.memory_space<vmem>>, vector<1x64xf32>
    %c0_7 = arith.constant 0 : index
    %c0_8 = arith.constant 0 : index
    %4 = vector.load %arg7[%c0_7, %c0_8] : memref<1x64xf32, #tpu.memory_space<vmem>>, vector<1x64xf32>
    %c0_9 = arith.constant 0 : index
    %c0_10 = arith.constant 0 : index
    %c0_11 = arith.constant 0 : index
    %5 = vector.load %arg0[%c0_9, %c0_10, %c0_11] : memref<4x24x512xbf16, #tpu.memory_space<vmem>>, vector<1x24x512xbf16>
    %6 = vector.shape_cast %5 : vector<1x24x512xbf16> to vector<24x512xbf16>
    %c0_12 = arith.constant 0 : index
    %c0_13 = arith.constant 0 : index
    %c0_14 = arith.constant 0 : index
    %7 = vector.load %arg1[%c0_12, %c0_13, %c0_14] : memref<4x512x64xbf16, #tpu.memory_space<vmem>>, vector<1x512x64xbf16>
    %8 = vector.shape_cast %7 : vector<1x512x64xbf16> to vector<512x64xbf16>
    %cst = arith.constant dense<0.000000e+00> : vector<24x64xf32>
    %9 = tpu.matmul %6, %8, %cst {dimension_numbers = #tpu.dot_dimension_numbers<[1], [0], [0], [1], [0, 0, 1, 1], [], []>} : vector<24x512xbf16>, vector<512x64xbf16>, vector<24x64xf32> -> vector<24x64xf32>
    %10 = vector.broadcast %1 : vector<1x64xf32> to vector<24x64xf32>
    %11 = arith.addf %9, %10 : vector<24x64xf32>
    %cst_15 = arith.constant 0.000000e+00 : f32
    %12 = vector.broadcast %cst_15 : f32 to vector<24x64xf32>
    %13 = arith.maximumf %11, %12 : vector<24x64xf32>
    %c0_16 = arith.constant 0 : index
    %c0_17 = arith.constant 0 : index
    %c0_18 = arith.constant 0 : index
    %14 = vector.load %arg3[%c0_16, %c0_17, %c0_18] : memref<4x24x256xbf16, #tpu.memory_space<vmem>>, vector<1x24x256xbf16>
    %15 = vector.shape_cast %14 : vector<1x24x256xbf16> to vector<24x256xbf16>
    %cst_19 = arith.constant dense<0.000000e+00> : vector<24x64xf32>
    %16 = tpu.matmul %15, %0, %cst_19 {dimension_numbers = #tpu.dot_dimension_numbers<[1], [0], [0], [1], [0, 0, 1, 1], [], []>} : vector<24x256xbf16>, vector<256x64xbf16>, vector<24x64xf32> -> vector<24x64xf32>
    %17 = vector.broadcast %2 : vector<1x64xf32> to vector<24x64xf32>
    %18 = arith.addf %16, %17 : vector<24x64xf32>
    %19 = arith.addf %13, %18 : vector<24x64xf32>
    %20 = vector.broadcast %3 : vector<1x64xf32> to vector<24x64xf32>
    %21 = arith.mulf %19, %20 : vector<24x64xf32>
    %22 = vector.broadcast %4 : vector<1x64xf32> to vector<24x64xf32>
    %23 = arith.addf %21, %22 : vector<24x64xf32>
    %24 = arith.truncf %23 : vector<24x64xf32> to vector<24x64xbf16>
    %c0_20 = arith.constant 0 : index
    %c0_21 = arith.constant 0 : index
    %c0_22 = arith.constant 0 : index
    %25 = vector.load %arg8[%c0_20, %c0_21, %c0_22] : memref<4x24x64xbf16, #tpu.memory_space<vmem>>, vector<1x24x64xbf16>
    %26 = vector.shape_cast %25 : vector<1x24x64xbf16> to vector<24x64xbf16>
    %27 = vector.shape_cast %24 : vector<24x64xbf16> to vector<1x24x64xbf16>
    tpu.vector_store %arg8[%c0_20, %c0_21, %c0_22], %27 {strides = array<i32>} : memref<4x24x64xbf16, #tpu.memory_space<vmem>>, vector<1x24x64xbf16>,
    %c1 = arith.constant 1 : index
    %c0_23 = arith.constant 0 : index
    %c0_24 = arith.constant 0 : index
    %28 = vector.load %arg0[%c1, %c0_23, %c0_24] : memref<4x24x512xbf16, #tpu.memory_space<vmem>>, vector<1x24x512xbf16>
    %29 = vector.shape_cast %28 : vector<1x24x512xbf16> to vector<24x512xbf16>
    %c1_25 = arith.constant 1 : index
    %c0_26 = arith.constant 0 : index
    %c0_27 = arith.constant 0 : index
    %30 = vector.load %arg1[%c1_25, %c0_26, %c0_27] : memref<4x512x64xbf16, #tpu.memory_space<vmem>>, vector<1x512x64xbf16>
    %31 = vector.shape_cast %30 : vector<1x512x64xbf16> to vector<512x64xbf16>
    %cst_28 = arith.constant dense<0.000000e+00> : vector<24x64xf32>
    %32 = tpu.matmul %29, %31, %cst_28 {dimension_numbers = #tpu.dot_dimension_numbers<[1], [0], [0], [1], [0, 0, 1, 1], [], []>} : vector<24x512xbf16>, vector<512x64xbf16>, vector<24x64xf32> -> vector<24x64xf32>
    %33 = vector.broadcast %1 : vector<1x64xf32> to vector<24x64xf32>
    %34 = arith.addf %32, %33 : vector<24x64xf32>
    %cst_29 = arith.constant 0.000000e+00 : f32
    %35 = vector.broadcast %cst_29 : f32 to vector<24x64xf32>
    %36 = arith.maximumf %34, %35 : vector<24x64xf32>
    %c1_30 = arith.constant 1 : index
    %c0_31 = arith.constant 0 : index
    %c0_32 = arith.constant 0 : index
    %37 = vector.load %arg3[%c1_30, %c0_31, %c0_32] : memref<4x24x256xbf16, #tpu.memory_space<vmem>>, vector<1x24x256xbf16>
    %38 = vector.shape_cast %37 : vector<1x24x256xbf16> to vector<24x256xbf16>
    %cst_33 = arith.constant dense<0.000000e+00> : vector<24x64xf32>
    %39 = tpu.matmul %38, %0, %cst_33 {dimension_numbers = #tpu.dot_dimension_numbers<[1], [0], [0], [1], [0, 0, 1, 1], [], []>} : vector<24x256xbf16>, vector<256x64xbf16>, vector<24x64xf32> -> vector<24x64xf32>
    %40 = vector.broadcast %2 : vector<1x64xf32> to vector<24x64xf32>
    %41 = arith.addf %39, %40 : vector<24x64xf32>
    %42 = arith.addf %36, %41 : vector<24x64xf32>
    %43 = vector.broadcast %3 : vector<1x64xf32> to vector<24x64xf32>
    %44 = arith.mulf %42, %43 : vector<24x64xf32>
    %45 = vector.broadcast %4 : vector<1x64xf32> to vector<24x64xf32>
    %46 = arith.addf %44, %45 : vector<24x64xf32>
    %47 = arith.truncf %46 : vector<24x64xf32> to vector<24x64xbf16>
    %c1_34 = arith.constant 1 : index
    %c0_35 = arith.constant 0 : index
    %c0_36 = arith.constant 0 : index
    %48 = vector.load %arg8[%c1_34, %c0_35, %c0_36] : memref<4x24x64xbf16, #tpu.memory_space<vmem>>, vector<1x24x64xbf16>
    %49 = vector.shape_cast %48 : vector<1x24x64xbf16> to vector<24x64xbf16>
    %50 = vector.shape_cast %47 : vector<24x64xbf16> to vector<1x24x64xbf16>
    tpu.vector_store %arg8[%c1_34, %c0_35, %c0_36], %50 {strides = array<i32>} : memref<4x24x64xbf16, #tpu.memory_space<vmem>>, vector<1x24x64xbf16>,
    %c2 = arith.constant 2 : index
    %c0_37 = arith.constant 0 : index
    %c0_38 = arith.constant 0 : index
    %51 = vector.load %arg0[%c2, %c0_37, %c0_38] : memref<4x24x512xbf16, #tpu.memory_space<vmem>>, vector<1x24x512xbf16>
    %52 = vector.shape_cast %51 : vector<1x24x512xbf16> to vector<24x512xbf16>
    %c2_39 = arith.constant 2 : index
    %c0_40 = arith.constant 0 : index
    %c0_41 = arith.constant 0 : index
    %53 = vector.load %arg1[%c2_39, %c0_40, %c0_41] : memref<4x512x64xbf16, #tpu.memory_space<vmem>>, vector<1x512x64xbf16>
    %54 = vector.shape_cast %53 : vector<1x512x64xbf16> to vector<512x64xbf16>
    %cst_42 = arith.constant dense<0.000000e+00> : vector<24x64xf32>
    %55 = tpu.matmul %52, %54, %cst_42 {dimension_numbers = #tpu.dot_dimension_numbers<[1], [0], [0], [1], [0, 0, 1, 1], [], []>} : vector<24x512xbf16>, vector<512x64xbf16>, vector<24x64xf32> -> vector<24x64xf32>
    %56 = vector.broadcast %1 : vector<1x64xf32> to vector<24x64xf32>
    %57 = arith.addf %55, %56 : vector<24x64xf32>
    %cst_43 = arith.constant 0.000000e+00 : f32
    %58 = vector.broadcast %cst_43 : f32 to vector<24x64xf32>
    %59 = arith.maximumf %57, %58 : vector<24x64xf32>
    %c2_44 = arith.constant 2 : index
    %c0_45 = arith.constant 0 : index
    %c0_46 = arith.constant 0 : index
    %60 = vector.load %arg3[%c2_44, %c0_45, %c0_46] : memref<4x24x256xbf16, #tpu.memory_space<vmem>>, vector<1x24x256xbf16>
    %61 = vector.shape_cast %60 : vector<1x24x256xbf16> to vector<24x256xbf16>
    %cst_47 = arith.constant dense<0.000000e+00> : vector<24x64xf32>
    %62 = tpu.matmul %61, %0, %cst_47 {dimension_numbers = #tpu.dot_dimension_numbers<[1], [0], [0], [1], [0, 0, 1, 1], [], []>} : vector<24x256xbf16>, vector<256x64xbf16>, vector<24x64xf32> -> vector<24x64xf32>
    %63 = vector.broadcast %2 : vector<1x64xf32> to vector<24x64xf32>
    %64 = arith.addf %62, %63 : vector<24x64xf32>
    %65 = arith.addf %59, %64 : vector<24x64xf32>
    %66 = vector.broadcast %3 : vector<1x64xf32> to vector<24x64xf32>
    %67 = arith.mulf %65, %66 : vector<24x64xf32>
    %68 = vector.broadcast %4 : vector<1x64xf32> to vector<24x64xf32>
    %69 = arith.addf %67, %68 : vector<24x64xf32>
    %70 = arith.truncf %69 : vector<24x64xf32> to vector<24x64xbf16>
    %c2_48 = arith.constant 2 : index
    %c0_49 = arith.constant 0 : index
    %c0_50 = arith.constant 0 : index
    %71 = vector.load %arg8[%c2_48, %c0_49, %c0_50] : memref<4x24x64xbf16, #tpu.memory_space<vmem>>, vector<1x24x64xbf16>
    %72 = vector.shape_cast %71 : vector<1x24x64xbf16> to vector<24x64xbf16>
    %73 = vector.shape_cast %70 : vector<24x64xbf16> to vector<1x24x64xbf16>
    tpu.vector_store %arg8[%c2_48, %c0_49, %c0_50], %73 {strides = array<i32>} : memref<4x24x64xbf16, #tpu.memory_space<vmem>>, vector<1x24x64xbf16>,
    %c3 = arith.constant 3 : index
    %c0_51 = arith.constant 0 : index
    %c0_52 = arith.constant 0 : index
    %74 = vector.load %arg0[%c3, %c0_51, %c0_52] : memref<4x24x512xbf16, #tpu.memory_space<vmem>>, vector<1x24x512xbf16>
    %75 = vector.shape_cast %74 : vector<1x24x512xbf16> to vector<24x512xbf16>
    %c3_53 = arith.constant 3 : index
    %c0_54 = arith.constant 0 : index
    %c0_55 = arith.constant 0 : index
    %76 = vector.load %arg1[%c3_53, %c0_54, %c0_55] : memref<4x512x64xbf16, #tpu.memory_space<vmem>>, vector<1x512x64xbf16>
    %77 = vector.shape_cast %76 : vector<1x512x64xbf16> to vector<512x64xbf16>
    %cst_56 = arith.constant dense<0.000000e+00> : vector<24x64xf32>
    %78 = tpu.matmul %75, %77, %cst_56 {dimension_numbers = #tpu.dot_dimension_numbers<[1], [0], [0], [1], [0, 0, 1, 1], [], []>} : vector<24x512xbf16>, vector<512x64xbf16>, vector<24x64xf32> -> vector<24x64xf32>
    %79 = vector.broadcast %1 : vector<1x64xf32> to vector<24x64xf32>
    %80 = arith.addf %78, %79 : vector<24x64xf32>
    %cst_57 = arith.constant 0.000000e+00 : f32
    %81 = vector.broadcast %cst_57 : f32 to vector<24x64xf32>
    %82 = arith.maximumf %80, %81 : vector<24x64xf32>
    %c3_58 = arith.constant 3 : index
    %c0_59 = arith.constant 0 : index
    %c0_60 = arith.constant 0 : index
    %83 = vector.load %arg3[%c3_58, %c0_59, %c0_60] : memref<4x24x256xbf16, #tpu.memory_space<vmem>>, vector<1x24x256xbf16>
    %84 = vector.shape_cast %83 : vector<1x24x256xbf16> to vector<24x256xbf16>
    %cst_61 = arith.constant dense<0.000000e+00> : vector<24x64xf32>
    %85 = tpu.matmul %84, %0, %cst_61 {dimension_numbers = #tpu.dot_dimension_numbers<[1], [0], [0], [1], [0, 0, 1, 1], [], []>} : vector<24x256xbf16>, vector<256x64xbf16>, vector<24x64xf32> -> vector<24x64xf32>
    %86 = vector.broadcast %2 : vector<1x64xf32> to vector<24x64xf32>
    %87 = arith.addf %85, %86 : vector<24x64xf32>
    %88 = arith.addf %82, %87 : vector<24x64xf32>
    %89 = vector.broadcast %3 : vector<1x64xf32> to vector<24x64xf32>
    %90 = arith.mulf %88, %89 : vector<24x64xf32>
    %91 = vector.broadcast %4 : vector<1x64xf32> to vector<24x64xf32>
    %92 = arith.addf %90, %91 : vector<24x64xf32>
    %93 = arith.truncf %92 : vector<24x64xf32> to vector<24x64xbf16>
    %c3_62 = arith.constant 3 : index
    %c0_63 = arith.constant 0 : index
    %c0_64 = arith.constant 0 : index
    %94 = vector.load %arg8[%c3_62, %c0_63, %c0_64] : memref<4x24x64xbf16, #tpu.memory_space<vmem>>, vector<1x24x64xbf16>
    %95 = vector.shape_cast %94 : vector<1x24x64xbf16> to vector<24x64xbf16>
    %96 = vector.shape_cast %93 : vector<24x64xbf16> to vector<1x24x64xbf16>
    tpu.vector_store %arg8[%c3_62, %c0_63, %c0_64], %96 {strides = array<i32>} : memref<4x24x64xbf16, #tpu.memory_space<vmem>>, vector<1x24x64xbf16>,
    return
  }
}

module attributes {stable_mosaic.version = 11 : i64} {
  func.func @_deconv2_sigmoid_bmm_kernel(%arg0: memref<4x96x256xbf16, #tpu.memory_space<vmem>>, %arg1: memref<4x256x8xbf16, #tpu.memory_space<vmem>>, %arg2: memref<1x8xf32, #tpu.memory_space<vmem>>, %arg3: memref<4x8x96xf32, #tpu.memory_space<vmem>>, %arg4: memref<8x8xf32, #tpu.memory_space<vmem>>) attributes {dimension_semantics = [], scalar_prefetch = 0 : i64, scratch_operands = 0 : i64, tpu.core_type = #tpu.core_type<tc>} {
    %c0 = arith.constant 0 : index
    %c0_0 = arith.constant 0 : index
    %0 = vector.load %arg2[%c0, %c0_0] : memref<1x8xf32, #tpu.memory_space<vmem>>, vector<1x8xf32>
    %cst = arith.constant 0.000000e+00 : f32
    %1 = vector.broadcast %cst : f32 to vector<8x8xf32>
    %c0_1 = arith.constant 0 : index
    %c0_2 = arith.constant 0 : index
    %c0_3 = arith.constant 0 : index
    %2 = vector.load %arg0[%c0_1, %c0_2, %c0_3] : memref<4x96x256xbf16, #tpu.memory_space<vmem>>, vector<1x96x256xbf16>
    %3 = vector.shape_cast %2 : vector<1x96x256xbf16> to vector<96x256xbf16>
    %c0_4 = arith.constant 0 : index
    %c0_5 = arith.constant 0 : index
    %c0_6 = arith.constant 0 : index
    %4 = vector.load %arg1[%c0_4, %c0_5, %c0_6] : memref<4x256x8xbf16, #tpu.memory_space<vmem>>, vector<1x256x8xbf16>
    %5 = vector.shape_cast %4 : vector<1x256x8xbf16> to vector<256x8xbf16>
    %cst_7 = arith.constant dense<0.000000e+00> : vector<96x8xf32>
    %6 = tpu.matmul %3, %5, %cst_7 {dimension_numbers = #tpu.dot_dimension_numbers<[1], [0], [0], [1], [0, 0, 1, 1], [], []>} : vector<96x256xbf16>, vector<256x8xbf16>, vector<96x8xf32> -> vector<96x8xf32>
    %7 = vector.broadcast %0 : vector<1x8xf32> to vector<96x8xf32>
    %8 = arith.addf %6, %7 : vector<96x8xf32>
    %9 = arith.negf %8 : vector<96x8xf32>
    %10 = math.exp %9 : vector<96x8xf32>
    %cst_8 = arith.constant 1.000000e+00 : f32
    %11 = vector.broadcast %cst_8 : f32 to vector<96x8xf32>
    %12 = arith.addf %11, %10 : vector<96x8xf32>
    %13 = arith.divf %11, %12 : vector<96x8xf32>
    %c0_9 = arith.constant 0 : index
    %c0_10 = arith.constant 0 : index
    %c0_11 = arith.constant 0 : index
    %14 = vector.load %arg3[%c0_9, %c0_10, %c0_11] : memref<4x8x96xf32, #tpu.memory_space<vmem>>, vector<1x8x96xf32>
    %15 = vector.shape_cast %14 : vector<1x8x96xf32> to vector<8x96xf32>
    %cst_12 = arith.constant dense<0.000000e+00> : vector<8x8xf32>
    %16 = tpu.matmul %15, %13, %cst_12 {dimension_numbers = #tpu.dot_dimension_numbers<[1], [0], [0], [1], [0, 0, 1, 1], [], []>} : vector<8x96xf32>, vector<96x8xf32>, vector<8x8xf32> -> vector<8x8xf32>
    %17 = arith.addf %1, %16 : vector<8x8xf32>
    %c1 = arith.constant 1 : index
    %c0_13 = arith.constant 0 : index
    %c0_14 = arith.constant 0 : index
    %18 = vector.load %arg0[%c1, %c0_13, %c0_14] : memref<4x96x256xbf16, #tpu.memory_space<vmem>>, vector<1x96x256xbf16>
    %19 = vector.shape_cast %18 : vector<1x96x256xbf16> to vector<96x256xbf16>
    %c1_15 = arith.constant 1 : index
    %c0_16 = arith.constant 0 : index
    %c0_17 = arith.constant 0 : index
    %20 = vector.load %arg1[%c1_15, %c0_16, %c0_17] : memref<4x256x8xbf16, #tpu.memory_space<vmem>>, vector<1x256x8xbf16>
    %21 = vector.shape_cast %20 : vector<1x256x8xbf16> to vector<256x8xbf16>
    %cst_18 = arith.constant dense<0.000000e+00> : vector<96x8xf32>
    %22 = tpu.matmul %19, %21, %cst_18 {dimension_numbers = #tpu.dot_dimension_numbers<[1], [0], [0], [1], [0, 0, 1, 1], [], []>} : vector<96x256xbf16>, vector<256x8xbf16>, vector<96x8xf32> -> vector<96x8xf32>
    %23 = vector.broadcast %0 : vector<1x8xf32> to vector<96x8xf32>
    %24 = arith.addf %22, %23 : vector<96x8xf32>
    %25 = arith.negf %24 : vector<96x8xf32>
    %26 = math.exp %25 : vector<96x8xf32>
    %cst_19 = arith.constant 1.000000e+00 : f32
    %27 = vector.broadcast %cst_19 : f32 to vector<96x8xf32>
    %28 = arith.addf %27, %26 : vector<96x8xf32>
    %29 = arith.divf %27, %28 : vector<96x8xf32>
    %c1_20 = arith.constant 1 : index
    %c0_21 = arith.constant 0 : index
    %c0_22 = arith.constant 0 : index
    %30 = vector.load %arg3[%c1_20, %c0_21, %c0_22] : memref<4x8x96xf32, #tpu.memory_space<vmem>>, vector<1x8x96xf32>
    %31 = vector.shape_cast %30 : vector<1x8x96xf32> to vector<8x96xf32>
    %cst_23 = arith.constant dense<0.000000e+00> : vector<8x8xf32>
    %32 = tpu.matmul %31, %29, %cst_23 {dimension_numbers = #tpu.dot_dimension_numbers<[1], [0], [0], [1], [0, 0, 1, 1], [], []>} : vector<8x96xf32>, vector<96x8xf32>, vector<8x8xf32> -> vector<8x8xf32>
    %33 = arith.addf %17, %32 : vector<8x8xf32>
    %c2 = arith.constant 2 : index
    %c0_24 = arith.constant 0 : index
    %c0_25 = arith.constant 0 : index
    %34 = vector.load %arg0[%c2, %c0_24, %c0_25] : memref<4x96x256xbf16, #tpu.memory_space<vmem>>, vector<1x96x256xbf16>
    %35 = vector.shape_cast %34 : vector<1x96x256xbf16> to vector<96x256xbf16>
    %c2_26 = arith.constant 2 : index
    %c0_27 = arith.constant 0 : index
    %c0_28 = arith.constant 0 : index
    %36 = vector.load %arg1[%c2_26, %c0_27, %c0_28] : memref<4x256x8xbf16, #tpu.memory_space<vmem>>, vector<1x256x8xbf16>
    %37 = vector.shape_cast %36 : vector<1x256x8xbf16> to vector<256x8xbf16>
    %cst_29 = arith.constant dense<0.000000e+00> : vector<96x8xf32>
    %38 = tpu.matmul %35, %37, %cst_29 {dimension_numbers = #tpu.dot_dimension_numbers<[1], [0], [0], [1], [0, 0, 1, 1], [], []>} : vector<96x256xbf16>, vector<256x8xbf16>, vector<96x8xf32> -> vector<96x8xf32>
    %39 = vector.broadcast %0 : vector<1x8xf32> to vector<96x8xf32>
    %40 = arith.addf %38, %39 : vector<96x8xf32>
    %41 = arith.negf %40 : vector<96x8xf32>
    %42 = math.exp %41 : vector<96x8xf32>
    %cst_30 = arith.constant 1.000000e+00 : f32
    %43 = vector.broadcast %cst_30 : f32 to vector<96x8xf32>
    %44 = arith.addf %43, %42 : vector<96x8xf32>
    %45 = arith.divf %43, %44 : vector<96x8xf32>
    %c2_31 = arith.constant 2 : index
    %c0_32 = arith.constant 0 : index
    %c0_33 = arith.constant 0 : index
    %46 = vector.load %arg3[%c2_31, %c0_32, %c0_33] : memref<4x8x96xf32, #tpu.memory_space<vmem>>, vector<1x8x96xf32>
    %47 = vector.shape_cast %46 : vector<1x8x96xf32> to vector<8x96xf32>
    %cst_34 = arith.constant dense<0.000000e+00> : vector<8x8xf32>
    %48 = tpu.matmul %47, %45, %cst_34 {dimension_numbers = #tpu.dot_dimension_numbers<[1], [0], [0], [1], [0, 0, 1, 1], [], []>} : vector<8x96xf32>, vector<96x8xf32>, vector<8x8xf32> -> vector<8x8xf32>
    %49 = arith.addf %33, %48 : vector<8x8xf32>
    %c3 = arith.constant 3 : index
    %c0_35 = arith.constant 0 : index
    %c0_36 = arith.constant 0 : index
    %50 = vector.load %arg0[%c3, %c0_35, %c0_36] : memref<4x96x256xbf16, #tpu.memory_space<vmem>>, vector<1x96x256xbf16>
    %51 = vector.shape_cast %50 : vector<1x96x256xbf16> to vector<96x256xbf16>
    %c3_37 = arith.constant 3 : index
    %c0_38 = arith.constant 0 : index
    %c0_39 = arith.constant 0 : index
    %52 = vector.load %arg1[%c3_37, %c0_38, %c0_39] : memref<4x256x8xbf16, #tpu.memory_space<vmem>>, vector<1x256x8xbf16>
    %53 = vector.shape_cast %52 : vector<1x256x8xbf16> to vector<256x8xbf16>
    %cst_40 = arith.constant dense<0.000000e+00> : vector<96x8xf32>
    %54 = tpu.matmul %51, %53, %cst_40 {dimension_numbers = #tpu.dot_dimension_numbers<[1], [0], [0], [1], [0, 0, 1, 1], [], []>} : vector<96x256xbf16>, vector<256x8xbf16>, vector<96x8xf32> -> vector<96x8xf32>
    %55 = vector.broadcast %0 : vector<1x8xf32> to vector<96x8xf32>
    %56 = arith.addf %54, %55 : vector<96x8xf32>
    %57 = arith.negf %56 : vector<96x8xf32>
    %58 = math.exp %57 : vector<96x8xf32>
    %cst_41 = arith.constant 1.000000e+00 : f32
    %59 = vector.broadcast %cst_41 : f32 to vector<96x8xf32>
    %60 = arith.addf %59, %58 : vector<96x8xf32>
    %61 = arith.divf %59, %60 : vector<96x8xf32>
    %c3_42 = arith.constant 3 : index
    %c0_43 = arith.constant 0 : index
    %c0_44 = arith.constant 0 : index
    %62 = vector.load %arg3[%c3_42, %c0_43, %c0_44] : memref<4x8x96xf32, #tpu.memory_space<vmem>>, vector<1x8x96xf32>
    %63 = vector.shape_cast %62 : vector<1x8x96xf32> to vector<8x96xf32>
    %cst_45 = arith.constant dense<0.000000e+00> : vector<8x8xf32>
    %64 = tpu.matmul %63, %61, %cst_45 {dimension_numbers = #tpu.dot_dimension_numbers<[1], [0], [0], [1], [0, 0, 1, 1], [], []>} : vector<8x96xf32>, vector<96x8xf32>, vector<8x8xf32> -> vector<8x8xf32>
    %65 = arith.addf %49, %64 : vector<8x8xf32>
    %c0_46 = arith.constant 0 : index
    %c0_47 = arith.constant 0 : index
    %66 = vector.load %arg4[%c0_46, %c0_47] : memref<8x8xf32, #tpu.memory_space<vmem>>, vector<8x8xf32>
    tpu.vector_store %arg4[%c0_46, %c0_47], %65 {strides = array<i32>} : memref<8x8xf32, #tpu.memory_space<vmem>>, vector<8x8xf32>,
    return
  }
}

</mosaic_0001>

<llo_original>
// kernel: attention_forward.4
$region0: #{attention_forward.4}
  #allocation0 [shape = 'u32[]', space=smem, size = 0x4, offset = 0x4, fixed_abs, tag = 'smem constant byte address 0x4 - core index']
  #allocation1 [shape = 'u32[144,128]{1,0:T(1,128)}', space=vmem, size = 0x12000, scoped, tag = 'internal scratch']
  %s0 = inlined_call_operand.vmem [shape: bf16[4,96,128], index: 0, kind: input, shape index: {}]
  %s1 = inlined_call_operand.vmem [shape: bf16[128,256], index: 1, kind: input, shape index: {}]
  %s2 = inlined_call_operand.vmem [shape: f32[1,256], index: 2, kind: input, shape index: {}]
  %s3 = inlined_call_operand.vmem [shape: f32[1,256], index: 3, kind: input, shape index: {}]
  %s4 = inlined_call_operand.vmem [shape: bf16[96,256], index: 4, kind: output, shape index: {}]
  %s5 = sld [smem:[#allocation0]]
  $region26: #{attention_forward.4} parent=0
    _
  %s7 = ssub.s32 1, %s5
  %s8 = scalar_select 0, %s7, %s5
  // Predicated region
  $region2: #{attention_forward.4} parent=0 // pred_check
    _
  $region3: #{attention_forward.4} parent=0 // pred_check_branch
    %10 = sbr.rel (0) target = $region5
  $region4: #{attention_forward.4} parent=0 // pred_region
    _
  $region5: #{attention_forward.4} parent=0 // pred_fallthru
    _
  // Predicated region
  $region6: #{attention_forward.4} parent=0 // pred_check
    _
  $region7: #{attention_forward.4} parent=0 // pred_check_branch
    %12 = sbr.rel (0) target = $region9
  $region8: #{attention_forward.4} parent=0 // pred_region
    _
  $region9: #{attention_forward.4} parent=0 // pred_fallthru
    _
  // Predicated region
  $region10: #{attention_forward.4} parent=0 // pred_check
    _
  $region11: #{attention_forward.4} parent=0 // pred_check_branch
    %14 = sbr.rel (0) target = $region13
  $region12: #{attention_forward.4} parent=0 // pred_region
    _
  $region13: #{attention_forward.4} parent=0 // pred_fallthru
    _
  // Predicated region
  $region14: #{attention_forward.4} parent=0 // pred_check
    _
  $region15: #{attention_forward.4} parent=0 // pred_check_branch
    %16 = sbr.rel (0) target = $region17
  $region16: #{attention_forward.4} parent=0 // pred_region
    _
  $region17: #{attention_forward.4} parent=0 // pred_fallthru
    _
  %v18 = vld [vmem:[%s1] sm:$0xff]
  %v19 = vld [vmem:[%s1 + $0x8] sm:$0xff]
  %v20 = vld [vmem:[%s1 + $0x10] sm:$0xff]
  %v21 = vld [vmem:[%s1 + $0x18] sm:$0xff]
  %v22 = vld [vmem:[%s1 + $0x20] sm:$0xff]
  %v23 = vld [vmem:[%s1 + $0x28] sm:$0xff]
  %v24 = vld [vmem:[%s1 + $0x30] sm:$0xff]
  %v25 = vld [vmem:[%s1 + $0x38] sm:$0xff]
  %v26 = vld [vmem:[%s1 + $0x40] sm:$0xff]
  %v27 = vld [vmem:[%s1 + $0x48] sm:$0xff]
  %v28 = vld [vmem:[%s1 + $0x50] sm:$0xff]
  %v29 = vld [vmem:[%s1 + $0x58] sm:$0xff]
  %v30 = vld [vmem:[%s1 + $0x60] sm:$0xff]
  %v31 = vld [vmem:[%s1 + $0x68] sm:$0xff]
  %v32 = vld [vmem:[%s1 + $0x70] sm:$0xff]
  %v33 = vld [vmem:[%s1 + $0x78] sm:$0xff]
  %v34 = vld [vmem:[%s2] sm:$0x3]
  %v35 = vld [vmem:[%s3] sm:$0x3]
  %v36 = vld [vmem:[%s0] sm:$0xf]
  %v37 = vld [vmem:[%s0 + $0x4] sm:$0xf]
  %v38 = vld [vmem:[%s0 + $0x8] sm:$0xf]
  %v39 = vld [vmem:[%s0 + $0xc] sm:$0xf]
  %v40 = vld [vmem:[%s0 + $0x10] sm:$0xf]
  %v41 = vld [vmem:[%s0 + $0x14] sm:$0xf]
  %v42 = vld [vmem:[%s0 + $0x18] sm:$0xf]
  %v43 = vld [vmem:[%s0 + $0x1c] sm:$0xf]
  %v44 = vld [vmem:[%s0 + $0x20] sm:$0xf]
  %v45 = vld [vmem:[%s0 + $0x24] sm:$0xf]
  %v46 = vld [vmem:[%s0 + $0x28] sm:$0xf]
  %v47 = vld [vmem:[%s0 + $0x2c] sm:$0xf]
  %v60 = vunpack.c.l.b16 %v36
  %v61 = vunpack.c.l.b16 %v37
  %v62 = vunpack.c.l.b16 %v38
  %v63 = vunpack.c.l.b16 %v39
  %v64 = vunpack.c.l.b16 %v40
  %v65 = vunpack.c.l.b16 %v41
  %v66 = vunpack.c.l.b16 %v42
  %v67 = vunpack.c.l.b16 %v43
  %v68 = vunpack.c.l.b16 %v44
  %v69 = vunpack.c.l.b16 %v45
  %v70 = vunpack.c.l.b16 %v46
  %v71 = vunpack.c.l.b16 %v47
  %v72 = vpack.c.b16 %v61, %v60
  %v73 = vpack.c.b16 %v63, %v62
  %v74 = vpack.c.b16 %v65, %v64
  %v75 = vpack.c.b16 %v67, %v66
  %v76 = vpack.c.b16 %v69, %v68
  %v77 = vpack.c.b16 %v71, %v70
  %v100 = vunpack.c.l.b16 %v18
  %v101 = vunpack.c.h.b16 %v18
  %v102 = vunpack.c.l.b16 %v19
  %v103 = vunpack.c.h.b16 %v19
  %v104 = vunpack.c.l.b16 %v20
  %v105 = vunpack.c.h.b16 %v20
  %v106 = vunpack.c.l.b16 %v21
  %v107 = vunpack.c.h.b16 %v21
  %v108 = vunpack.c.l.b16 %v22
  %v109 = vunpack.c.h.b16 %v22
  %v110 = vunpack.c.l.b16 %v23
  %v111 = vunpack.c.h.b16 %v23
  %v112 = vunpack.c.l.b16 %v24
  %v113 = vunpack.c.h.b16 %v24
  %v114 = vunpack.c.l.b16 %v25
  %v115 = vunpack.c.h.b16 %v25
  %v116 = vunpack.c.l.b16 %v26
  %v117 = vunpack.c.h.b16 %v26
  %v118 = vunpack.c.l.b16 %v27
  %v119 = vunpack.c.h.b16 %v27
  %v120 = vunpack.c.l.b16 %v28
  %v121 = vunpack.c.h.b16 %v28
  %v122 = vunpack.c.l.b16 %v29
  %v123 = vunpack.c.h.b16 %v29
  %v124 = vunpack.c.l.b16 %v30
  %v125 = vunpack.c.h.b16 %v30
  %v126 = vunpack.c.l.b16 %v31
  %v127 = vunpack.c.h.b16 %v31
  %v128 = vunpack.c.l.b16 %v32
  %v129 = vunpack.c.h.b16 %v32
  %v130 = vunpack.c.l.b16 %v33
  %v131 = vunpack.c.h.b16 %v33
  %v132 = vpack.c.b16 %v102, %v100
  %v133 = vpack.c.b16 %v103, %v101
  %v134 = vpack.c.b16 %v106, %v104
  %v135 = vpack.c.b16 %v107, %v105
  %v136 = vpack.c.b16 %v110, %v108
  %v137 = vpack.c.b16 %v111, %v109
  %v138 = vpack.c.b16 %v114, %v112
  %v139 = vpack.c.b16 %v115, %v113
  %v140 = vpack.c.b16 %v118, %v116
  %v141 = vpack.c.b16 %v119, %v117
  %v142 = vpack.c.b16 %v122, %v120
  %v143 = vpack.c.b16 %v123, %v121
  %v144 = vpack.c.b16 %v126, %v124
  %v145 = vpack.c.b16 %v127, %v125
  %v146 = vpack.c.b16 %v130, %v128
  %v147 = vpack.c.b16 %v131, %v129
  %164 = vmatprep.subr.bf16.mxu0 %v133
  %165 = vmatpush1.bf16.msra.mxu0 %v132
  %166 = vmatprep.subr.bf16.mxu0 %v135
  %167 = vmatpush1.bf16.msra.mxu0 %v134
  %168 = vmatprep.subr.bf16.mxu0 %v137
  %169 = vmatpush1.bf16.msra.mxu0 %v136
  %170 = vmatprep.subr.bf16.mxu0 %v139
  %171 = vmatpush1.bf16.msra.mxu0 %v138
  %172 = vmatprep.subr.bf16.mxu0 %v141
  %173 = vmatpush1.bf16.msra.mxu0 %v140
  %174 = vmatprep.subr.bf16.mxu0 %v143
  %175 = vmatpush1.bf16.msra.mxu0 %v142
  %176 = vmatprep.subr.bf16.mxu0 %v145
  %177 = vmatpush1.bf16.msra.mxu0 %v144
  %178 = vmatprep.subr.bf16.mxu0 %v147
  %179 = vmatpush1.bf16.msra.mxu0 %v146
  %180 = vmatprep.subr.bf16.mxu0 0
  %181 = vmatpush1.bf16.msra.mxu0 0
  %182 = vmatprep.subr.bf16.mxu0 0
  %183 = vmatpush1.bf16.msra.mxu0 0
  %184 = vmatprep.subr.bf16.mxu0 0
  %185 = vmatpush1.bf16.msra.mxu0 0
  %186 = vmatprep.subr.bf16.mxu0 0
  %187 = vmatpush1.bf16.msra.mxu0 0
  %188 = vmatprep.subr.bf16.mxu0 0
  %189 = vmatpush1.bf16.msra.mxu0 0
  %190 = vmatprep.subr.bf16.mxu0 0
  %191 = vmatpush1.bf16.msra.mxu0 0
  %192 = vmatprep.subr.bf16.mxu0 0
  %193 = vmatpush1.bf16.msra.mxu0 0
  %194 = vmatprep.subr.bf16.mxu0 0
  %195 = vmatpush1.bf16.msra.mxu0 0
  %196 = vmatprep.mubr.bf16.mxu0 0
  %197 = vmatmul.mubr.bf16.gmra.mrb[0].mxu0 %v72
  %v198 = vpop.f32.mrb[0].mxu0
  %v199 = vadd.f32 0.0, %v198
  %v200 = vpop.f32.mrb[0].mxu0
  %v201 = vadd.f32 0.0, %v200
  %v202 = vpop.f32.mrb[0].mxu0
  %v203 = vadd.f32 0.0, %v202
  %v204 = vpop.f32.mrb[0].mxu0
  %v205 = vadd.f32 0.0, %v204
  %206 = vmatprep.mubr.bf16.mxu0 0
  %207 = vmatmul.mubr.bf16.gmra.mrb[0].mxu0 %v73
  %v208 = vpop.f32.mrb[0].mxu0
  %v209 = vadd.f32 0.0, %v208
  %v210 = vpop.f32.mrb[0].mxu0
  %v211 = vadd.f32 0.0, %v210
  %v212 = vpop.f32.mrb[0].mxu0
  %v213 = vadd.f32 0.0, %v212
  %v214 = vpop.f32.mrb[0].mxu0
  %v215 = vadd.f32 0.0, %v214
  %216 = vmatprep.mubr.bf16.mxu0 0
  %217 = vmatmul.mubr.bf16.gmra.mrb[0].mxu0 %v74
  %v218 = vpop.f32.mrb[0].mxu0
  %v219 = vadd.f32 0.0, %v218
  %v220 = vpop.f32.mrb[0].mxu0
  %v221 = vadd.f32 0.0, %v220
  %v222 = vpop.f32.mrb[0].mxu0
  %v223 = vadd.f32 0.0, %v222
  %v224 = vpop.f32.mrb[0].mxu0
  %v225 = vadd.f32 0.0, %v224
  %226 = vmatprep.mubr.bf16.mxu0 0
  %227 = vmatmul.mubr.bf16.gmra.mrb[0].mxu0 %v75
  %v228 = vpop.f32.mrb[0].mxu0
  %v229 = vadd.f32 0.0, %v228
  %v230 = vpop.f32.mrb[0].mxu0
  %v231 = vadd.f32 0.0, %v230
  %v232 = vpop.f32.mrb[0].mxu0
  %v233 = vadd.f32 0.0, %v232
  %v234 = vpop.f32.mrb[0].mxu0
  %v235 = vadd.f32 0.0, %v234
  %236 = vmatprep.mubr.bf16.mxu0 0
  %237 = vmatmul.mubr.bf16.gmra.mrb[0].mxu0 %v76
  %v238 = vpop.f32.mrb[0].mxu0
  %v239 = vadd.f32 0.0, %v238
  %v240 = vpop.f32.mrb[0].mxu0
  %v241 = vadd.f32 0.0, %v240
  %v242 = vpop.f32.mrb[0].mxu0
  %v243 = vadd.f32 0.0, %v242
  %v244 = vpop.f32.mrb[0].mxu0
  %v245 = vadd.f32 0.0, %v244
  %246 = vmatprep.mubr.bf16.mxu0 0
  %247 = vmatmul.mubr.bf16.gmra.mrb[0].mxu0 %v77
  %v248 = vpop.f32.mrb[0].mxu0
  %v249 = vadd.f32 0.0, %v248
  %v250 = vpop.f32.mrb[0].mxu0
  %v251 = vadd.f32 0.0, %v250
  %v252 = vpop.f32.mrb[0].mxu0
  %v253 = vadd.f32 0.0, %v252
  %v254 = vpop.f32.mrb[0].mxu0
  %v255 = vadd.f32 0.0, %v254
  %256 = vdwg.mxu0
  %v258 = vlaneseq
  %v259 = vshrl.u32 %v258, 7
  %v260 = vsub.s32 0, %v259
  %v261 = vrot.slane %v34, %v260
  %v262 = vlaneseq
  %v263 = vshrl.u32 %v262, 7
  %v264 = vsub.s32 1, %v263
  %v265 = vrot.slane %v34, %v264
  %v268 = vmul.f32 %v199, %v261
  %v269 = vmul.f32 %v201, %v265
  %v270 = vmul.f32 %v203, %v261
  %v271 = vmul.f32 %v205, %v265
  %v272 = vmul.f32 %v209, %v261
  %v273 = vmul.f32 %v211, %v265
  %v274 = vmul.f32 %v213, %v261
  %v275 = vmul.f32 %v215, %v265
  %v276 = vmul.f32 %v219, %v261
  %v277 = vmul.f32 %v221, %v265
  %v278 = vmul.f32 %v223, %v261
  %v279 = vmul.f32 %v225, %v265
  %v280 = vmul.f32 %v229, %v261
  %v281 = vmul.f32 %v231, %v265
  %v282 = vmul.f32 %v233, %v261
  %v283 = vmul.f32 %v235, %v265
  %v284 = vmul.f32 %v239, %v261
  %v285 = vmul.f32 %v241, %v265
  %v286 = vmul.f32 %v243, %v261
  %v287 = vmul.f32 %v245, %v265
  %v288 = vmul.f32 %v249, %v261
  %v289 = vmul.f32 %v251, %v265
  %v290 = vmul.f32 %v253, %v261
  %v291 = vmul.f32 %v255, %v265
  %v293 = vlaneseq
  %v294 = vshrl.u32 %v293, 7
  %v295 = vsub.s32 0, %v294
  %v296 = vrot.slane %v35, %v295
  %v297 = vlaneseq
  %v298 = vshrl.u32 %v297, 7
  %v299 = vsub.s32 1, %v298
  %v300 = vrot.slane %v35, %v299
  %v303 = vadd.f32 %v268, %v296
  %v304 = vadd.f32 %v269, %v300
  %v305 = vadd.f32 %v270, %v296
  %v306 = vadd.f32 %v271, %v300
  %v307 = vadd.f32 %v272, %v296
  %v308 = vadd.f32 %v273, %v300
  %v309 = vadd.f32 %v274, %v296
  %v310 = vadd.f32 %v275, %v300
  %v311 = vadd.f32 %v276, %v296
  %v312 = vadd.f32 %v277, %v300
  %v313 = vadd.f32 %v278, %v296
  %v314 = vadd.f32 %v279, %v300
  %v315 = vadd.f32 %v280, %v296
  %v316 = vadd.f32 %v281, %v300
  %v317 = vadd.f32 %v282, %v296
  %v318 = vadd.f32 %v283, %v300
  %v319 = vadd.f32 %v284, %v296
  %v320 = vadd.f32 %v285, %v300
  %v321 = vadd.f32 %v286, %v296
  %v322 = vadd.f32 %v287, %v300
  %v323 = vadd.f32 %v288, %v296
  %v324 = vadd.f32 %v289, %v300
  %v325 = vadd.f32 %v290, %v296
  %v326 = vadd.f32 %v291, %v300
  %s327 = scalar_lea.vmem %s0, 48
  %v328 = vld [vmem:[%s327] sm:$0xf]
  %v329 = vld [vmem:[%s327 + $0x4] sm:$0xf]
  %v330 = vld [vmem:[%s327 + $0x8] sm:$0xf]
  %v331 = vld [vmem:[%s327 + $0xc] sm:$0xf]
  %v332 = vld [vmem:[%s327 + $0x10] sm:$0xf]
  %v333 = vld [vmem:[%s327 + $0x14] sm:$0xf]
  %v334 = vld [vmem:[%s327 + $0x18] sm:$0xf]
  %v335 = vld [vmem:[%s327 + $0x1c] sm:$0xf]
  %v336 = vld [vmem:[%s327 + $0x20] sm:$0xf]
  %v337 = vld [vmem:[%s327 + $0x24] sm:$0xf]
  %v338 = vld [vmem:[%s327 + $0x28] sm:$0xf]
  %v339 = vld [vmem:[%s327 + $0x2c] sm:$0xf]
  %v352 = vunpack.c.l.b16 %v328
  %v353 = vunpack.c.l.b16 %v329
  %v354 = vunpack.c.l.b16 %v330
  %v355 = vunpack.c.l.b16 %v331
  %v356 = vunpack.c.l.b16 %v332
  %v357 = vunpack.c.l.b16 %v333
  %v358 = vunpack.c.l.b16 %v334
  %v359 = vunpack.c.l.b16 %v335
  %v360 = vunpack.c.l.b16 %v336
  %v361 = vunpack.c.l.b16 %v337
  %v362 = vunpack.c.l.b16 %v338
  %v363 = vunpack.c.l.b16 %v339
  %v364 = vpack.c.b16 %v353, %v352
  %v365 = vpack.c.b16 %v355, %v354
  %v366 = vpack.c.b16 %v357, %v356
  %v367 = vpack.c.b16 %v359, %v358
  %v368 = vpack.c.b16 %v361, %v360
  %v369 = vpack.c.b16 %v363, %v362
  %376 = vmatprep.subr.bf16.mxu0 %v133
  %377 = vmatpush1.bf16.msra.mxu0 %v132
  %378 = vmatprep.subr.bf16.mxu0 %v135
  %379 = vmatpush1.bf16.msra.mxu0 %v134
  %380 = vmatprep.subr.bf16.mxu0 %v137
  %381 = vmatpush1.bf16.msra.mxu0 %v136
  %382 = vmatprep.subr.bf16.mxu0 %v139
  %383 = vmatpush1.bf16.msra.mxu0 %v138
  %384 = vmatprep.subr.bf16.mxu0 %v141
  %385 = vmatpush1.bf16.msra.mxu0 %v140
  %386 = vmatprep.subr.bf16.mxu0 %v143
  %387 = vmatpush1.bf16.msra.mxu0 %v142
  %388 = vmatprep.subr.bf16.mxu0 %v145
  %389 = vmatpush1.bf16.msra.mxu0 %v144
  %390 = vmatprep.subr.bf16.mxu0 %v147
  %391 = vmatpush1.bf16.msra.mxu0 %v146
  %392 = vmatprep.subr.bf16.mxu0 0
  %393 = vmatpush1.bf16.msra.mxu0 0
  %394 = vmatprep.subr.bf16.mxu0 0
  %395 = vmatpush1.bf16.msra.mxu0 0
  %396 = vmatprep.subr.bf16.mxu0 0
  %397 = vmatpush1.bf16.msra.mxu0 0
  %398 = vmatprep.subr.bf16.mxu0 0
  %399 = vmatpush1.bf16.msra.mxu0 0
  %400 = vmatprep.subr.bf16.mxu0 0
  %401 = vmatpush1.bf16.msra.mxu0 0
  %402 = vmatprep.subr.bf16.mxu0 0
  %403 = vmatpush1.bf16.msra.mxu0 0
  %404 = vmatprep.subr.bf16.mxu0 0
  %405 = vmatpush1.bf16.msra.mxu0 0
  %406 = vmatprep.subr.bf16.mxu0 0
  %407 = vmatpush1.bf16.msra.mxu0 0
  %408 = vmatprep.mubr.bf16.mxu0 0
  %409 = vmatmul.mubr.bf16.gmra.mrb[0].mxu0 %v364
  %v410 = vpop.f32.mrb[0].mxu0
  %v411 = vadd.f32 0.0, %v410
  %v412 = vpop.f32.mrb[0].mxu0
  %v413 = vadd.f32 0.0, %v412
  %v414 = vpop.f32.mrb[0].mxu0
  %v415 = vadd.f32 0.0, %v414
  %v416 = vpop.f32.mrb[0].mxu0
  %v417 = vadd.f32 0.0, %v416
  %418 = vmatprep.mubr.bf16.mxu0 0
  %419 = vmatmul.mubr.bf16.gmra.mrb[0].mxu0 %v365
  %v420 = vpop.f32.mrb[0].mxu0
  %v421 = vadd.f32 0.0, %v420
  %v422 = vpop.f32.mrb[0].mxu0
  %v423 = vadd.f32 0.0, %v422
  %v424 = vpop.f32.mrb[0].mxu0
  %v425 = vadd.f32 0.0, %v424
  %v426 = vpop.f32.mrb[0].mxu0
  %v427 = vadd.f32 0.0, %v426
  %428 = vmatprep.mubr.bf16.mxu0 0
  %429 = vmatmul.mubr.bf16.gmra.mrb[0].mxu0 %v366
  %v430 = vpop.f32.mrb[0].mxu0
  %v431 = vadd.f32 0.0, %v430
  %v432 = vpop.f32.mrb[0].mxu0
  %v433 = vadd.f32 0.0, %v432
  %v434 = vpop.f32.mrb[0].mxu0
  %v435 = vadd.f32 0.0, %v434
  %v436 = vpop.f32.mrb[0].mxu0
  %v437 = vadd.f32 0.0, %v436
  %438 = vmatprep.mubr.bf16.mxu0 0
  %439 = vmatmul.mubr.bf16.gmra.mrb[0].mxu0 %v367
  %v440 = vpop.f32.mrb[0].mxu0
  %v441 = vadd.f32 0.0, %v440
  %v442 = vpop.f32.mrb[0].mxu0
  %v443 = vadd.f32 0.0, %v442
  %v444 = vpop.f32.mrb[0].mxu0
  %v445 = vadd.f32 0.0, %v444
  %v446 = vpop.f32.mrb[0].mxu0
  %v447 = vadd.f32 0.0, %v446
  %448 = vmatprep.mubr.bf16.mxu0 0
  %449 = vmatmul.mubr.bf16.gmra.mrb[0].mxu0 %v368
  %v450 = vpop.f32.mrb[0].mxu0
  %v451 = vadd.f32 0.0, %v450
  %v452 = vpop.f32.mrb[0].mxu0
  %v453 = vadd.f32 0.0, %v452
  %v454 = vpop.f32.mrb[0].mxu0
  %v455 = vadd.f32 0.0, %v454
  %v456 = vpop.f32.mrb[0].mxu0
  %v457 = vadd.f32 0.0, %v456
  %458 = vmatprep.mubr.bf16.mxu0 0
  %459 = vmatmul.mubr.bf16.gmra.mrb[0].mxu0 %v369
  %v460 = vpop.f32.mrb[0].mxu0
  %v461 = vadd.f32 0.0, %v460
  %v462 = vpop.f32.mrb[0].mxu0
  %v463 = vadd.f32 0.0, %v462
  %v464 = vpop.f32.mrb[0].mxu0
  %v465 = vadd.f32 0.0, %v464
  %v466 = vpop.f32.mrb[0].mxu0
  %v467 = vadd.f32 0.0, %v466
  %468 = vdwg.mxu0
  %v469 = vmul.f32 %v411, %v261
  %v470 = vmul.f32 %v413, %v265
  %v471 = vmul.f32 %v415, %v261
  %v472 = vmul.f32 %v417, %v265
  %v473 = vmul.f32 %v421, %v261
  %v474 = vmul.f32 %v423, %v265
  %v475 = vmul.f32 %v425, %v261
  %v476 = vmul.f32 %v427, %v265
  %v477 = vmul.f32 %v431, %v261
  %v478 = vmul.f32 %v433, %v265
  %v479 = vmul.f32 %v435, %v261
  %v480 = vmul.f32 %v437, %v265
  %v481 = vmul.f32 %v441, %v261
  %v482 = vmul.f32 %v443, %v265
  %v483 = vmul.f32 %v445, %v261
  %v484 = vmul.f32 %v447, %v265
  %v485 = vmul.f32 %v451, %v261
  %v486 = vmul.f32 %v453, %v265
  %v487 = vmul.f32 %v455, %v261
  %v488 = vmul.f32 %v457, %v265
  %v489 = vmul.f32 %v461, %v261
  %v490 = vmul.f32 %v463, %v265
  %v491 = vmul.f32 %v465, %v261
  %v492 = vmul.f32 %v467, %v265
  %v493 = vadd.f32 %v469, %v296
  %v494 = vadd.f32 %v470, %v300
  %v495 = vadd.f32 %v471, %v296
  %v496 = vadd.f32 %v472, %v300
  %v497 = vadd.f32 %v473, %v296
  %v498 = vadd.f32 %v474, %v300
  %v499 = vadd.f32 %v475, %v296
  %v500 = vadd.f32 %v476, %v300
  %v501 = vadd.f32 %v477, %v296
  %v502 = vadd.f32 %v478, %v300
  %v503 = vadd.f32 %v479, %v296
  %v504 = vadd.f32 %v480, %v300
  %v505 = vadd.f32 %v481, %v296
  %v506 = vadd.f32 %v482, %v300
  %v507 = vadd.f32 %v483, %v296
  %v508 = vadd.f32 %v484, %v300
  %v509 = vadd.f32 %v485, %v296
  %v510 = vadd.f32 %v486, %v300
  %v511 = vadd.f32 %v487, %v296
  %v512 = vadd.f32 %v488, %v300
  %v513 = vadd.f32 %v489, %v296
  %v514 = vadd.f32 %v490, %v300
  %v515 = vadd.f32 %v491, %v296
  %v516 = vadd.f32 %v492, %v300
  %v517 = vmax.f32 %v303, %v493
  %v518 = vmax.f32 %v304, %v494
  %v519 = vmax.f32 %v305, %v495
  %v520 = vmax.f32 %v306, %v496
  %v521 = vmax.f32 %v307, %v497
  %v522 = vmax.f32 %v308, %v498
  %v523 = vmax.f32 %v309, %v499
  %v524 = vmax.f32 %v310, %v500
  %v525 = vmax.f32 %v311, %v501
  %v526 = vmax.f32 %v312, %v502
  %v527 = vmax.f32 %v313, %v503
  %v528 = vmax.f32 %v314, %v504
  %v529 = vmax.f32 %v315, %v505
  %v530 = vmax.f32 %v316, %v506
  %v531 = vmax.f32 %v317, %v507
  %v532 = vmax.f32 %v318, %v508
  %v533 = vmax.f32 %v319, %v509
  %v534 = vmax.f32 %v320, %v510
  %v535 = vmax.f32 %v321, %v511
  %v536 = vmax.f32 %v322, %v512
  %v537 = vmax.f32 %v323, %v513
  %v538 = vmax.f32 %v324, %v514
  %v539 = vmax.f32 %v325, %v515
  %v540 = vmax.f32 %v326, %v516
  %s541 = scalar_lea.vmem %s0, 96
  %v542 = vld [vmem:[%s541] sm:$0xf]
  %v543 = vld [vmem:[%s541 + $0x4] sm:$0xf]
  %v544 = vld [vmem:[%s541 + $0x8] sm:$0xf]
  %v545 = vld [vmem:[%s541 + $0xc] sm:$0xf]
  %v546 = vld [vmem:[%s541 + $0x10] sm:$0xf]
  %v547 = vld [vmem:[%s541 + $0x14] sm:$0xf]
  %v548 = vld [vmem:[%s541 + $0x18] sm:$0xf]
  %v549 = vld [vmem:[%s541 + $0x1c] sm:$0xf]
  %v550 = vld [vmem:[%s541 + $0x20] sm:$0xf]
  %v551 = vld [vmem:[%s541 + $0x24] sm:$0xf]
  %v552 = vld [vmem:[%s541 + $0x28] sm:$0xf]
  %v553 = vld [vmem:[%s541 + $0x2c] sm:$0xf]
  %v566 = vunpack.c.l.b16 %v542
  %v567 = vunpack.c.l.b16 %v543
  %v568 = vunpack.c.l.b16 %v544
  %v569 = vunpack.c.l.b16 %v545
  %v570 = vunpack.c.l.b16 %v546
  %v571 = vunpack.c.l.b16 %v547
  %v572 = vunpack.c.l.b16 %v548
  %v573 = vunpack.c.l.b16 %v549
  %v574 = vunpack.c.l.b16 %v550
  %v575 = vunpack.c.l.b16 %v551
  %v576 = vunpack.c.l.b16 %v552
  %v577 = vunpack.c.l.b16 %v553
  %v578 = vpack.c.b16 %v567, %v566
  %v579 = vpack.c.b16 %v569, %v568
  %v580 = vpack.c.b16 %v571, %v570
  %v581 = vpack.c.b16 %v573, %v572
  %v582 = vpack.c.b16 %v575, %v574
  %v583 = vpack.c.b16 %v577, %v576
  %590 = vmatprep.subr.bf16.mxu0 %v133
  %591 = vmatpush1.bf16.msra.mxu0 %v132
  %592 = vmatprep.subr.bf16.mxu0 %v135
  %593 = vmatpush1.bf16.msra.mxu0 %v134
  %594 = vmatprep.subr.bf16.mxu0 %v137
  %595 = vmatpush1.bf16.msra.mxu0 %v136
  %596 = vmatprep.subr.bf16.mxu0 %v139
  %597 = vmatpush1.bf16.msra.mxu0 %v138
  %598 = vmatprep.subr.bf16.mxu0 %v141
  %599 = vmatpush1.bf16.msra.mxu0 %v140
  %600 = vmatprep.subr.bf16.mxu0 %v143
  %601 = vmatpush1.bf16.msra.mxu0 %v142
  %602 = vmatprep.subr.bf16.mxu0 %v145
  %603 = vmatpush1.bf16.msra.mxu0 %v144
  %604 = vmatprep.subr.bf16.mxu0 %v147
  %605 = vmatpush1.bf16.msra.mxu0 %v146
  %606 = vmatprep.subr.bf16.mxu0 0
  %607 = vmatpush1.bf16.msra.mxu0 0
  %608 = vmatprep.subr.bf16.mxu0 0
  %609 = vmatpush1.bf16.msra.mxu0 0
  %610 = vmatprep.subr.bf16.mxu0 0
  %611 = vmatpush1.bf16.msra.mxu0 0
  %612 = vmatprep.subr.bf16.mxu0 0
  %613 = vmatpush1.bf16.msra.mxu0 0
  %614 = vmatprep.subr.bf16.mxu0 0
  %615 = vmatpush1.bf16.msra.mxu0 0
  %616 = vmatprep.subr.bf16.mxu0 0
  %617 = vmatpush1.bf16.msra.mxu0 0
  %618 = vmatprep.subr.bf16.mxu0 0
  %619 = vmatpush1.bf16.msra.mxu0 0
  %620 = vmatprep.subr.bf16.mxu0 0
  %621 = vmatpush1.bf16.msra.mxu0 0
  %622 = vmatprep.mubr.bf16.mxu0 0
  %623 = vmatmul.mubr.bf16.gmra.mrb[0].mxu0 %v578
  %v624 = vpop.f32.mrb[0].mxu0
  %v625 = vadd.f32 0.0, %v624
  %v626 = vpop.f32.mrb[0].mxu0
  %v627 = vadd.f32 0.0, %v626
  %v628 = vpop.f32.mrb[0].mxu0
  %v629 = vadd.f32 0.0, %v628
  %v630 = vpop.f32.mrb[0].mxu0
  %v631 = vadd.f32 0.0, %v630
  %632 = vmatprep.mubr.bf16.mxu0 0
  %633 = vmatmul.mubr.bf16.gmra.mrb[0].mxu0 %v579
  %v634 = vpop.f32.mrb[0].mxu0
  %v635 = vadd.f32 0.0, %v634
  %v636 = vpop.f32.mrb[0].mxu0
  %v637 = vadd.f32 0.0, %v636
  %v638 = vpop.f32.mrb[0].mxu0
  %v639 = vadd.f32 0.0, %v638
  %v640 = vpop.f32.mrb[0].mxu0
  %v641 = vadd.f32 0.0, %v640
  %642 = vmatprep.mubr.bf16.mxu0 0
  %643 = vmatmul.mubr.bf16.gmra.mrb[0].mxu0 %v580
  %v644 = vpop.f32.mrb[0].mxu0
  %v645 = vadd.f32 0.0, %v644
  %v646 = vpop.f32.mrb[0].mxu0
  %v647 = vadd.f32 0.0, %v646
  %v648 = vpop.f32.mrb[0].mxu0
  %v649 = vadd.f32 0.0, %v648
  %v650 = vpop.f32.mrb[0].mxu0
  %v651 = vadd.f32 0.0, %v650
  %652 = vmatprep.mubr.bf16.mxu0 0
  %653 = vmatmul.mubr.bf16.gmra.mrb[0].mxu0 %v581
  %v654 = vpop.f32.mrb[0].mxu0
  %v655 = vadd.f32 0.0, %v654
  %v656 = vpop.f32.mrb[0].mxu0
  %v657 = vadd.f32 0.0, %v656
  %v658 = vpop.f32.mrb[0].mxu0
  %v659 = vadd.f32 0.0, %v658
  %v660 = vpop.f32.mrb[0].mxu0
  %v661 = vadd.f32 0.0, %v660
  %662 = vmatprep.mubr.bf16.mxu0 0
  %663 = vmatmul.mubr.bf16.gmra.mrb[0].mxu0 %v582
  %v664 = vpop.f32.mrb[0].mxu0
  %v665 = vadd.f32 0.0, %v664
  %v666 = vpop.f32.mrb[0].mxu0
  %v667 = vadd.f32 0.0, %v666
  %v668 = vpop.f32.mrb[0].mxu0
  %v669 = vadd.f32 0.0, %v668
  %v670 = vpop.f32.mrb[0].mxu0
  %v671 = vadd.f32 0.0, %v670
  %672 = vmatprep.mubr.bf16.mxu0 0
  %673 = vmatmul.mubr.bf16.gmra.mrb[0].mxu0 %v583
  %v674 = vpop.f32.mrb[0].mxu0
  %v675 = vadd.f32 0.0, %v674
  %v676 = vpop.f32.mrb[0].mxu0
  %v677 = vadd.f32 0.0, %v676
  %v678 = vpop.f32.mrb[0].mxu0
  %v679 = vadd.f32 0.0, %v678
  %v680 = vpop.f32.mrb[0].mxu0
  %v681 = vadd.f32 0.0, %v680
  %682 = vdwg.mxu0
  %v683 = vmul.f32 %v625, %v261
  %v684 = vmul.f32 %v627, %v265
  %v685 = vmul.f32 %v629, %v261
  %v686 = vmul.f32 %v631, %v265
  %v687 = vmul.f32 %v635, %v261
  %v688 = vmul.f32 %v637, %v265
  %v689 = vmul.f32 %v639, %v261
  %v690 = vmul.f32 %v641, %v265
  %v691 = vmul.f32 %v645, %v261
  %v692 = vmul.f32 %v647, %v265
  %v693 = vmul.f32 %v649, %v261
  %v694 = vmul.f32 %v651, %v265
  %v695 = vmul.f32 %v655, %v261
  %v696 = vmul.f32 %v657, %v265
  %v697 = vmul.f32 %v659, %v261
  %v698 = vmul.f32 %v661, %v265
  %v699 = vmul.f32 %v665, %v261
  %v700 = vmul.f32 %v667, %v265
  %v701 = vmul.f32 %v669, %v261
  %v702 = vmul.f32 %v671, %v265
  %v703 = vmul.f32 %v675, %v261
  %v704 = vmul.f32 %v677, %v265
  %v705 = vmul.f32 %v679, %v261
  %v706 = vmul.f32 %v681, %v265
  %v707 = vadd.f32 %v683, %v296
  %v708 = vadd.f32 %v684, %v300
  %v709 = vadd.f32 %v685, %v296
  %v710 = vadd.f32 %v686, %v300
  %v711 = vadd.f32 %v687, %v296
  %v712 = vadd.f32 %v688, %v300
  %v713 = vadd.f32 %v689, %v296
  %v714 = vadd.f32 %v690, %v300
  %v715 = vadd.f32 %v691, %v296
  %v716 = vadd.f32 %v692, %v300
  %v717 = vadd.f32 %v693, %v296
  %v718 = vadd.f32 %v694, %v300
  %v719 = vadd.f32 %v695, %v296
  %v720 = vadd.f32 %v696, %v300
  %v721 = vadd.f32 %v697, %v296
  %v722 = vadd.f32 %v698, %v300
  %v723 = vadd.f32 %v699, %v296
  %v724 = vadd.f32 %v700, %v300
  %v725 = vadd.f32 %v701, %v296
  %v726 = vadd.f32 %v702, %v300
  %v727 = vadd.f32 %v703, %v296
  %v728 = vadd.f32 %v704, %v300
  %v729 = vadd.f32 %v705, %v296
  %v730 = vadd.f32 %v706, %v300
  %v731 = vmax.f32 %v517, %v707
  %v732 = vmax.f32 %v518, %v708
  %v733 = vmax.f32 %v519, %v709
  %v734 = vmax.f32 %v520, %v710
  %v735 = vmax.f32 %v521, %v711
  %v736 = vmax.f32 %v522, %v712
  %v737 = vmax.f32 %v523, %v713
  %v738 = vmax.f32 %v524, %v714
  %v739 = vmax.f32 %v525, %v715
  %v740 = vmax.f32 %v526, %v716
  %v741 = vmax.f32 %v527, %v717
  %v742 = vmax.f32 %v528, %v718
  %v743 = vmax.f32 %v529, %v719
  %v744 = vmax.f32 %v530, %v720
  %v745 = vmax.f32 %v531, %v721
  %v746 = vmax.f32 %v532, %v722
  %v747 = vmax.f32 %v533, %v723
  %v748 = vmax.f32 %v534, %v724
  %v749 = vmax.f32 %v535, %v725
  %v750 = vmax.f32 %v536, %v726
  %v751 = vmax.f32 %v537, %v727
  %v752 = vmax.f32 %v538, %v728
  %v753 = vmax.f32 %v539, %v729
  %v754 = vmax.f32 %v540, %v730
  %s755 = scalar_lea.vmem %s0, 144
  %v756 = vld [vmem:[%s755] sm:$0xf]
  %v757 = vld [vmem:[%s755 + $0x4] sm:$0xf]
  %v758 = vld [vmem:[%s755 + $0x8] sm:$0xf]
  %v759 = vld [vmem:[%s755 + $0xc] sm:$0xf]
  %v760 = vld [vmem:[%s755 + $0x10] sm:$0xf]
  %v761 = vld [vmem:[%s755 + $0x14] sm:$0xf]
  %v762 = vld [vmem:[%s755 + $0x18] sm:$0xf]
  %v763 = vld [vmem:[%s755 + $0x1c] sm:$0xf]
  %v764 = vld [vmem:[%s755 + $0x20] sm:$0xf]
  %v765 = vld [vmem:[%s755 + $0x24] sm:$0xf]
  %v766 = vld [vmem:[%s755 + $0x28] sm:$0xf]
  %v767 = vld [vmem:[%s755 + $0x2c] sm:$0xf]
  %v780 = vunpack.c.l.b16 %v756
  %v781 = vunpack.c.l.b16 %v757
  %v782 = vunpack.c.l.b16 %v758
  %v783 = vunpack.c.l.b16 %v759
  %v784 = vunpack.c.l.b16 %v760
  %v785 = vunpack.c.l.b16 %v761
  %v786 = vunpack.c.l.b16 %v762
  %v787 = vunpack.c.l.b16 %v763
  %v788 = vunpack.c.l.b16 %v764
  %v789 = vunpack.c.l.b16 %v765
  %v790 = vunpack.c.l.b16 %v766
  %v791 = vunpack.c.l.b16 %v767
  %v792 = vpack.c.b16 %v781, %v780
  %v793 = vpack.c.b16 %v783, %v782
  %v794 = vpack.c.b16 %v785, %v784
  %v795 = vpack.c.b16 %v787, %v786
  %v796 = vpack.c.b16 %v789, %v788
  %v797 = vpack.c.b16 %v791, %v790
  %804 = vmatprep.subr.bf16.mxu0 %v133
  %805 = vmatpush1.bf16.msra.mxu0 %v132
  %806 = vmatprep.subr.bf16.mxu0 %v135
  %807 = vmatpush1.bf16.msra.mxu0 %v134
  %808 = vmatprep.subr.bf16.mxu0 %v137
  %809 = vmatpush1.bf16.msra.mxu0 %v136
  %810 = vmatprep.subr.bf16.mxu0 %v139
  %811 = vmatpush1.bf16.msra.mxu0 %v138
  %812 = vmatprep.subr.bf16.mxu0 %v141
  %813 = vmatpush1.bf16.msra.mxu0 %v140
  %814 = vmatprep.subr.bf16.mxu0 %v143
  %815 = vmatpush1.bf16.msra.mxu0 %v142
  %816 = vmatprep.subr.bf16.mxu0 %v145
  %817 = vmatpush1.bf16.msra.mxu0 %v144
  %818 = vmatprep.subr.bf16.mxu0 %v147
  %819 = vmatpush1.bf16.msra.mxu0 %v146
  %820 = vmatprep.subr.bf16.mxu0 0
  %821 = vmatpush1.bf16.msra.mxu0 0
  %822 = vmatprep.subr.bf16.mxu0 0
  %823 = vmatpush1.bf16.msra.mxu0 0
  %824 = vmatprep.subr.bf16.mxu0 0
  %825 = vmatpush1.bf16.msra.mxu0 0
  %826 = vmatprep.subr.bf16.mxu0 0
  %827 = vmatpush1.bf16.msra.mxu0 0
  %828 = vmatprep.subr.bf16.mxu0 0
  %829 = vmatpush1.bf16.msra.mxu0 0
  %830 = vmatprep.subr.bf16.mxu0 0
  %831 = vmatpush1.bf16.msra.mxu0 0
  %832 = vmatprep.subr.bf16.mxu0 0
  %833 = vmatpush1.bf16.msra.mxu0 0
  %834 = vmatprep.subr.bf16.mxu0 0
  %835 = vmatpush1.bf16.msra.mxu0 0
  %836 = vmatprep.mubr.bf16.mxu0 0
  %837 = vmatmul.mubr.bf16.gmra.mrb[0].mxu0 %v792
  %v838 = vpop.f32.mrb[0].mxu0
  %v839 = vadd.f32 0.0, %v838
  %v840 = vpop.f32.mrb[0].mxu0
  %v841 = vadd.f32 0.0, %v840
  %v842 = vpop.f32.mrb[0].mxu0
  %v843 = vadd.f32 0.0, %v842
  %v844 = vpop.f32.mrb[0].mxu0
  %v845 = vadd.f32 0.0, %v844
  %846 = vmatprep.mubr.bf16.mxu0 0
  %847 = vmatmul.mubr.bf16.gmra.mrb[0].mxu0 %v793
  %v848 = vpop.f32.mrb[0].mxu0
  %v849 = vadd.f32 0.0, %v848
  %v850 = vpop.f32.mrb[0].mxu0
  %v851 = vadd.f32 0.0, %v850
  %v852 = vpop.f32.mrb[0].mxu0
  %v853 = vadd.f32 0.0, %v852
  %v854 = vpop.f32.mrb[0].mxu0
  %v855 = vadd.f32 0.0, %v854
  %856 = vmatprep.mubr.bf16.mxu0 0
  %857 = vmatmul.mubr.bf16.gmra.mrb[0].mxu0 %v794
  %v858 = vpop.f32.mrb[0].mxu0
  %v859 = vadd.f32 0.0, %v858
  %v860 = vpop.f32.mrb[0].mxu0
  %v861 = vadd.f32 0.0, %v860
  %v862 = vpop.f32.mrb[0].mxu0
  %v863 = vadd.f32 0.0, %v862
  %v864 = vpop.f32.mrb[0].mxu0
  %v865 = vadd.f32 0.0, %v864
  %866 = vmatprep.mubr.bf16.mxu0 0
  %867 = vmatmul.mubr.bf16.gmra.mrb[0].mxu0 %v795
  %v868 = vpop.f32.mrb[0].mxu0
  %v869 = vadd.f32 0.0, %v868
  %v870 = vpop.f32.mrb[0].mxu0
  %v871 = vadd.f32 0.0, %v870
  %v872 = vpop.f32.mrb[0].mxu0
  %v873 = vadd.f32 0.0, %v872
  %v874 = vpop.f32.mrb[0].mxu0
  %v875 = vadd.f32 0.0, %v874
  %876 = vmatprep.mubr.bf16.mxu0 0
  %877 = vmatmul.mubr.bf16.gmra.mrb[0].mxu0 %v796
  %v878 = vpop.f32.mrb[0].mxu0
  %v879 = vadd.f32 0.0, %v878
  %v880 = vpop.f32.mrb[0].mxu0
  %v881 = vadd.f32 0.0, %v880
  %v882 = vpop.f32.mrb[0].mxu0
  %v883 = vadd.f32 0.0, %v882
  %v884 = vpop.f32.mrb[0].mxu0
  %v885 = vadd.f32 0.0, %v884
  %886 = vmatprep.mubr.bf16.mxu0 0
  %887 = vmatmul.mubr.bf16.gmra.mrb[0].mxu0 %v797
  %v888 = vpop.f32.mrb[0].mxu0
  %v889 = vadd.f32 0.0, %v888
  %v890 = vpop.f32.mrb[0].mxu0
  %v891 = vadd.f32 0.0, %v890
  %v892 = vpop.f32.mrb[0].mxu0
  %v893 = vadd.f32 0.0, %v892
  %v894 = vpop.f32.mrb[0].mxu0
  %v895 = vadd.f32 0.0, %v894
  %896 = vdwg.mxu0
  %v897 = vmul.f32 %v839, %v261
  %v898 = vmul.f32 %v841, %v265
  %v899 = vmul.f32 %v843, %v261
  %v900 = vmul.f32 %v845, %v265
  %v901 = vmul.f32 %v849, %v261
  %v902 = vmul.f32 %v851, %v265
  %v903 = vmul.f32 %v853, %v261
  %v904 = vmul.f32 %v855, %v265
  %v905 = vmul.f32 %v859, %v261
  %v906 = vmul.f32 %v861, %v265
  %v907 = vmul.f32 %v863, %v261
  %v908 = vmul.f32 %v865, %v265
  %v909 = vmul.f32 %v869, %v261
  %v910 = vmul.f32 %v871, %v265
  %v911 = vmul.f32 %v873, %v261
  %v912 = vmul.f32 %v875, %v265
  %v913 = vmul.f32 %v879, %v261
  %v914 = vmul.f32 %v881, %v265
  %v915 = vmul.f32 %v883, %v261
  %v916 = vmul.f32 %v885, %v265
  %v917 = vmul.f32 %v889, %v261
  %v918 = vmul.f32 %v891, %v265
  %v919 = vmul.f32 %v893, %v261
  %v920 = vmul.f32 %v895, %v265
  %v921 = vadd.f32 %v897, %v296
  %v922 = vadd.f32 %v898, %v300
  %v923 = vadd.f32 %v899, %v296
  %v924 = vadd.f32 %v900, %v300
  %v925 = vadd.f32 %v901, %v296
  %v926 = vadd.f32 %v902, %v300
  %v927 = vadd.f32 %v903, %v296
  %v928 = vadd.f32 %v904, %v300
  %v929 = vadd.f32 %v905, %v296
  %v930 = vadd.f32 %v906, %v300
  %v931 = vadd.f32 %v907, %v296
  %v932 = vadd.f32 %v908, %v300
  %v933 = vadd.f32 %v909, %v296
  %v934 = vadd.f32 %v910, %v300
  %v935 = vadd.f32 %v911, %v296
  %v936 = vadd.f32 %v912, %v300
  %v937 = vadd.f32 %v913, %v296
  %v938 = vadd.f32 %v914, %v300
  %v939 = vadd.f32 %v915, %v296
  %v940 = vadd.f32 %v916, %v300
  %v941 = vadd.f32 %v917, %v296
  %v942 = vadd.f32 %v918, %v300
  %v943 = vadd.f32 %v919, %v296
  %v944 = vadd.f32 %v920, %v300
  %v945 = vmax.f32 %v731, %v921
  %v946 = vmax.f32 %v732, %v922
  %v947 = vmax.f32 %v733, %v923
  %v948 = vmax.f32 %v734, %v924
  %v949 = vmax.f32 %v735, %v925
  %v950 = vmax.f32 %v736, %v926
  %v951 = vmax.f32 %v737, %v927
  %v952 = vmax.f32 %v738, %v928
  %v953 = vmax.f32 %v739, %v929
  %v954 = vmax.f32 %v740, %v930
  %v955 = vmax.f32 %v741, %v931
  %v956 = vmax.f32 %v742, %v932
  %v957 = vmax.f32 %v743, %v933
  %v958 = vmax.f32 %v744, %v934
  %v959 = vmax.f32 %v745, %v935
  %v960 = vmax.f32 %v746, %v936
  %v961 = vmax.f32 %v747, %v937
  %v962 = vmax.f32 %v748, %v938
  %v963 = vmax.f32 %v749, %v939
  %v964 = vmax.f32 %v750, %v940
  %v965 = vmax.f32 %v751, %v941
  %v966 = vmax.f32 %v752, %v942
  %v967 = vmax.f32 %v753, %v943
  %v968 = vmax.f32 %v754, %v944
  %v969 = vmax.f32 %v945, 0.0
  %v970 = vmax.f32 %v946, 0.0
  %v971 = vmax.f32 %v947, 0.0
  %v972 = vmax.f32 %v948, 0.0
  %v973 = vmax.f32 %v949, 0.0
  %v974 = vmax.f32 %v950, 0.0
  %v975 = vmax.f32 %v951, 0.0
  %v976 = vmax.f32 %v952, 0.0
  %v977 = vmax.f32 %v953, 0.0
  %v978 = vmax.f32 %v954, 0.0
  %v979 = vmax.f32 %v955, 0.0
  %v980 = vmax.f32 %v956, 0.0
  %v981 = vmax.f32 %v957, 0.0
  %v982 = vmax.f32 %v958, 0.0
  %v983 = vmax.f32 %v959, 0.0
  %v984 = vmax.f32 %v960, 0.0
  %v985 = vmax.f32 %v961, 0.0
  %v986 = vmax.f32 %v962, 0.0
  %v987 = vmax.f32 %v963, 0.0
  %v988 = vmax.f32 %v964, 0.0
  %v989 = vmax.f32 %v965, 0.0
  %v990 = vmax.f32 %v966, 0.0
  %v991 = vmax.f32 %v967, 0.0
  %v992 = vmax.f32 %v968, 0.0
  %v993 = vpack.c.bf16 %v971, %v969
  %v994 = vpack.c.bf16 %v972, %v970
  %v995 = vpack.c.bf16 %v975, %v973
  %v996 = vpack.c.bf16 %v976, %v974
  %v997 = vpack.c.bf16 %v979, %v977
  %v998 = vpack.c.bf16 %v980, %v978
  %v999 = vpack.c.bf16 %v983, %v981
  %v1000 = vpack.c.bf16 %v984, %v982
  %v1001 = vpack.c.bf16 %v987, %v985
  %v1002 = vpack.c.bf16 %v988, %v986
  %v1003 = vpack.c.bf16 %v991, %v989
  %v1004 = vpack.c.bf16 %v992, %v990
  %v1017 = vunpack.c.l.b16 %v993
  %v1018 = vunpack.c.l.b16 %v994
  %v1019 = vunpack.c.h.b16 %v993
  %v1020 = vunpack.c.h.b16 %v994
  %v1021 = vunpack.c.l.b16 %v995
  %v1022 = vunpack.c.l.b16 %v996
  %v1023 = vunpack.c.h.b16 %v995
  %v1024 = vunpack.c.h.b16 %v996
  %v1025 = vunpack.c.l.b16 %v997
  %v1026 = vunpack.c.l.b16 %v998
  %v1027 = vunpack.c.h.b16 %v997
  %v1028 = vunpack.c.h.b16 %v998
  %v1029 = vunpack.c.l.b16 %v999
  %v1030 = vunpack.c.l.b16 %v1000
  %v1031 = vunpack.c.h.b16 %v999
  %v1032 = vunpack.c.h.b16 %v1000
  %v1033 = vunpack.c.l.b16 %v1001
  %v1034 = vunpack.c.l.b16 %v1002
  %v1035 = vunpack.c.h.b16 %v1001
  %v1036 = vunpack.c.h.b16 %v1002
  %v1037 = vunpack.c.l.b16 %v1003
  %v1038 = vunpack.c.l.b16 %v1004
  %v1039 = vunpack.c.h.b16 %v1003
  %v1040 = vunpack.c.h.b16 %v1004
  %v1041 = vpack.c.b16 %v1018, %v1017
  %v1042 = vpack.c.b16 %v1020, %v1019
  %v1043 = vpack.c.b16 %v1022, %v1021
  %v1044 = vpack.c.b16 %v1024, %v1023
  %v1045 = vpack.c.b16 %v1026, %v1025
  %v1046 = vpack.c.b16 %v1028, %v1027
  %v1047 = vpack.c.b16 %v1030, %v1029
  %v1048 = vpack.c.b16 %v1032, %v1031
  %v1049 = vpack.c.b16 %v1034, %v1033
  %v1050 = vpack.c.b16 %v1036, %v1035
  %v1051 = vpack.c.b16 %v1038, %v1037
  %v1052 = vpack.c.b16 %v1040, %v1039
  %1065 = vst [vmem:[%s4] sm:$0xff] %v1041
  %1066 = vst [vmem:[%s4 + $0x8] sm:$0xff] %v1042
  %1067 = vst [vmem:[%s4 + $0x10] sm:$0xff] %v1043
  %1068 = vst [vmem:[%s4 + $0x18] sm:$0xff] %v1044
  %1069 = vst [vmem:[%s4 + $0x20] sm:$0xff] %v1045
  %1070 = vst [vmem:[%s4 + $0x28] sm:$0xff] %v1046
  %1071 = vst [vmem:[%s4 + $0x30] sm:$0xff] %v1047
  %1072 = vst [vmem:[%s4 + $0x38] sm:$0xff] %v1048
  %1073 = vst [vmem:[%s4 + $0x40] sm:$0xff] %v1049
  %1074 = vst [vmem:[%s4 + $0x48] sm:$0xff] %v1050
  %1075 = vst [vmem:[%s4 + $0x50] sm:$0xff] %v1051
  %1076 = vst [vmem:[%s4 + $0x58] sm:$0xff] %v1052
  // Predicated region
  $region18: #{attention_forward.4} parent=0 // pred_check
    _
  $region19: #{attention_forward.4} parent=0 // pred_check_branch
    %1078 = sbr.rel (0) target = $region21
  $region20: #{attention_forward.4} parent=0 // pred_region
    _
  $region21: #{attention_forward.4} parent=0 // pred_fallthru
    _
  // Predicated region
  $region22: #{attention_forward.4} parent=0 // pred_check
    _
  $region23: #{attention_forward.4} parent=0 // pred_check_branch
    %1080 = sbr.rel (0) target = $region25
  $region24: #{attention_forward.4} parent=0 // pred_region
    _
  $region25: #{attention_forward.4} parent=0 // pred_fallthru
    _

// kernel: attention_forward.6
$region0: #{attention_forward.6}
  #allocation0 [shape = 'u32[]', space=smem, size = 0x4, offset = 0x4, fixed_abs, tag = 'smem constant byte address 0x4 - core index']
  #allocation1 [shape = 'u32[144,128]{1,0:T(1,128)}', space=vmem, size = 0x12000, scoped, tag = 'internal scratch']
  %s0 = inlined_call_operand.vmem [shape: bf16[4,24,512], index: 0, kind: input, shape index: {}]
  %s1 = inlined_call_operand.vmem [shape: bf16[4,512,64], index: 1, kind: input, shape index: {}]
  %s2 = inlined_call_operand.vmem [shape: f32[1,64], index: 2, kind: input, shape index: {}]
  %s3 = inlined_call_operand.vmem [shape: bf16[4,24,256], index: 3, kind: input, shape index: {}]
  %s4 = inlined_call_operand.vmem [shape: bf16[256,64], index: 4, kind: input, shape index: {}]
  %s5 = inlined_call_operand.vmem [shape: f32[1,64], index: 5, kind: input, shape index: {}]
  %s6 = inlined_call_operand.vmem [shape: f32[1,64], index: 6, kind: input, shape index: {}]
  %s7 = inlined_call_operand.vmem [shape: f32[1,64], index: 7, kind: input, shape index: {}]
  %s8 = inlined_call_operand.vmem [shape: bf16[4,24,64], index: 8, kind: output, shape index: {}]
  %s9 = sld [smem:[#allocation0]]
  $region42: #{attention_forward.6} parent=0
    _
  %s11 = ssub.s32 1, %s9
  %s12 = scalar_select 0, %s11, %s9
  // Predicated region
  $region2: #{attention_forward.6} parent=0 // pred_check
    _
  $region3: #{attention_forward.6} parent=0 // pred_check_branch
    %14 = sbr.rel (0) target = $region5
  $region4: #{attention_forward.6} parent=0 // pred_region
    _
  $region5: #{attention_forward.6} parent=0 // pred_fallthru
    _
  // Predicated region
  $region6: #{attention_forward.6} parent=0 // pred_check
    _
  $region7: #{attention_forward.6} parent=0 // pred_check_branch
    %16 = sbr.rel (0) target = $region9
  $region8: #{attention_forward.6} parent=0 // pred_region
    _
  $region9: #{attention_forward.6} parent=0 // pred_fallthru
    _
  // Predicated region
  $region10: #{attention_forward.6} parent=0 // pred_check
    _
  $region11: #{attention_forward.6} parent=0 // pred_check_branch
    %18 = sbr.rel (0) target = $region13
  $region12: #{attention_forward.6} parent=0 // pred_region
    _
  $region13: #{attention_forward.6} parent=0 // pred_fallthru
    _
  // Predicated region
  $region14: #{attention_forward.6} parent=0 // pred_check
    _
  $region15: #{attention_forward.6} parent=0 // pred_check_branch
    %20 = sbr.rel (0) target = $region17
  $region16: #{attention_forward.6} parent=0 // pred_region
    _
  $region17: #{attention_forward.6} parent=0 // pred_fallthru
    _
  // Predicated region
  $region18: #{attention_forward.6} parent=0 // pred_check
    _
  $region19: #{attention_forward.6} parent=0 // pred_check_branch
    %22 = sbr.rel (0) target = $region21
  $region20: #{attention_forward.6} parent=0 // pred_region
    _
  $region21: #{attention_forward.6} parent=0 // pred_fallthru
    _
  // Predicated region
  $region22: #{attention_forward.6} parent=0 // pred_check
    _
  $region23: #{attention_forward.6} parent=0 // pred_check_branch
    %24 = sbr.rel (0) target = $region25
  $region24: #{attention_forward.6} parent=0 // pred_region
    _
  $region25: #{attention_forward.6} parent=0 // pred_fallthru
    _
  // Predicated region
  $region26: #{attention_forward.6} parent=0 // pred_check
    _
  $region27: #{attention_forward.6} parent=0 // pred_check_branch
    %26 = sbr.rel (0) target = $region29
  $region28: #{attention_forward.6} parent=0 // pred_region
    _
  $region29: #{attention_forward.6} parent=0 // pred_fallthru
    _
  // Predicated region
  $region30: #{attention_forward.6} parent=0 // pred_check
    _
  $region31: #{attention_forward.6} parent=0 // pred_check_branch
    %28 = sbr.rel (0) target = $region33
  $region32: #{attention_forward.6} parent=0 // pred_region
    _
  $region33: #{attention_forward.6} parent=0 // pred_fallthru
    _
  %v30 = vld [vmem:[%s4] sm:$0xf]
  %v31 = vld [vmem:[%s4 + $0x4] sm:$0xf]
  %v32 = vld [vmem:[%s4 + $0x8] sm:$0xf]
  %v33 = vld [vmem:[%s4 + $0xc] sm:$0xf]
  %v34 = vld [vmem:[%s4 + $0x10] sm:$0xf]
  %v35 = vld [vmem:[%s4 + $0x14] sm:$0xf]
  %v36 = vld [vmem:[%s4 + $0x18] sm:$0xf]
  %v37 = vld [vmem:[%s4 + $0x1c] sm:$0xf]
  %v38 = vld [vmem:[%s4 + $0x20] sm:$0xf]
  %v39 = vld [vmem:[%s4 + $0x24] sm:$0xf]
  %v40 = vld [vmem:[%s4 + $0x28] sm:$0xf]
  %v41 = vld [vmem:[%s4 + $0x2c] sm:$0xf]
  %v42 = vld [vmem:[%s4 + $0x30] sm:$0xf]
  %v43 = vld [vmem:[%s4 + $0x34] sm:$0xf]
  %v44 = vld [vmem:[%s4 + $0x38] sm:$0xf]
  %v45 = vld [vmem:[%s4 + $0x3c] sm:$0xf]
  %v46 = vld [vmem:[%s4 + $0x40] sm:$0xf]
  %v47 = vld [vmem:[%s4 + $0x44] sm:$0xf]
  %v48 = vld [vmem:[%s4 + $0x48] sm:$0xf]
  %v49 = vld [vmem:[%s4 + $0x4c] sm:$0xf]
  %v50 = vld [vmem:[%s4 + $0x50] sm:$0xf]
  %v51 = vld [vmem:[%s4 + $0x54] sm:$0xf]
  %v52 = vld [vmem:[%s4 + $0x58] sm:$0xf]
  %v53 = vld [vmem:[%s4 + $0x5c] sm:$0xf]
  %v54 = vld [vmem:[%s4 + $0x60] sm:$0xf]
  %v55 = vld [vmem:[%s4 + $0x64] sm:$0xf]
  %v56 = vld [vmem:[%s4 + $0x68] sm:$0xf]
  %v57 = vld [vmem:[%s4 + $0x6c] sm:$0xf]
  %v58 = vld [vmem:[%s4 + $0x70] sm:$0xf]
  %v59 = vld [vmem:[%s4 + $0x74] sm:$0xf]
  %v60 = vld [vmem:[%s4 + $0x78] sm:$0xf]
  %v61 = vld [vmem:[%s4 + $0x7c] sm:$0xf]
  %v62 = vld [vmem:[%s2] sm:$0x1]
  %v63 = vld [vmem:[%s5] sm:$0x1]
  %v64 = vld [vmem:[%s6] sm:$0x1]
  %v65 = vld [vmem:[%s7] sm:$0x1]
  %v66 = vld [vmem:[%s0] sm:$0xff]
  %v67 = vld [vmem:[%s0 + $0x8] sm:$0xff]
  %v68 = vld [vmem:[%s0 + $0x10] sm:$0xff]
  %v69 = vld [vmem:[%s0 + $0x18] sm:$0xff]
  %v70 = vld [vmem:[%s0 + $0x20] sm:$0xff]
  %v71 = vld [vmem:[%s0 + $0x28] sm:$0xff]
  %v72 = vld [vmem:[%s1] sm:$0xf]
  %v73 = vld [vmem:[%s1 + $0x4] sm:$0xf]
  %v74 = vld [vmem:[%s1 + $0x8] sm:$0xf]
  %v75 = vld [vmem:[%s1 + $0xc] sm:$0xf]
  %v76 = vld [vmem:[%s1 + $0x10] sm:$0xf]
  %v77 = vld [vmem:[%s1 + $0x14] sm:$0xf]
  %v78 = vld [vmem:[%s1 + $0x18] sm:$0xf]
  %v79 = vld [vmem:[%s1 + $0x1c] sm:$0xf]
  %v80 = vld [vmem:[%s1 + $0x20] sm:$0xf]
  %v81 = vld [vmem:[%s1 + $0x24] sm:$0xf]
  %v82 = vld [vmem:[%s1 + $0x28] sm:$0xf]
  %v83 = vld [vmem:[%s1 + $0x2c] sm:$0xf]
  %v84 = vld [vmem:[%s1 + $0x30] sm:$0xf]
  %v85 = vld [vmem:[%s1 + $0x34] sm:$0xf]
  %v86 = vld [vmem:[%s1 + $0x38] sm:$0xf]
  %v87 = vld [vmem:[%s1 + $0x3c] sm:$0xf]
  %v88 = vld [vmem:[%s1 + $0x40] sm:$0xf]
  %v89 = vld [vmem:[%s1 + $0x44] sm:$0xf]
  %v90 = vld [vmem:[%s1 + $0x48] sm:$0xf]
  %v91 = vld [vmem:[%s1 + $0x4c] sm:$0xf]
  %v92 = vld [vmem:[%s1 + $0x50] sm:$0xf]
  %v93 = vld [vmem:[%s1 + $0x54] sm:$0xf]
  %v94 = vld [vmem:[%s1 + $0x58] sm:$0xf]
  %v95 = vld [vmem:[%s1 + $0x5c] sm:$0xf]
  %v96 = vld [vmem:[%s1 + $0x60] sm:$0xf]
  %v97 = vld [vmem:[%s1 + $0x64] sm:$0xf]
  %v98 = vld [vmem:[%s1 + $0x68] sm:$0xf]
  %v99 = vld [vmem:[%s1 + $0x6c] sm:$0xf]
  %v100 = vld [vmem:[%s1 + $0x70] sm:$0xf]
  %v101 = vld [vmem:[%s1 + $0x74] sm:$0xf]
  %v102 = vld [vmem:[%s1 + $0x78] sm:$0xf]
  %v103 = vld [vmem:[%s1 + $0x7c] sm:$0xf]
  %v104 = vld [vmem:[%s1 + $0x80] sm:$0xf]
  %v105 = vld [vmem:[%s1 + $0x84] sm:$0xf]
  %v106 = vld [vmem:[%s1 + $0x88] sm:$0xf]
  %v107 = vld [vmem:[%s1 + $0x8c] sm:$0xf]
  %v108 = vld [vmem:[%s1 + $0x90] sm:$0xf]
  %v109 = vld [vmem:[%s1 + $0x94] sm:$0xf]
  %v110 = vld [vmem:[%s1 + $0x98] sm:$0xf]
  %v111 = vld [vmem:[%s1 + $0x9c] sm:$0xf]
  %v112 = vld [vmem:[%s1 + $0xa0] sm:$0xf]
  %v113 = vld [vmem:[%s1 + $0xa4] sm:$0xf]
  %v114 = vld [vmem:[%s1 + $0xa8] sm:$0xf]
  %v115 = vld [vmem:[%s1 + $0xac] sm:$0xf]
  %v116 = vld [vmem:[%s1 + $0xb0] sm:$0xf]
  %v117 = vld [vmem:[%s1 + $0xb4] sm:$0xf]
  %v118 = vld [vmem:[%s1 + $0xb8] sm:$0xf]
  %v119 = vld [vmem:[%s1 + $0xbc] sm:$0xf]
  %v120 = vld [vmem:[%s1 + $0xc0] sm:$0xf]
  %v121 = vld [vmem:[%s1 + $0xc4] sm:$0xf]
  %v122 = vld [vmem:[%s1 + $0xc8] sm:$0xf]
  %v123 = vld [vmem:[%s1 + $0xcc] sm:$0xf]
  %v124 = vld [vmem:[%s1 + $0xd0] sm:$0xf]
  %v125 = vld [vmem:[%s1 + $0xd4] sm:$0xf]
  %v126 = vld [vmem:[%s1 + $0xd8] sm:$0xf]
  %v127 = vld [vmem:[%s1 + $0xdc] sm:$0xf]
  %v128 = vld [vmem:[%s1 + $0xe0] sm:$0xf]
  %v129 = vld [vmem:[%s1 + $0xe4] sm:$0xf]
  %v130 = vld [vmem:[%s1 + $0xe8] sm:$0xf]
  %v131 = vld [vmem:[%s1 + $0xec] sm:$0xf]
  %v132 = vld [vmem:[%s1 + $0xf0] sm:$0xf]
  %v133 = vld [vmem:[%s1 + $0xf4] sm:$0xf]
  %v134 = vld [vmem:[%s1 + $0xf8] sm:$0xf]
  %v135 = vld [vmem:[%s1 + $0xfc] sm:$0xf]
  %v137 = vlaneseq
  %v138 = vshrl.u32 %v137, 7
  %v139 = vsub.s32 0, %v138
  %v140 = vrot.slane %v62, %v139
  %v148 = vunpack.c.l.b16 %v66
  %v149 = vunpack.c.h.b16 %v66
  %v150 = vunpack.c.l.b16 %v67
  %v151 = vunpack.c.h.b16 %v67
  %v152 = vunpack.c.l.b16 %v68
  %v153 = vunpack.c.h.b16 %v68
  %v154 = vunpack.c.l.b16 %v69
  %v155 = vunpack.c.h.b16 %v69
  %v156 = vunpack.c.l.b16 %v70
  %v157 = vunpack.c.h.b16 %v70
  %v158 = vunpack.c.l.b16 %v71
  %v159 = vunpack.c.h.b16 %v71
  %v160 = vpack.c.b16 %v152, %v148
  %v161 = vpack.c.b16 %v153, %v149
  %v162 = vpack.c.b16 %v154, %v150
  %v163 = vpack.c.b16 %v155, %v151
  %v164 = vpack.c.b16 %v156, %v156
  %v165 = vpack.c.b16 %v157, %v157
  %v166 = vpack.c.b16 %v158, %v158
  %v167 = vpack.c.b16 %v159, %v159
  %v240 = vunpack.c.l.b16 %v72
  %v241 = vunpack.c.l.b16 %v73
  %v242 = vunpack.c.l.b16 %v74
  %v243 = vunpack.c.l.b16 %v75
  %v244 = vunpack.c.l.b16 %v76
  %v245 = vunpack.c.l.b16 %v77
  %v246 = vunpack.c.l.b16 %v78
  %v247 = vunpack.c.l.b16 %v79
  %v248 = vunpack.c.l.b16 %v80
  %v249 = vunpack.c.l.b16 %v81
  %v250 = vunpack.c.l.b16 %v82
  %v251 = vunpack.c.l.b16 %v83
  %v252 = vunpack.c.l.b16 %v84
  %v253 = vunpack.c.l.b16 %v85
  %v254 = vunpack.c.l.b16 %v86
  %v255 = vunpack.c.l.b16 %v87
  %v256 = vunpack.c.l.b16 %v88
  %v257 = vunpack.c.l.b16 %v89
  %v258 = vunpack.c.l.b16 %v90
  %v259 = vunpack.c.l.b16 %v91
  %v260 = vunpack.c.l.b16 %v92
  %v261 = vunpack.c.l.b16 %v93
  %v262 = vunpack.c.l.b16 %v94
  %v263 = vunpack.c.l.b16 %v95
  %v264 = vunpack.c.l.b16 %v96
  %v265 = vunpack.c.l.b16 %v97
  %v266 = vunpack.c.l.b16 %v98
  %v267 = vunpack.c.l.b16 %v99
  %v268 = vunpack.c.l.b16 %v100
  %v269 = vunpack.c.l.b16 %v101
  %v270 = vunpack.c.l.b16 %v102
  %v271 = vunpack.c.l.b16 %v103
  %v272 = vunpack.c.l.b16 %v104
  %v273 = vunpack.c.l.b16 %v105
  %v274 = vunpack.c.l.b16 %v106
  %v275 = vunpack.c.l.b16 %v107
  %v276 = vunpack.c.l.b16 %v108
  %v277 = vunpack.c.l.b16 %v109
  %v278 = vunpack.c.l.b16 %v110
  %v279 = vunpack.c.l.b16 %v111
  %v280 = vunpack.c.l.b16 %v112
  %v281 = vunpack.c.l.b16 %v113
  %v282 = vunpack.c.l.b16 %v114
  %v283 = vunpack.c.l.b16 %v115
  %v284 = vunpack.c.l.b16 %v116
  %v285 = vunpack.c.l.b16 %v117
  %v286 = vunpack.c.l.b16 %v118
  %v287 = vunpack.c.l.b16 %v119
  %v288 = vunpack.c.l.b16 %v120
  %v289 = vunpack.c.l.b16 %v121
  %v290 = vunpack.c.l.b16 %v122
  %v291 = vunpack.c.l.b16 %v123
  %v292 = vunpack.c.l.b16 %v124
  %v293 = vunpack.c.l.b16 %v125
  %v294 = vunpack.c.l.b16 %v126
  %v295 = vunpack.c.l.b16 %v127
  %v296 = vunpack.c.l.b16 %v128
  %v297 = vunpack.c.l.b16 %v129
  %v298 = vunpack.c.l.b16 %v130
  %v299 = vunpack.c.l.b16 %v131
  %v300 = vunpack.c.l.b16 %v132
  %v301 = vunpack.c.l.b16 %v133
  %v302 = vunpack.c.l.b16 %v134
  %v303 = vunpack.c.l.b16 %v135
  %v304 = vpack.c.b16 %v241, %v240
  %v305 = vpack.c.b16 %v243, %v242
  %v306 = vpack.c.b16 %v245, %v244
  %v307 = vpack.c.b16 %v247, %v246
  %v308 = vpack.c.b16 %v249, %v248
  %v309 = vpack.c.b16 %v251, %v250
  %v310 = vpack.c.b16 %v253, %v252
  %v311 = vpack.c.b16 %v255, %v254
  %v312 = vpack.c.b16 %v257, %v256
  %v313 = vpack.c.b16 %v259, %v258
  %v314 = vpack.c.b16 %v261, %v260
  %v315 = vpack.c.b16 %v263, %v262
  %v316 = vpack.c.b16 %v265, %v264
  %v317 = vpack.c.b16 %v267, %v266
  %v318 = vpack.c.b16 %v269, %v268
  %v319 = vpack.c.b16 %v271, %v270
  %v320 = vpack.c.b16 %v273, %v272
  %v321 = vpack.c.b16 %v275, %v274
  %v322 = vpack.c.b16 %v277, %v276
  %v323 = vpack.c.b16 %v279, %v278
  %v324 = vpack.c.b16 %v281, %v280
  %v325 = vpack.c.b16 %v283, %v282
  %v326 = vpack.c.b16 %v285, %v284
  %v327 = vpack.c.b16 %v287, %v286
  %v328 = vpack.c.b16 %v289, %v288
  %v329 = vpack.c.b16 %v291, %v290
  %v330 = vpack.c.b16 %v293, %v292
  %v331 = vpack.c.b16 %v295, %v294
  %v332 = vpack.c.b16 %v297, %v296
  %v333 = vpack.c.b16 %v299, %v298
  %v334 = vpack.c.b16 %v301, %v300
  %v335 = vpack.c.b16 %v303, %v302
  %368 = vmatprep.subr.bf16.mxu0 0
  %369 = vmatpush1.bf16.msra.mxu0 %v304
  %370 = vmatprep.subr.bf16.mxu0 0
  %371 = vmatpush1.bf16.msra.mxu0 %v305
  %372 = vmatprep.subr.bf16.mxu0 0
  %373 = vmatpush1.bf16.msra.mxu0 %v306
  %374 = vmatprep.subr.bf16.mxu0 0
  %375 = vmatpush1.bf16.msra.mxu0 %v307
  %376 = vmatprep.subr.bf16.mxu0 0
  %377 = vmatpush1.bf16.msra.mxu0 %v308
  %378 = vmatprep.subr.bf16.mxu0 0
  %379 = vmatpush1.bf16.msra.mxu0 %v309
  %380 = vmatprep.subr.bf16.mxu0 0
  %381 = vmatpush1.bf16.msra.mxu0 %v310
  %382 = vmatprep.subr.bf16.mxu0 0
  %383 = vmatpush1.bf16.msra.mxu0 %v311
  %384 = vmatprep.subr.bf16.mxu0 0
  %385 = vmatpush1.bf16.msra.mxu0 %v312
  %386 = vmatprep.subr.bf16.mxu0 0
  %387 = vmatpush1.bf16.msra.mxu0 %v313
  %388 = vmatprep.subr.bf16.mxu0 0
  %389 = vmatpush1.bf16.msra.mxu0 %v314
  %390 = vmatprep.subr.bf16.mxu0 0
  %391 = vmatpush1.bf16.msra.mxu0 %v315
  %392 = vmatprep.subr.bf16.mxu0 0
  %393 = vmatpush1.bf16.msra.mxu0 %v316
  %394 = vmatprep.subr.bf16.mxu0 0
  %395 = vmatpush1.bf16.msra.mxu0 %v317
  %396 = vmatprep.subr.bf16.mxu0 0
  %397 = vmatpush1.bf16.msra.mxu0 %v318
  %398 = vmatprep.subr.bf16.mxu0 0
  %399 = vmatpush1.bf16.msra.mxu0 %v319
  %400 = vmatprep.mubr.bf16.mxu0 %v161
  %401 = vmatmul.mubr.bf16.gmra.mrb[0].mxu0 %v160
  %v402 = vpop.f32.mrb[0].mxu0
  %v403 = vadd.f32 %v140, %v402
  %v404 = vpop.f32.mrb[0].mxu0
  %v405 = vpop.f32.mrb[0].mxu0
  %v406 = vadd.f32 %v140, %v405
  %v407 = vpop.f32.mrb[0].mxu0
  %408 = vmatprep.mubr.bf16.mxu0 %v165
  %409 = vmatmul.mubr.bf16.gmra.mrb[0].mxu0 %v164
  %v410 = vpop.f32.mrb[0].mxu0
  %v411 = vadd.f32 %v140, %v410
  %v412 = vpop.f32.mrb[0].mxu0
  %v413 = vpop.f32.mrb[0].mxu0
  %v414 = vpop.f32.mrb[0].mxu0
  %415 = vdwg.mxu0
  %416 = vmatprep.subr.bf16.mxu0 0
  %417 = vmatpush1.bf16.msra.mxu0 %v320
  %418 = vmatprep.subr.bf16.mxu0 0
  %419 = vmatpush1.bf16.msra.mxu0 %v321
  %420 = vmatprep.subr.bf16.mxu0 0
  %421 = vmatpush1.bf16.msra.mxu0 %v322
  %422 = vmatprep.subr.bf16.mxu0 0
  %423 = vmatpush1.bf16.msra.mxu0 %v323
  %424 = vmatprep.subr.bf16.mxu0 0
  %425 = vmatpush1.bf16.msra.mxu0 %v324
  %426 = vmatprep.subr.bf16.mxu0 0
  %427 = vmatpush1.bf16.msra.mxu0 %v325
  %428 = vmatprep.subr.bf16.mxu0 0
  %429 = vmatpush1.bf16.msra.mxu0 %v326
  %430 = vmatprep.subr.bf16.mxu0 0
  %431 = vmatpush1.bf16.msra.mxu0 %v327
  %432 = vmatprep.subr.bf16.mxu0 0
  %433 = vmatpush1.bf16.msra.mxu0 %v328
  %434 = vmatprep.subr.bf16.mxu0 0
  %435 = vmatpush1.bf16.msra.mxu0 %v329
  %436 = vmatprep.subr.bf16.mxu0 0
  %437 = vmatpush1.bf16.msra.mxu0 %v330
  %438 = vmatprep.subr.bf16.mxu0 0
  %439 = vmatpush1.bf16.msra.mxu0 %v331
  %440 = vmatprep.subr.bf16.mxu0 0
  %441 = vmatpush1.bf16.msra.mxu0 %v332
  %442 = vmatprep.subr.bf16.mxu0 0
  %443 = vmatpush1.bf16.msra.mxu0 %v333
  %444 = vmatprep.subr.bf16.mxu0 0
  %445 = vmatpush1.bf16.msra.mxu0 %v334
  %446 = vmatprep.subr.bf16.mxu0 0
  %447 = vmatpush1.bf16.msra.mxu0 %v335
  %448 = vmatprep.mubr.bf16.mxu0 %v163
  %449 = vmatmul.mubr.bf16.gmra.mrb[0].mxu0 %v162
  %v450 = vpop.f32.mrb[0].mxu0
  %v451 = vadd.f32 %v403, %v450
  %v452 = vpop.f32.mrb[0].mxu0
  %v453 = vpop.f32.mrb[0].mxu0
  %v454 = vadd.f32 %v406, %v453
  %v455 = vpop.f32.mrb[0].mxu0
  %456 = vmatprep.mubr.bf16.mxu0 %v167
  %457 = vmatmul.mubr.bf16.gmra.mrb[0].mxu0 %v166
  %v458 = vpop.f32.mrb[0].mxu0
  %v459 = vadd.f32 %v411, %v458
  %v460 = vpop.f32.mrb[0].mxu0
  %v461 = vpop.f32.mrb[0].mxu0
  %v462 = vpop.f32.mrb[0].mxu0
  %463 = vdwg.mxu0
  %v464 = vmax.f32 %v451, 0.0
  %v465 = vmax.f32 %v454, 0.0
  %v466 = vmax.f32 %v459, 0.0
  %v467 = vld [vmem:[%s3] sm:$0xff]
  %v468 = vld [vmem:[%s3 + $0x8] sm:$0xff]
  %v469 = vld [vmem:[%s3 + $0x10] sm:$0xff]
  %v471 = vlaneseq
  %v472 = vshrl.u32 %v471, 7
  %v473 = vsub.s32 0, %v472
  %v474 = vrot.slane %v63, %v473
  %v479 = vunpack.c.l.b16 %v467
  %v480 = vunpack.c.h.b16 %v467
  %v481 = vunpack.c.l.b16 %v468
  %v482 = vunpack.c.h.b16 %v468
  %v483 = vunpack.c.l.b16 %v469
  %v484 = vunpack.c.h.b16 %v469
  %v485 = vpack.c.b16 %v481, %v479
  %v486 = vpack.c.b16 %v482, %v480
  %v487 = vpack.c.b16 %v483, %v483
  %v488 = vpack.c.b16 %v484, %v484
  %v525 = vunpack.c.l.b16 %v30
  %v526 = vunpack.c.l.b16 %v31
  %v527 = vunpack.c.l.b16 %v32
  %v528 = vunpack.c.l.b16 %v33
  %v529 = vunpack.c.l.b16 %v34
  %v530 = vunpack.c.l.b16 %v35
  %v531 = vunpack.c.l.b16 %v36
  %v532 = vunpack.c.l.b16 %v37
  %v533 = vunpack.c.l.b16 %v38
  %v534 = vunpack.c.l.b16 %v39
  %v535 = vunpack.c.l.b16 %v40
  %v536 = vunpack.c.l.b16 %v41
  %v537 = vunpack.c.l.b16 %v42
  %v538 = vunpack.c.l.b16 %v43
  %v539 = vunpack.c.l.b16 %v44
  %v540 = vunpack.c.l.b16 %v45
  %v541 = vunpack.c.l.b16 %v46
  %v542 = vunpack.c.l.b16 %v47
  %v543 = vunpack.c.l.b16 %v48
  %v544 = vunpack.c.l.b16 %v49
  %v545 = vunpack.c.l.b16 %v50
  %v546 = vunpack.c.l.b16 %v51
  %v547 = vunpack.c.l.b16 %v52
  %v548 = vunpack.c.l.b16 %v53
  %v549 = vunpack.c.l.b16 %v54
  %v550 = vunpack.c.l.b16 %v55
  %v551 = vunpack.c.l.b16 %v56
  %v552 = vunpack.c.l.b16 %v57
  %v553 = vunpack.c.l.b16 %v58
  %v554 = vunpack.c.l.b16 %v59
  %v555 = vunpack.c.l.b16 %v60
  %v556 = vunpack.c.l.b16 %v61
  %v557 = vpack.c.b16 %v526, %v525
  %v558 = vpack.c.b16 %v528, %v527
  %v559 = vpack.c.b16 %v530, %v529
  %v560 = vpack.c.b16 %v532, %v531
  %v561 = vpack.c.b16 %v534, %v533
  %v562 = vpack.c.b16 %v536, %v535
  %v563 = vpack.c.b16 %v538, %v537
  %v564 = vpack.c.b16 %v540, %v539
  %v565 = vpack.c.b16 %v542, %v541
  %v566 = vpack.c.b16 %v544, %v543
  %v567 = vpack.c.b16 %v546, %v545
  %v568 = vpack.c.b16 %v548, %v547
  %v569 = vpack.c.b16 %v550, %v549
  %v570 = vpack.c.b16 %v552, %v551
  %v571 = vpack.c.b16 %v554, %v553
  %v572 = vpack.c.b16 %v556, %v555
  %589 = vmatprep.subr.bf16.mxu0 0
  %590 = vmatpush1.bf16.msra.mxu0 %v557
  %591 = vmatprep.subr.bf16.mxu0 0
  %592 = vmatpush1.bf16.msra.mxu0 %v558
  %593 = vmatprep.subr.bf16.mxu0 0
  %594 = vmatpush1.bf16.msra.mxu0 %v559
  %595 = vmatprep.subr.bf16.mxu0 0
  %596 = vmatpush1.bf16.msra.mxu0 %v560
  %597 = vmatprep.subr.bf16.mxu0 0
  %598 = vmatpush1.bf16.msra.mxu0 %v561
  %599 = vmatprep.subr.bf16.mxu0 0
  %600 = vmatpush1.bf16.msra.mxu0 %v562
  %601 = vmatprep.subr.bf16.mxu0 0
  %602 = vmatpush1.bf16.msra.mxu0 %v563
  %603 = vmatprep.subr.bf16.mxu0 0
  %604 = vmatpush1.bf16.msra.mxu0 %v564
  %605 = vmatprep.subr.bf16.mxu0 0
  %606 = vmatpush1.bf16.msra.mxu0 %v565
  %607 = vmatprep.subr.bf16.mxu0 0
  %608 = vmatpush1.bf16.msra.mxu0 %v566
  %609 = vmatprep.subr.bf16.mxu0 0
  %610 = vmatpush1.bf16.msra.mxu0 %v567
  %611 = vmatprep.subr.bf16.mxu0 0
  %612 = vmatpush1.bf16.msra.mxu0 %v568
  %613 = vmatprep.subr.bf16.mxu0 0
  %614 = vmatpush1.bf16.msra.mxu0 %v569
  %615 = vmatprep.subr.bf16.mxu0 0
  %616 = vmatpush1.bf16.msra.mxu0 %v570
  %617 = vmatprep.subr.bf16.mxu0 0
  %618 = vmatpush1.bf16.msra.mxu0 %v571
  %619 = vmatprep.subr.bf16.mxu0 0
  %620 = vmatpush1.bf16.msra.mxu0 %v572
  %621 = vmatprep.mubr.bf16.mxu0 %v486
  %622 = vmatmul.mubr.bf16.gmra.mrb[0].mxu0 %v485
  %v623 = vpop.f32.mrb[0].mxu0
  %v624 = vadd.f32 %v474, %v623
  %v625 = vpop.f32.mrb[0].mxu0
  %v626 = vpop.f32.mrb[0].mxu0
  %v627 = vadd.f32 %v474, %v626
  %v628 = vpop.f32.mrb[0].mxu0
  %629 = vmatprep.mubr.bf16.mxu0 %v488
  %630 = vmatmul.mubr.bf16.gmra.mrb[0].mxu0 %v487
  %v631 = vpop.f32.mrb[0].mxu0
  %v632 = vadd.f32 %v474, %v631
  %v633 = vpop.f32.mrb[0].mxu0
  %v634 = vpop.f32.mrb[0].mxu0
  %v635 = vpop.f32.mrb[0].mxu0
  %636 = vdwg.mxu0
  %v637 = vadd.f32 %v464, %v624
  %v638 = vadd.f32 %v465, %v627
  %v639 = vadd.f32 %v466, %v632
  %v641 = vlaneseq
  %v642 = vshrl.u32 %v641, 7
  %v643 = vsub.s32 0, %v642
  %v644 = vrot.slane %v64, %v643
  %v646 = vmul.f32 %v637, %v644
  %v647 = vmul.f32 %v638, %v644
  %v648 = vmul.f32 %v639, %v644
  %v650 = vlaneseq
  %v651 = vshrl.u32 %v650, 7
  %v652 = vsub.s32 0, %v651
  %v653 = vrot.slane %v65, %v652
  %v655 = vadd.f32 %v646, %v653
  %v656 = vadd.f32 %v647, %v653
  %v657 = vadd.f32 %v648, %v653
  %v658 = vpack.c.bf16 %v656, %v655
  %v659 = vpack.c.bf16 %v657, %v657
  %v662 = vunpack.c.l.b16 %v658
  %v663 = vunpack.c.h.b16 %v658
  %v664 = vunpack.c.l.b16 %v659
  %v665 = vpack.c.b16 %v662, %v662
  %v666 = vpack.c.b16 %v663, %v663
  %v667 = vpack.c.b16 %v664, %v664
  %vm671 = vcmask 519168
  %672 = vst.msk [vmem:[%s8] sm:$0xf] %vm671, %v665
  %673 = vst.msk [vmem:[%s8 + $0x4] sm:$0xf] %vm671, %v666
  %674 = vst.msk [vmem:[%s8 + $0x8] sm:$0xf] %vm671, %v667
  %s675 = scalar_lea.vmem %s0, 48
  %v676 = vld [vmem:[%s675] sm:$0xff]
  %v677 = vld [vmem:[%s675 + $0x8] sm:$0xff]
  %v678 = vld [vmem:[%s675 + $0x10] sm:$0xff]
  %v679 = vld [vmem:[%s675 + $0x18] sm:$0xff]
  %v680 = vld [vmem:[%s675 + $0x20] sm:$0xff]
  %v681 = vld [vmem:[%s675 + $0x28] sm:$0xff]
  %s682 = scalar_lea.vmem %s1, 256
  %v683 = vld [vmem:[%s682] sm:$0xf]
  %v684 = vld [vmem:[%s682 + $0x4] sm:$0xf]
  %v685 = vld [vmem:[%s682 + $0x8] sm:$0xf]
  %v686 = vld [vmem:[%s682 + $0xc] sm:$0xf]
  %v687 = vld [vmem:[%s682 + $0x10] sm:$0xf]
  %v688 = vld [vmem:[%s682 + $0x14] sm:$0xf]
  %v689 = vld [vmem:[%s682 + $0x18] sm:$0xf]
  %v690 = vld [vmem:[%s682 + $0x1c] sm:$0xf]
  %v691 = vld [vmem:[%s682 + $0x20] sm:$0xf]
  %v692 = vld [vmem:[%s682 + $0x24] sm:$0xf]
  %v693 = vld [vmem:[%s682 + $0x28] sm:$0xf]
  %v694 = vld [vmem:[%s682 + $0x2c] sm:$0xf]
  %v695 = vld [vmem:[%s682 + $0x30] sm:$0xf]
  %v696 = vld [vmem:[%s682 + $0x34] sm:$0xf]
  %v697 = vld [vmem:[%s682 + $0x38] sm:$0xf]
  %v698 = vld [vmem:[%s682 + $0x3c] sm:$0xf]
  %v699 = vld [vmem:[%s682 + $0x40] sm:$0xf]
  %v700 = vld [vmem:[%s682 + $0x44] sm:$0xf]
  %v701 = vld [vmem:[%s682 + $0x48] sm:$0xf]
  %v702 = vld [vmem:[%s682 + $0x4c] sm:$0xf]
  %v703 = vld [vmem:[%s682 + $0x50] sm:$0xf]
  %v704 = vld [vmem:[%s682 + $0x54] sm:$0xf]
  %v705 = vld [vmem:[%s682 + $0x58] sm:$0xf]
  %v706 = vld [vmem:[%s682 + $0x5c] sm:$0xf]
  %v707 = vld [vmem:[%s682 + $0x60] sm:$0xf]
  %v708 = vld [vmem:[%s682 + $0x64] sm:$0xf]
  %v709 = vld [vmem:[%s682 + $0x68] sm:$0xf]
  %v710 = vld [vmem:[%s682 + $0x6c] sm:$0xf]
  %v711 = vld [vmem:[%s682 + $0x70] sm:$0xf]
  %v712 = vld [vmem:[%s682 + $0x74] sm:$0xf]
  %v713 = vld [vmem:[%s682 + $0x78] sm:$0xf]
  %v714 = vld [vmem:[%s682 + $0x7c] sm:$0xf]
  %v715 = vld [vmem:[%s682 + $0x80] sm:$0xf]
  %v716 = vld [vmem:[%s682 + $0x84] sm:$0xf]
  %v717 = vld [vmem:[%s682 + $0x88] sm:$0xf]
  %v718 = vld [vmem:[%s682 + $0x8c] sm:$0xf]
  %v719 = vld [vmem:[%s682 + $0x90] sm:$0xf]
  %v720 = vld [vmem:[%s682 + $0x94] sm:$0xf]
  %v721 = vld [vmem:[%s682 + $0x98] sm:$0xf]
  %v722 = vld [vmem:[%s682 + $0x9c] sm:$0xf]
  %v723 = vld [vmem:[%s682 + $0xa0] sm:$0xf]
  %v724 = vld [vmem:[%s682 + $0xa4] sm:$0xf]
  %v725 = vld [vmem:[%s682 + $0xa8] sm:$0xf]
  %v726 = vld [vmem:[%s682 + $0xac] sm:$0xf]
  %v727 = vld [vmem:[%s682 + $0xb0] sm:$0xf]
  %v728 = vld [vmem:[%s682 + $0xb4] sm:$0xf]
  %v729 = vld [vmem:[%s682 + $0xb8] sm:$0xf]
  %v730 = vld [vmem:[%s682 + $0xbc] sm:$0xf]
  %v731 = vld [vmem:[%s682 + $0xc0] sm:$0xf]
  %v732 = vld [vmem:[%s682 + $0xc4] sm:$0xf]
  %v733 = vld [vmem:[%s682 + $0xc8] sm:$0xf]
  %v734 = vld [vmem:[%s682 + $0xcc] sm:$0xf]
  %v735 = vld [vmem:[%s682 + $0xd0] sm:$0xf]
  %v736 = vld [vmem:[%s682 + $0xd4] sm:$0xf]
  %v737 = vld [vmem:[%s682 + $0xd8] sm:$0xf]
  %v738 = vld [vmem:[%s682 + $0xdc] sm:$0xf]
  %v739 = vld [vmem:[%s682 + $0xe0] sm:$0xf]
  %v740 = vld [vmem:[%s682 + $0xe4] sm:$0xf]
  %v741 = vld [vmem:[%s682 + $0xe8] sm:$0xf]
  %v742 = vld [vmem:[%s682 + $0xec] sm:$0xf]
  %v743 = vld [vmem:[%s682 + $0xf0] sm:$0xf]
  %v744 = vld [vmem:[%s682 + $0xf4] sm:$0xf]
  %v745 = vld [vmem:[%s682 + $0xf8] sm:$0xf]
  %v746 = vld [vmem:[%s682 + $0xfc] sm:$0xf]
  %v753 = vunpack.c.l.b16 %v676
  %v754 = vunpack.c.h.b16 %v676
  %v755 = vunpack.c.l.b16 %v677
  %v756 = vunpack.c.h.b16 %v677
  %v757 = vunpack.c.l.b16 %v678
  %v758 = vunpack.c.h.b16 %v678
  %v759 = vunpack.c.l.b16 %v679
  %v760 = vunpack.c.h.b16 %v679
  %v761 = vunpack.c.l.b16 %v680
  %v762 = vunpack.c.h.b16 %v680
  %v763 = vunpack.c.l.b16 %v681
  %v764 = vunpack.c.h.b16 %v681
  %v765 = vpack.c.b16 %v757, %v753
  %v766 = vpack.c.b16 %v758, %v754
  %v767 = vpack.c.b16 %v759, %v755
  %v768 = vpack.c.b16 %v760, %v756
  %v769 = vpack.c.b16 %v761, %v761
  %v770 = vpack.c.b16 %v762, %v762
  %v771 = vpack.c.b16 %v763, %v763
  %v772 = vpack.c.b16 %v764, %v764
  %v845 = vunpack.c.l.b16 %v683
  %v846 = vunpack.c.l.b16 %v684
  %v847 = vunpack.c.l.b16 %v685
  %v848 = vunpack.c.l.b16 %v686
  %v849 = vunpack.c.l.b16 %v687
  %v850 = vunpack.c.l.b16 %v688
  %v851 = vunpack.c.l.b16 %v689
  %v852 = vunpack.c.l.b16 %v690
  %v853 = vunpack.c.l.b16 %v691
  %v854 = vunpack.c.l.b16 %v692
  %v855 = vunpack.c.l.b16 %v693
  %v856 = vunpack.c.l.b16 %v694
  %v857 = vunpack.c.l.b16 %v695
  %v858 = vunpack.c.l.b16 %v696
  %v859 = vunpack.c.l.b16 %v697
  %v860 = vunpack.c.l.b16 %v698
  %v861 = vunpack.c.l.b16 %v699
  %v862 = vunpack.c.l.b16 %v700
  %v863 = vunpack.c.l.b16 %v701
  %v864 = vunpack.c.l.b16 %v702
  %v865 = vunpack.c.l.b16 %v703
  %v866 = vunpack.c.l.b16 %v704
  %v867 = vunpack.c.l.b16 %v705
  %v868 = vunpack.c.l.b16 %v706
  %v869 = vunpack.c.l.b16 %v707
  %v870 = vunpack.c.l.b16 %v708
  %v871 = vunpack.c.l.b16 %v709
  %v872 = vunpack.c.l.b16 %v710
  %v873 = vunpack.c.l.b16 %v711
  %v874 = vunpack.c.l.b16 %v712
  %v875 = vunpack.c.l.b16 %v713
  %v876 = vunpack.c.l.b16 %v714
  %v877 = vunpack.c.l.b16 %v715
  %v878 = vunpack.c.l.b16 %v716
  %v879 = vunpack.c.l.b16 %v717
  %v880 = vunpack.c.l.b16 %v718
  %v881 = vunpack.c.l.b16 %v719
  %v882 = vunpack.c.l.b16 %v720
  %v883 = vunpack.c.l.b16 %v721
  %v884 = vunpack.c.l.b16 %v722
  %v885 = vunpack.c.l.b16 %v723
  %v886 = vunpack.c.l.b16 %v724
  %v887 = vunpack.c.l.b16 %v725
  %v888 = vunpack.c.l.b16 %v726
  %v889 = vunpack.c.l.b16 %v727
  %v890 = vunpack.c.l.b16 %v728
  %v891 = vunpack.c.l.b16 %v729
  %v892 = vunpack.c.l.b16 %v730
  %v893 = vunpack.c.l.b16 %v731
  %v894 = vunpack.c.l.b16 %v732
  %v895 = vunpack.c.l.b16 %v733
  %v896 = vunpack.c.l.b16 %v734
  %v897 = vunpack.c.l.b16 %v735
  %v898 = vunpack.c.l.b16 %v736
  %v899 = vunpack.c.l.b16 %v737
  %v900 = vunpack.c.l.b16 %v738
  %v901 = vunpack.c.l.b16 %v739
  %v902 = vunpack.c.l.b16 %v740
  %v903 = vunpack.c.l.b16 %v741
  %v904 = vunpack.c.l.b16 %v742
  %v905 = vunpack.c.l.b16 %v743
  %v906 = vunpack.c.l.b16 %v744
  %v907 = vunpack.c.l.b16 %v745
  %v908 = vunpack.c.l.b16 %v746
  %v909 = vpack.c.b16 %v846, %v845
  %v910 = vpack.c.b16 %v848, %v847
  %v911 = vpack.c.b16 %v850, %v849
  %v912 = vpack.c.b16 %v852, %v851
  %v913 = vpack.c.b16 %v854, %v853
  %v914 = vpack.c.b16 %v856, %v855
  %v915 = vpack.c.b16 %v858, %v857
  %v916 = vpack.c.b16 %v860, %v859
  %v917 = vpack.c.b16 %v862, %v861
  %v918 = vpack.c.b16 %v864, %v863
  %v919 = vpack.c.b16 %v866, %v865
  %v920 = vpack.c.b16 %v868, %v867
  %v921 = vpack.c.b16 %v870, %v869
  %v922 = vpack.c.b16 %v872, %v871
  %v923 = vpack.c.b16 %v874, %v873
  %v924 = vpack.c.b16 %v876, %v875
  %v925 = vpack.c.b16 %v878, %v877
  %v926 = vpack.c.b16 %v880, %v879
  %v927 = vpack.c.b16 %v882, %v881
  %v928 = vpack.c.b16 %v884, %v883
  %v929 = vpack.c.b16 %v886, %v885
  %v930 = vpack.c.b16 %v888, %v887
  %v931 = vpack.c.b16 %v890, %v889
  %v932 = vpack.c.b16 %v892, %v891
  %v933 = vpack.c.b16 %v894, %v893
  %v934 = vpack.c.b16 %v896, %v895
  %v935 = vpack.c.b16 %v898, %v897
  %v936 = vpack.c.b16 %v900, %v899
  %v937 = vpack.c.b16 %v902, %v901
  %v938 = vpack.c.b16 %v904, %v903
  %v939 = vpack.c.b16 %v906, %v905
  %v940 = vpack.c.b16 %v908, %v907
  %973 = vmatprep.subr.bf16.mxu0 0
  %974 = vmatpush1.bf16.msra.mxu0 %v909
  %975 = vmatprep.subr.bf16.mxu0 0
  %976 = vmatpush1.bf16.msra.mxu0 %v910
  %977 = vmatprep.subr.bf16.mxu0 0
  %978 = vmatpush1.bf16.msra.mxu0 %v911
  %979 = vmatprep.subr.bf16.mxu0 0
  %980 = vmatpush1.bf16.msra.mxu0 %v912
  %981 = vmatprep.subr.bf16.mxu0 0
  %982 = vmatpush1.bf16.msra.mxu0 %v913
  %983 = vmatprep.subr.bf16.mxu0 0
  %984 = vmatpush1.bf16.msra.mxu0 %v914
  %985 = vmatprep.subr.bf16.mxu0 0
  %986 = vmatpush1.bf16.msra.mxu0 %v915
  %987 = vmatprep.subr.bf16.mxu0 0
  %988 = vmatpush1.bf16.msra.mxu0 %v916
  %989 = vmatprep.subr.bf16.mxu0 0
  %990 = vmatpush1.bf16.msra.mxu0 %v917
  %991 = vmatprep.subr.bf16.mxu0 0
  %992 = vmatpush1.bf16.msra.mxu0 %v918
  %993 = vmatprep.subr.bf16.mxu0 0
  %994 = vmatpush1.bf16.msra.mxu0 %v919
  %995 = vmatprep.subr.bf16.mxu0 0
  %996 = vmatpush1.bf16.msra.mxu0 %v920
  %997 = vmatprep.subr.bf16.mxu0 0
  %998 = vmatpush1.bf16.msra.mxu0 %v921
  %999 = vmatprep.subr.bf16.mxu0 0
  %1000 = vmatpush1.bf16.msra.mxu0 %v922
  %1001 = vmatprep.subr.bf16.mxu0 0
  %1002 = vmatpush1.bf16.msra.mxu0 %v923
  %1003 = vmatprep.subr.bf16.mxu0 0
  %1004 = vmatpush1.bf16.msra.mxu0 %v924
  %1005 = vmatprep.mubr.bf16.mxu0 %v766
  %1006 = vmatmul.mubr.bf16.gmra.mrb[0].mxu0 %v765
  %v1007 = vpop.f32.mrb[0].mxu0
  %v1008 = vadd.f32 %v140, %v1007
  %v1009 = vpop.f32.mrb[0].mxu0
  %v1010 = vpop.f32.mrb[0].mxu0
  %v1011 = vadd.f32 %v140, %v1010
  %v1012 = vpop.f32.mrb[0].mxu0
  %1013 = vmatprep.mubr.bf16.mxu0 %v770
  %1014 = vmatmul.mubr.bf16.gmra.mrb[0].mxu0 %v769
  %v1015 = vpop.f32.mrb[0].mxu0
  %v1016 = vadd.f32 %v140, %v1015
  %v1017 = vpop.f32.mrb[0].mxu0
  %v1018 = vpop.f32.mrb[0].mxu0
  %v1019 = vpop.f32.mrb[0].mxu0
  %1020 = vdwg.mxu0
  %1021 = vmatprep.subr.bf16.mxu0 0
  %1022 = vmatpush1.bf16.msra.mxu0 %v925
  %1023 = vmatprep.subr.bf16.mxu0 0
  %1024 = vmatpush1.bf16.msra.mxu0 %v926
  %1025 = vmatprep.subr.bf16.mxu0 0
  %1026 = vmatpush1.bf16.msra.mxu0 %v927
  %1027 = vmatprep.subr.bf16.mxu0 0
  %1028 = vmatpush1.bf16.msra.mxu0 %v928
  %1029 = vmatprep.subr.bf16.mxu0 0
  %1030 = vmatpush1.bf16.msra.mxu0 %v929
  %1031 = vmatprep.subr.bf16.mxu0 0
  %1032 = vmatpush1.bf16.msra.mxu0 %v930
  %1033 = vmatprep.subr.bf16.mxu0 0
  %1034 = vmatpush1.bf16.msra.mxu0 %v931
  %1035 = vmatprep.subr.bf16.mxu0 0
  %1036 = vmatpush1.bf16.msra.mxu0 %v932
  %1037 = vmatprep.subr.bf16.mxu0 0
  %1038 = vmatpush1.bf16.msra.mxu0 %v933
  %1039 = vmatprep.subr.bf16.mxu0 0
  %1040 = vmatpush1.bf16.msra.mxu0 %v934
  %1041 = vmatprep.subr.bf16.mxu0 0
  %1042 = vmatpush1.bf16.msra.mxu0 %v935
  %1043 = vmatprep.subr.bf16.mxu0 0
  %1044 = vmatpush1.bf16.msra.mxu0 %v936
  %1045 = vmatprep.subr.bf16.mxu0 0
  %1046 = vmatpush1.bf16.msra.mxu0 %v937
  %1047 = vmatprep.subr.bf16.mxu0 0
  %1048 = vmatpush1.bf16.msra.mxu0 %v938
  %1049 = vmatprep.subr.bf16.mxu0 0
  %1050 = vmatpush1.bf16.msra.mxu0 %v939
  %1051 = vmatprep.subr.bf16.mxu0 0
  %1052 = vmatpush1.bf16.msra.mxu0 %v940
  %1053 = vmatprep.mubr.bf16.mxu0 %v768
  %1054 = vmatmul.mubr.bf16.gmra.mrb[0].mxu0 %v767
  %v1055 = vpop.f32.mrb[0].mxu0
  %v1056 = vadd.f32 %v1008, %v1055
  %v1057 = vpop.f32.mrb[0].mxu0
  %v1058 = vpop.f32.mrb[0].mxu0
  %v1059 = vadd.f32 %v1011, %v1058
  %v1060 = vpop.f32.mrb[0].mxu0
  %1061 = vmatprep.mubr.bf16.mxu0 %v772
  %1062 = vmatmul.mubr.bf16.gmra.mrb[0].mxu0 %v771
  %v1063 = vpop.f32.mrb[0].mxu0
  %v1064 = vadd.f32 %v1016, %v1063
  %v1065 = vpop.f32.mrb[0].mxu0
  %v1066 = vpop.f32.mrb[0].mxu0
  %v1067 = vpop.f32.mrb[0].mxu0
  %1068 = vdwg.mxu0
  %v1069 = vmax.f32 %v1056, 0.0
  %v1070 = vmax.f32 %v1059, 0.0
  %v1071 = vmax.f32 %v1064, 0.0
  %s1072 = scalar_lea.vmem %s3, 24
  %v1073 = vld [vmem:[%s1072] sm:$0xff]
  %v1074 = vld [vmem:[%s1072 + $0x8] sm:$0xff]
  %v1075 = vld [vmem:[%s1072 + $0x10] sm:$0xff]
  %v1079 = vunpack.c.l.b16 %v1073
  %v1080 = vunpack.c.h.b16 %v1073
  %v1081 = vunpack.c.l.b16 %v1074
  %v1082 = vunpack.c.h.b16 %v1074
  %v1083 = vunpack.c.l.b16 %v1075
  %v1084 = vunpack.c.h.b16 %v1075
  %v1085 = vpack.c.b16 %v1081, %v1079
  %v1086 = vpack.c.b16 %v1082, %v1080
  %v1087 = vpack.c.b16 %v1083, %v1083
  %v1088 = vpack.c.b16 %v1084, %v1084
  %1093 = vmatprep.subr.bf16.mxu0 0
  %1094 = vmatpush1.bf16.msra.mxu0 %v557
  %1095 = vmatprep.subr.bf16.mxu0 0
  %1096 = vmatpush1.bf16.msra.mxu0 %v558
  %1097 = vmatprep.subr.bf16.mxu0 0
  %1098 = vmatpush1.bf16.msra.mxu0 %v559
  %1099 = vmatprep.subr.bf16.mxu0 0
  %1100 = vmatpush1.bf16.msra.mxu0 %v560
  %1101 = vmatprep.subr.bf16.mxu0 0
  %1102 = vmatpush1.bf16.msra.mxu0 %v561
  %1103 = vmatprep.subr.bf16.mxu0 0
  %1104 = vmatpush1.bf16.msra.mxu0 %v562
  %1105 = vmatprep.subr.bf16.mxu0 0
  %1106 = vmatpush1.bf16.msra.mxu0 %v563
  %1107 = vmatprep.subr.bf16.mxu0 0
  %1108 = vmatpush1.bf16.msra.mxu0 %v564
  %1109 = vmatprep.subr.bf16.mxu0 0
  %1110 = vmatpush1.bf16.msra.mxu0 %v565
  %1111 = vmatprep.subr.bf16.mxu0 0
  %1112 = vmatpush1.bf16.msra.mxu0 %v566
  %1113 = vmatprep.subr.bf16.mxu0 0
  %1114 = vmatpush1.bf16.msra.mxu0 %v567
  %1115 = vmatprep.subr.bf16.mxu0 0
  %1116 = vmatpush1.bf16.msra.mxu0 %v568
  %1117 = vmatprep.subr.bf16.mxu0 0
  %1118 = vmatpush1.bf16.msra.mxu0 %v569
  %1119 = vmatprep.subr.bf16.mxu0 0
  %1120 = vmatpush1.bf16.msra.mxu0 %v570
  %1121 = vmatprep.subr.bf16.mxu0 0
  %1122 = vmatpush1.bf16.msra.mxu0 %v571
  %1123 = vmatprep.subr.bf16.mxu0 0
  %1124 = vmatpush1.bf16.msra.mxu0 %v572
  %1125 = vmatprep.mubr.bf16.mxu0 %v1086
  %1126 = vmatmul.mubr.bf16.gmra.mrb[0].mxu0 %v1085
  %v1127 = vpop.f32.mrb[0].mxu0
  %v1128 = vadd.f32 %v474, %v1127
  %v1129 = vpop.f32.mrb[0].mxu0
  %v1130 = vpop.f32.mrb[0].mxu0
  %v1131 = vadd.f32 %v474, %v1130
  %v1132 = vpop.f32.mrb[0].mxu0
  %1133 = vmatprep.mubr.bf16.mxu0 %v1088
  %1134 = vmatmul.mubr.bf16.gmra.mrb[0].mxu0 %v1087
  %v1135 = vpop.f32.mrb[0].mxu0
  %v1136 = vadd.f32 %v474, %v1135
  %v1137 = vpop.f32.mrb[0].mxu0
  %v1138 = vpop.f32.mrb[0].mxu0
  %v1139 = vpop.f32.mrb[0].mxu0
  %1140 = vdwg.mxu0
  %v1141 = vadd.f32 %v1069, %v1128
  %v1142 = vadd.f32 %v1070, %v1131
  %v1143 = vadd.f32 %v1071, %v1136
  %v1144 = vmul.f32 %v1141, %v644
  %v1145 = vmul.f32 %v1142, %v644
  %v1146 = vmul.f32 %v1143, %v644
  %v1147 = vadd.f32 %v1144, %v653
  %v1148 = vadd.f32 %v1145, %v653
  %v1149 = vadd.f32 %v1146, %v653
  %v1150 = vpack.c.bf16 %v1148, %v1147
  %v1151 = vpack.c.bf16 %v1149, %v1149
  %v1154 = vunpack.c.l.b16 %v1150
  %v1155 = vunpack.c.h.b16 %v1150
  %v1156 = vunpack.c.l.b16 %v1151
  %v1157 = vpack.c.b16 %v1154, %v1154
  %v1158 = vpack.c.b16 %v1155, %v1155
  %v1159 = vpack.c.b16 %v1156, %v1156
  %s1163 = scalar_lea.vmem %s8, 12
  %1164 = vst.msk [vmem:[%s1163] sm:$0xf] %vm671, %v1157
  %1165 = vst.msk [vmem:[%s1163 + $0x4] sm:$0xf] %vm671, %v1158
  %1166 = vst.msk [vmem:[%s1163 + $0x8] sm:$0xf] %vm671, %v1159
  %s1167 = scalar_lea.vmem %s0, 96
  %v1168 = vld [vmem:[%s1167] sm:$0xff]
  %v1169 = vld [vmem:[%s1167 + $0x8] sm:$0xff]
  %v1170 = vld [vmem:[%s1167 + $0x10] sm:$0xff]
  %v1171 = vld [vmem:[%s1167 + $0x18] sm:$0xff]
  %v1172 = vld [vmem:[%s1167 + $0x20] sm:$0xff]
  %v1173 = vld [vmem:[%s1167 + $0x28] sm:$0xff]
  %s1174 = scalar_lea.vmem %s1, 512
  %v1175 = vld [vmem:[%s1174] sm:$0xf]
  %v1176 = vld [vmem:[%s1174 + $0x4] sm:$0xf]
  %v1177 = vld [vmem:[%s1174 + $0x8] sm:$0xf]
  %v1178 = vld [vmem:[%s1174 + $0xc] sm:$0xf]
  %v1179 = vld [vmem:[%s1174 + $0x10] sm:$0xf]
  %v1180 = vld [vmem:[%s1174 + $0x14] sm:$0xf]
  %v1181 = vld [vmem:[%s1174 + $0x18] sm:$0xf]
  %v1182 = vld [vmem:[%s1174 + $0x1c] sm:$0xf]
  %v1183 = vld [vmem:[%s1174 + $0x20] sm:$0xf]
  %v1184 = vld [vmem:[%s1174 + $0x24] sm:$0xf]
  %v1185 = vld [vmem:[%s1174 + $0x28] sm:$0xf]
  %v1186 = vld [vmem:[%s1174 + $0x2c] sm:$0xf]
  %v1187 = vld [vmem:[%s1174 + $0x30] sm:$0xf]
  %v1188 = vld [vmem:[%s1174 + $0x34] sm:$0xf]
  %v1189 = vld [vmem:[%s1174 + $0x38] sm:$0xf]
  %v1190 = vld [vmem:[%s1174 + $0x3c] sm:$0xf]
  %v1191 = vld [vmem:[%s1174 + $0x40] sm:$0xf]
  %v1192 = vld [vmem:[%s1174 + $0x44] sm:$0xf]
  %v1193 = vld [vmem:[%s1174 + $0x48] sm:$0xf]
  %v1194 = vld [vmem:[%s1174 + $0x4c] sm:$0xf]
  %v1195 = vld [vmem:[%s1174 + $0x50] sm:$0xf]
  %v1196 = vld [vmem:[%s1174 + $0x54] sm:$0xf]
  %v1197 = vld [vmem:[%s1174 + $0x58] sm:$0xf]
  %v1198 = vld [vmem:[%s1174 + $0x5c] sm:$0xf]
  %v1199 = vld [vmem:[%s1174 + $0x60] sm:$0xf]
  %v1200 = vld [vmem:[%s1174 + $0x64] sm:$0xf]
  %v1201 = vld [vmem:[%s1174 + $0x68] sm:$0xf]
  %v1202 = vld [vmem:[%s1174 + $0x6c] sm:$0xf]
  %v1203 = vld [vmem:[%s1174 + $0x70] sm:$0xf]
  %v1204 = vld [vmem:[%s1174 + $0x74] sm:$0xf]
  %v1205 = vld [vmem:[%s1174 + $0x78] sm:$0xf]
  %v1206 = vld [vmem:[%s1174 + $0x7c] sm:$0xf]
  %v1207 = vld [vmem:[%s1174 + $0x80] sm:$0xf]
  %v1208 = vld [vmem:[%s1174 + $0x84] sm:$0xf]
  %v1209 = vld [vmem:[%s1174 + $0x88] sm:$0xf]
  %v1210 = vld [vmem:[%s1174 + $0x8c] sm:$0xf]
  %v1211 = vld [vmem:[%s1174 + $0x90] sm:$0xf]
  %v1212 = vld [vmem:[%s1174 + $0x94] sm:$0xf]
  %v1213 = vld [vmem:[%s1174 + $0x98] sm:$0xf]
  %v1214 = vld [vmem:[%s1174 + $0x9c] sm:$0xf]
  %v1215 = vld [vmem:[%s1174 + $0xa0] sm:$0xf]
  %v1216 = vld [vmem:[%s1174 + $0xa4] sm:$0xf]
  %v1217 = vld [vmem:[%s1174 + $0xa8] sm:$0xf]
  %v1218 = vld [vmem:[%s1174 + $0xac] sm:$0xf]
  %v1219 = vld [vmem:[%s1174 + $0xb0] sm:$0xf]
  %v1220 = vld [vmem:[%s1174 + $0xb4] sm:$0xf]
  %v1221 = vld [vmem:[%s1174 + $0xb8] sm:$0xf]
  %v1222 = vld [vmem:[%s1174 + $0xbc] sm:$0xf]
  %v1223 = vld [vmem:[%s1174 + $0xc0] sm:$0xf]
  %v1224 = vld [vmem:[%s1174 + $0xc4] sm:$0xf]
  %v1225 = vld [vmem:[%s1174 + $0xc8] sm:$0xf]
  %v1226 = vld [vmem:[%s1174 + $0xcc] sm:$0xf]
  %v1227 = vld [vmem:[%s1174 + $0xd0] sm:$0xf]
  %v1228 = vld [vmem:[%s1174 + $0xd4] sm:$0xf]
  %v1229 = vld [vmem:[%s1174 + $0xd8] sm:$0xf]
  %v1230 = vld [vmem:[%s1174 + $0xdc] sm:$0xf]
  %v1231 = vld [vmem:[%s1174 + $0xe0] sm:$0xf]
  %v1232 = vld [vmem:[%s1174 + $0xe4] sm:$0xf]
  %v1233 = vld [vmem:[%s1174 + $0xe8] sm:$0xf]
  %v1234 = vld [vmem:[%s1174 + $0xec] sm:$0xf]
  %v1235 = vld [vmem:[%s1174 + $0xf0] sm:$0xf]
  %v1236 = vld [vmem:[%s1174 + $0xf4] sm:$0xf]
  %v1237 = vld [vmem:[%s1174 + $0xf8] sm:$0xf]
  %v1238 = vld [vmem:[%s1174 + $0xfc] sm:$0xf]
  %v1245 = vunpack.c.l.b16 %v1168
  %v1246 = vunpack.c.h.b16 %v1168
  %v1247 = vunpack.c.l.b16 %v1169
  %v1248 = vunpack.c.h.b16 %v1169
  %v1249 = vunpack.c.l.b16 %v1170
  %v1250 = vunpack.c.h.b16 %v1170
  %v1251 = vunpack.c.l.b16 %v1171
  %v1252 = vunpack.c.h.b16 %v1171
  %v1253 = vunpack.c.l.b16 %v1172
  %v1254 = vunpack.c.h.b16 %v1172
  %v1255 = vunpack.c.l.b16 %v1173
  %v1256 = vunpack.c.h.b16 %v1173
  %v1257 = vpack.c.b16 %v1249, %v1245
  %v1258 = vpack.c.b16 %v1250, %v1246
  %v1259 = vpack.c.b16 %v1251, %v1247
  %v1260 = vpack.c.b16 %v1252, %v1248
  %v1261 = vpack.c.b16 %v1253, %v1253
  %v1262 = vpack.c.b16 %v1254, %v1254
  %v1263 = vpack.c.b16 %v1255, %v1255
  %v1264 = vpack.c.b16 %v1256, %v1256
  %v1337 = vunpack.c.l.b16 %v1175
  %v1338 = vunpack.c.l.b16 %v1176
  %v1339 = vunpack.c.l.b16 %v1177
  %v1340 = vunpack.c.l.b16 %v1178
  %v1341 = vunpack.c.l.b16 %v1179
  %v1342 = vunpack.c.l.b16 %v1180
  %v1343 = vunpack.c.l.b16 %v1181
  %v1344 = vunpack.c.l.b16 %v1182
  %v1345 = vunpack.c.l.b16 %v1183
  %v1346 = vunpack.c.l.b16 %v1184
  %v1347 = vunpack.c.l.b16 %v1185
  %v1348 = vunpack.c.l.b16 %v1186
  %v1349 = vunpack.c.l.b16 %v1187
  %v1350 = vunpack.c.l.b16 %v1188
  %v1351 = vunpack.c.l.b16 %v1189
  %v1352 = vunpack.c.l.b16 %v1190
  %v1353 = vunpack.c.l.b16 %v1191
  %v1354 = vunpack.c.l.b16 %v1192
  %v1355 = vunpack.c.l.b16 %v1193
  %v1356 = vunpack.c.l.b16 %v1194
  %v1357 = vunpack.c.l.b16 %v1195
  %v1358 = vunpack.c.l.b16 %v1196
  %v1359 = vunpack.c.l.b16 %v1197
  %v1360 = vunpack.c.l.b16 %v1198
  %v1361 = vunpack.c.l.b16 %v1199
  %v1362 = vunpack.c.l.b16 %v1200
  %v1363 = vunpack.c.l.b16 %v1201
  %v1364 = vunpack.c.l.b16 %v1202
  %v1365 = vunpack.c.l.b16 %v1203
  %v1366 = vunpack.c.l.b16 %v1204
  %v1367 = vunpack.c.l.b16 %v1205
  %v1368 = vunpack.c.l.b16 %v1206
  %v1369 = vunpack.c.l.b16 %v1207
  %v1370 = vunpack.c.l.b16 %v1208
  %v1371 = vunpack.c.l.b16 %v1209
  %v1372 = vunpack.c.l.b16 %v1210
  %v1373 = vunpack.c.l.b16 %v1211
  %v1374 = vunpack.c.l.b16 %v1212
  %v1375 = vunpack.c.l.b16 %v1213
  %v1376 = vunpack.c.l.b16 %v1214
  %v1377 = vunpack.c.l.b16 %v1215
  %v1378 = vunpack.c.l.b16 %v1216
  %v1379 = vunpack.c.l.b16 %v1217
  %v1380 = vunpack.c.l.b16 %v1218
  %v1381 = vunpack.c.l.b16 %v1219
  %v1382 = vunpack.c.l.b16 %v1220
  %v1383 = vunpack.c.l.b16 %v1221
  %v1384 = vunpack.c.l.b16 %v1222
  %v1385 = vunpack.c.l.b16 %v1223
  %v1386 = vunpack.c.l.b16 %v1224
  %v1387 = vunpack.c.l.b16 %v1225
  %v1388 = vunpack.c.l.b16 %v1226
  %v1389 = vunpack.c.l.b16 %v1227
  %v1390 = vunpack.c.l.b16 %v1228
  %v1391 = vunpack.c.l.b16 %v1229
  %v1392 = vunpack.c.l.b16 %v1230
  %v1393 = vunpack.c.l.b16 %v1231
  %v1394 = vunpack.c.l.b16 %v1232
  %v1395 = vunpack.c.l.b16 %v1233
  %v1396 = vunpack.c.l.b16 %v1234
  %v1397 = vunpack.c.l.b16 %v1235
  %v1398 = vunpack.c.l.b16 %v1236
  %v1399 = vunpack.c.l.b16 %v1237
  %v1400 = vunpack.c.l.b16 %v1238
  %v1401 = vpack.c.b16 %v1338, %v1337
  %v1402 = vpack.c.b16 %v1340, %v1339
  %v1403 = vpack.c.b16 %v1342, %v1341
  %v1404 = vpack.c.b16 %v1344, %v1343
  %v1405 = vpack.c.b16 %v1346, %v1345
  %v1406 = vpack.c.b16 %v1348, %v1347
  %v1407 = vpack.c.b16 %v1350, %v1349
  %v1408 = vpack.c.b16 %v1352, %v1351
  %v1409 = vpack.c.b16 %v1354, %v1353
  %v1410 = vpack.c.b16 %v1356, %v1355
  %v1411 = vpack.c.b16 %v1358, %v1357
  %v1412 = vpack.c.b16 %v1360, %v1359
  %v1413 = vpack.c.b16 %v1362, %v1361
  %v1414 = vpack.c.b16 %v1364, %v1363
  %v1415 = vpack.c.b16 %v1366, %v1365
  %v1416 = vpack.c.b16 %v1368, %v1367
  %v1417 = vpack.c.b16 %v1370, %v1369
  %v1418 = vpack.c.b16 %v1372, %v1371
  %v1419 = vpack.c.b16 %v1374, %v1373
  %v1420 = vpack.c.b16 %v1376, %v1375
  %v1421 = vpack.c.b16 %v1378, %v1377
  %v1422 = vpack.c.b16 %v1380, %v1379
  %v1423 = vpack.c.b16 %v1382, %v1381
  %v1424 = vpack.c.b16 %v1384, %v1383
  %v1425 = vpack.c.b16 %v1386, %v1385
  %v1426 = vpack.c.b16 %v1388, %v1387
  %v1427 = vpack.c.b16 %v1390, %v1389
  %v1428 = vpack.c.b16 %v1392, %v1391
  %v1429 = vpack.c.b16 %v1394, %v1393
  %v1430 = vpack.c.b16 %v1396, %v1395
  %v1431 = vpack.c.b16 %v1398, %v1397
  %v1432 = vpack.c.b16 %v1400, %v1399
  %1465 = vmatprep.subr.bf16.mxu0 0
  %1466 = vmatpush1.bf16.msra.mxu0 %v1401
  %1467 = vmatprep.subr.bf16.mxu0 0
  %1468 = vmatpush1.bf16.msra.mxu0 %v1402
  %1469 = vmatprep.subr.bf16.mxu0 0
  %1470 = vmatpush1.bf16.msra.mxu0 %v1403
  %1471 = vmatprep.subr.bf16.mxu0 0
  %1472 = vmatpush1.bf16.msra.mxu0 %v1404
  %1473 = vmatprep.subr.bf16.mxu0 0
  %1474 = vmatpush1.bf16.msra.mxu0 %v1405
  %1475 = vmatprep.subr.bf16.mxu0 0
  %1476 = vmatpush1.bf16.msra.mxu0 %v1406
  %1477 = vmatprep.subr.bf16.mxu0 0
  %1478 = vmatpush1.bf16.msra.mxu0 %v1407
  %1479 = vmatprep.subr.bf16.mxu0 0
  %1480 = vmatpush1.bf16.msra.mxu0 %v1408
  %1481 = vmatprep.subr.bf16.mxu0 0
  %1482 = vmatpush1.bf16.msra.mxu0 %v1409
  %1483 = vmatprep.subr.bf16.mxu0 0
  %1484 = vmatpush1.bf16.msra.mxu0 %v1410
  %1485 = vmatprep.subr.bf16.mxu0 0
  %1486 = vmatpush1.bf16.msra.mxu0 %v1411
  %1487 = vmatprep.subr.bf16.mxu0 0
  %1488 = vmatpush1.bf16.msra.mxu0 %v1412
  %1489 = vmatprep.subr.bf16.mxu0 0
  %1490 = vmatpush1.bf16.msra.mxu0 %v1413
  %1491 = vmatprep.subr.bf16.mxu0 0
  %1492 = vmatpush1.bf16.msra.mxu0 %v1414
  %1493 = vmatprep.subr.bf16.mxu0 0
  %1494 = vmatpush1.bf16.msra.mxu0 %v1415
  %1495 = vmatprep.subr.bf16.mxu0 0
  %1496 = vmatpush1.bf16.msra.mxu0 %v1416
  %1497 = vmatprep.mubr.bf16.mxu0 %v1258
  %1498 = vmatmul.mubr.bf16.gmra.mrb[0].mxu0 %v1257
  %v1499 = vpop.f32.mrb[0].mxu0
  %v1500 = vadd.f32 %v140, %v1499
  %v1501 = vpop.f32.mrb[0].mxu0
  %v1502 = vpop.f32.mrb[0].mxu0
  %v1503 = vadd.f32 %v140, %v1502
  %v1504 = vpop.f32.mrb[0].mxu0
  %1505 = vmatprep.mubr.bf16.mxu0 %v1262
  %1506 = vmatmul.mubr.bf16.gmra.mrb[0].mxu0 %v1261
  %v1507 = vpop.f32.mrb[0].mxu0
  %v1508 = vadd.f32 %v140, %v1507
  %v1509 = vpop.f32.mrb[0].mxu0
  %v1510 = vpop.f32.mrb[0].mxu0
  %v1511 = vpop.f32.mrb[0].mxu0
  %1512 = vdwg.mxu0
  %1513 = vmatprep.subr.bf16.mxu0 0
  %1514 = vmatpush1.bf16.msra.mxu0 %v1417
  %1515 = vmatprep.subr.bf16.mxu0 0
  %1516 = vmatpush1.bf16.msra.mxu0 %v1418
  %1517 = vmatprep.subr.bf16.mxu0 0
  %1518 = vmatpush1.bf16.msra.mxu0 %v1419
  %1519 = vmatprep.subr.bf16.mxu0 0
  %1520 = vmatpush1.bf16.msra.mxu0 %v1420
  %1521 = vmatprep.subr.bf16.mxu0 0
  %1522 = vmatpush1.bf16.msra.mxu0 %v1421
  %1523 = vmatprep.subr.bf16.mxu0 0
  %1524 = vmatpush1.bf16.msra.mxu0 %v1422
  %1525 = vmatprep.subr.bf16.mxu0 0
  %1526 = vmatpush1.bf16.msra.mxu0 %v1423
  %1527 = vmatprep.subr.bf16.mxu0 0
  %1528 = vmatpush1.bf16.msra.mxu0 %v1424
  %1529 = vmatprep.subr.bf16.mxu0 0
  %1530 = vmatpush1.bf16.msra.mxu0 %v1425
  %1531 = vmatprep.subr.bf16.mxu0 0
  %1532 = vmatpush1.bf16.msra.mxu0 %v1426
  %1533 = vmatprep.subr.bf16.mxu0 0
  %1534 = vmatpush1.bf16.msra.mxu0 %v1427
  %1535 = vmatprep.subr.bf16.mxu0 0
  %1536 = vmatpush1.bf16.msra.mxu0 %v1428
  %1537 = vmatprep.subr.bf16.mxu0 0
  %1538 = vmatpush1.bf16.msra.mxu0 %v1429
  %1539 = vmatprep.subr.bf16.mxu0 0
  %1540 = vmatpush1.bf16.msra.mxu0 %v1430
  %1541 = vmatprep.subr.bf16.mxu0 0
  %1542 = vmatpush1.bf16.msra.mxu0 %v1431
  %1543 = vmatprep.subr.bf16.mxu0 0
  %1544 = vmatpush1.bf16.msra.mxu0 %v1432
  %1545 = vmatprep.mubr.bf16.mxu0 %v1260
  %1546 = vmatmul.mubr.bf16.gmra.mrb[0].mxu0 %v1259
  %v1547 = vpop.f32.mrb[0].mxu0
  %v1548 = vadd.f32 %v1500, %v1547
  %v1549 = vpop.f32.mrb[0].mxu0
  %v1550 = vpop.f32.mrb[0].mxu0
  %v1551 = vadd.f32 %v1503, %v1550
  %v1552 = vpop.f32.mrb[0].mxu0
  %1553 = vmatprep.mubr.bf16.mxu0 %v1264
  %1554 = vmatmul.mubr.bf16.gmra.mrb[0].mxu0 %v1263
  %v1555 = vpop.f32.mrb[0].mxu0
  %v1556 = vadd.f32 %v1508, %v1555
  %v1557 = vpop.f32.mrb[0].mxu0
  %v1558 = vpop.f32.mrb[0].mxu0
  %v1559 = vpop.f32.mrb[0].mxu0
  %1560 = vdwg.mxu0
  %v1561 = vmax.f32 %v1548, 0.0
  %v1562 = vmax.f32 %v1551, 0.0
  %v1563 = vmax.f32 %v1556, 0.0
  %s1564 = scalar_lea.vmem %s3, 48
  %v1565 = vld [vmem:[%s1564] sm:$0xff]
  %v1566 = vld [vmem:[%s1564 + $0x8] sm:$0xff]
  %v1567 = vld [vmem:[%s1564 + $0x10] sm:$0xff]
  %v1571 = vunpack.c.l.b16 %v1565
  %v1572 = vunpack.c.h.b16 %v1565
  %v1573 = vunpack.c.l.b16 %v1566
  %v1574 = vunpack.c.h.b16 %v1566
  %v1575 = vunpack.c.l.b16 %v1567
  %v1576 = vunpack.c.h.b16 %v1567
  %v1577 = vpack.c.b16 %v1573, %v1571
  %v1578 = vpack.c.b16 %v1574, %v1572
  %v1579 = vpack.c.b16 %v1575, %v1575
  %v1580 = vpack.c.b16 %v1576, %v1576
  %1585 = vmatprep.subr.bf16.mxu0 0
  %1586 = vmatpush1.bf16.msra.mxu0 %v557
  %1587 = vmatprep.subr.bf16.mxu0 0
  %1588 = vmatpush1.bf16.msra.mxu0 %v558
  %1589 = vmatprep.subr.bf16.mxu0 0
  %1590 = vmatpush1.bf16.msra.mxu0 %v559
  %1591 = vmatprep.subr.bf16.mxu0 0
  %1592 = vmatpush1.bf16.msra.mxu0 %v560
  %1593 = vmatprep.subr.bf16.mxu0 0
  %1594 = vmatpush1.bf16.msra.mxu0 %v561
  %1595 = vmatprep.subr.bf16.mxu0 0
  %1596 = vmatpush1.bf16.msra.mxu0 %v562
  %1597 = vmatprep.subr.bf16.mxu0 0
  %1598 = vmatpush1.bf16.msra.mxu0 %v563
  %1599 = vmatprep.subr.bf16.mxu0 0
  %1600 = vmatpush1.bf16.msra.mxu0 %v564
  %1601 = vmatprep.subr.bf16.mxu0 0
  %1602 = vmatpush1.bf16.msra.mxu0 %v565
  %1603 = vmatprep.subr.bf16.mxu0 0
  %1604 = vmatpush1.bf16.msra.mxu0 %v566
  %1605 = vmatprep.subr.bf16.mxu0 0
  %1606 = vmatpush1.bf16.msra.mxu0 %v567
  %1607 = vmatprep.subr.bf16.mxu0 0
  %1608 = vmatpush1.bf16.msra.mxu0 %v568
  %1609 = vmatprep.subr.bf16.mxu0 0
  %1610 = vmatpush1.bf16.msra.mxu0 %v569
  %1611 = vmatprep.subr.bf16.mxu0 0
  %1612 = vmatpush1.bf16.msra.mxu0 %v570
  %1613 = vmatprep.subr.bf16.mxu0 0
  %1614 = vmatpush1.bf16.msra.mxu0 %v571
  %1615 = vmatprep.subr.bf16.mxu0 0
  %1616 = vmatpush1.bf16.msra.mxu0 %v572
  %1617 = vmatprep.mubr.bf16.mxu0 %v1578
  %1618 = vmatmul.mubr.bf16.gmra.mrb[0].mxu0 %v1577
  %v1619 = vpop.f32.mrb[0].mxu0
  %v1620 = vadd.f32 %v474, %v1619
  %v1621 = vpop.f32.mrb[0].mxu0
  %v1622 = vpop.f32.mrb[0].mxu0
  %v1623 = vadd.f32 %v474, %v1622
  %v1624 = vpop.f32.mrb[0].mxu0
  %1625 = vmatprep.mubr.bf16.mxu0 %v1580
  %1626 = vmatmul.mubr.bf16.gmra.mrb[0].mxu0 %v1579
  %v1627 = vpop.f32.mrb[0].mxu0
  %v1628 = vadd.f32 %v474, %v1627
  %v1629 = vpop.f32.mrb[0].mxu0
  %v1630 = vpop.f32.mrb[0].mxu0
  %v1631 = vpop.f32.mrb[0].mxu0
  %1632 = vdwg.mxu0
  %v1633 = vadd.f32 %v1561, %v1620
  %v1634 = vadd.f32 %v1562, %v1623
  %v1635 = vadd.f32 %v1563, %v1628
  %v1636 = vmul.f32 %v1633, %v644
  %v1637 = vmul.f32 %v1634, %v644
  %v1638 = vmul.f32 %v1635, %v644
  %v1639 = vadd.f32 %v1636, %v653
  %v1640 = vadd.f32 %v1637, %v653
  %v1641 = vadd.f32 %v1638, %v653
  %v1642 = vpack.c.bf16 %v1640, %v1639
  %v1643 = vpack.c.bf16 %v1641, %v1641
  %v1646 = vunpack.c.l.b16 %v1642
  %v1647 = vunpack.c.h.b16 %v1642
  %v1648 = vunpack.c.l.b16 %v1643
  %v1649 = vpack.c.b16 %v1646, %v1646
  %v1650 = vpack.c.b16 %v1647, %v1647
  %v1651 = vpack.c.b16 %v1648, %v1648
  %s1655 = scalar_lea.vmem %s8, 24
  %1656 = vst.msk [vmem:[%s1655] sm:$0xf] %vm671, %v1649
  %1657 = vst.msk [vmem:[%s1655 + $0x4] sm:$0xf] %vm671, %v1650
  %1658 = vst.msk [vmem:[%s1655 + $0x8] sm:$0xf] %vm671, %v1651
  %s1659 = scalar_lea.vmem %s0, 144
  %v1660 = vld [vmem:[%s1659] sm:$0xff]
  %v1661 = vld [vmem:[%s1659 + $0x8] sm:$0xff]
  %v1662 = vld [vmem:[%s1659 + $0x10] sm:$0xff]
  %v1663 = vld [vmem:[%s1659 + $0x18] sm:$0xff]
  %v1664 = vld [vmem:[%s1659 + $0x20] sm:$0xff]
  %v1665 = vld [vmem:[%s1659 + $0x28] sm:$0xff]
  %s1666 = scalar_lea.vmem %s1, 768
  %v1667 = vld [vmem:[%s1666] sm:$0xf]
  %v1668 = vld [vmem:[%s1666 + $0x4] sm:$0xf]
  %v1669 = vld [vmem:[%s1666 + $0x8] sm:$0xf]
  %v1670 = vld [vmem:[%s1666 + $0xc] sm:$0xf]
  %v1671 = vld [vmem:[%s1666 + $0x10] sm:$0xf]
  %v1672 = vld [vmem:[%s1666 + $0x14] sm:$0xf]
  %v1673 = vld [vmem:[%s1666 + $0x18] sm:$0xf]
  %v1674 = vld [vmem:[%s1666 + $0x1c] sm:$0xf]
  %v1675 = vld [vmem:[%s1666 + $0x20] sm:$0xf]
  %v1676 = vld [vmem:[%s1666 + $0x24] sm:$0xf]
  %v1677 = vld [vmem:[%s1666 + $0x28] sm:$0xf]
  %v1678 = vld [vmem:[%s1666 + $0x2c] sm:$0xf]
  %v1679 = vld [vmem:[%s1666 + $0x30] sm:$0xf]
  %v1680 = vld [vmem:[%s1666 + $0x34] sm:$0xf]
  %v1681 = vld [vmem:[%s1666 + $0x38] sm:$0xf]
  %v1682 = vld [vmem:[%s1666 + $0x3c] sm:$0xf]
  %v1683 = vld [vmem:[%s1666 + $0x40] sm:$0xf]
  %v1684 = vld [vmem:[%s1666 + $0x44] sm:$0xf]
  %v1685 = vld [vmem:[%s1666 + $0x48] sm:$0xf]
  %v1686 = vld [vmem:[%s1666 + $0x4c] sm:$0xf]
  %v1687 = vld [vmem:[%s1666 + $0x50] sm:$0xf]
  %v1688 = vld [vmem:[%s1666 + $0x54] sm:$0xf]
  %v1689 = vld [vmem:[%s1666 + $0x58] sm:$0xf]
  %v1690 = vld [vmem:[%s1666 + $0x5c] sm:$0xf]
  %v1691 = vld [vmem:[%s1666 + $0x60] sm:$0xf]
  %v1692 = vld [vmem:[%s1666 + $0x64] sm:$0xf]
  %v1693 = vld [vmem:[%s1666 + $0x68] sm:$0xf]
  %v1694 = vld [vmem:[%s1666 + $0x6c] sm:$0xf]
  %v1695 = vld [vmem:[%s1666 + $0x70] sm:$0xf]
  %v1696 = vld [vmem:[%s1666 + $0x74] sm:$0xf]
  %v1697 = vld [vmem:[%s1666 + $0x78] sm:$0xf]
  %v1698 = vld [vmem:[%s1666 + $0x7c] sm:$0xf]
  %v1699 = vld [vmem:[%s1666 + $0x80] sm:$0xf]
  %v1700 = vld [vmem:[%s1666 + $0x84] sm:$0xf]
  %v1701 = vld [vmem:[%s1666 + $0x88] sm:$0xf]
  %v1702 = vld [vmem:[%s1666 + $0x8c] sm:$0xf]
  %v1703 = vld [vmem:[%s1666 + $0x90] sm:$0xf]
  %v1704 = vld [vmem:[%s1666 + $0x94] sm:$0xf]
  %v1705 = vld [vmem:[%s1666 + $0x98] sm:$0xf]
  %v1706 = vld [vmem:[%s1666 + $0x9c] sm:$0xf]
  %v1707 = vld [vmem:[%s1666 + $0xa0] sm:$0xf]
  %v1708 = vld [vmem:[%s1666 + $0xa4] sm:$0xf]
  %v1709 = vld [vmem:[%s1666 + $0xa8] sm:$0xf]
  %v1710 = vld [vmem:[%s1666 + $0xac] sm:$0xf]
  %v1711 = vld [vmem:[%s1666 + $0xb0] sm:$0xf]
  %v1712 = vld [vmem:[%s1666 + $0xb4] sm:$0xf]
  %v1713 = vld [vmem:[%s1666 + $0xb8] sm:$0xf]
  %v1714 = vld [vmem:[%s1666 + $0xbc] sm:$0xf]
  %v1715 = vld [vmem:[%s1666 + $0xc0] sm:$0xf]
  %v1716 = vld [vmem:[%s1666 + $0xc4] sm:$0xf]
  %v1717 = vld [vmem:[%s1666 + $0xc8] sm:$0xf]
  %v1718 = vld [vmem:[%s1666 + $0xcc] sm:$0xf]
  %v1719 = vld [vmem:[%s1666 + $0xd0] sm:$0xf]
  %v1720 = vld [vmem:[%s1666 + $0xd4] sm:$0xf]
  %v1721 = vld [vmem:[%s1666 + $0xd8] sm:$0xf]
  %v1722 = vld [vmem:[%s1666 + $0xdc] sm:$0xf]
  %v1723 = vld [vmem:[%s1666 + $0xe0] sm:$0xf]
  %v1724 = vld [vmem:[%s1666 + $0xe4] sm:$0xf]
  %v1725 = vld [vmem:[%s1666 + $0xe8] sm:$0xf]
  %v1726 = vld [vmem:[%s1666 + $0xec] sm:$0xf]
  %v1727 = vld [vmem:[%s1666 + $0xf0] sm:$0xf]
  %v1728 = vld [vmem:[%s1666 + $0xf4] sm:$0xf]
  %v1729 = vld [vmem:[%s1666 + $0xf8] sm:$0xf]
  %v1730 = vld [vmem:[%s1666 + $0xfc] sm:$0xf]
  %v1737 = vunpack.c.l.b16 %v1660
  %v1738 = vunpack.c.h.b16 %v1660
  %v1739 = vunpack.c.l.b16 %v1661
  %v1740 = vunpack.c.h.b16 %v1661
  %v1741 = vunpack.c.l.b16 %v1662
  %v1742 = vunpack.c.h.b16 %v1662
  %v1743 = vunpack.c.l.b16 %v1663
  %v1744 = vunpack.c.h.b16 %v1663
  %v1745 = vunpack.c.l.b16 %v1664
  %v1746 = vunpack.c.h.b16 %v1664
  %v1747 = vunpack.c.l.b16 %v1665
  %v1748 = vunpack.c.h.b16 %v1665
  %v1749 = vpack.c.b16 %v1741, %v1737
  %v1750 = vpack.c.b16 %v1742, %v1738
  %v1751 = vpack.c.b16 %v1743, %v1739
  %v1752 = vpack.c.b16 %v1744, %v1740
  %v1753 = vpack.c.b16 %v1745, %v1745
  %v1754 = vpack.c.b16 %v1746, %v1746
  %v1755 = vpack.c.b16 %v1747, %v1747
  %v1756 = vpack.c.b16 %v1748, %v1748
  %v1829 = vunpack.c.l.b16 %v1667
  %v1830 = vunpack.c.l.b16 %v1668
  %v1831 = vunpack.c.l.b16 %v1669
  %v1832 = vunpack.c.l.b16 %v1670
  %v1833 = vunpack.c.l.b16 %v1671
  %v1834 = vunpack.c.l.b16 %v1672
  %v1835 = vunpack.c.l.b16 %v1673
  %v1836 = vunpack.c.l.b16 %v1674
  %v1837 = vunpack.c.l.b16 %v1675
  %v1838 = vunpack.c.l.b16 %v1676
  %v1839 = vunpack.c.l.b16 %v1677
  %v1840 = vunpack.c.l.b16 %v1678
  %v1841 = vunpack.c.l.b16 %v1679
  %v1842 = vunpack.c.l.b16 %v1680
  %v1843 = vunpack.c.l.b16 %v1681
  %v1844 = vunpack.c.l.b16 %v1682
  %v1845 = vunpack.c.l.b16 %v1683
  %v1846 = vunpack.c.l.b16 %v1684
  %v1847 = vunpack.c.l.b16 %v1685
  %v1848 = vunpack.c.l.b16 %v1686
  %v1849 = vunpack.c.l.b16 %v1687
  %v1850 = vunpack.c.l.b16 %v1688
  %v1851 = vunpack.c.l.b16 %v1689
  %v1852 = vunpack.c.l.b16 %v1690
  %v1853 = vunpack.c.l.b16 %v1691
  %v1854 = vunpack.c.l.b16 %v1692
  %v1855 = vunpack.c.l.b16 %v1693
  %v1856 = vunpack.c.l.b16 %v1694
  %v1857 = vunpack.c.l.b16 %v1695
  %v1858 = vunpack.c.l.b16 %v1696
  %v1859 = vunpack.c.l.b16 %v1697
  %v1860 = vunpack.c.l.b16 %v1698
  %v1861 = vunpack.c.l.b16 %v1699
  %v1862 = vunpack.c.l.b16 %v1700
  %v1863 = vunpack.c.l.b16 %v1701
  %v1864 = vunpack.c.l.b16 %v1702
  %v1865 = vunpack.c.l.b16 %v1703
  %v1866 = vunpack.c.l.b16 %v1704
  %v1867 = vunpack.c.l.b16 %v1705
  %v1868 = vunpack.c.l.b16 %v1706
  %v1869 = vunpack.c.l.b16 %v1707
  %v1870 = vunpack.c.l.b16 %v1708
  %v1871 = vunpack.c.l.b16 %v1709
  %v1872 = vunpack.c.l.b16 %v1710
  %v1873 = vunpack.c.l.b16 %v1711
  %v1874 = vunpack.c.l.b16 %v1712
  %v1875 = vunpack.c.l.b16 %v1713
  %v1876 = vunpack.c.l.b16 %v1714
  %v1877 = vunpack.c.l.b16 %v1715
  %v1878 = vunpack.c.l.b16 %v1716
  %v1879 = vunpack.c.l.b16 %v1717
  %v1880 = vunpack.c.l.b16 %v1718
  %v1881 = vunpack.c.l.b16 %v1719
  %v1882 = vunpack.c.l.b16 %v1720
  %v1883 = vunpack.c.l.b16 %v1721
  %v1884 = vunpack.c.l.b16 %v1722
  %v1885 = vunpack.c.l.b16 %v1723
  %v1886 = vunpack.c.l.b16 %v1724
  %v1887 = vunpack.c.l.b16 %v1725
  %v1888 = vunpack.c.l.b16 %v1726
  %v1889 = vunpack.c.l.b16 %v1727
  %v1890 = vunpack.c.l.b16 %v1728
  %v1891 = vunpack.c.l.b16 %v1729
  %v1892 = vunpack.c.l.b16 %v1730
  %v1893 = vpack.c.b16 %v1830, %v1829
  %v1894 = vpack.c.b16 %v1832, %v1831
  %v1895 = vpack.c.b16 %v1834, %v1833
  %v1896 = vpack.c.b16 %v1836, %v1835
  %v1897 = vpack.c.b16 %v1838, %v1837
  %v1898 = vpack.c.b16 %v1840, %v1839
  %v1899 = vpack.c.b16 %v1842, %v1841
  %v1900 = vpack.c.b16 %v1844, %v1843
  %v1901 = vpack.c.b16 %v1846, %v1845
  %v1902 = vpack.c.b16 %v1848, %v1847
  %v1903 = vpack.c.b16 %v1850, %v1849
  %v1904 = vpack.c.b16 %v1852, %v1851
  %v1905 = vpack.c.b16 %v1854, %v1853
  %v1906 = vpack.c.b16 %v1856, %v1855
  %v1907 = vpack.c.b16 %v1858, %v1857
  %v1908 = vpack.c.b16 %v1860, %v1859
  %v1909 = vpack.c.b16 %v1862, %v1861
  %v1910 = vpack.c.b16 %v1864, %v1863
  %v1911 = vpack.c.b16 %v1866, %v1865
  %v1912 = vpack.c.b16 %v1868, %v1867
  %v1913 = vpack.c.b16 %v1870, %v1869
  %v1914 = vpack.c.b16 %v1872, %v1871
  %v1915 = vpack.c.b16 %v1874, %v1873
  %v1916 = vpack.c.b16 %v1876, %v1875
  %v1917 = vpack.c.b16 %v1878, %v1877
  %v1918 = vpack.c.b16 %v1880, %v1879
  %v1919 = vpack.c.b16 %v1882, %v1881
  %v1920 = vpack.c.b16 %v1884, %v1883
  %v1921 = vpack.c.b16 %v1886, %v1885
  %v1922 = vpack.c.b16 %v1888, %v1887
  %v1923 = vpack.c.b16 %v1890, %v1889
  %v1924 = vpack.c.b16 %v1892, %v1891
  %1957 = vmatprep.subr.bf16.mxu0 0
  %1958 = vmatpush1.bf16.msra.mxu0 %v1893
  %1959 = vmatprep.subr.bf16.mxu0 0
  %1960 = vmatpush1.bf16.msra.mxu0 %v1894
  %1961 = vmatprep.subr.bf16.mxu0 0
  %1962 = vmatpush1.bf16.msra.mxu0 %v1895
  %1963 = vmatprep.subr.bf16.mxu0 0
  %1964 = vmatpush1.bf16.msra.mxu0 %v1896
  %1965 = vmatprep.subr.bf16.mxu0 0
  %1966 = vmatpush1.bf16.msra.mxu0 %v1897
  %1967 = vmatprep.subr.bf16.mxu0 0
  %1968 = vmatpush1.bf16.msra.mxu0 %v1898
  %1969 = vmatprep.subr.bf16.mxu0 0
  %1970 = vmatpush1.bf16.msra.mxu0 %v1899
  %1971 = vmatprep.subr.bf16.mxu0 0
  %1972 = vmatpush1.bf16.msra.mxu0 %v1900
  %1973 = vmatprep.subr.bf16.mxu0 0
  %1974 = vmatpush1.bf16.msra.mxu0 %v1901
  %1975 = vmatprep.subr.bf16.mxu0 0
  %1976 = vmatpush1.bf16.msra.mxu0 %v1902
  %1977 = vmatprep.subr.bf16.mxu0 0
  %1978 = vmatpush1.bf16.msra.mxu0 %v1903
  %1979 = vmatprep.subr.bf16.mxu0 0
  %1980 = vmatpush1.bf16.msra.mxu0 %v1904
  %1981 = vmatprep.subr.bf16.mxu0 0
  %1982 = vmatpush1.bf16.msra.mxu0 %v1905
  %1983 = vmatprep.subr.bf16.mxu0 0
  %1984 = vmatpush1.bf16.msra.mxu0 %v1906
  %1985 = vmatprep.subr.bf16.mxu0 0
  %1986 = vmatpush1.bf16.msra.mxu0 %v1907
  %1987 = vmatprep.subr.bf16.mxu0 0
  %1988 = vmatpush1.bf16.msra.mxu0 %v1908
  %1989 = vmatprep.mubr.bf16.mxu0 %v1750
  %1990 = vmatmul.mubr.bf16.gmra.mrb[0].mxu0 %v1749
  %v1991 = vpop.f32.mrb[0].mxu0
  %v1992 = vadd.f32 %v140, %v1991
  %v1993 = vpop.f32.mrb[0].mxu0
  %v1994 = vpop.f32.mrb[0].mxu0
  %v1995 = vadd.f32 %v140, %v1994
  %v1996 = vpop.f32.mrb[0].mxu0
  %1997 = vmatprep.mubr.bf16.mxu0 %v1754
  %1998 = vmatmul.mubr.bf16.gmra.mrb[0].mxu0 %v1753
  %v1999 = vpop.f32.mrb[0].mxu0
  %v2000 = vadd.f32 %v140, %v1999
  %v2001 = vpop.f32.mrb[0].mxu0
  %v2002 = vpop.f32.mrb[0].mxu0
  %v2003 = vpop.f32.mrb[0].mxu0
  %2004 = vdwg.mxu0
  %2005 = vmatprep.subr.bf16.mxu0 0
  %2006 = vmatpush1.bf16.msra.mxu0 %v1909
  %2007 = vmatprep.subr.bf16.mxu0 0
  %2008 = vmatpush1.bf16.msra.mxu0 %v1910
  %2009 = vmatprep.subr.bf16.mxu0 0
  %2010 = vmatpush1.bf16.msra.mxu0 %v1911
  %2011 = vmatprep.subr.bf16.mxu0 0
  %2012 = vmatpush1.bf16.msra.mxu0 %v1912
  %2013 = vmatprep.subr.bf16.mxu0 0
  %2014 = vmatpush1.bf16.msra.mxu0 %v1913
  %2015 = vmatprep.subr.bf16.mxu0 0
  %2016 = vmatpush1.bf16.msra.mxu0 %v1914
  %2017 = vmatprep.subr.bf16.mxu0 0
  %2018 = vmatpush1.bf16.msra.mxu0 %v1915
  %2019 = vmatprep.subr.bf16.mxu0 0
  %2020 = vmatpush1.bf16.msra.mxu0 %v1916
  %2021 = vmatprep.subr.bf16.mxu0 0
  %2022 = vmatpush1.bf16.msra.mxu0 %v1917
  %2023 = vmatprep.subr.bf16.mxu0 0
  %2024 = vmatpush1.bf16.msra.mxu0 %v1918
  %2025 = vmatprep.subr.bf16.mxu0 0
  %2026 = vmatpush1.bf16.msra.mxu0 %v1919
  %2027 = vmatprep.subr.bf16.mxu0 0
  %2028 = vmatpush1.bf16.msra.mxu0 %v1920
  %2029 = vmatprep.subr.bf16.mxu0 0
  %2030 = vmatpush1.bf16.msra.mxu0 %v1921
  %2031 = vmatprep.subr.bf16.mxu0 0
  %2032 = vmatpush1.bf16.msra.mxu0 %v1922
  %2033 = vmatprep.subr.bf16.mxu0 0
  %2034 = vmatpush1.bf16.msra.mxu0 %v1923
  %2035 = vmatprep.subr.bf16.mxu0 0
  %2036 = vmatpush1.bf16.msra.mxu0 %v1924
  %2037 = vmatprep.mubr.bf16.mxu0 %v1752
  %2038 = vmatmul.mubr.bf16.gmra.mrb[0].mxu0 %v1751
  %v2039 = vpop.f32.mrb[0].mxu0
  %v2040 = vadd.f32 %v1992, %v2039
  %v2041 = vpop.f32.mrb[0].mxu0
  %v2042 = vpop.f32.mrb[0].mxu0
  %v2043 = vadd.f32 %v1995, %v2042
  %v2044 = vpop.f32.mrb[0].mxu0
  %2045 = vmatprep.mubr.bf16.mxu0 %v1756
  %2046 = vmatmul.mubr.bf16.gmra.mrb[0].mxu0 %v1755
  %v2047 = vpop.f32.mrb[0].mxu0
  %v2048 = vadd.f32 %v2000, %v2047
  %v2049 = vpop.f32.mrb[0].mxu0
  %v2050 = vpop.f32.mrb[0].mxu0
  %v2051 = vpop.f32.mrb[0].mxu0
  %2052 = vdwg.mxu0
  %v2053 = vmax.f32 %v2040, 0.0
  %v2054 = vmax.f32 %v2043, 0.0
  %v2055 = vmax.f32 %v2048, 0.0
  %s2056 = scalar_lea.vmem %s3, 72
  %v2057 = vld [vmem:[%s2056] sm:$0xff]
  %v2058 = vld [vmem:[%s2056 + $0x8] sm:$0xff]
  %v2059 = vld [vmem:[%s2056 + $0x10] sm:$0xff]
  %v2063 = vunpack.c.l.b16 %v2057
  %v2064 = vunpack.c.h.b16 %v2057
  %v2065 = vunpack.c.l.b16 %v2058
  %v2066 = vunpack.c.h.b16 %v2058
  %v2067 = vunpack.c.l.b16 %v2059
  %v2068 = vunpack.c.h.b16 %v2059
  %v2069 = vpack.c.b16 %v2065, %v2063
  %v2070 = vpack.c.b16 %v2066, %v2064
  %v2071 = vpack.c.b16 %v2067, %v2067
  %v2072 = vpack.c.b16 %v2068, %v2068
  %2077 = vmatprep.subr.bf16.mxu0 0
  %2078 = vmatpush1.bf16.msra.mxu0 %v557
  %2079 = vmatprep.subr.bf16.mxu0 0
  %2080 = vmatpush1.bf16.msra.mxu0 %v558
  %2081 = vmatprep.subr.bf16.mxu0 0
  %2082 = vmatpush1.bf16.msra.mxu0 %v559
  %2083 = vmatprep.subr.bf16.mxu0 0
  %2084 = vmatpush1.bf16.msra.mxu0 %v560
  %2085 = vmatprep.subr.bf16.mxu0 0
  %2086 = vmatpush1.bf16.msra.mxu0 %v561
  %2087 = vmatprep.subr.bf16.mxu0 0
  %2088 = vmatpush1.bf16.msra.mxu0 %v562
  %2089 = vmatprep.subr.bf16.mxu0 0
  %2090 = vmatpush1.bf16.msra.mxu0 %v563
  %2091 = vmatprep.subr.bf16.mxu0 0
  %2092 = vmatpush1.bf16.msra.mxu0 %v564
  %2093 = vmatprep.subr.bf16.mxu0 0
  %2094 = vmatpush1.bf16.msra.mxu0 %v565
  %2095 = vmatprep.subr.bf16.mxu0 0
  %2096 = vmatpush1.bf16.msra.mxu0 %v566
  %2097 = vmatprep.subr.bf16.mxu0 0
  %2098 = vmatpush1.bf16.msra.mxu0 %v567
  %2099 = vmatprep.subr.bf16.mxu0 0
  %2100 = vmatpush1.bf16.msra.mxu0 %v568
  %2101 = vmatprep.subr.bf16.mxu0 0
  %2102 = vmatpush1.bf16.msra.mxu0 %v569
  %2103 = vmatprep.subr.bf16.mxu0 0
  %2104 = vmatpush1.bf16.msra.mxu0 %v570
  %2105 = vmatprep.subr.bf16.mxu0 0
  %2106 = vmatpush1.bf16.msra.mxu0 %v571
  %2107 = vmatprep.subr.bf16.mxu0 0
  %2108 = vmatpush1.bf16.msra.mxu0 %v572
  %2109 = vmatprep.mubr.bf16.mxu0 %v2070
  %2110 = vmatmul.mubr.bf16.gmra.mrb[0].mxu0 %v2069
  %v2111 = vpop.f32.mrb[0].mxu0
  %v2112 = vadd.f32 %v474, %v2111
  %v2113 = vpop.f32.mrb[0].mxu0
  %v2114 = vpop.f32.mrb[0].mxu0
  %v2115 = vadd.f32 %v474, %v2114
  %v2116 = vpop.f32.mrb[0].mxu0
  %2117 = vmatprep.mubr.bf16.mxu0 %v2072
  %2118 = vmatmul.mubr.bf16.gmra.mrb[0].mxu0 %v2071
  %v2119 = vpop.f32.mrb[0].mxu0
  %v2120 = vadd.f32 %v474, %v2119
  %v2121 = vpop.f32.mrb[0].mxu0
  %v2122 = vpop.f32.mrb[0].mxu0
  %v2123 = vpop.f32.mrb[0].mxu0
  %2124 = vdwg.mxu0
  %v2125 = vadd.f32 %v2053, %v2112
  %v2126 = vadd.f32 %v2054, %v2115
  %v2127 = vadd.f32 %v2055, %v2120
  %v2128 = vmul.f32 %v2125, %v644
  %v2129 = vmul.f32 %v2126, %v644
  %v2130 = vmul.f32 %v2127, %v644
  %v2131 = vadd.f32 %v2128, %v653
  %v2132 = vadd.f32 %v2129, %v653
  %v2133 = vadd.f32 %v2130, %v653
  %v2134 = vpack.c.bf16 %v2132, %v2131
  %v2135 = vpack.c.bf16 %v2133, %v2133
  %v2138 = vunpack.c.l.b16 %v2134
  %v2139 = vunpack.c.h.b16 %v2134
  %v2140 = vunpack.c.l.b16 %v2135
  %v2141 = vpack.c.b16 %v2138, %v2138
  %v2142 = vpack.c.b16 %v2139, %v2139
  %v2143 = vpack.c.b16 %v2140, %v2140
  %s2147 = scalar_lea.vmem %s8, 36
  %2148 = vst.msk [vmem:[%s2147] sm:$0xf] %vm671, %v2141
  %2149 = vst.msk [vmem:[%s2147 + $0x4] sm:$0xf] %vm671, %v2142
  %2150 = vst.msk [vmem:[%s2147 + $0x8] sm:$0xf] %vm671, %v2143
  // Predicated region
  $region34: #{attention_forward.6} parent=0 // pred_check
    _
  $region35: #{attention_forward.6} parent=0 // pred_check_branch
    %2152 = sbr.rel (0) target = $region37
  $region36: #{attention_forward.6} parent=0 // pred_region
    _
  $region37: #{attention_forward.6} parent=0 // pred_fallthru
    _
  // Predicated region
  $region38: #{attention_forward.6} parent=0 // pred_check
    _
  $region39: #{attention_forward.6} parent=0 // pred_check_branch
    %2154 = sbr.rel (0) target = $region41
  $region40: #{attention_forward.6} parent=0 // pred_region
    _
  $region41: #{attention_forward.6} parent=0 // pred_fallthru
    _

// kernel: attention_forward.5
$region0: #{attention_forward.5}
  #allocation0 [shape = 'u32[]', space=smem, size = 0x4, offset = 0x4, fixed_abs, tag = 'smem constant byte address 0x4 - core index']
  #allocation1 [shape = 'u32[144,128]{1,0:T(1,128)}', space=vmem, size = 0x12000, scoped, tag = 'internal scratch']
  %s0 = inlined_call_operand.vmem [shape: bf16[4,24,2304], index: 0, kind: input, shape index: {}]
  %s1 = inlined_call_operand.vmem [shape: bf16[2304,128], index: 1, kind: input, shape index: {}]
  %s2 = inlined_call_operand.vmem [shape: f32[1,128], index: 2, kind: input, shape index: {}]
  %s3 = inlined_call_operand.vmem [shape: f32[1,128], index: 3, kind: input, shape index: {}]
  %s4 = inlined_call_operand.vmem [shape: f32[24,24], index: 4, kind: input, shape index: {}]
  %s5 = inlined_call_operand.vmem [shape: f32[24,1], index: 5, kind: input, shape index: {}]
  %s6 = inlined_call_operand.vmem [shape: bf16[24,128], index: 6, kind: output, shape index: {}]
  %s7 = sld [smem:[#allocation0]]
  $region34: #{attention_forward.5} parent=0
    _
  %s9 = ssub.s32 1, %s7
  %s10 = scalar_select 0, %s9, %s7
  // Predicated region
  $region2: #{attention_forward.5} parent=0 // pred_check
    _
  $region3: #{attention_forward.5} parent=0 // pred_check_branch
    %12 = sbr.rel (0) target = $region5
  $region4: #{attention_forward.5} parent=0 // pred_region
    _
  $region5: #{attention_forward.5} parent=0 // pred_fallthru
    _
  // Predicated region
  $region6: #{attention_forward.5} parent=0 // pred_check
    _
  $region7: #{attention_forward.5} parent=0 // pred_check_branch
    %14 = sbr.rel (0) target = $region9
  $region8: #{attention_forward.5} parent=0 // pred_region
    _
  $region9: #{attention_forward.5} parent=0 // pred_fallthru
    _
  // Predicated region
  $region10: #{attention_forward.5} parent=0 // pred_check
    _
  $region11: #{attention_forward.5} parent=0 // pred_check_branch
    %16 = sbr.rel (0) target = $region13
  $region12: #{attention_forward.5} parent=0 // pred_region
    _
  $region13: #{attention_forward.5} parent=0 // pred_fallthru
    _
  // Predicated region
  $region14: #{attention_forward.5} parent=0 // pred_check
    _
  $region15: #{attention_forward.5} parent=0 // pred_check_branch
    %18 = sbr.rel (0) target = $region17
  $region16: #{attention_forward.5} parent=0 // pred_region
    _
  $region17: #{attention_forward.5} parent=0 // pred_fallthru
    _
  // Predicated region
  $region18: #{attention_forward.5} parent=0 // pred_check
    _
  $region19: #{attention_forward.5} parent=0 // pred_check_branch
    %20 = sbr.rel (0) target = $region21
  $region20: #{attention_forward.5} parent=0 // pred_region
    _
  $region21: #{attention_forward.5} parent=0 // pred_fallthru
    _
  // Predicated region
  $region22: #{attention_forward.5} parent=0 // pred_check
    _
  $region23: #{attention_forward.5} parent=0 // pred_check_branch
    %22 = sbr.rel (0) target = $region25
  $region24: #{attention_forward.5} parent=0 // pred_region
    _
  $region25: #{attention_forward.5} parent=0 // pred_fallthru
    _
  %v24 = vld [vmem:[%s1] sm:$0xf]
  %v25 = vld [vmem:[%s1 + $0x4] sm:$0xf]
  %v26 = vld [vmem:[%s1 + $0x8] sm:$0xf]
  %v27 = vld [vmem:[%s1 + $0xc] sm:$0xf]
  %v28 = vld [vmem:[%s1 + $0x10] sm:$0xf]
  %v29 = vld [vmem:[%s1 + $0x14] sm:$0xf]
  %v30 = vld [vmem:[%s1 + $0x18] sm:$0xf]
  %v31 = vld [vmem:[%s1 + $0x1c] sm:$0xf]
  %v32 = vld [vmem:[%s1 + $0x20] sm:$0xf]
  %v33 = vld [vmem:[%s1 + $0x24] sm:$0xf]
  %v34 = vld [vmem:[%s1 + $0x28] sm:$0xf]
  %v35 = vld [vmem:[%s1 + $0x2c] sm:$0xf]
  %v36 = vld [vmem:[%s1 + $0x30] sm:$0xf]
  %v37 = vld [vmem:[%s1 + $0x34] sm:$0xf]
  %v38 = vld [vmem:[%s1 + $0x38] sm:$0xf]
  %v39 = vld [vmem:[%s1 + $0x3c] sm:$0xf]
  %v40 = vld [vmem:[%s1 + $0x40] sm:$0xf]
  %v41 = vld [vmem:[%s1 + $0x44] sm:$0xf]
  %v42 = vld [vmem:[%s1 + $0x48] sm:$0xf]
  %v43 = vld [vmem:[%s1 + $0x4c] sm:$0xf]
  %v44 = vld [vmem:[%s1 + $0x50] sm:$0xf]
  %v45 = vld [vmem:[%s1 + $0x54] sm:$0xf]
  %v46 = vld [vmem:[%s1 + $0x58] sm:$0xf]
  %v47 = vld [vmem:[%s1 + $0x5c] sm:$0xf]
  %v48 = vld [vmem:[%s1 + $0x60] sm:$0xf]
  %v49 = vld [vmem:[%s1 + $0x64] sm:$0xf]
  %v50 = vld [vmem:[%s1 + $0x68] sm:$0xf]
  %v51 = vld [vmem:[%s1 + $0x6c] sm:$0xf]
  %v52 = vld [vmem:[%s1 + $0x70] sm:$0xf]
  %v53 = vld [vmem:[%s1 + $0x74] sm:$0xf]
  %v54 = vld [vmem:[%s1 + $0x78] sm:$0xf]
  %v55 = vld [vmem:[%s1 + $0x7c] sm:$0xf]
  %v56 = vld [vmem:[%s1 + $0x80] sm:$0xf]
  %v57 = vld [vmem:[%s1 + $0x84] sm:$0xf]
  %v58 = vld [vmem:[%s1 + $0x88] sm:$0xf]
  %v59 = vld [vmem:[%s1 + $0x8c] sm:$0xf]
  %v60 = vld [vmem:[%s1 + $0x90] sm:$0xf]
  %v61 = vld [vmem:[%s1 + $0x94] sm:$0xf]
  %v62 = vld [vmem:[%s1 + $0x98] sm:$0xf]
  %v63 = vld [vmem:[%s1 + $0x9c] sm:$0xf]
  %v64 = vld [vmem:[%s1 + $0xa0] sm:$0xf]
  %v65 = vld [vmem:[%s1 + $0xa4] sm:$0xf]
  %v66 = vld [vmem:[%s1 + $0xa8] sm:$0xf]
  %v67 = vld [vmem:[%s1 + $0xac] sm:$0xf]
  %v68 = vld [vmem:[%s1 + $0xb0] sm:$0xf]
  %v69 = vld [vmem:[%s1 + $0xb4] sm:$0xf]
  %v70 = vld [vmem:[%s1 + $0xb8] sm:$0xf]
  %v71 = vld [vmem:[%s1 + $0xbc] sm:$0xf]
  %v72 = vld [vmem:[%s1 + $0xc0] sm:$0xf]
  %v73 = vld [vmem:[%s1 + $0xc4] sm:$0xf]
  %v74 = vld [vmem:[%s1 + $0xc8] sm:$0xf]
  %v75 = vld [vmem:[%s1 + $0xcc] sm:$0xf]
  %v76 = vld [vmem:[%s1 + $0xd0] sm:$0xf]
  %v77 = vld [vmem:[%s1 + $0xd4] sm:$0xf]
  %v78 = vld [vmem:[%s1 + $0xd8] sm:$0xf]
  %v79 = vld [vmem:[%s1 + $0xdc] sm:$0xf]
  %v80 = vld [vmem:[%s1 + $0xe0] sm:$0xf]
  %v81 = vld [vmem:[%s1 + $0xe4] sm:$0xf]
  %v82 = vld [vmem:[%s1 + $0xe8] sm:$0xf]
  %v83 = vld [vmem:[%s1 + $0xec] sm:$0xf]
  %v84 = vld [vmem:[%s1 + $0xf0] sm:$0xf]
  %v85 = vld [vmem:[%s1 + $0xf4] sm:$0xf]
  %v86 = vld [vmem:[%s1 + $0xf8] sm:$0xf]
  %v87 = vld [vmem:[%s1 + $0xfc] sm:$0xf]
  %v88 = vld [vmem:[%s1 + $0x100] sm:$0xf]
  %v89 = vld [vmem:[%s1 + $0x104] sm:$0xf]
  %v90 = vld [vmem:[%s1 + $0x108] sm:$0xf]
  %v91 = vld [vmem:[%s1 + $0x10c] sm:$0xf]
  %v92 = vld [vmem:[%s1 + $0x110] sm:$0xf]
  %v93 = vld [vmem:[%s1 + $0x114] sm:$0xf]
  %v94 = vld [vmem:[%s1 + $0x118] sm:$0xf]
  %v95 = vld [vmem:[%s1 + $0x11c] sm:$0xf]
  %v96 = vld [vmem:[%s1 + $0x120] sm:$0xf]
  %v97 = vld [vmem:[%s1 + $0x124] sm:$0xf]
  %v98 = vld [vmem:[%s1 + $0x128] sm:$0xf]
  %v99 = vld [vmem:[%s1 + $0x12c] sm:$0xf]
  %v100 = vld [vmem:[%s1 + $0x130] sm:$0xf]
  %v101 = vld [vmem:[%s1 + $0x134] sm:$0xf]
  %v102 = vld [vmem:[%s1 + $0x138] sm:$0xf]
  %v103 = vld [vmem:[%s1 + $0x13c] sm:$0xf]
  %v104 = vld [vmem:[%s1 + $0x140] sm:$0xf]
  %v105 = vld [vmem:[%s1 + $0x144] sm:$0xf]
  %v106 = vld [vmem:[%s1 + $0x148] sm:$0xf]
  %v107 = vld [vmem:[%s1 + $0x14c] sm:$0xf]
  %v108 = vld [vmem:[%s1 + $0x150] sm:$0xf]
  %v109 = vld [vmem:[%s1 + $0x154] sm:$0xf]
  %v110 = vld [vmem:[%s1 + $0x158] sm:$0xf]
  %v111 = vld [vmem:[%s1 + $0x15c] sm:$0xf]
  %v112 = vld [vmem:[%s1 + $0x160] sm:$0xf]
  %v113 = vld [vmem:[%s1 + $0x164] sm:$0xf]
  %v114 = vld [vmem:[%s1 + $0x168] sm:$0xf]
  %v115 = vld [vmem:[%s1 + $0x16c] sm:$0xf]
  %v116 = vld [vmem:[%s1 + $0x170] sm:$0xf]
  %v117 = vld [vmem:[%s1 + $0x174] sm:$0xf]
  %v118 = vld [vmem:[%s1 + $0x178] sm:$0xf]
  %v119 = vld [vmem:[%s1 + $0x17c] sm:$0xf]
  %v120 = vld [vmem:[%s1 + $0x180] sm:$0xf]
  %v121 = vld [vmem:[%s1 + $0x184] sm:$0xf]
  %v122 = vld [vmem:[%s1 + $0x188] sm:$0xf]
  %v123 = vld [vmem:[%s1 + $0x18c] sm:$0xf]
  %v124 = vld [vmem:[%s1 + $0x190] sm:$0xf]
  %v125 = vld [vmem:[%s1 + $0x194] sm:$0xf]
  %v126 = vld [vmem:[%s1 + $0x198] sm:$0xf]
  %v127 = vld [vmem:[%s1 + $0x19c] sm:$0xf]
  %v128 = vld [vmem:[%s1 + $0x1a0] sm:$0xf]
  %v129 = vld [vmem:[%s1 + $0x1a4] sm:$0xf]
  %v130 = vld [vmem:[%s1 + $0x1a8] sm:$0xf]
  %v131 = vld [vmem:[%s1 + $0x1ac] sm:$0xf]
  %v132 = vld [vmem:[%s1 + $0x1b0] sm:$0xf]
  %v133 = vld [vmem:[%s1 + $0x1b4] sm:$0xf]
  %v134 = vld [vmem:[%s1 + $0x1b8] sm:$0xf]
  %v135 = vld [vmem:[%s1 + $0x1bc] sm:$0xf]
  %v136 = vld [vmem:[%s1 + $0x1c0] sm:$0xf]
  %v137 = vld [vmem:[%s1 + $0x1c4] sm:$0xf]
  %v138 = vld [vmem:[%s1 + $0x1c8] sm:$0xf]
  %v139 = vld [vmem:[%s1 + $0x1cc] sm:$0xf]
  %v140 = vld [vmem:[%s1 + $0x1d0] sm:$0xf]
  %v141 = vld [vmem:[%s1 + $0x1d4] sm:$0xf]
  %v142 = vld [vmem:[%s1 + $0x1d8] sm:$0xf]
  %v143 = vld [vmem:[%s1 + $0x1dc] sm:$0xf]
  %v144 = vld [vmem:[%s1 + $0x1e0] sm:$0xf]
  %v145 = vld [vmem:[%s1 + $0x1e4] sm:$0xf]
  %v146 = vld [vmem:[%s1 + $0x1e8] sm:$0xf]
  %v147 = vld [vmem:[%s1 + $0x1ec] sm:$0xf]
  %v148 = vld [vmem:[%s1 + $0x1f0] sm:$0xf]
  %v149 = vld [vmem:[%s1 + $0x1f4] sm:$0xf]
  %v150 = vld [vmem:[%s1 + $0x1f8] sm:$0xf]
  %v151 = vld [vmem:[%s1 + $0x1fc] sm:$0xf]
  %v152 = vld [vmem:[%s1 + $0x200] sm:$0xf]
  %v153 = vld [vmem:[%s1 + $0x204] sm:$0xf]
  %v154 = vld [vmem:[%s1 + $0x208] sm:$0xf]
  %v155 = vld [vmem:[%s1 + $0x20c] sm:$0xf]
  %v156 = vld [vmem:[%s1 + $0x210] sm:$0xf]
  %v157 = vld [vmem:[%s1 + $0x214] sm:$0xf]
  %v158 = vld [vmem:[%s1 + $0x218] sm:$0xf]
  %v159 = vld [vmem:[%s1 + $0x21c] sm:$0xf]
  %v160 = vld [vmem:[%s1 + $0x220] sm:$0xf]
  %v161 = vld [vmem:[%s1 + $0x224] sm:$0xf]
  %v162 = vld [vmem:[%s1 + $0x228] sm:$0xf]
  %v163 = vld [vmem:[%s1 + $0x22c] sm:$0xf]
  %v164 = vld [vmem:[%s1 + $0x230] sm:$0xf]
  %v165 = vld [vmem:[%s1 + $0x234] sm:$0xf]
  %v166 = vld [vmem:[%s1 + $0x238] sm:$0xf]
  %v167 = vld [vmem:[%s1 + $0x23c] sm:$0xf]
  %v168 = vld [vmem:[%s1 + $0x240] sm:$0xf]
  %v169 = vld [vmem:[%s1 + $0x244] sm:$0xf]
  %v170 = vld [vmem:[%s1 + $0x248] sm:$0xf]
  %v171 = vld [vmem:[%s1 + $0x24c] sm:$0xf]
  %v172 = vld [vmem:[%s1 + $0x250] sm:$0xf]
  %v173 = vld [vmem:[%s1 + $0x254] sm:$0xf]
  %v174 = vld [vmem:[%s1 + $0x258] sm:$0xf]
  %v175 = vld [vmem:[%s1 + $0x25c] sm:$0xf]
  %v176 = vld [vmem:[%s1 + $0x260] sm:$0xf]
  %v177 = vld [vmem:[%s1 + $0x264] sm:$0xf]
  %v178 = vld [vmem:[%s1 + $0x268] sm:$0xf]
  %v179 = vld [vmem:[%s1 + $0x26c] sm:$0xf]
  %v180 = vld [vmem:[%s1 + $0x270] sm:$0xf]
  %v181 = vld [vmem:[%s1 + $0x274] sm:$0xf]
  %v182 = vld [vmem:[%s1 + $0x278] sm:$0xf]
  %v183 = vld [vmem:[%s1 + $0x27c] sm:$0xf]
  %v184 = vld [vmem:[%s1 + $0x280] sm:$0xf]
  %v185 = vld [vmem:[%s1 + $0x284] sm:$0xf]
  %v186 = vld [vmem:[%s1 + $0x288] sm:$0xf]
  %v187 = vld [vmem:[%s1 + $0x28c] sm:$0xf]
  %v188 = vld [vmem:[%s1 + $0x290] sm:$0xf]
  %v189 = vld [vmem:[%s1 + $0x294] sm:$0xf]
  %v190 = vld [vmem:[%s1 + $0x298] sm:$0xf]
  %v191 = vld [vmem:[%s1 + $0x29c] sm:$0xf]
  %v192 = vld [vmem:[%s1 + $0x2a0] sm:$0xf]
  %v193 = vld [vmem:[%s1 + $0x2a4] sm:$0xf]
  %v194 = vld [vmem:[%s1 + $0x2a8] sm:$0xf]
  %v195 = vld [vmem:[%s1 + $0x2ac] sm:$0xf]
  %v196 = vld [vmem:[%s1 + $0x2b0] sm:$0xf]
  %v197 = vld [vmem:[%s1 + $0x2b4] sm:$0xf]
  %v198 = vld [vmem:[%s1 + $0x2b8] sm:$0xf]
  %v199 = vld [vmem:[%s1 + $0x2bc] sm:$0xf]
  %v200 = vld [vmem:[%s1 + $0x2c0] sm:$0xf]
  %v201 = vld [vmem:[%s1 + $0x2c4] sm:$0xf]
  %v202 = vld [vmem:[%s1 + $0x2c8] sm:$0xf]
  %v203 = vld [vmem:[%s1 + $0x2cc] sm:$0xf]
  %v204 = vld [vmem:[%s1 + $0x2d0] sm:$0xf]
  %v205 = vld [vmem:[%s1 + $0x2d4] sm:$0xf]
  %v206 = vld [vmem:[%s1 + $0x2d8] sm:$0xf]
  %v207 = vld [vmem:[%s1 + $0x2dc] sm:$0xf]
  %v208 = vld [vmem:[%s1 + $0x2e0] sm:$0xf]
  %v209 = vld [vmem:[%s1 + $0x2e4] sm:$0xf]
  %v210 = vld [vmem:[%s1 + $0x2e8] sm:$0xf]
  %v211 = vld [vmem:[%s1 + $0x2ec] sm:$0xf]
  %v212 = vld [vmem:[%s1 + $0x2f0] sm:$0xf]
  %v213 = vld [vmem:[%s1 + $0x2f4] sm:$0xf]
  %v214 = vld [vmem:[%s1 + $0x2f8] sm:$0xf]
  %v215 = vld [vmem:[%s1 + $0x2fc] sm:$0xf]
  %v216 = vld [vmem:[%s1 + $0x300] sm:$0xf]
  %v217 = vld [vmem:[%s1 + $0x304] sm:$0xf]
  %v218 = vld [vmem:[%s1 + $0x308] sm:$0xf]
  %v219 = vld [vmem:[%s1 + $0x30c] sm:$0xf]
  %v220 = vld [vmem:[%s1 + $0x310] sm:$0xf]
  %v221 = vld [vmem:[%s1 + $0x314] sm:$0xf]
  %v222 = vld [vmem:[%s1 + $0x318] sm:$0xf]
  %v223 = vld [vmem:[%s1 + $0x31c] sm:$0xf]
  %v224 = vld [vmem:[%s1 + $0x320] sm:$0xf]
  %v225 = vld [vmem:[%s1 + $0x324] sm:$0xf]
  %v226 = vld [vmem:[%s1 + $0x328] sm:$0xf]
  %v227 = vld [vmem:[%s1 + $0x32c] sm:$0xf]
  %v228 = vld [vmem:[%s1 + $0x330] sm:$0xf]
  %v229 = vld [vmem:[%s1 + $0x334] sm:$0xf]
  %v230 = vld [vmem:[%s1 + $0x338] sm:$0xf]
  %v231 = vld [vmem:[%s1 + $0x33c] sm:$0xf]
  %v232 = vld [vmem:[%s1 + $0x340] sm:$0xf]
  %v233 = vld [vmem:[%s1 + $0x344] sm:$0xf]
  %v234 = vld [vmem:[%s1 + $0x348] sm:$0xf]
  %v235 = vld [vmem:[%s1 + $0x34c] sm:$0xf]
  %v236 = vld [vmem:[%s1 + $0x350] sm:$0xf]
  %v237 = vld [vmem:[%s1 + $0x354] sm:$0xf]
  %v238 = vld [vmem:[%s1 + $0x358] sm:$0xf]
  %v239 = vld [vmem:[%s1 + $0x35c] sm:$0xf]
  %v240 = vld [vmem:[%s1 + $0x360] sm:$0xf]
  %v241 = vld [vmem:[%s1 + $0x364] sm:$0xf]
  %v242 = vld [vmem:[%s1 + $0x368] sm:$0xf]
  %v243 = vld [vmem:[%s1 + $0x36c] sm:$0xf]
  %v244 = vld [vmem:[%s1 + $0x370] sm:$0xf]
  %v245 = vld [vmem:[%s1 + $0x374] sm:$0xf]
  %v246 = vld [vmem:[%s1 + $0x378] sm:$0xf]
  %v247 = vld [vmem:[%s1 + $0x37c] sm:$0xf]
  %v248 = vld [vmem:[%s1 + $0x380] sm:$0xf]
  %v249 = vld [vmem:[%s1 + $0x384] sm:$0xf]
  %v250 = vld [vmem:[%s1 + $0x388] sm:$0xf]
  %v251 = vld [vmem:[%s1 + $0x38c] sm:$0xf]
  %v252 = vld [vmem:[%s1 + $0x390] sm:$0xf]
  %v253 = vld [vmem:[%s1 + $0x394] sm:$0xf]
  %v254 = vld [vmem:[%s1 + $0x398] sm:$0xf]
  %v255 = vld [vmem:[%s1 + $0x39c] sm:$0xf]
  %v256 = vld [vmem:[%s1 + $0x3a0] sm:$0xf]
  %v257 = vld [vmem:[%s1 + $0x3a4] sm:$0xf]
  %v258 = vld [vmem:[%s1 + $0x3a8] sm:$0xf]
  %v259 = vld [vmem:[%s1 + $0x3ac] sm:$0xf]
  %v260 = vld [vmem:[%s1 + $0x3b0] sm:$0xf]
  %v261 = vld [vmem:[%s1 + $0x3b4] sm:$0xf]
  %v262 = vld [vmem:[%s1 + $0x3b8] sm:$0xf]
  %v263 = vld [vmem:[%s1 + $0x3bc] sm:$0xf]
  %v264 = vld [vmem:[%s1 + $0x3c0] sm:$0xf]
  %v265 = vld [vmem:[%s1 + $0x3c4] sm:$0xf]
  %v266 = vld [vmem:[%s1 + $0x3c8] sm:$0xf]
  %v267 = vld [vmem:[%s1 + $0x3cc] sm:$0xf]
  %v268 = vld [vmem:[%s1 + $0x3d0] sm:$0xf]
  %v269 = vld [vmem:[%s1 + $0x3d4] sm:$0xf]
  %v270 = vld [vmem:[%s1 + $0x3d8] sm:$0xf]
  %v271 = vld [vmem:[%s1 + $0x3dc] sm:$0xf]
  %v272 = vld [vmem:[%s1 + $0x3e0] sm:$0xf]
  %v273 = vld [vmem:[%s1 + $0x3e4] sm:$0xf]
  %v274 = vld [vmem:[%s1 + $0x3e8] sm:$0xf]
  %v275 = vld [vmem:[%s1 + $0x3ec] sm:$0xf]
  %v276 = vld [vmem:[%s1 + $0x3f0] sm:$0xf]
  %v277 = vld [vmem:[%s1 + $0x3f4] sm:$0xf]
  %v278 = vld [vmem:[%s1 + $0x3f8] sm:$0xf]
  %v279 = vld [vmem:[%s1 + $0x3fc] sm:$0xf]
  %v280 = vld [vmem:[%s1 + $0x400] sm:$0xf]
  %v281 = vld [vmem:[%s1 + $0x404] sm:$0xf]
  %v282 = vld [vmem:[%s1 + $0x408] sm:$0xf]
  %v283 = vld [vmem:[%s1 + $0x40c] sm:$0xf]
  %v284 = vld [vmem:[%s1 + $0x410] sm:$0xf]
  %v285 = vld [vmem:[%s1 + $0x414] sm:$0xf]
  %v286 = vld [vmem:[%s1 + $0x418] sm:$0xf]
  %v287 = vld [vmem:[%s1 + $0x41c] sm:$0xf]
  %v288 = vld [vmem:[%s1 + $0x420] sm:$0xf]
  %v289 = vld [vmem:[%s1 + $0x424] sm:$0xf]
  %v290 = vld [vmem:[%s1 + $0x428] sm:$0xf]
  %v291 = vld [vmem:[%s1 + $0x42c] sm:$0xf]
  %v292 = vld [vmem:[%s1 + $0x430] sm:$0xf]
  %v293 = vld [vmem:[%s1 + $0x434] sm:$0xf]
  %v294 = vld [vmem:[%s1 + $0x438] sm:$0xf]
  %v295 = vld [vmem:[%s1 + $0x43c] sm:$0xf]
  %v296 = vld [vmem:[%s1 + $0x440] sm:$0xf]
  %v297 = vld [vmem:[%s1 + $0x444] sm:$0xf]
  %v298 = vld [vmem:[%s1 + $0x448] sm:$0xf]
  %v299 = vld [vmem:[%s1 + $0x44c] sm:$0xf]
  %v300 = vld [vmem:[%s1 + $0x450] sm:$0xf]
  %v301 = vld [vmem:[%s1 + $0x454] sm:$0xf]
  %v302 = vld [vmem:[%s1 + $0x458] sm:$0xf]
  %v303 = vld [vmem:[%s1 + $0x45c] sm:$0xf]
  %v304 = vld [vmem:[%s1 + $0x460] sm:$0xf]
  %v305 = vld [vmem:[%s1 + $0x464] sm:$0xf]
  %v306 = vld [vmem:[%s1 + $0x468] sm:$0xf]
  %v307 = vld [vmem:[%s1 + $0x46c] sm:$0xf]
  %v308 = vld [vmem:[%s1 + $0x470] sm:$0xf]
  %v309 = vld [vmem:[%s1 + $0x474] sm:$0xf]
  %v310 = vld [vmem:[%s1 + $0x478] sm:$0xf]
  %v311 = vld [vmem:[%s1 + $0x47c] sm:$0xf]
  %v312 = vld [vmem:[%s2] sm:$0x1]
  %v313 = vld [vmem:[%s3] sm:$0x1]
  %v314 = vld [vmem:[%s0] sm:$0xff]
  %v315 = vld [vmem:[%s0 + $0x8] sm:$0xff]
  %v316 = vld [vmem:[%s0 + $0x10] sm:$0xff]
  %v317 = vld [vmem:[%s0 + $0x18] sm:$0xff]
  %v318 = vld [vmem:[%s0 + $0x20] sm:$0xff]
  %v319 = vld [vmem:[%s0 + $0x28] sm:$0xff]
  %v320 = vld [vmem:[%s0 + $0x30] sm:$0xff]
  %v321 = vld [vmem:[%s0 + $0x38] sm:$0xff]
  %v322 = vld [vmem:[%s0 + $0x40] sm:$0xff]
  %v323 = vld [vmem:[%s0 + $0x48] sm:$0xff]
  %v324 = vld [vmem:[%s0 + $0x50] sm:$0xff]
  %v325 = vld [vmem:[%s0 + $0x58] sm:$0xff]
  %v326 = vld [vmem:[%s0 + $0x60] sm:$0xff]
  %v327 = vld [vmem:[%s0 + $0x68] sm:$0xff]
  %v328 = vld [vmem:[%s0 + $0x70] sm:$0xff]
  %v329 = vld [vmem:[%s0 + $0x78] sm:$0xff]
  %v330 = vld [vmem:[%s0 + $0x80] sm:$0xff]
  %v331 = vld [vmem:[%s0 + $0x88] sm:$0xff]
  %v332 = vld [vmem:[%s0 + $0x90] sm:$0xff]
  %v333 = vld [vmem:[%s0 + $0x98] sm:$0xff]
  %v334 = vld [vmem:[%s0 + $0xa0] sm:$0xff]
  %v335 = vld [vmem:[%s0 + $0xa8] sm:$0xff]
  %v336 = vld [vmem:[%s0 + $0xb0] sm:$0xff]
  %v337 = vld [vmem:[%s0 + $0xb8] sm:$0xff]
  %v338 = vld [vmem:[%s0 + $0xc0] sm:$0xff]
  %v339 = vld [vmem:[%s0 + $0xc8] sm:$0xff]
  %v340 = vld [vmem:[%s0 + $0xd0] sm:$0xff]
  %v368 = vunpack.c.l.b16 %v314
  %v369 = vunpack.c.h.b16 %v314
  %v370 = vunpack.c.l.b16 %v315
  %v371 = vunpack.c.h.b16 %v315
  %v372 = vunpack.c.l.b16 %v316
  %v373 = vunpack.c.h.b16 %v316
  %v374 = vunpack.c.l.b16 %v317
  %v375 = vunpack.c.h.b16 %v317
  %v376 = vunpack.c.l.b16 %v318
  %v377 = vunpack.c.h.b16 %v318
  %v378 = vunpack.c.l.b16 %v319
  %v379 = vunpack.c.h.b16 %v319
  %v380 = vunpack.c.l.b16 %v320
  %v381 = vunpack.c.h.b16 %v320
  %v382 = vunpack.c.l.b16 %v321
  %v383 = vunpack.c.h.b16 %v321
  %v384 = vunpack.c.l.b16 %v322
  %v385 = vunpack.c.h.b16 %v322
  %v386 = vunpack.c.l.b16 %v323
  %v387 = vunpack.c.h.b16 %v323
  %v388 = vunpack.c.l.b16 %v324
  %v389 = vunpack.c.h.b16 %v324
  %v390 = vunpack.c.l.b16 %v325
  %v391 = vunpack.c.h.b16 %v325
  %v392 = vunpack.c.l.b16 %v326
  %v393 = vunpack.c.h.b16 %v326
  %v394 = vunpack.c.l.b16 %v327
  %v395 = vunpack.c.h.b16 %v327
  %v396 = vunpack.c.l.b16 %v328
  %v397 = vunpack.c.h.b16 %v328
  %v398 = vunpack.c.l.b16 %v329
  %v399 = vunpack.c.h.b16 %v329
  %v400 = vunpack.c.l.b16 %v330
  %v401 = vunpack.c.h.b16 %v330
  %v402 = vunpack.c.l.b16 %v331
  %v403 = vunpack.c.h.b16 %v331
  %v404 = vunpack.c.l.b16 %v332
  %v405 = vunpack.c.h.b16 %v332
  %v406 = vunpack.c.l.b16 %v333
  %v407 = vunpack.c.h.b16 %v333
  %v408 = vunpack.c.l.b16 %v334
  %v409 = vunpack.c.h.b16 %v334
  %v410 = vunpack.c.l.b16 %v335
  %v411 = vunpack.c.h.b16 %v335
  %v412 = vunpack.c.l.b16 %v336
  %v413 = vunpack.c.h.b16 %v336
  %v414 = vunpack.c.l.b16 %v337
  %v415 = vunpack.c.h.b16 %v337
  %v416 = vunpack.c.l.b16 %v338
  %v417 = vunpack.c.h.b16 %v338
  %v418 = vunpack.c.l.b16 %v339
  %v419 = vunpack.c.h.b16 %v339
  %v420 = vunpack.c.l.b16 %v340
  %v421 = vunpack.c.h.b16 %v340
  %v422 = vpack.c.b16 %v386, %v368
  %v423 = vpack.c.b16 %v387, %v369
  %v424 = vpack.c.b16 %v388, %v370
  %v425 = vpack.c.b16 %v389, %v371
  %v426 = vpack.c.b16 %v390, %v372
  %v427 = vpack.c.b16 %v391, %v373
  %v428 = vpack.c.b16 %v392, %v374
  %v429 = vpack.c.b16 %v393, %v375
  %v430 = vpack.c.b16 %v394, %v376
  %v431 = vpack.c.b16 %v395, %v377
  %v432 = vpack.c.b16 %v396, %v378
  %v433 = vpack.c.b16 %v397, %v379
  %v434 = vpack.c.b16 %v398, %v380
  %v435 = vpack.c.b16 %v399, %v381
  %v436 = vpack.c.b16 %v400, %v382
  %v437 = vpack.c.b16 %v401, %v383
  %v438 = vpack.c.b16 %v402, %v384
  %v439 = vpack.c.b16 %v403, %v385
  %v440 = vpack.c.b16 %v404, %v404
  %v441 = vpack.c.b16 %v405, %v405
  %v442 = vpack.c.b16 %v406, %v406
  %v443 = vpack.c.b16 %v407, %v407
  %v444 = vpack.c.b16 %v408, %v408
  %v445 = vpack.c.b16 %v409, %v409
  %v446 = vpack.c.b16 %v410, %v410
  %v447 = vpack.c.b16 %v411, %v411
  %v448 = vpack.c.b16 %v412, %v412
  %v449 = vpack.c.b16 %v413, %v413
  %v450 = vpack.c.b16 %v414, %v414
  %v451 = vpack.c.b16 %v415, %v415
  %v452 = vpack.c.b16 %v416, %v416
  %v453 = vpack.c.b16 %v417, %v417
  %v454 = vpack.c.b16 %v418, %v418
  %v455 = vpack.c.b16 %v419, %v419
  %v456 = vpack.c.b16 %v420, %v420
  %v457 = vpack.c.b16 %v421, %v421
  %v782 = vunpack.c.l.b16 %v24
  %v783 = vunpack.c.l.b16 %v25
  %v784 = vunpack.c.l.b16 %v26
  %v785 = vunpack.c.l.b16 %v27
  %v786 = vunpack.c.l.b16 %v28
  %v787 = vunpack.c.l.b16 %v29
  %v788 = vunpack.c.l.b16 %v30
  %v789 = vunpack.c.l.b16 %v31
  %v790 = vunpack.c.l.b16 %v32
  %v791 = vunpack.c.l.b16 %v33
  %v792 = vunpack.c.l.b16 %v34
  %v793 = vunpack.c.l.b16 %v35
  %v794 = vunpack.c.l.b16 %v36
  %v795 = vunpack.c.l.b16 %v37
  %v796 = vunpack.c.l.b16 %v38
  %v797 = vunpack.c.l.b16 %v39
  %v798 = vunpack.c.l.b16 %v40
  %v799 = vunpack.c.l.b16 %v41
  %v800 = vunpack.c.l.b16 %v42
  %v801 = vunpack.c.l.b16 %v43
  %v802 = vunpack.c.l.b16 %v44
  %v803 = vunpack.c.l.b16 %v45
  %v804 = vunpack.c.l.b16 %v46
  %v805 = vunpack.c.l.b16 %v47
  %v806 = vunpack.c.l.b16 %v48
  %v807 = vunpack.c.l.b16 %v49
  %v808 = vunpack.c.l.b16 %v50
  %v809 = vunpack.c.l.b16 %v51
  %v810 = vunpack.c.l.b16 %v52
  %v811 = vunpack.c.l.b16 %v53
  %v812 = vunpack.c.l.b16 %v54
  %v813 = vunpack.c.l.b16 %v55
  %v814 = vunpack.c.l.b16 %v56
  %v815 = vunpack.c.l.b16 %v57
  %v816 = vunpack.c.l.b16 %v58
  %v817 = vunpack.c.l.b16 %v59
  %v818 = vunpack.c.l.b16 %v60
  %v819 = vunpack.c.l.b16 %v61
  %v820 = vunpack.c.l.b16 %v62
  %v821 = vunpack.c.l.b16 %v63
  %v822 = vunpack.c.l.b16 %v64
  %v823 = vunpack.c.l.b16 %v65
  %v824 = vunpack.c.l.b16 %v66
  %v825 = vunpack.c.l.b16 %v67
  %v826 = vunpack.c.l.b16 %v68
  %v827 = vunpack.c.l.b16 %v69
  %v828 = vunpack.c.l.b16 %v70
  %v829 = vunpack.c.l.b16 %v71
  %v830 = vunpack.c.l.b16 %v72
  %v831 = vunpack.c.l.b16 %v73
  %v832 = vunpack.c.l.b16 %v74
  %v833 = vunpack.c.l.b16 %v75
  %v834 = vunpack.c.l.b16 %v76
  %v835 = vunpack.c.l.b16 %v77
  %v836 = vunpack.c.l.b16 %v78
  %v837 = vunpack.c.l.b16 %v79
  %v838 = vunpack.c.l.b16 %v80
  %v839 = vunpack.c.l.b16 %v81
  %v840 = vunpack.c.l.b16 %v82
  %v841 = vunpack.c.l.b16 %v83
  %v842 = vunpack.c.l.b16 %v84
  %v843 = vunpack.c.l.b16 %v85
  %v844 = vunpack.c.l.b16 %v86
  %v845 = vunpack.c.l.b16 %v87
  %v846 = vunpack.c.l.b16 %v88
  %v847 = vunpack.c.l.b16 %v89
  %v848 = vunpack.c.l.b16 %v90
  %v849 = vunpack.c.l.b16 %v91
  %v850 = vunpack.c.l.b16 %v92
  %v851 = vunpack.c.l.b16 %v93
  %v852 = vunpack.c.l.b16 %v94
  %v853 = vunpack.c.l.b16 %v95
  %v854 = vunpack.c.l.b16 %v96
  %v855 = vunpack.c.l.b16 %v97
  %v856 = vunpack.c.l.b16 %v98
  %v857 = vunpack.c.l.b16 %v99
  %v858 = vunpack.c.l.b16 %v100
  %v859 = vunpack.c.l.b16 %v101
  %v860 = vunpack.c.l.b16 %v102
  %v861 = vunpack.c.l.b16 %v103
  %v862 = vunpack.c.l.b16 %v104
  %v863 = vunpack.c.l.b16 %v105
  %v864 = vunpack.c.l.b16 %v106
  %v865 = vunpack.c.l.b16 %v107
  %v866 = vunpack.c.l.b16 %v108
  %v867 = vunpack.c.l.b16 %v109
  %v868 = vunpack.c.l.b16 %v110
  %v869 = vunpack.c.l.b16 %v111
  %v870 = vunpack.c.l.b16 %v112
  %v871 = vunpack.c.l.b16 %v113
  %v872 = vunpack.c.l.b16 %v114
  %v873 = vunpack.c.l.b16 %v115
  %v874 = vunpack.c.l.b16 %v116
  %v875 = vunpack.c.l.b16 %v117
  %v876 = vunpack.c.l.b16 %v118
  %v877 = vunpack.c.l.b16 %v119
  %v878 = vunpack.c.l.b16 %v120
  %v879 = vunpack.c.l.b16 %v121
  %v880 = vunpack.c.l.b16 %v122
  %v881 = vunpack.c.l.b16 %v123
  %v882 = vunpack.c.l.b16 %v124
  %v883 = vunpack.c.l.b16 %v125
  %v884 = vunpack.c.l.b16 %v126
  %v885 = vunpack.c.l.b16 %v127
  %v886 = vunpack.c.l.b16 %v128
  %v887 = vunpack.c.l.b16 %v129
  %v888 = vunpack.c.l.b16 %v130
  %v889 = vunpack.c.l.b16 %v131
  %v890 = vunpack.c.l.b16 %v132
  %v891 = vunpack.c.l.b16 %v133
  %v892 = vunpack.c.l.b16 %v134
  %v893 = vunpack.c.l.b16 %v135
  %v894 = vunpack.c.l.b16 %v136
  %v895 = vunpack.c.l.b16 %v137
  %v896 = vunpack.c.l.b16 %v138
  %v897 = vunpack.c.l.b16 %v139
  %v898 = vunpack.c.l.b16 %v140
  %v899 = vunpack.c.l.b16 %v141
  %v900 = vunpack.c.l.b16 %v142
  %v901 = vunpack.c.l.b16 %v143
  %v902 = vunpack.c.l.b16 %v144
  %v903 = vunpack.c.l.b16 %v145
  %v904 = vunpack.c.l.b16 %v146
  %v905 = vunpack.c.l.b16 %v147
  %v906 = vunpack.c.l.b16 %v148
  %v907 = vunpack.c.l.b16 %v149
  %v908 = vunpack.c.l.b16 %v150
  %v909 = vunpack.c.l.b16 %v151
  %v910 = vunpack.c.l.b16 %v152
  %v911 = vunpack.c.l.b16 %v153
  %v912 = vunpack.c.l.b16 %v154
  %v913 = vunpack.c.l.b16 %v155
  %v914 = vunpack.c.l.b16 %v156
  %v915 = vunpack.c.l.b16 %v157
  %v916 = vunpack.c.l.b16 %v158
  %v917 = vunpack.c.l.b16 %v159
  %v918 = vunpack.c.l.b16 %v160
  %v919 = vunpack.c.l.b16 %v161
  %v920 = vunpack.c.l.b16 %v162
  %v921 = vunpack.c.l.b16 %v163
  %v922 = vunpack.c.l.b16 %v164
  %v923 = vunpack.c.l.b16 %v165
  %v924 = vunpack.c.l.b16 %v166
  %v925 = vunpack.c.l.b16 %v167
  %v926 = vunpack.c.l.b16 %v168
  %v927 = vunpack.c.l.b16 %v169
  %v928 = vunpack.c.l.b16 %v170
  %v929 = vunpack.c.l.b16 %v171
  %v930 = vunpack.c.l.b16 %v172
  %v931 = vunpack.c.l.b16 %v173
  %v932 = vunpack.c.l.b16 %v174
  %v933 = vunpack.c.l.b16 %v175
  %v934 = vunpack.c.l.b16 %v176
  %v935 = vunpack.c.l.b16 %v177
  %v936 = vunpack.c.l.b16 %v178
  %v937 = vunpack.c.l.b16 %v179
  %v938 = vunpack.c.l.b16 %v180
  %v939 = vunpack.c.l.b16 %v181
  %v940 = vunpack.c.l.b16 %v182
  %v941 = vunpack.c.l.b16 %v183
  %v942 = vunpack.c.l.b16 %v184
  %v943 = vunpack.c.l.b16 %v185
  %v944 = vunpack.c.l.b16 %v186
  %v945 = vunpack.c.l.b16 %v187
  %v946 = vunpack.c.l.b16 %v188
  %v947 = vunpack.c.l.b16 %v189
  %v948 = vunpack.c.l.b16 %v190
  %v949 = vunpack.c.l.b16 %v191
  %v950 = vunpack.c.l.b16 %v192
  %v951 = vunpack.c.l.b16 %v193
  %v952 = vunpack.c.l.b16 %v194
  %v953 = vunpack.c.l.b16 %v195
  %v954 = vunpack.c.l.b16 %v196
  %v955 = vunpack.c.l.b16 %v197
  %v956 = vunpack.c.l.b16 %v198
  %v957 = vunpack.c.l.b16 %v199
  %v958 = vunpack.c.l.b16 %v200
  %v959 = vunpack.c.l.b16 %v201
  %v960 = vunpack.c.l.b16 %v202
  %v961 = vunpack.c.l.b16 %v203
  %v962 = vunpack.c.l.b16 %v204
  %v963 = vunpack.c.l.b16 %v205
  %v964 = vunpack.c.l.b16 %v206
  %v965 = vunpack.c.l.b16 %v207
  %v966 = vunpack.c.l.b16 %v208
  %v967 = vunpack.c.l.b16 %v209
  %v968 = vunpack.c.l.b16 %v210
  %v969 = vunpack.c.l.b16 %v211
  %v970 = vunpack.c.l.b16 %v212
  %v971 = vunpack.c.l.b16 %v213
  %v972 = vunpack.c.l.b16 %v214
  %v973 = vunpack.c.l.b16 %v215
  %v974 = vunpack.c.l.b16 %v216
  %v975 = vunpack.c.l.b16 %v217
  %v976 = vunpack.c.l.b16 %v218
  %v977 = vunpack.c.l.b16 %v219
  %v978 = vunpack.c.l.b16 %v220
  %v979 = vunpack.c.l.b16 %v221
  %v980 = vunpack.c.l.b16 %v222
  %v981 = vunpack.c.l.b16 %v223
  %v982 = vunpack.c.l.b16 %v224
  %v983 = vunpack.c.l.b16 %v225
  %v984 = vunpack.c.l.b16 %v226
  %v985 = vunpack.c.l.b16 %v227
  %v986 = vunpack.c.l.b16 %v228
  %v987 = vunpack.c.l.b16 %v229
  %v988 = vunpack.c.l.b16 %v230
  %v989 = vunpack.c.l.b16 %v231
  %v990 = vunpack.c.l.b16 %v232
  %v991 = vunpack.c.l.b16 %v233
  %v992 = vunpack.c.l.b16 %v234
  %v993 = vunpack.c.l.b16 %v235
  %v994 = vunpack.c.l.b16 %v236
  %v995 = vunpack.c.l.b16 %v237
  %v996 = vunpack.c.l.b16 %v238
  %v997 = vunpack.c.l.b16 %v239
  %v998 = vunpack.c.l.b16 %v240
  %v999 = vunpack.c.l.b16 %v241
  %v1000 = vunpack.c.l.b16 %v242
  %v1001 = vunpack.c.l.b16 %v243
  %v1002 = vunpack.c.l.b16 %v244
  %v1003 = vunpack.c.l.b16 %v245
  %v1004 = vunpack.c.l.b16 %v246
  %v1005 = vunpack.c.l.b16 %v247
  %v1006 = vunpack.c.l.b16 %v248
  %v1007 = vunpack.c.l.b16 %v249
  %v1008 = vunpack.c.l.b16 %v250
  %v1009 = vunpack.c.l.b16 %v251
  %v1010 = vunpack.c.l.b16 %v252
  %v1011 = vunpack.c.l.b16 %v253
  %v1012 = vunpack.c.l.b16 %v254
  %v1013 = vunpack.c.l.b16 %v255
  %v1014 = vunpack.c.l.b16 %v256
  %v1015 = vunpack.c.l.b16 %v257
  %v1016 = vunpack.c.l.b16 %v258
  %v1017 = vunpack.c.l.b16 %v259
  %v1018 = vunpack.c.l.b16 %v260
  %v1019 = vunpack.c.l.b16 %v261
  %v1020 = vunpack.c.l.b16 %v262
  %v1021 = vunpack.c.l.b16 %v263
  %v1022 = vunpack.c.l.b16 %v264
  %v1023 = vunpack.c.l.b16 %v265
  %v1024 = vunpack.c.l.b16 %v266
  %v1025 = vunpack.c.l.b16 %v267
  %v1026 = vunpack.c.l.b16 %v268
  %v1027 = vunpack.c.l.b16 %v269
  %v1028 = vunpack.c.l.b16 %v270
  %v1029 = vunpack.c.l.b16 %v271
  %v1030 = vunpack.c.l.b16 %v272
  %v1031 = vunpack.c.l.b16 %v273
  %v1032 = vunpack.c.l.b16 %v274
  %v1033 = vunpack.c.l.b16 %v275
  %v1034 = vunpack.c.l.b16 %v276
  %v1035 = vunpack.c.l.b16 %v277
  %v1036 = vunpack.c.l.b16 %v278
  %v1037 = vunpack.c.l.b16 %v279
  %v1038 = vunpack.c.l.b16 %v280
  %v1039 = vunpack.c.l.b16 %v281
  %v1040 = vunpack.c.l.b16 %v282
  %v1041 = vunpack.c.l.b16 %v283
  %v1042 = vunpack.c.l.b16 %v284
  %v1043 = vunpack.c.l.b16 %v285
  %v1044 = vunpack.c.l.b16 %v286
  %v1045 = vunpack.c.l.b16 %v287
  %v1046 = vunpack.c.l.b16 %v288
  %v1047 = vunpack.c.l.b16 %v289
  %v1048 = vunpack.c.l.b16 %v290
  %v1049 = vunpack.c.l.b16 %v291
  %v1050 = vunpack.c.l.b16 %v292
  %v1051 = vunpack.c.l.b16 %v293
  %v1052 = vunpack.c.l.b16 %v294
  %v1053 = vunpack.c.l.b16 %v295
  %v1054 = vunpack.c.l.b16 %v296
  %v1055 = vunpack.c.l.b16 %v297
  %v1056 = vunpack.c.l.b16 %v298
  %v1057 = vunpack.c.l.b16 %v299
  %v1058 = vunpack.c.l.b16 %v300
  %v1059 = vunpack.c.l.b16 %v301
  %v1060 = vunpack.c.l.b16 %v302
  %v1061 = vunpack.c.l.b16 %v303
  %v1062 = vunpack.c.l.b16 %v304
  %v1063 = vunpack.c.l.b16 %v305
  %v1064 = vunpack.c.l.b16 %v306
  %v1065 = vunpack.c.l.b16 %v307
  %v1066 = vunpack.c.l.b16 %v308
  %v1067 = vunpack.c.l.b16 %v309
  %v1068 = vunpack.c.l.b16 %v310
  %v1069 = vunpack.c.l.b16 %v311
  %v1070 = vpack.c.b16 %v783, %v782
  %v1071 = vpack.c.b16 %v785, %v784
  %v1072 = vpack.c.b16 %v787, %v786
  %v1073 = vpack.c.b16 %v789, %v788
  %v1074 = vpack.c.b16 %v791, %v790
  %v1075 = vpack.c.b16 %v793, %v792
  %v1076 = vpack.c.b16 %v795, %v794
  %v1077 = vpack.c.b16 %v797, %v796
  %v1078 = vpack.c.b16 %v799, %v798
  %v1079 = vpack.c.b16 %v801, %v800
  %v1080 = vpack.c.b16 %v803, %v802
  %v1081 = vpack.c.b16 %v805, %v804
  %v1082 = vpack.c.b16 %v807, %v806
  %v1083 = vpack.c.b16 %v809, %v808
  %v1084 = vpack.c.b16 %v811, %v810
  %v1085 = vpack.c.b16 %v813, %v812
  %v1086 = vpack.c.b16 %v815, %v814
  %v1087 = vpack.c.b16 %v817, %v816
  %v1088 = vpack.c.b16 %v819, %v818
  %v1089 = vpack.c.b16 %v821, %v820
  %v1090 = vpack.c.b16 %v823, %v822
  %v1091 = vpack.c.b16 %v825, %v824
  %v1092 = vpack.c.b16 %v827, %v826
  %v1093 = vpack.c.b16 %v829, %v828
  %v1094 = vpack.c.b16 %v831, %v830
  %v1095 = vpack.c.b16 %v833, %v832
  %v1096 = vpack.c.b16 %v835, %v834
  %v1097 = vpack.c.b16 %v837, %v836
  %v1098 = vpack.c.b16 %v839, %v838
  %v1099 = vpack.c.b16 %v841, %v840
  %v1100 = vpack.c.b16 %v843, %v842
  %v1101 = vpack.c.b16 %v845, %v844
  %v1102 = vpack.c.b16 %v847, %v846
  %v1103 = vpack.c.b16 %v849, %v848
  %v1104 = vpack.c.b16 %v851, %v850
  %v1105 = vpack.c.b16 %v853, %v852
  %v1106 = vpack.c.b16 %v855, %v854
  %v1107 = vpack.c.b16 %v857, %v856
  %v1108 = vpack.c.b16 %v859, %v858
  %v1109 = vpack.c.b16 %v861, %v860
  %v1110 = vpack.c.b16 %v863, %v862
  %v1111 = vpack.c.b16 %v865, %v864
  %v1112 = vpack.c.b16 %v867, %v866
  %v1113 = vpack.c.b16 %v869, %v868
  %v1114 = vpack.c.b16 %v871, %v870
  %v1115 = vpack.c.b16 %v873, %v872
  %v1116 = vpack.c.b16 %v875, %v874
  %v1117 = vpack.c.b16 %v877, %v876
  %v1118 = vpack.c.b16 %v879, %v878
  %v1119 = vpack.c.b16 %v881, %v880
  %v1120 = vpack.c.b16 %v883, %v882
  %v1121 = vpack.c.b16 %v885, %v884
  %v1122 = vpack.c.b16 %v887, %v886
  %v1123 = vpack.c.b16 %v889, %v888
  %v1124 = vpack.c.b16 %v891, %v890
  %v1125 = vpack.c.b16 %v893, %v892
  %v1126 = vpack.c.b16 %v895, %v894
  %v1127 = vpack.c.b16 %v897, %v896
  %v1128 = vpack.c.b16 %v899, %v898
  %v1129 = vpack.c.b16 %v901, %v900
  %v1130 = vpack.c.b16 %v903, %v902
  %v1131 = vpack.c.b16 %v905, %v904
  %v1132 = vpack.c.b16 %v907, %v906
  %v1133 = vpack.c.b16 %v909, %v908
  %v1134 = vpack.c.b16 %v911, %v910
  %v1135 = vpack.c.b16 %v913, %v912
  %v1136 = vpack.c.b16 %v915, %v914
  %v1137 = vpack.c.b16 %v917, %v916
  %v1138 = vpack.c.b16 %v919, %v918
  %v1139 = vpack.c.b16 %v921, %v920
  %v1140 = vpack.c.b16 %v923, %v922
  %v1141 = vpack.c.b16 %v925, %v924
  %v1142 = vpack.c.b16 %v927, %v926
  %v1143 = vpack.c.b16 %v929, %v928
  %v1144 = vpack.c.b16 %v931, %v930
  %v1145 = vpack.c.b16 %v933, %v932
  %v1146 = vpack.c.b16 %v935, %v934
  %v1147 = vpack.c.b16 %v937, %v936
  %v1148 = vpack.c.b16 %v939, %v938
  %v1149 = vpack.c.b16 %v941, %v940
  %v1150 = vpack.c.b16 %v943, %v942
  %v1151 = vpack.c.b16 %v945, %v944
  %v1152 = vpack.c.b16 %v947, %v946
  %v1153 = vpack.c.b16 %v949, %v948
  %v1154 = vpack.c.b16 %v951, %v950
  %v1155 = vpack.c.b16 %v953, %v952
  %v1156 = vpack.c.b16 %v955, %v954
  %v1157 = vpack.c.b16 %v957, %v956
  %v1158 = vpack.c.b16 %v959, %v958
  %v1159 = vpack.c.b16 %v961, %v960
  %v1160 = vpack.c.b16 %v963, %v962
  %v1161 = vpack.c.b16 %v965, %v964
  %v1162 = vpack.c.b16 %v967, %v966
  %v1163 = vpack.c.b16 %v969, %v968
  %v1164 = vpack.c.b16 %v971, %v970
  %v1165 = vpack.c.b16 %v973, %v972
  %v1166 = vpack.c.b16 %v975, %v974
  %v1167 = vpack.c.b16 %v977, %v976
  %v1168 = vpack.c.b16 %v979, %v978
  %v1169 = vpack.c.b16 %v981, %v980
  %v1170 = vpack.c.b16 %v983, %v982
  %v1171 = vpack.c.b16 %v985, %v984
  %v1172 = vpack.c.b16 %v987, %v986
  %v1173 = vpack.c.b16 %v989, %v988
  %v1174 = vpack.c.b16 %v991, %v990
  %v1175 = vpack.c.b16 %v993, %v992
  %v1176 = vpack.c.b16 %v995, %v994
  %v1177 = vpack.c.b16 %v997, %v996
  %v1178 = vpack.c.b16 %v999, %v998
  %v1179 = vpack.c.b16 %v1001, %v1000
  %v1180 = vpack.c.b16 %v1003, %v1002
  %v1181 = vpack.c.b16 %v1005, %v1004
  %v1182 = vpack.c.b16 %v1007, %v1006
  %v1183 = vpack.c.b16 %v1009, %v1008
  %v1184 = vpack.c.b16 %v1011, %v1010
  %v1185 = vpack.c.b16 %v1013, %v1012
  %v1186 = vpack.c.b16 %v1015, %v1014
  %v1187 = vpack.c.b16 %v1017, %v1016
  %v1188 = vpack.c.b16 %v1019, %v1018
  %v1189 = vpack.c.b16 %v1021, %v1020
  %v1190 = vpack.c.b16 %v1023, %v1022
  %v1191 = vpack.c.b16 %v1025, %v1024
  %v1192 = vpack.c.b16 %v1027, %v1026
  %v1193 = vpack.c.b16 %v1029, %v1028
  %v1194 = vpack.c.b16 %v1031, %v1030
  %v1195 = vpack.c.b16 %v1033, %v1032
  %v1196 = vpack.c.b16 %v1035, %v1034
  %v1197 = vpack.c.b16 %v1037, %v1036
  %v1198 = vpack.c.b16 %v1039, %v1038
  %v1199 = vpack.c.b16 %v1041, %v1040
  %v1200 = vpack.c.b16 %v1043, %v1042
  %v1201 = vpack.c.b16 %v1045, %v1044
  %v1202 = vpack.c.b16 %v1047, %v1046
  %v1203 = vpack.c.b16 %v1049, %v1048
  %v1204 = vpack.c.b16 %v1051, %v1050
  %v1205 = vpack.c.b16 %v1053, %v1052
  %v1206 = vpack.c.b16 %v1055, %v1054
  %v1207 = vpack.c.b16 %v1057, %v1056
  %v1208 = vpack.c.b16 %v1059, %v1058
  %v1209 = vpack.c.b16 %v1061, %v1060
  %v1210 = vpack.c.b16 %v1063, %v1062
  %v1211 = vpack.c.b16 %v1065, %v1064
  %v1212 = vpack.c.b16 %v1067, %v1066
  %v1213 = vpack.c.b16 %v1069, %v1068
  %1358 = vmatprep.subr.bf16.mxu0 0
  %1359 = vmatpush1.bf16.msra.mxu0 %v1070
  %1360 = vmatprep.subr.bf16.mxu0 0
  %1361 = vmatpush1.bf16.msra.mxu0 %v1071
  %1362 = vmatprep.subr.bf16.mxu0 0
  %1363 = vmatpush1.bf16.msra.mxu0 %v1072
  %1364 = vmatprep.subr.bf16.mxu0 0
  %1365 = vmatpush1.bf16.msra.mxu0 %v1073
  %1366 = vmatprep.subr.bf16.mxu0 0
  %1367 = vmatpush1.bf16.msra.mxu0 %v1074
  %1368 = vmatprep.subr.bf16.mxu0 0
  %1369 = vmatpush1.bf16.msra.mxu0 %v1075
  %1370 = vmatprep.subr.bf16.mxu0 0
  %1371 = vmatpush1.bf16.msra.mxu0 %v1076
  %1372 = vmatprep.subr.bf16.mxu0 0
  %1373 = vmatpush1.bf16.msra.mxu0 %v1077
  %1374 = vmatprep.subr.bf16.mxu0 0
  %1375 = vmatpush1.bf16.msra.mxu0 %v1078
  %1376 = vmatprep.subr.bf16.mxu0 0
  %1377 = vmatpush1.bf16.msra.mxu0 %v1079
  %1378 = vmatprep.subr.bf16.mxu0 0
  %1379 = vmatpush1.bf16.msra.mxu0 %v1080
  %1380 = vmatprep.subr.bf16.mxu0 0
  %1381 = vmatpush1.bf16.msra.mxu0 %v1081
  %1382 = vmatprep.subr.bf16.mxu0 0
  %1383 = vmatpush1.bf16.msra.mxu0 %v1082
  %1384 = vmatprep.subr.bf16.mxu0 0
  %1385 = vmatpush1.bf16.msra.mxu0 %v1083
  %1386 = vmatprep.subr.bf16.mxu0 0
  %1387 = vmatpush1.bf16.msra.mxu0 %v1084
  %1388 = vmatprep.subr.bf16.mxu0 0
  %1389 = vmatpush1.bf16.msra.mxu0 %v1085
  %1390 = vmatprep.mubr.bf16.mxu0 %v423
  %1391 = vmatmul.mubr.bf16.gmra.mrb[0].mxu0 %v422
  %v1392 = vpop.f32.mrb[0].mxu0
  %v1393 = vadd.f32 0.0, %v1392
  %v1394 = vpop.f32.mrb[0].mxu0
  %v1395 = vpop.f32.mrb[0].mxu0
  %v1396 = vadd.f32 0.0, %v1395
  %v1397 = vpop.f32.mrb[0].mxu0
  %1398 = vmatprep.mubr.bf16.mxu0 %v441
  %1399 = vmatmul.mubr.bf16.gmra.mrb[0].mxu0 %v440
  %v1400 = vpop.f32.mrb[0].mxu0
  %v1401 = vadd.f32 0.0, %v1400
  %v1402 = vpop.f32.mrb[0].mxu0
  %v1403 = vpop.f32.mrb[0].mxu0
  %v1404 = vpop.f32.mrb[0].mxu0
  %1405 = vdwg.mxu0
  %1406 = vmatprep.subr.bf16.mxu0 0
  %1407 = vmatpush1.bf16.msra.mxu0 %v1086
  %1408 = vmatprep.subr.bf16.mxu0 0
  %1409 = vmatpush1.bf16.msra.mxu0 %v1087
  %1410 = vmatprep.subr.bf16.mxu0 0
  %1411 = vmatpush1.bf16.msra.mxu0 %v1088
  %1412 = vmatprep.subr.bf16.mxu0 0
  %1413 = vmatpush1.bf16.msra.mxu0 %v1089
  %1414 = vmatprep.subr.bf16.mxu0 0
  %1415 = vmatpush1.bf16.msra.mxu0 %v1090
  %1416 = vmatprep.subr.bf16.mxu0 0
  %1417 = vmatpush1.bf16.msra.mxu0 %v1091
  %1418 = vmatprep.subr.bf16.mxu0 0
  %1419 = vmatpush1.bf16.msra.mxu0 %v1092
  %1420 = vmatprep.subr.bf16.mxu0 0
  %1421 = vmatpush1.bf16.msra.mxu0 %v1093
  %1422 = vmatprep.subr.bf16.mxu0 0
  %1423 = vmatpush1.bf16.msra.mxu0 %v1094
  %1424 = vmatprep.subr.bf16.mxu0 0
  %1425 = vmatpush1.bf16.msra.mxu0 %v1095
  %1426 = vmatprep.subr.bf16.mxu0 0
  %1427 = vmatpush1.bf16.msra.mxu0 %v1096
  %1428 = vmatprep.subr.bf16.mxu0 0
  %1429 = vmatpush1.bf16.msra.mxu0 %v1097
  %1430 = vmatprep.subr.bf16.mxu0 0
  %1431 = vmatpush1.bf16.msra.mxu0 %v1098
  %1432 = vmatprep.subr.bf16.mxu0 0
  %1433 = vmatpush1.bf16.msra.mxu0 %v1099
  %1434 = vmatprep.subr.bf16.mxu0 0
  %1435 = vmatpush1.bf16.msra.mxu0 %v1100
  %1436 = vmatprep.subr.bf16.mxu0 0
  %1437 = vmatpush1.bf16.msra.mxu0 %v1101
  %1438 = vmatprep.mubr.bf16.mxu0 %v425
  %1439 = vmatmul.mubr.bf16.gmra.mrb[0].mxu0 %v424
  %v1440 = vpop.f32.mrb[0].mxu0
  %v1441 = vadd.f32 %v1393, %v1440
  %v1442 = vpop.f32.mrb[0].mxu0
  %v1443 = vpop.f32.mrb[0].mxu0
  %v1444 = vadd.f32 %v1396, %v1443
  %v1445 = vpop.f32.mrb[0].mxu0
  %1446 = vmatprep.mubr.bf16.mxu0 %v443
  %1447 = vmatmul.mubr.bf16.gmra.mrb[0].mxu0 %v442
  %v1448 = vpop.f32.mrb[0].mxu0
  %v1449 = vadd.f32 %v1401, %v1448
  %v1450 = vpop.f32.mrb[0].mxu0
  %v1451 = vpop.f32.mrb[0].mxu0
  %v1452 = vpop.f32.mrb[0].mxu0
  %1453 = vdwg.mxu0
  %1454 = vmatprep.subr.bf16.mxu0 0
  %1455 = vmatpush1.bf16.msra.mxu0 %v1102
  %1456 = vmatprep.subr.bf16.mxu0 0
  %1457 = vmatpush1.bf16.msra.mxu0 %v1103
  %1458 = vmatprep.subr.bf16.mxu0 0
  %1459 = vmatpush1.bf16.msra.mxu0 %v1104
  %1460 = vmatprep.subr.bf16.mxu0 0
  %1461 = vmatpush1.bf16.msra.mxu0 %v1105
  %1462 = vmatprep.subr.bf16.mxu0 0
  %1463 = vmatpush1.bf16.msra.mxu0 %v1106
  %1464 = vmatprep.subr.bf16.mxu0 0
  %1465 = vmatpush1.bf16.msra.mxu0 %v1107
  %1466 = vmatprep.subr.bf16.mxu0 0
  %1467 = vmatpush1.bf16.msra.mxu0 %v1108
  %1468 = vmatprep.subr.bf16.mxu0 0
  %1469 = vmatpush1.bf16.msra.mxu0 %v1109
  %1470 = vmatprep.subr.bf16.mxu0 0
  %1471 = vmatpush1.bf16.msra.mxu0 %v1110
  %1472 = vmatprep.subr.bf16.mxu0 0
  %1473 = vmatpush1.bf16.msra.mxu0 %v1111
  %1474 = vmatprep.subr.bf16.mxu0 0
  %1475 = vmatpush1.bf16.msra.mxu0 %v1112
  %1476 = vmatprep.subr.bf16.mxu0 0
  %1477 = vmatpush1.bf16.msra.mxu0 %v1113
  %1478 = vmatprep.subr.bf16.mxu0 0
  %1479 = vmatpush1.bf16.msra.mxu0 %v1114
  %1480 = vmatprep.subr.bf16.mxu0 0
  %1481 = vmatpush1.bf16.msra.mxu0 %v1115
  %1482 = vmatprep.subr.bf16.mxu0 0
  %1483 = vmatpush1.bf16.msra.mxu0 %v1116
  %1484 = vmatprep.subr.bf16.mxu0 0
  %1485 = vmatpush1.bf16.msra.mxu0 %v1117
  %1486 = vmatprep.mubr.bf16.mxu0 %v427
  %1487 = vmatmul.mubr.bf16.gmra.mrb[0].mxu0 %v426
  %v1488 = vpop.f32.mrb[0].mxu0
  %v1489 = vadd.f32 %v1441, %v1488
  %v1490 = vpop.f32.mrb[0].mxu0
  %v1491 = vpop.f32.mrb[0].mxu0
  %v1492 = vadd.f32 %v1444, %v1491
  %v1493 = vpop.f32.mrb[0].mxu0
  %1494 = vmatprep.mubr.bf16.mxu0 %v445
  %1495 = vmatmul.mubr.bf16.gmra.mrb[0].mxu0 %v444
  %v1496 = vpop.f32.mrb[0].mxu0
  %v1497 = vadd.f32 %v1449, %v1496
  %v1498 = vpop.f32.mrb[0].mxu0
  %v1499 = vpop.f32.mrb[0].mxu0
  %v1500 = vpop.f32.mrb[0].mxu0
  %1501 = vdwg.mxu0
  %1502 = vmatprep.subr.bf16.mxu0 0
  %1503 = vmatpush1.bf16.msra.mxu0 %v1118
  %1504 = vmatprep.subr.bf16.mxu0 0
  %1505 = vmatpush1.bf16.msra.mxu0 %v1119
  %1506 = vmatprep.subr.bf16.mxu0 0
  %1507 = vmatpush1.bf16.msra.mxu0 %v1120
  %1508 = vmatprep.subr.bf16.mxu0 0
  %1509 = vmatpush1.bf16.msra.mxu0 %v1121
  %1510 = vmatprep.subr.bf16.mxu0 0
  %1511 = vmatpush1.bf16.msra.mxu0 %v1122
  %1512 = vmatprep.subr.bf16.mxu0 0
  %1513 = vmatpush1.bf16.msra.mxu0 %v1123
  %1514 = vmatprep.subr.bf16.mxu0 0
  %1515 = vmatpush1.bf16.msra.mxu0 %v1124
  %1516 = vmatprep.subr.bf16.mxu0 0
  %1517 = vmatpush1.bf16.msra.mxu0 %v1125
  %1518 = vmatprep.subr.bf16.mxu0 0
  %1519 = vmatpush1.bf16.msra.mxu0 %v1126
  %1520 = vmatprep.subr.bf16.mxu0 0
  %1521 = vmatpush1.bf16.msra.mxu0 %v1127
  %1522 = vmatprep.subr.bf16.mxu0 0
  %1523 = vmatpush1.bf16.msra.mxu0 %v1128
  %1524 = vmatprep.subr.bf16.mxu0 0
  %1525 = vmatpush1.bf16.msra.mxu0 %v1129
  %1526 = vmatprep.subr.bf16.mxu0 0
  %1527 = vmatpush1.bf16.msra.mxu0 %v1130
  %1528 = vmatprep.subr.bf16.mxu0 0
  %1529 = vmatpush1.bf16.msra.mxu0 %v1131
  %1530 = vmatprep.subr.bf16.mxu0 0
  %1531 = vmatpush1.bf16.msra.mxu0 %v1132
  %1532 = vmatprep.subr.bf16.mxu0 0
  %1533 = vmatpush1.bf16.msra.mxu0 %v1133
  %1534 = vmatprep.mubr.bf16.mxu0 %v429
  %1535 = vmatmul.mubr.bf16.gmra.mrb[0].mxu0 %v428
  %v1536 = vpop.f32.mrb[0].mxu0
  %v1537 = vadd.f32 %v1489, %v1536
  %v1538 = vpop.f32.mrb[0].mxu0
  %v1539 = vpop.f32.mrb[0].mxu0
  %v1540 = vadd.f32 %v1492, %v1539
  %v1541 = vpop.f32.mrb[0].mxu0
  %1542 = vmatprep.mubr.bf16.mxu0 %v447
  %1543 = vmatmul.mubr.bf16.gmra.mrb[0].mxu0 %v446
  %v1544 = vpop.f32.mrb[0].mxu0
  %v1545 = vadd.f32 %v1497, %v1544
  %v1546 = vpop.f32.mrb[0].mxu0
  %v1547 = vpop.f32.mrb[0].mxu0
  %v1548 = vpop.f32.mrb[0].mxu0
  %1549 = vdwg.mxu0
  %1550 = vmatprep.subr.bf16.mxu0 0
  %1551 = vmatpush1.bf16.msra.mxu0 %v1134
  %1552 = vmatprep.subr.bf16.mxu0 0
  %1553 = vmatpush1.bf16.msra.mxu0 %v1135
  %1554 = vmatprep.subr.bf16.mxu0 0
  %1555 = vmatpush1.bf16.msra.mxu0 %v1136
  %1556 = vmatprep.subr.bf16.mxu0 0
  %1557 = vmatpush1.bf16.msra.mxu0 %v1137
  %1558 = vmatprep.subr.bf16.mxu0 0
  %1559 = vmatpush1.bf16.msra.mxu0 %v1138
  %1560 = vmatprep.subr.bf16.mxu0 0
  %1561 = vmatpush1.bf16.msra.mxu0 %v1139
  %1562 = vmatprep.subr.bf16.mxu0 0
  %1563 = vmatpush1.bf16.msra.mxu0 %v1140
  %1564 = vmatprep.subr.bf16.mxu0 0
  %1565 = vmatpush1.bf16.msra.mxu0 %v1141
  %1566 = vmatprep.subr.bf16.mxu0 0
  %1567 = vmatpush1.bf16.msra.mxu0 %v1142
  %1568 = vmatprep.subr.bf16.mxu0 0
  %1569 = vmatpush1.bf16.msra.mxu0 %v1143
  %1570 = vmatprep.subr.bf16.mxu0 0
  %1571 = vmatpush1.bf16.msra.mxu0 %v1144
  %1572 = vmatprep.subr.bf16.mxu0 0
  %1573 = vmatpush1.bf16.msra.mxu0 %v1145
  %1574 = vmatprep.subr.bf16.mxu0 0
  %1575 = vmatpush1.bf16.msra.mxu0 %v1146
  %1576 = vmatprep.subr.bf16.mxu0 0
  %1577 = vmatpush1.bf16.msra.mxu0 %v1147
  %1578 = vmatprep.subr.bf16.mxu0 0
  %1579 = vmatpush1.bf16.msra.mxu0 %v1148
  %1580 = vmatprep.subr.bf16.mxu0 0
  %1581 = vmatpush1.bf16.msra.mxu0 %v1149
  %1582 = vmatprep.mubr.bf16.mxu0 %v431
  %1583 = vmatmul.mubr.bf16.gmra.mrb[0].mxu0 %v430
  %v1584 = vpop.f32.mrb[0].mxu0
  %v1585 = vadd.f32 %v1537, %v1584
  %v1586 = vpop.f32.mrb[0].mxu0
  %v1587 = vpop.f32.mrb[0].mxu0
  %v1588 = vadd.f32 %v1540, %v1587
  %v1589 = vpop.f32.mrb[0].mxu0
  %1590 = vmatprep.mubr.bf16.mxu0 %v449
  %1591 = vmatmul.mubr.bf16.gmra.mrb[0].mxu0 %v448
  %v1592 = vpop.f32.mrb[0].mxu0
  %v1593 = vadd.f32 %v1545, %v1592
  %v1594 = vpop.f32.mrb[0].mxu0
  %v1595 = vpop.f32.mrb[0].mxu0
  %v1596 = vpop.f32.mrb[0].mxu0
  %1597 = vdwg.mxu0
  %1598 = vmatprep.subr.bf16.mxu0 0
  %1599 = vmatpush1.bf16.msra.mxu0 %v1150
  %1600 = vmatprep.subr.bf16.mxu0 0
  %1601 = vmatpush1.bf16.msra.mxu0 %v1151
  %1602 = vmatprep.subr.bf16.mxu0 0
  %1603 = vmatpush1.bf16.msra.mxu0 %v1152
  %1604 = vmatprep.subr.bf16.mxu0 0
  %1605 = vmatpush1.bf16.msra.mxu0 %v1153
  %1606 = vmatprep.subr.bf16.mxu0 0
  %1607 = vmatpush1.bf16.msra.mxu0 %v1154
  %1608 = vmatprep.subr.bf16.mxu0 0
  %1609 = vmatpush1.bf16.msra.mxu0 %v1155
  %1610 = vmatprep.subr.bf16.mxu0 0
  %1611 = vmatpush1.bf16.msra.mxu0 %v1156
  %1612 = vmatprep.subr.bf16.mxu0 0
  %1613 = vmatpush1.bf16.msra.mxu0 %v1157
  %1614 = vmatprep.subr.bf16.mxu0 0
  %1615 = vmatpush1.bf16.msra.mxu0 %v1158
  %1616 = vmatprep.subr.bf16.mxu0 0
  %1617 = vmatpush1.bf16.msra.mxu0 %v1159
  %1618 = vmatprep.subr.bf16.mxu0 0
  %1619 = vmatpush1.bf16.msra.mxu0 %v1160
  %1620 = vmatprep.subr.bf16.mxu0 0
  %1621 = vmatpush1.bf16.msra.mxu0 %v1161
  %1622 = vmatprep.subr.bf16.mxu0 0
  %1623 = vmatpush1.bf16.msra.mxu0 %v1162
  %1624 = vmatprep.subr.bf16.mxu0 0
  %1625 = vmatpush1.bf16.msra.mxu0 %v1163
  %1626 = vmatprep.subr.bf16.mxu0 0
  %1627 = vmatpush1.bf16.msra.mxu0 %v1164
  %1628 = vmatprep.subr.bf16.mxu0 0
  %1629 = vmatpush1.bf16.msra.mxu0 %v1165
  %1630 = vmatprep.mubr.bf16.mxu0 %v433
  %1631 = vmatmul.mubr.bf16.gmra.mrb[0].mxu0 %v432
  %v1632 = vpop.f32.mrb[0].mxu0
  %v1633 = vadd.f32 %v1585, %v1632
  %v1634 = vpop.f32.mrb[0].mxu0
  %v1635 = vpop.f32.mrb[0].mxu0
  %v1636 = vadd.f32 %v1588, %v1635
  %v1637 = vpop.f32.mrb[0].mxu0
  %1638 = vmatprep.mubr.bf16.mxu0 %v451
  %1639 = vmatmul.mubr.bf16.gmra.mrb[0].mxu0 %v450
  %v1640 = vpop.f32.mrb[0].mxu0
  %v1641 = vadd.f32 %v1593, %v1640
  %v1642 = vpop.f32.mrb[0].mxu0
  %v1643 = vpop.f32.mrb[0].mxu0
  %v1644 = vpop.f32.mrb[0].mxu0
  %1645 = vdwg.mxu0
  %1646 = vmatprep.subr.bf16.mxu0 0
  %1647 = vmatpush1.bf16.msra.mxu0 %v1166
  %1648 = vmatprep.subr.bf16.mxu0 0
  %1649 = vmatpush1.bf16.msra.mxu0 %v1167
  %1650 = vmatprep.subr.bf16.mxu0 0
  %1651 = vmatpush1.bf16.msra.mxu0 %v1168
  %1652 = vmatprep.subr.bf16.mxu0 0
  %1653 = vmatpush1.bf16.msra.mxu0 %v1169
  %1654 = vmatprep.subr.bf16.mxu0 0
  %1655 = vmatpush1.bf16.msra.mxu0 %v1170
  %1656 = vmatprep.subr.bf16.mxu0 0
  %1657 = vmatpush1.bf16.msra.mxu0 %v1171
  %1658 = vmatprep.subr.bf16.mxu0 0
  %1659 = vmatpush1.bf16.msra.mxu0 %v1172
  %1660 = vmatprep.subr.bf16.mxu0 0
  %1661 = vmatpush1.bf16.msra.mxu0 %v1173
  %1662 = vmatprep.subr.bf16.mxu0 0
  %1663 = vmatpush1.bf16.msra.mxu0 %v1174
  %1664 = vmatprep.subr.bf16.mxu0 0
  %1665 = vmatpush1.bf16.msra.mxu0 %v1175
  %1666 = vmatprep.subr.bf16.mxu0 0
  %1667 = vmatpush1.bf16.msra.mxu0 %v1176
  %1668 = vmatprep.subr.bf16.mxu0 0
  %1669 = vmatpush1.bf16.msra.mxu0 %v1177
  %1670 = vmatprep.subr.bf16.mxu0 0
  %1671 = vmatpush1.bf16.msra.mxu0 %v1178
  %1672 = vmatprep.subr.bf16.mxu0 0
  %1673 = vmatpush1.bf16.msra.mxu0 %v1179
  %1674 = vmatprep.subr.bf16.mxu0 0
  %1675 = vmatpush1.bf16.msra.mxu0 %v1180
  %1676 = vmatprep.subr.bf16.mxu0 0
  %1677 = vmatpush1.bf16.msra.mxu0 %v1181
  %1678 = vmatprep.mubr.bf16.mxu0 %v435
  %1679 = vmatmul.mubr.bf16.gmra.mrb[0].mxu0 %v434
  %v1680 = vpop.f32.mrb[0].mxu0
  %v1681 = vadd.f32 %v1633, %v1680
  %v1682 = vpop.f32.mrb[0].mxu0
  %v1683 = vpop.f32.mrb[0].mxu0
  %v1684 = vadd.f32 %v1636, %v1683
  %v1685 = vpop.f32.mrb[0].mxu0
  %1686 = vmatprep.mubr.bf16.mxu0 %v453
  %1687 = vmatmul.mubr.bf16.gmra.mrb[0].mxu0 %v452
  %v1688 = vpop.f32.mrb[0].mxu0
  %v1689 = vadd.f32 %v1641, %v1688
  %v1690 = vpop.f32.mrb[0].mxu0
  %v1691 = vpop.f32.mrb[0].mxu0
  %v1692 = vpop.f32.mrb[0].mxu0
  %1693 = vdwg.mxu0
  %1694 = vmatprep.subr.bf16.mxu0 0
  %1695 = vmatpush1.bf16.msra.mxu0 %v1182
  %1696 = vmatprep.subr.bf16.mxu0 0
  %1697 = vmatpush1.bf16.msra.mxu0 %v1183
  %1698 = vmatprep.subr.bf16.mxu0 0
  %1699 = vmatpush1.bf16.msra.mxu0 %v1184
  %1700 = vmatprep.subr.bf16.mxu0 0
  %1701 = vmatpush1.bf16.msra.mxu0 %v1185
  %1702 = vmatprep.subr.bf16.mxu0 0
  %1703 = vmatpush1.bf16.msra.mxu0 %v1186
  %1704 = vmatprep.subr.bf16.mxu0 0
  %1705 = vmatpush1.bf16.msra.mxu0 %v1187
  %1706 = vmatprep.subr.bf16.mxu0 0
  %1707 = vmatpush1.bf16.msra.mxu0 %v1188
  %1708 = vmatprep.subr.bf16.mxu0 0
  %1709 = vmatpush1.bf16.msra.mxu0 %v1189
  %1710 = vmatprep.subr.bf16.mxu0 0
  %1711 = vmatpush1.bf16.msra.mxu0 %v1190
  %1712 = vmatprep.subr.bf16.mxu0 0
  %1713 = vmatpush1.bf16.msra.mxu0 %v1191
  %1714 = vmatprep.subr.bf16.mxu0 0
  %1715 = vmatpush1.bf16.msra.mxu0 %v1192
  %1716 = vmatprep.subr.bf16.mxu0 0
  %1717 = vmatpush1.bf16.msra.mxu0 %v1193
  %1718 = vmatprep.subr.bf16.mxu0 0
  %1719 = vmatpush1.bf16.msra.mxu0 %v1194
  %1720 = vmatprep.subr.bf16.mxu0 0
  %1721 = vmatpush1.bf16.msra.mxu0 %v1195
  %1722 = vmatprep.subr.bf16.mxu0 0
  %1723 = vmatpush1.bf16.msra.mxu0 %v1196
  %1724 = vmatprep.subr.bf16.mxu0 0
  %1725 = vmatpush1.bf16.msra.mxu0 %v1197
  %1726 = vmatprep.mubr.bf16.mxu0 %v437
  %1727 = vmatmul.mubr.bf16.gmra.mrb[0].mxu0 %v436
  %v1728 = vpop.f32.mrb[0].mxu0
  %v1729 = vadd.f32 %v1681, %v1728
  %v1730 = vpop.f32.mrb[0].mxu0
  %v1731 = vpop.f32.mrb[0].mxu0
  %v1732 = vadd.f32 %v1684, %v1731
  %v1733 = vpop.f32.mrb[0].mxu0
  %1734 = vmatprep.mubr.bf16.mxu0 %v455
  %1735 = vmatmul.mubr.bf16.gmra.mrb[0].mxu0 %v454
  %v1736 = vpop.f32.mrb[0].mxu0
  %v1737 = vadd.f32 %v1689, %v1736
  %v1738 = vpop.f32.mrb[0].mxu0
  %v1739 = vpop.f32.mrb[0].mxu0
  %v1740 = vpop.f32.mrb[0].mxu0
  %1741 = vdwg.mxu0
  %1742 = vmatprep.subr.bf16.mxu0 0
  %1743 = vmatpush1.bf16.msra.mxu0 %v1198
  %1744 = vmatprep.subr.bf16.mxu0 0
  %1745 = vmatpush1.bf16.msra.mxu0 %v1199
  %1746 = vmatprep.subr.bf16.mxu0 0
  %1747 = vmatpush1.bf16.msra.mxu0 %v1200
  %1748 = vmatprep.subr.bf16.mxu0 0
  %1749 = vmatpush1.bf16.msra.mxu0 %v1201
  %1750 = vmatprep.subr.bf16.mxu0 0
  %1751 = vmatpush1.bf16.msra.mxu0 %v1202
  %1752 = vmatprep.subr.bf16.mxu0 0
  %1753 = vmatpush1.bf16.msra.mxu0 %v1203
  %1754 = vmatprep.subr.bf16.mxu0 0
  %1755 = vmatpush1.bf16.msra.mxu0 %v1204
  %1756 = vmatprep.subr.bf16.mxu0 0
  %1757 = vmatpush1.bf16.msra.mxu0 %v1205
  %1758 = vmatprep.subr.bf16.mxu0 0
  %1759 = vmatpush1.bf16.msra.mxu0 %v1206
  %1760 = vmatprep.subr.bf16.mxu0 0
  %1761 = vmatpush1.bf16.msra.mxu0 %v1207
  %1762 = vmatprep.subr.bf16.mxu0 0
  %1763 = vmatpush1.bf16.msra.mxu0 %v1208
  %1764 = vmatprep.subr.bf16.mxu0 0
  %1765 = vmatpush1.bf16.msra.mxu0 %v1209
  %1766 = vmatprep.subr.bf16.mxu0 0
  %1767 = vmatpush1.bf16.msra.mxu0 %v1210
  %1768 = vmatprep.subr.bf16.mxu0 0
  %1769 = vmatpush1.bf16.msra.mxu0 %v1211
  %1770 = vmatprep.subr.bf16.mxu0 0
  %1771 = vmatpush1.bf16.msra.mxu0 %v1212
  %1772 = vmatprep.subr.bf16.mxu0 0
  %1773 = vmatpush1.bf16.msra.mxu0 %v1213
  %1774 = vmatprep.mubr.bf16.mxu0 %v439
  %1775 = vmatmul.mubr.bf16.gmra.mrb[0].mxu0 %v438
  %v1776 = vpop.f32.mrb[0].mxu0
  %v1777 = vadd.f32 %v1729, %v1776
  %v1778 = vpop.f32.mrb[0].mxu0
  %v1779 = vpop.f32.mrb[0].mxu0
  %v1780 = vadd.f32 %v1732, %v1779
  %v1781 = vpop.f32.mrb[0].mxu0
  %1782 = vmatprep.mubr.bf16.mxu0 %v457
  %1783 = vmatmul.mubr.bf16.gmra.mrb[0].mxu0 %v456
  %v1784 = vpop.f32.mrb[0].mxu0
  %v1785 = vadd.f32 %v1737, %v1784
  %v1786 = vpop.f32.mrb[0].mxu0
  %v1787 = vpop.f32.mrb[0].mxu0
  %v1788 = vpop.f32.mrb[0].mxu0
  %1789 = vdwg.mxu0
  %v1791 = vlaneseq
  %v1792 = vshrl.u32 %v1791, 7
  %v1793 = vsub.s32 0, %v1792
  %v1794 = vrot.slane %v312, %v1793
  %v1796 = vmul.f32 %v1777, %v1794
  %v1797 = vmul.f32 %v1780, %v1794
  %v1798 = vmul.f32 %v1785, %v1794
  %v1800 = vlaneseq
  %v1801 = vshrl.u32 %v1800, 7
  %v1802 = vsub.s32 0, %v1801
  %v1803 = vrot.slane %v313, %v1802
  %v1805 = vadd.f32 %v1796, %v1803
  %v1806 = vadd.f32 %v1797, %v1803
  %v1807 = vadd.f32 %v1798, %v1803
  %s1808 = scalar_lea.vmem %s0, 216
  %v1809 = vld [vmem:[%s1808] sm:$0xff]
  %v1810 = vld [vmem:[%s1808 + $0x8] sm:$0xff]
  %v1811 = vld [vmem:[%s1808 + $0x10] sm:$0xff]
  %v1812 = vld [vmem:[%s1808 + $0x18] sm:$0xff]
  %v1813 = vld [vmem:[%s1808 + $0x20] sm:$0xff]
  %v1814 = vld [vmem:[%s1808 + $0x28] sm:$0xff]
  %v1815 = vld [vmem:[%s1808 + $0x30] sm:$0xff]
  %v1816 = vld [vmem:[%s1808 + $0x38] sm:$0xff]
  %v1817 = vld [vmem:[%s1808 + $0x40] sm:$0xff]
  %v1818 = vld [vmem:[%s1808 + $0x48] sm:$0xff]
  %v1819 = vld [vmem:[%s1808 + $0x50] sm:$0xff]
  %v1820 = vld [vmem:[%s1808 + $0x58] sm:$0xff]
  %v1821 = vld [vmem:[%s1808 + $0x60] sm:$0xff]
  %v1822 = vld [vmem:[%s1808 + $0x68] sm:$0xff]
  %v1823 = vld [vmem:[%s1808 + $0x70] sm:$0xff]
  %v1824 = vld [vmem:[%s1808 + $0x78] sm:$0xff]
  %v1825 = vld [vmem:[%s1808 + $0x80] sm:$0xff]
  %v1826 = vld [vmem:[%s1808 + $0x88] sm:$0xff]
  %v1827 = vld [vmem:[%s1808 + $0x90] sm:$0xff]
  %v1828 = vld [vmem:[%s1808 + $0x98] sm:$0xff]
  %v1829 = vld [vmem:[%s1808 + $0xa0] sm:$0xff]
  %v1830 = vld [vmem:[%s1808 + $0xa8] sm:$0xff]
  %v1831 = vld [vmem:[%s1808 + $0xb0] sm:$0xff]
  %v1832 = vld [vmem:[%s1808 + $0xb8] sm:$0xff]
  %v1833 = vld [vmem:[%s1808 + $0xc0] sm:$0xff]
  %v1834 = vld [vmem:[%s1808 + $0xc8] sm:$0xff]
  %v1835 = vld [vmem:[%s1808 + $0xd0] sm:$0xff]
  %v1863 = vunpack.c.l.b16 %v1809
  %v1864 = vunpack.c.h.b16 %v1809
  %v1865 = vunpack.c.l.b16 %v1810
  %v1866 = vunpack.c.h.b16 %v1810
  %v1867 = vunpack.c.l.b16 %v1811
  %v1868 = vunpack.c.h.b16 %v1811
  %v1869 = vunpack.c.l.b16 %v1812
  %v1870 = vunpack.c.h.b16 %v1812
  %v1871 = vunpack.c.l.b16 %v1813
  %v1872 = vunpack.c.h.b16 %v1813
  %v1873 = vunpack.c.l.b16 %v1814
  %v1874 = vunpack.c.h.b16 %v1814
  %v1875 = vunpack.c.l.b16 %v1815
  %v1876 = vunpack.c.h.b16 %v1815
  %v1877 = vunpack.c.l.b16 %v1816
  %v1878 = vunpack.c.h.b16 %v1816
  %v1879 = vunpack.c.l.b16 %v1817
  %v1880 = vunpack.c.h.b16 %v1817
  %v1881 = vunpack.c.l.b16 %v1818
  %v1882 = vunpack.c.h.b16 %v1818
  %v1883 = vunpack.c.l.b16 %v1819
  %v1884 = vunpack.c.h.b16 %v1819
  %v1885 = vunpack.c.l.b16 %v1820
  %v1886 = vunpack.c.h.b16 %v1820
  %v1887 = vunpack.c.l.b16 %v1821
  %v1888 = vunpack.c.h.b16 %v1821
  %v1889 = vunpack.c.l.b16 %v1822
  %v1890 = vunpack.c.h.b16 %v1822
  %v1891 = vunpack.c.l.b16 %v1823
  %v1892 = vunpack.c.h.b16 %v1823
  %v1893 = vunpack.c.l.b16 %v1824
  %v1894 = vunpack.c.h.b16 %v1824
  %v1895 = vunpack.c.l.b16 %v1825
  %v1896 = vunpack.c.h.b16 %v1825
  %v1897 = vunpack.c.l.b16 %v1826
  %v1898 = vunpack.c.h.b16 %v1826
  %v1899 = vunpack.c.l.b16 %v1827
  %v1900 = vunpack.c.h.b16 %v1827
  %v1901 = vunpack.c.l.b16 %v1828
  %v1902 = vunpack.c.h.b16 %v1828
  %v1903 = vunpack.c.l.b16 %v1829
  %v1904 = vunpack.c.h.b16 %v1829
  %v1905 = vunpack.c.l.b16 %v1830
  %v1906 = vunpack.c.h.b16 %v1830
  %v1907 = vunpack.c.l.b16 %v1831
  %v1908 = vunpack.c.h.b16 %v1831
  %v1909 = vunpack.c.l.b16 %v1832
  %v1910 = vunpack.c.h.b16 %v1832
  %v1911 = vunpack.c.l.b16 %v1833
  %v1912 = vunpack.c.h.b16 %v1833
  %v1913 = vunpack.c.l.b16 %v1834
  %v1914 = vunpack.c.h.b16 %v1834
  %v1915 = vunpack.c.l.b16 %v1835
  %v1916 = vunpack.c.h.b16 %v1835
  %v1917 = vpack.c.b16 %v1881, %v1863
  %v1918 = vpack.c.b16 %v1882, %v1864
  %v1919 = vpack.c.b16 %v1883, %v1865
  %v1920 = vpack.c.b16 %v1884, %v1866
  %v1921 = vpack.c.b16 %v1885, %v1867
  %v1922 = vpack.c.b16 %v1886, %v1868
  %v1923 = vpack.c.b16 %v1887, %v1869
  %v1924 = vpack.c.b16 %v1888, %v1870
  %v1925 = vpack.c.b16 %v1889, %v1871
  %v1926 = vpack.c.b16 %v1890, %v1872
  %v1927 = vpack.c.b16 %v1891, %v1873
  %v1928 = vpack.c.b16 %v1892, %v1874
  %v1929 = vpack.c.b16 %v1893, %v1875
  %v1930 = vpack.c.b16 %v1894, %v1876
  %v1931 = vpack.c.b16 %v1895, %v1877
  %v1932 = vpack.c.b16 %v1896, %v1878
  %v1933 = vpack.c.b16 %v1897, %v1879
  %v1934 = vpack.c.b16 %v1898, %v1880
  %v1935 = vpack.c.b16 %v1899, %v1899
  %v1936 = vpack.c.b16 %v1900, %v1900
  %v1937 = vpack.c.b16 %v1901, %v1901
  %v1938 = vpack.c.b16 %v1902, %v1902
  %v1939 = vpack.c.b16 %v1903, %v1903
  %v1940 = vpack.c.b16 %v1904, %v1904
  %v1941 = vpack.c.b16 %v1905, %v1905
  %v1942 = vpack.c.b16 %v1906, %v1906
  %v1943 = vpack.c.b16 %v1907, %v1907
  %v1944 = vpack.c.b16 %v1908, %v1908
  %v1945 = vpack.c.b16 %v1909, %v1909
  %v1946 = vpack.c.b16 %v1910, %v1910
  %v1947 = vpack.c.b16 %v1911, %v1911
  %v1948 = vpack.c.b16 %v1912, %v1912
  %v1949 = vpack.c.b16 %v1913, %v1913
  %v1950 = vpack.c.b16 %v1914, %v1914
  %v1951 = vpack.c.b16 %v1915, %v1915
  %v1952 = vpack.c.b16 %v1916, %v1916
  %1989 = vmatprep.subr.bf16.mxu0 0
  %1990 = vmatpush1.bf16.msra.mxu0 %v1070
  %1991 = vmatprep.subr.bf16.mxu0 0
  %1992 = vmatpush1.bf16.msra.mxu0 %v1071
  %1993 = vmatprep.subr.bf16.mxu0 0
  %1994 = vmatpush1.bf16.msra.mxu0 %v1072
  %1995 = vmatprep.subr.bf16.mxu0 0
  %1996 = vmatpush1.bf16.msra.mxu0 %v1073
  %1997 = vmatprep.subr.bf16.mxu0 0
  %1998 = vmatpush1.bf16.msra.mxu0 %v1074
  %1999 = vmatprep.subr.bf16.mxu0 0
  %2000 = vmatpush1.bf16.msra.mxu0 %v1075
  %2001 = vmatprep.subr.bf16.mxu0 0
  %2002 = vmatpush1.bf16.msra.mxu0 %v1076
  %2003 = vmatprep.subr.bf16.mxu0 0
  %2004 = vmatpush1.bf16.msra.mxu0 %v1077
  %2005 = vmatprep.subr.bf16.mxu0 0
  %2006 = vmatpush1.bf16.msra.mxu0 %v1078
  %2007 = vmatprep.subr.bf16.mxu0 0
  %2008 = vmatpush1.bf16.msra.mxu0 %v1079
  %2009 = vmatprep.subr.bf16.mxu0 0
  %2010 = vmatpush1.bf16.msra.mxu0 %v1080
  %2011 = vmatprep.subr.bf16.mxu0 0
  %2012 = vmatpush1.bf16.msra.mxu0 %v1081
  %2013 = vmatprep.subr.bf16.mxu0 0
  %2014 = vmatpush1.bf16.msra.mxu0 %v1082
  %2015 = vmatprep.subr.bf16.mxu0 0
  %2016 = vmatpush1.bf16.msra.mxu0 %v1083
  %2017 = vmatprep.subr.bf16.mxu0 0
  %2018 = vmatpush1.bf16.msra.mxu0 %v1084
  %2019 = vmatprep.subr.bf16.mxu0 0
  %2020 = vmatpush1.bf16.msra.mxu0 %v1085
  %2021 = vmatprep.mubr.bf16.mxu0 %v1918
  %2022 = vmatmul.mubr.bf16.gmra.mrb[0].mxu0 %v1917
  %v2023 = vpop.f32.mrb[0].mxu0
  %v2024 = vadd.f32 0.0, %v2023
  %v2025 = vpop.f32.mrb[0].mxu0
  %v2026 = vpop.f32.mrb[0].mxu0
  %v2027 = vadd.f32 0.0, %v2026
  %v2028 = vpop.f32.mrb[0].mxu0
  %2029 = vmatprep.mubr.bf16.mxu0 %v1936
  %2030 = vmatmul.mubr.bf16.gmra.mrb[0].mxu0 %v1935
  %v2031 = vpop.f32.mrb[0].mxu0
  %v2032 = vadd.f32 0.0, %v2031
  %v2033 = vpop.f32.mrb[0].mxu0
  %v2034 = vpop.f32.mrb[0].mxu0
  %v2035 = vpop.f32.mrb[0].mxu0
  %2036 = vdwg.mxu0
  %2037 = vmatprep.subr.bf16.mxu0 0
  %2038 = vmatpush1.bf16.msra.mxu0 %v1086
  %2039 = vmatprep.subr.bf16.mxu0 0
  %2040 = vmatpush1.bf16.msra.mxu0 %v1087
  %2041 = vmatprep.subr.bf16.mxu0 0
  %2042 = vmatpush1.bf16.msra.mxu0 %v1088
  %2043 = vmatprep.subr.bf16.mxu0 0
  %2044 = vmatpush1.bf16.msra.mxu0 %v1089
  %2045 = vmatprep.subr.bf16.mxu0 0
  %2046 = vmatpush1.bf16.msra.mxu0 %v1090
  %2047 = vmatprep.subr.bf16.mxu0 0
  %2048 = vmatpush1.bf16.msra.mxu0 %v1091
  %2049 = vmatprep.subr.bf16.mxu0 0
  %2050 = vmatpush1.bf16.msra.mxu0 %v1092
  %2051 = vmatprep.subr.bf16.mxu0 0
  %2052 = vmatpush1.bf16.msra.mxu0 %v1093
  %2053 = vmatprep.subr.bf16.mxu0 0
  %2054 = vmatpush1.bf16.msra.mxu0 %v1094
  %2055 = vmatprep.subr.bf16.mxu0 0
  %2056 = vmatpush1.bf16.msra.mxu0 %v1095
  %2057 = vmatprep.subr.bf16.mxu0 0
  %2058 = vmatpush1.bf16.msra.mxu0 %v1096
  %2059 = vmatprep.subr.bf16.mxu0 0
  %2060 = vmatpush1.bf16.msra.mxu0 %v1097
  %2061 = vmatprep.subr.bf16.mxu0 0
  %2062 = vmatpush1.bf16.msra.mxu0 %v1098
  %2063 = vmatprep.subr.bf16.mxu0 0
  %2064 = vmatpush1.bf16.msra.mxu0 %v1099
  %2065 = vmatprep.subr.bf16.mxu0 0
  %2066 = vmatpush1.bf16.msra.mxu0 %v1100
  %2067 = vmatprep.subr.bf16.mxu0 0
  %2068 = vmatpush1.bf16.msra.mxu0 %v1101
  %2069 = vmatprep.mubr.bf16.mxu0 %v1920
  %2070 = vmatmul.mubr.bf16.gmra.mrb[0].mxu0 %v1919
  %v2071 = vpop.f32.mrb[0].mxu0
  %v2072 = vadd.f32 %v2024, %v2071
  %v2073 = vpop.f32.mrb[0].mxu0
  %v2074 = vpop.f32.mrb[0].mxu0
  %v2075 = vadd.f32 %v2027, %v2074
  %v2076 = vpop.f32.mrb[0].mxu0
  %2077 = vmatprep.mubr.bf16.mxu0 %v1938
  %2078 = vmatmul.mubr.bf16.gmra.mrb[0].mxu0 %v1937
  %v2079 = vpop.f32.mrb[0].mxu0
  %v2080 = vadd.f32 %v2032, %v2079
  %v2081 = vpop.f32.mrb[0].mxu0
  %v2082 = vpop.f32.mrb[0].mxu0
  %v2083 = vpop.f32.mrb[0].mxu0
  %2084 = vdwg.mxu0
  %2085 = vmatprep.subr.bf16.mxu0 0
  %2086 = vmatpush1.bf16.msra.mxu0 %v1102
  %2087 = vmatprep.subr.bf16.mxu0 0
  %2088 = vmatpush1.bf16.msra.mxu0 %v1103
  %2089 = vmatprep.subr.bf16.mxu0 0
  %2090 = vmatpush1.bf16.msra.mxu0 %v1104
  %2091 = vmatprep.subr.bf16.mxu0 0
  %2092 = vmatpush1.bf16.msra.mxu0 %v1105
  %2093 = vmatprep.subr.bf16.mxu0 0
  %2094 = vmatpush1.bf16.msra.mxu0 %v1106
  %2095 = vmatprep.subr.bf16.mxu0 0
  %2096 = vmatpush1.bf16.msra.mxu0 %v1107
  %2097 = vmatprep.subr.bf16.mxu0 0
  %2098 = vmatpush1.bf16.msra.mxu0 %v1108
  %2099 = vmatprep.subr.bf16.mxu0 0
  %2100 = vmatpush1.bf16.msra.mxu0 %v1109
  %2101 = vmatprep.subr.bf16.mxu0 0
  %2102 = vmatpush1.bf16.msra.mxu0 %v1110
  %2103 = vmatprep.subr.bf16.mxu0 0
  %2104 = vmatpush1.bf16.msra.mxu0 %v1111
  %2105 = vmatprep.subr.bf16.mxu0 0
  %2106 = vmatpush1.bf16.msra.mxu0 %v1112
  %2107 = vmatprep.subr.bf16.mxu0 0
  %2108 = vmatpush1.bf16.msra.mxu0 %v1113
  %2109 = vmatprep.subr.bf16.mxu0 0
  %2110 = vmatpush1.bf16.msra.mxu0 %v1114
  %2111 = vmatprep.subr.bf16.mxu0 0
  %2112 = vmatpush1.bf16.msra.mxu0 %v1115
  %2113 = vmatprep.subr.bf16.mxu0 0
  %2114 = vmatpush1.bf16.msra.mxu0 %v1116
  %2115 = vmatprep.subr.bf16.mxu0 0
  %2116 = vmatpush1.bf16.msra.mxu0 %v1117
  %2117 = vmatprep.mubr.bf16.mxu0 %v1922
  %2118 = vmatmul.mubr.bf16.gmra.mrb[0].mxu0 %v1921
  %v2119 = vpop.f32.mrb[0].mxu0
  %v2120 = vadd.f32 %v2072, %v2119
  %v2121 = vpop.f32.mrb[0].mxu0
  %v2122 = vpop.f32.mrb[0].mxu0
  %v2123 = vadd.f32 %v2075, %v2122
  %v2124 = vpop.f32.mrb[0].mxu0
  %2125 = vmatprep.mubr.bf16.mxu0 %v1940
  %2126 = vmatmul.mubr.bf16.gmra.mrb[0].mxu0 %v1939
  %v2127 = vpop.f32.mrb[0].mxu0
  %v2128 = vadd.f32 %v2080, %v2127
  %v2129 = vpop.f32.mrb[0].mxu0
  %v2130 = vpop.f32.mrb[0].mxu0
  %v2131 = vpop.f32.mrb[0].mxu0
  %2132 = vdwg.mxu0
  %2133 = vmatprep.subr.bf16.mxu0 0
  %2134 = vmatpush1.bf16.msra.mxu0 %v1118
  %2135 = vmatprep.subr.bf16.mxu0 0
  %2136 = vmatpush1.bf16.msra.mxu0 %v1119
  %2137 = vmatprep.subr.bf16.mxu0 0
  %2138 = vmatpush1.bf16.msra.mxu0 %v1120
  %2139 = vmatprep.subr.bf16.mxu0 0
  %2140 = vmatpush1.bf16.msra.mxu0 %v1121
  %2141 = vmatprep.subr.bf16.mxu0 0
  %2142 = vmatpush1.bf16.msra.mxu0 %v1122
  %2143 = vmatprep.subr.bf16.mxu0 0
  %2144 = vmatpush1.bf16.msra.mxu0 %v1123
  %2145 = vmatprep.subr.bf16.mxu0 0
  %2146 = vmatpush1.bf16.msra.mxu0 %v1124
  %2147 = vmatprep.subr.bf16.mxu0 0
  %2148 = vmatpush1.bf16.msra.mxu0 %v1125
  %2149 = vmatprep.subr.bf16.mxu0 0
  %2150 = vmatpush1.bf16.msra.mxu0 %v1126
  %2151 = vmatprep.subr.bf16.mxu0 0
  %2152 = vmatpush1.bf16.msra.mxu0 %v1127
  %2153 = vmatprep.subr.bf16.mxu0 0
  %2154 = vmatpush1.bf16.msra.mxu0 %v1128
  %2155 = vmatprep.subr.bf16.mxu0 0
  %2156 = vmatpush1.bf16.msra.mxu0 %v1129
  %2157 = vmatprep.subr.bf16.mxu0 0
  %2158 = vmatpush1.bf16.msra.mxu0 %v1130
  %2159 = vmatprep.subr.bf16.mxu0 0
  %2160 = vmatpush1.bf16.msra.mxu0 %v1131
  %2161 = vmatprep.subr.bf16.mxu0 0
  %2162 = vmatpush1.bf16.msra.mxu0 %v1132
  %2163 = vmatprep.subr.bf16.mxu0 0
  %2164 = vmatpush1.bf16.msra.mxu0 %v1133
  %2165 = vmatprep.mubr.bf16.mxu0 %v1924
  %2166 = vmatmul.mubr.bf16.gmra.mrb[0].mxu0 %v1923
  %v2167 = vpop.f32.mrb[0].mxu0
  %v2168 = vadd.f32 %v2120, %v2167
  %v2169 = vpop.f32.mrb[0].mxu0
  %v2170 = vpop.f32.mrb[0].mxu0
  %v2171 = vadd.f32 %v2123, %v2170
  %v2172 = vpop.f32.mrb[0].mxu0
  %2173 = vmatprep.mubr.bf16.mxu0 %v1942
  %2174 = vmatmul.mubr.bf16.gmra.mrb[0].mxu0 %v1941
  %v2175 = vpop.f32.mrb[0].mxu0
  %v2176 = vadd.f32 %v2128, %v2175
  %v2177 = vpop.f32.mrb[0].mxu0
  %v2178 = vpop.f32.mrb[0].mxu0
  %v2179 = vpop.f32.mrb[0].mxu0
  %2180 = vdwg.mxu0
  %2181 = vmatprep.subr.bf16.mxu0 0
  %2182 = vmatpush1.bf16.msra.mxu0 %v1134
  %2183 = vmatprep.subr.bf16.mxu0 0
  %2184 = vmatpush1.bf16.msra.mxu0 %v1135
  %2185 = vmatprep.subr.bf16.mxu0 0
  %2186 = vmatpush1.bf16.msra.mxu0 %v1136
  %2187 = vmatprep.subr.bf16.mxu0 0
  %2188 = vmatpush1.bf16.msra.mxu0 %v1137
  %2189 = vmatprep.subr.bf16.mxu0 0
  %2190 = vmatpush1.bf16.msra.mxu0 %v1138
  %2191 = vmatprep.subr.bf16.mxu0 0
  %2192 = vmatpush1.bf16.msra.mxu0 %v1139
  %2193 = vmatprep.subr.bf16.mxu0 0
  %2194 = vmatpush1.bf16.msra.mxu0 %v1140
  %2195 = vmatprep.subr.bf16.mxu0 0
  %2196 = vmatpush1.bf16.msra.mxu0 %v1141
  %2197 = vmatprep.subr.bf16.mxu0 0
  %2198 = vmatpush1.bf16.msra.mxu0 %v1142
  %2199 = vmatprep.subr.bf16.mxu0 0
  %2200 = vmatpush1.bf16.msra.mxu0 %v1143
  %2201 = vmatprep.subr.bf16.mxu0 0
  %2202 = vmatpush1.bf16.msra.mxu0 %v1144
  %2203 = vmatprep.subr.bf16.mxu0 0
  %2204 = vmatpush1.bf16.msra.mxu0 %v1145
  %2205 = vmatprep.subr.bf16.mxu0 0
  %2206 = vmatpush1.bf16.msra.mxu0 %v1146
  %2207 = vmatprep.subr.bf16.mxu0 0
  %2208 = vmatpush1.bf16.msra.mxu0 %v1147
  %2209 = vmatprep.subr.bf16.mxu0 0
  %2210 = vmatpush1.bf16.msra.mxu0 %v1148
  %2211 = vmatprep.subr.bf16.mxu0 0
  %2212 = vmatpush1.bf16.msra.mxu0 %v1149
  %2213 = vmatprep.mubr.bf16.mxu0 %v1926
  %2214 = vmatmul.mubr.bf16.gmra.mrb[0].mxu0 %v1925
  %v2215 = vpop.f32.mrb[0].mxu0
  %v2216 = vadd.f32 %v2168, %v2215
  %v2217 = vpop.f32.mrb[0].mxu0
  %v2218 = vpop.f32.mrb[0].mxu0
  %v2219 = vadd.f32 %v2171, %v2218
  %v2220 = vpop.f32.mrb[0].mxu0
  %2221 = vmatprep.mubr.bf16.mxu0 %v1944
  %2222 = vmatmul.mubr.bf16.gmra.mrb[0].mxu0 %v1943
  %v2223 = vpop.f32.mrb[0].mxu0
  %v2224 = vadd.f32 %v2176, %v2223
  %v2225 = vpop.f32.mrb[0].mxu0
  %v2226 = vpop.f32.mrb[0].mxu0
  %v2227 = vpop.f32.mrb[0].mxu0
  %2228 = vdwg.mxu0
  %2229 = vmatprep.subr.bf16.mxu0 0
  %2230 = vmatpush1.bf16.msra.mxu0 %v1150
  %2231 = vmatprep.subr.bf16.mxu0 0
  %2232 = vmatpush1.bf16.msra.mxu0 %v1151
  %2233 = vmatprep.subr.bf16.mxu0 0
  %2234 = vmatpush1.bf16.msra.mxu0 %v1152
  %2235 = vmatprep.subr.bf16.mxu0 0
  %2236 = vmatpush1.bf16.msra.mxu0 %v1153
  %2237 = vmatprep.subr.bf16.mxu0 0
  %2238 = vmatpush1.bf16.msra.mxu0 %v1154
  %2239 = vmatprep.subr.bf16.mxu0 0
  %2240 = vmatpush1.bf16.msra.mxu0 %v1155
  %2241 = vmatprep.subr.bf16.mxu0 0
  %2242 = vmatpush1.bf16.msra.mxu0 %v1156
  %2243 = vmatprep.subr.bf16.mxu0 0
  %2244 = vmatpush1.bf16.msra.mxu0 %v1157
  %2245 = vmatprep.subr.bf16.mxu0 0
  %2246 = vmatpush1.bf16.msra.mxu0 %v1158
  %2247 = vmatprep.subr.bf16.mxu0 0
  %2248 = vmatpush1.bf16.msra.mxu0 %v1159
  %2249 = vmatprep.subr.bf16.mxu0 0
  %2250 = vmatpush1.bf16.msra.mxu0 %v1160
  %2251 = vmatprep.subr.bf16.mxu0 0
  %2252 = vmatpush1.bf16.msra.mxu0 %v1161
  %2253 = vmatprep.subr.bf16.mxu0 0
  %2254 = vmatpush1.bf16.msra.mxu0 %v1162
  %2255 = vmatprep.subr.bf16.mxu0 0
  %2256 = vmatpush1.bf16.msra.mxu0 %v1163
  %2257 = vmatprep.subr.bf16.mxu0 0
  %2258 = vmatpush1.bf16.msra.mxu0 %v1164
  %2259 = vmatprep.subr.bf16.mxu0 0
  %2260 = vmatpush1.bf16.msra.mxu0 %v1165
  %2261 = vmatprep.mubr.bf16.mxu0 %v1928
  %2262 = vmatmul.mubr.bf16.gmra.mrb[0].mxu0 %v1927
  %v2263 = vpop.f32.mrb[0].mxu0
  %v2264 = vadd.f32 %v2216, %v2263
  %v2265 = vpop.f32.mrb[0].mxu0
  %v2266 = vpop.f32.mrb[0].mxu0
  %v2267 = vadd.f32 %v2219, %v2266
  %v2268 = vpop.f32.mrb[0].mxu0
  %2269 = vmatprep.mubr.bf16.mxu0 %v1946
  %2270 = vmatmul.mubr.bf16.gmra.mrb[0].mxu0 %v1945
  %v2271 = vpop.f32.mrb[0].mxu0
  %v2272 = vadd.f32 %v2224, %v2271
  %v2273 = vpop.f32.mrb[0].mxu0
  %v2274 = vpop.f32.mrb[0].mxu0
  %v2275 = vpop.f32.mrb[0].mxu0
  %2276 = vdwg.mxu0
  %2277 = vmatprep.subr.bf16.mxu0 0
  %2278 = vmatpush1.bf16.msra.mxu0 %v1166
  %2279 = vmatprep.subr.bf16.mxu0 0
  %2280 = vmatpush1.bf16.msra.mxu0 %v1167
  %2281 = vmatprep.subr.bf16.mxu0 0
  %2282 = vmatpush1.bf16.msra.mxu0 %v1168
  %2283 = vmatprep.subr.bf16.mxu0 0
  %2284 = vmatpush1.bf16.msra.mxu0 %v1169
  %2285 = vmatprep.subr.bf16.mxu0 0
  %2286 = vmatpush1.bf16.msra.mxu0 %v1170
  %2287 = vmatprep.subr.bf16.mxu0 0
  %2288 = vmatpush1.bf16.msra.mxu0 %v1171
  %2289 = vmatprep.subr.bf16.mxu0 0
  %2290 = vmatpush1.bf16.msra.mxu0 %v1172
  %2291 = vmatprep.subr.bf16.mxu0 0
  %2292 = vmatpush1.bf16.msra.mxu0 %v1173
  %2293 = vmatprep.subr.bf16.mxu0 0
  %2294 = vmatpush1.bf16.msra.mxu0 %v1174
  %2295 = vmatprep.subr.bf16.mxu0 0
  %2296 = vmatpush1.bf16.msra.mxu0 %v1175
  %2297 = vmatprep.subr.bf16.mxu0 0
  %2298 = vmatpush1.bf16.msra.mxu0 %v1176
  %2299 = vmatprep.subr.bf16.mxu0 0
  %2300 = vmatpush1.bf16.msra.mxu0 %v1177
  %2301 = vmatprep.subr.bf16.mxu0 0
  %2302 = vmatpush1.bf16.msra.mxu0 %v1178
  %2303 = vmatprep.subr.bf16.mxu0 0
  %2304 = vmatpush1.bf16.msra.mxu0 %v1179
  %2305 = vmatprep.subr.bf16.mxu0 0
  %2306 = vmatpush1.bf16.msra.mxu0 %v1180
  %2307 = vmatprep.subr.bf16.mxu0 0
  %2308 = vmatpush1.bf16.msra.mxu0 %v1181
  %2309 = vmatprep.mubr.bf16.mxu0 %v1930
  %2310 = vmatmul.mubr.bf16.gmra.mrb[0].mxu0 %v1929
  %v2311 = vpop.f32.mrb[0].mxu0
  %v2312 = vadd.f32 %v2264, %v2311
  %v2313 = vpop.f32.mrb[0].mxu0
  %v2314 = vpop.f32.mrb[0].mxu0
  %v2315 = vadd.f32 %v2267, %v2314
  %v2316 = vpop.f32.mrb[0].mxu0
  %2317 = vmatprep.mubr.bf16.mxu0 %v1948
  %2318 = vmatmul.mubr.bf16.gmra.mrb[0].mxu0 %v1947
  %v2319 = vpop.f32.mrb[0].mxu0
  %v2320 = vadd.f32 %v2272, %v2319
  %v2321 = vpop.f32.mrb[0].mxu0
  %v2322 = vpop.f32.mrb[0].mxu0
  %v2323 = vpop.f32.mrb[0].mxu0
  %2324 = vdwg.mxu0
  %2325 = vmatprep.subr.bf16.mxu0 0
  %2326 = vmatpush1.bf16.msra.mxu0 %v1182
  %2327 = vmatprep.subr.bf16.mxu0 0
  %2328 = vmatpush1.bf16.msra.mxu0 %v1183
  %2329 = vmatprep.subr.bf16.mxu0 0
  %2330 = vmatpush1.bf16.msra.mxu0 %v1184
  %2331 = vmatprep.subr.bf16.mxu0 0
  %2332 = vmatpush1.bf16.msra.mxu0 %v1185
  %2333 = vmatprep.subr.bf16.mxu0 0
  %2334 = vmatpush1.bf16.msra.mxu0 %v1186
  %2335 = vmatprep.subr.bf16.mxu0 0
  %2336 = vmatpush1.bf16.msra.mxu0 %v1187
  %2337 = vmatprep.subr.bf16.mxu0 0
  %2338 = vmatpush1.bf16.msra.mxu0 %v1188
  %2339 = vmatprep.subr.bf16.mxu0 0
  %2340 = vmatpush1.bf16.msra.mxu0 %v1189
  %2341 = vmatprep.subr.bf16.mxu0 0
  %2342 = vmatpush1.bf16.msra.mxu0 %v1190
  %2343 = vmatprep.subr.bf16.mxu0 0
  %2344 = vmatpush1.bf16.msra.mxu0 %v1191
  %2345 = vmatprep.subr.bf16.mxu0 0
  %2346 = vmatpush1.bf16.msra.mxu0 %v1192
  %2347 = vmatprep.subr.bf16.mxu0 0
  %2348 = vmatpush1.bf16.msra.mxu0 %v1193
  %2349 = vmatprep.subr.bf16.mxu0 0
  %2350 = vmatpush1.bf16.msra.mxu0 %v1194
  %2351 = vmatprep.subr.bf16.mxu0 0
  %2352 = vmatpush1.bf16.msra.mxu0 %v1195
  %2353 = vmatprep.subr.bf16.mxu0 0
  %2354 = vmatpush1.bf16.msra.mxu0 %v1196
  %2355 = vmatprep.subr.bf16.mxu0 0
  %2356 = vmatpush1.bf16.msra.mxu0 %v1197
  %2357 = vmatprep.mubr.bf16.mxu0 %v1932
  %2358 = vmatmul.mubr.bf16.gmra.mrb[0].mxu0 %v1931
  %v2359 = vpop.f32.mrb[0].mxu0
  %v2360 = vadd.f32 %v2312, %v2359
  %v2361 = vpop.f32.mrb[0].mxu0
  %v2362 = vpop.f32.mrb[0].mxu0
  %v2363 = vadd.f32 %v2315, %v2362
  %v2364 = vpop.f32.mrb[0].mxu0
  %2365 = vmatprep.mubr.bf16.mxu0 %v1950
  %2366 = vmatmul.mubr.bf16.gmra.mrb[0].mxu0 %v1949
  %v2367 = vpop.f32.mrb[0].mxu0
  %v2368 = vadd.f32 %v2320, %v2367
  %v2369 = vpop.f32.mrb[0].mxu0
  %v2370 = vpop.f32.mrb[0].mxu0
  %v2371 = vpop.f32.mrb[0].mxu0
  %2372 = vdwg.mxu0
  %2373 = vmatprep.subr.bf16.mxu0 0
  %2374 = vmatpush1.bf16.msra.mxu0 %v1198
  %2375 = vmatprep.subr.bf16.mxu0 0
  %2376 = vmatpush1.bf16.msra.mxu0 %v1199
  %2377 = vmatprep.subr.bf16.mxu0 0
  %2378 = vmatpush1.bf16.msra.mxu0 %v1200
  %2379 = vmatprep.subr.bf16.mxu0 0
  %2380 = vmatpush1.bf16.msra.mxu0 %v1201
  %2381 = vmatprep.subr.bf16.mxu0 0
  %2382 = vmatpush1.bf16.msra.mxu0 %v1202
  %2383 = vmatprep.subr.bf16.mxu0 0
  %2384 = vmatpush1.bf16.msra.mxu0 %v1203
  %2385 = vmatprep.subr.bf16.mxu0 0
  %2386 = vmatpush1.bf16.msra.mxu0 %v1204
  %2387 = vmatprep.subr.bf16.mxu0 0
  %2388 = vmatpush1.bf16.msra.mxu0 %v1205
  %2389 = vmatprep.subr.bf16.mxu0 0
  %2390 = vmatpush1.bf16.msra.mxu0 %v1206
  %2391 = vmatprep.subr.bf16.mxu0 0
  %2392 = vmatpush1.bf16.msra.mxu0 %v1207
  %2393 = vmatprep.subr.bf16.mxu0 0
  %2394 = vmatpush1.bf16.msra.mxu0 %v1208
  %2395 = vmatprep.subr.bf16.mxu0 0
  %2396 = vmatpush1.bf16.msra.mxu0 %v1209
  %2397 = vmatprep.subr.bf16.mxu0 0
  %2398 = vmatpush1.bf16.msra.mxu0 %v1210
  %2399 = vmatprep.subr.bf16.mxu0 0
  %2400 = vmatpush1.bf16.msra.mxu0 %v1211
  %2401 = vmatprep.subr.bf16.mxu0 0
  %2402 = vmatpush1.bf16.msra.mxu0 %v1212
  %2403 = vmatprep.subr.bf16.mxu0 0
  %2404 = vmatpush1.bf16.msra.mxu0 %v1213
  %2405 = vmatprep.mubr.bf16.mxu0 %v1934
  %2406 = vmatmul.mubr.bf16.gmra.mrb[0].mxu0 %v1933
  %v2407 = vpop.f32.mrb[0].mxu0
  %v2408 = vadd.f32 %v2360, %v2407
  %v2409 = vpop.f32.mrb[0].mxu0
  %v2410 = vpop.f32.mrb[0].mxu0
  %v2411 = vadd.f32 %v2363, %v2410
  %v2412 = vpop.f32.mrb[0].mxu0
  %2413 = vmatprep.mubr.bf16.mxu0 %v1952
  %2414 = vmatmul.mubr.bf16.gmra.mrb[0].mxu0 %v1951
  %v2415 = vpop.f32.mrb[0].mxu0
  %v2416 = vadd.f32 %v2368, %v2415
  %v2417 = vpop.f32.mrb[0].mxu0
  %v2418 = vpop.f32.mrb[0].mxu0
  %v2419 = vpop.f32.mrb[0].mxu0
  %2420 = vdwg.mxu0
  %v2421 = vmul.f32 %v2408, %v1794
  %v2422 = vmul.f32 %v2411, %v1794
  %v2423 = vmul.f32 %v2416, %v1794
  %v2424 = vadd.f32 %v2421, %v1803
  %v2425 = vadd.f32 %v2422, %v1803
  %v2426 = vadd.f32 %v2423, %v1803
  %v2427 = vmax.f32 %v1805, %v2424
  %v2428 = vmax.f32 %v1806, %v2425
  %v2429 = vmax.f32 %v1807, %v2426
  %s2430 = scalar_lea.vmem %s0, 432
  %v2431 = vld [vmem:[%s2430] sm:$0xff]
  %v2432 = vld [vmem:[%s2430 + $0x8] sm:$0xff]
  %v2433 = vld [vmem:[%s2430 + $0x10] sm:$0xff]
  %v2434 = vld [vmem:[%s2430 + $0x18] sm:$0xff]
  %v2435 = vld [vmem:[%s2430 + $0x20] sm:$0xff]
  %v2436 = vld [vmem:[%s2430 + $0x28] sm:$0xff]
  %v2437 = vld [vmem:[%s2430 + $0x30] sm:$0xff]
  %v2438 = vld [vmem:[%s2430 + $0x38] sm:$0xff]
  %v2439 = vld [vmem:[%s2430 + $0x40] sm:$0xff]
  %v2440 = vld [vmem:[%s2430 + $0x48] sm:$0xff]
  %v2441 = vld [vmem:[%s2430 + $0x50] sm:$0xff]
  %v2442 = vld [vmem:[%s2430 + $0x58] sm:$0xff]
  %v2443 = vld [vmem:[%s2430 + $0x60] sm:$0xff]
  %v2444 = vld [vmem:[%s2430 + $0x68] sm:$0xff]
  %v2445 = vld [vmem:[%s2430 + $0x70] sm:$0xff]
  %v2446 = vld [vmem:[%s2430 + $0x78] sm:$0xff]
  %v2447 = vld [vmem:[%s2430 + $0x80] sm:$0xff]
  %v2448 = vld [vmem:[%s2430 + $0x88] sm:$0xff]
  %v2449 = vld [vmem:[%s2430 + $0x90] sm:$0xff]
  %v2450 = vld [vmem:[%s2430 + $0x98] sm:$0xff]
  %v2451 = vld [vmem:[%s2430 + $0xa0] sm:$0xff]
  %v2452 = vld [vmem:[%s2430 + $0xa8] sm:$0xff]
  %v2453 = vld [vmem:[%s2430 + $0xb0] sm:$0xff]
  %v2454 = vld [vmem:[%s2430 + $0xb8] sm:$0xff]
  %v2455 = vld [vmem:[%s2430 + $0xc0] sm:$0xff]
  %v2456 = vld [vmem:[%s2430 + $0xc8] sm:$0xff]
  %v2457 = vld [vmem:[%s2430 + $0xd0] sm:$0xff]
  %v2485 = vunpack.c.l.b16 %v2431
  %v2486 = vunpack.c.h.b16 %v2431
  %v2487 = vunpack.c.l.b16 %v2432
  %v2488 = vunpack.c.h.b16 %v2432
  %v2489 = vunpack.c.l.b16 %v2433
  %v2490 = vunpack.c.h.b16 %v2433
  %v2491 = vunpack.c.l.b16 %v2434
  %v2492 = vunpack.c.h.b16 %v2434
  %v2493 = vunpack.c.l.b16 %v2435
  %v2494 = vunpack.c.h.b16 %v2435
  %v2495 = vunpack.c.l.b16 %v2436
  %v2496 = vunpack.c.h.b16 %v2436
  %v2497 = vunpack.c.l.b16 %v2437
  %v2498 = vunpack.c.h.b16 %v2437
  %v2499 = vunpack.c.l.b16 %v2438
  %v2500 = vunpack.c.h.b16 %v2438
  %v2501 = vunpack.c.l.b16 %v2439
  %v2502 = vunpack.c.h.b16 %v2439
  %v2503 = vunpack.c.l.b16 %v2440
  %v2504 = vunpack.c.h.b16 %v2440
  %v2505 = vunpack.c.l.b16 %v2441
  %v2506 = vunpack.c.h.b16 %v2441
  %v2507 = vunpack.c.l.b16 %v2442
  %v2508 = vunpack.c.h.b16 %v2442
  %v2509 = vunpack.c.l.b16 %v2443
  %v2510 = vunpack.c.h.b16 %v2443
  %v2511 = vunpack.c.l.b16 %v2444
  %v2512 = vunpack.c.h.b16 %v2444
  %v2513 = vunpack.c.l.b16 %v2445
  %v2514 = vunpack.c.h.b16 %v2445
  %v2515 = vunpack.c.l.b16 %v2446
  %v2516 = vunpack.c.h.b16 %v2446
  %v2517 = vunpack.c.l.b16 %v2447
  %v2518 = vunpack.c.h.b16 %v2447
  %v2519 = vunpack.c.l.b16 %v2448
  %v2520 = vunpack.c.h.b16 %v2448
  %v2521 = vunpack.c.l.b16 %v2449
  %v2522 = vunpack.c.h.b16 %v2449
  %v2523 = vunpack.c.l.b16 %v2450
  %v2524 = vunpack.c.h.b16 %v2450
  %v2525 = vunpack.c.l.b16 %v2451
  %v2526 = vunpack.c.h.b16 %v2451
  %v2527 = vunpack.c.l.b16 %v2452
  %v2528 = vunpack.c.h.b16 %v2452
  %v2529 = vunpack.c.l.b16 %v2453
  %v2530 = vunpack.c.h.b16 %v2453
  %v2531 = vunpack.c.l.b16 %v2454
  %v2532 = vunpack.c.h.b16 %v2454
  %v2533 = vunpack.c.l.b16 %v2455
  %v2534 = vunpack.c.h.b16 %v2455
  %v2535 = vunpack.c.l.b16 %v2456
  %v2536 = vunpack.c.h.b16 %v2456
  %v2537 = vunpack.c.l.b16 %v2457
  %v2538 = vunpack.c.h.b16 %v2457
  %v2539 = vpack.c.b16 %v2503, %v2485
  %v2540 = vpack.c.b16 %v2504, %v2486
  %v2541 = vpack.c.b16 %v2505, %v2487
  %v2542 = vpack.c.b16 %v2506, %v2488
  %v2543 = vpack.c.b16 %v2507, %v2489
  %v2544 = vpack.c.b16 %v2508, %v2490
  %v2545 = vpack.c.b16 %v2509, %v2491
  %v2546 = vpack.c.b16 %v2510, %v2492
  %v2547 = vpack.c.b16 %v2511, %v2493
  %v2548 = vpack.c.b16 %v2512, %v2494
  %v2549 = vpack.c.b16 %v2513, %v2495
  %v2550 = vpack.c.b16 %v2514, %v2496
  %v2551 = vpack.c.b16 %v2515, %v2497
  %v2552 = vpack.c.b16 %v2516, %v2498
  %v2553 = vpack.c.b16 %v2517, %v2499
  %v2554 = vpack.c.b16 %v2518, %v2500
  %v2555 = vpack.c.b16 %v2519, %v2501
  %v2556 = vpack.c.b16 %v2520, %v2502
  %v2557 = vpack.c.b16 %v2521, %v2521
  %v2558 = vpack.c.b16 %v2522, %v2522
  %v2559 = vpack.c.b16 %v2523, %v2523
  %v2560 = vpack.c.b16 %v2524, %v2524
  %v2561 = vpack.c.b16 %v2525, %v2525
  %v2562 = vpack.c.b16 %v2526, %v2526
  %v2563 = vpack.c.b16 %v2527, %v2527
  %v2564 = vpack.c.b16 %v2528, %v2528
  %v2565 = vpack.c.b16 %v2529, %v2529
  %v2566 = vpack.c.b16 %v2530, %v2530
  %v2567 = vpack.c.b16 %v2531, %v2531
  %v2568 = vpack.c.b16 %v2532, %v2532
  %v2569 = vpack.c.b16 %v2533, %v2533
  %v2570 = vpack.c.b16 %v2534, %v2534
  %v2571 = vpack.c.b16 %v2535, %v2535
  %v2572 = vpack.c.b16 %v2536, %v2536
  %v2573 = vpack.c.b16 %v2537, %v2537
  %v2574 = vpack.c.b16 %v2538, %v2538
  %2611 = vmatprep.subr.bf16.mxu0 0
  %2612 = vmatpush1.bf16.msra.mxu0 %v1070
  %2613 = vmatprep.subr.bf16.mxu0 0
  %2614 = vmatpush1.bf16.msra.mxu0 %v1071
  %2615 = vmatprep.subr.bf16.mxu0 0
  %2616 = vmatpush1.bf16.msra.mxu0 %v1072
  %2617 = vmatprep.subr.bf16.mxu0 0
  %2618 = vmatpush1.bf16.msra.mxu0 %v1073
  %2619 = vmatprep.subr.bf16.mxu0 0
  %2620 = vmatpush1.bf16.msra.mxu0 %v1074
  %2621 = vmatprep.subr.bf16.mxu0 0
  %2622 = vmatpush1.bf16.msra.mxu0 %v1075
  %2623 = vmatprep.subr.bf16.mxu0 0
  %2624 = vmatpush1.bf16.msra.mxu0 %v1076
  %2625 = vmatprep.subr.bf16.mxu0 0
  %2626 = vmatpush1.bf16.msra.mxu0 %v1077
  %2627 = vmatprep.subr.bf16.mxu0 0
  %2628 = vmatpush1.bf16.msra.mxu0 %v1078
  %2629 = vmatprep.subr.bf16.mxu0 0
  %2630 = vmatpush1.bf16.msra.mxu0 %v1079
  %2631 = vmatprep.subr.bf16.mxu0 0
  %2632 = vmatpush1.bf16.msra.mxu0 %v1080
  %2633 = vmatprep.subr.bf16.mxu0 0
  %2634 = vmatpush1.bf16.msra.mxu0 %v1081
  %2635 = vmatprep.subr.bf16.mxu0 0
  %2636 = vmatpush1.bf16.msra.mxu0 %v1082
  %2637 = vmatprep.subr.bf16.mxu0 0
  %2638 = vmatpush1.bf16.msra.mxu0 %v1083
  %2639 = vmatprep.subr.bf16.mxu0 0
  %2640 = vmatpush1.bf16.msra.mxu0 %v1084
  %2641 = vmatprep.subr.bf16.mxu0 0
  %2642 = vmatpush1.bf16.msra.mxu0 %v1085
  %2643 = vmatprep.mubr.bf16.mxu0 %v2540
  %2644 = vmatmul.mubr.bf16.gmra.mrb[0].mxu0 %v2539
  %v2645 = vpop.f32.mrb[0].mxu0
  %v2646 = vadd.f32 0.0, %v2645
  %v2647 = vpop.f32.mrb[0].mxu0
  %v2648 = vpop.f32.mrb[0].mxu0
  %v2649 = vadd.f32 0.0, %v2648
  %v2650 = vpop.f32.mrb[0].mxu0
  %2651 = vmatprep.mubr.bf16.mxu0 %v2558
  %2652 = vmatmul.mubr.bf16.gmra.mrb[0].mxu0 %v2557
  %v2653 = vpop.f32.mrb[0].mxu0
  %v2654 = vadd.f32 0.0, %v2653
  %v2655 = vpop.f32.mrb[0].mxu0
  %v2656 = vpop.f32.mrb[0].mxu0
  %v2657 = vpop.f32.mrb[0].mxu0
  %2658 = vdwg.mxu0
  %2659 = vmatprep.subr.bf16.mxu0 0
  %2660 = vmatpush1.bf16.msra.mxu0 %v1086
  %2661 = vmatprep.subr.bf16.mxu0 0
  %2662 = vmatpush1.bf16.msra.mxu0 %v1087
  %2663 = vmatprep.subr.bf16.mxu0 0
  %2664 = vmatpush1.bf16.msra.mxu0 %v1088
  %2665 = vmatprep.subr.bf16.mxu0 0
  %2666 = vmatpush1.bf16.msra.mxu0 %v1089
  %2667 = vmatprep.subr.bf16.mxu0 0
  %2668 = vmatpush1.bf16.msra.mxu0 %v1090
  %2669 = vmatprep.subr.bf16.mxu0 0
  %2670 = vmatpush1.bf16.msra.mxu0 %v1091
  %2671 = vmatprep.subr.bf16.mxu0 0
  %2672 = vmatpush1.bf16.msra.mxu0 %v1092
  %2673 = vmatprep.subr.bf16.mxu0 0
  %2674 = vmatpush1.bf16.msra.mxu0 %v1093
  %2675 = vmatprep.subr.bf16.mxu0 0
  %2676 = vmatpush1.bf16.msra.mxu0 %v1094
  %2677 = vmatprep.subr.bf16.mxu0 0
  %2678 = vmatpush1.bf16.msra.mxu0 %v1095
  %2679 = vmatprep.subr.bf16.mxu0 0
  %2680 = vmatpush1.bf16.msra.mxu0 %v1096
  %2681 = vmatprep.subr.bf16.mxu0 0
  %2682 = vmatpush1.bf16.msra.mxu0 %v1097
  %2683 = vmatprep.subr.bf16.mxu0 0
  %2684 = vmatpush1.bf16.msra.mxu0 %v1098
  %2685 = vmatprep.subr.bf16.mxu0 0
  %2686 = vmatpush1.bf16.msra.mxu0 %v1099
  %2687 = vmatprep.subr.bf16.mxu0 0
  %2688 = vmatpush1.bf16.msra.mxu0 %v1100
  %2689 = vmatprep.subr.bf16.mxu0 0
  %2690 = vmatpush1.bf16.msra.mxu0 %v1101
  %2691 = vmatprep.mubr.bf16.mxu0 %v2542
  %2692 = vmatmul.mubr.bf16.gmra.mrb[0].mxu0 %v2541
  %v2693 = vpop.f32.mrb[0].mxu0
  %v2694 = vadd.f32 %v2646, %v2693
  %v2695 = vpop.f32.mrb[0].mxu0
  %v2696 = vpop.f32.mrb[0].mxu0
  %v2697 = vadd.f32 %v2649, %v2696
  %v2698 = vpop.f32.mrb[0].mxu0
  %2699 = vmatprep.mubr.bf16.mxu0 %v2560
  %2700 = vmatmul.mubr.bf16.gmra.mrb[0].mxu0 %v2559
  %v2701 = vpop.f32.mrb[0].mxu0
  %v2702 = vadd.f32 %v2654, %v2701
  %v2703 = vpop.f32.mrb[0].mxu0
  %v2704 = vpop.f32.mrb[0].mxu0
  %v2705 = vpop.f32.mrb[0].mxu0
  %2706 = vdwg.mxu0
  %2707 = vmatprep.subr.bf16.mxu0 0
  %2708 = vmatpush1.bf16.msra.mxu0 %v1102
  %2709 = vmatprep.subr.bf16.mxu0 0
  %2710 = vmatpush1.bf16.msra.mxu0 %v1103
  %2711 = vmatprep.subr.bf16.mxu0 0
  %2712 = vmatpush1.bf16.msra.mxu0 %v1104
  %2713 = vmatprep.subr.bf16.mxu0 0
  %2714 = vmatpush1.bf16.msra.mxu0 %v1105
  %2715 = vmatprep.subr.bf16.mxu0 0
  %2716 = vmatpush1.bf16.msra.mxu0 %v1106
  %2717 = vmatprep.subr.bf16.mxu0 0
  %2718 = vmatpush1.bf16.msra.mxu0 %v1107
  %2719 = vmatprep.subr.bf16.mxu0 0
  %2720 = vmatpush1.bf16.msra.mxu0 %v1108
  %2721 = vmatprep.subr.bf16.mxu0 0
  %2722 = vmatpush1.bf16.msra.mxu0 %v1109
  %2723 = vmatprep.subr.bf16.mxu0 0
  %2724 = vmatpush1.bf16.msra.mxu0 %v1110
  %2725 = vmatprep.subr.bf16.mxu0 0
  %2726 = vmatpush1.bf16.msra.mxu0 %v1111
  %2727 = vmatprep.subr.bf16.mxu0 0
  %2728 = vmatpush1.bf16.msra.mxu0 %v1112
  %2729 = vmatprep.subr.bf16.mxu0 0
  %2730 = vmatpush1.bf16.msra.mxu0 %v1113
  %2731 = vmatprep.subr.bf16.mxu0 0
  %2732 = vmatpush1.bf16.msra.mxu0 %v1114
  %2733 = vmatprep.subr.bf16.mxu0 0
  %2734 = vmatpush1.bf16.msra.mxu0 %v1115
  %2735 = vmatprep.subr.bf16.mxu0 0
  %2736 = vmatpush1.bf16.msra.mxu0 %v1116
  %2737 = vmatprep.subr.bf16.mxu0 0
  %2738 = vmatpush1.bf16.msra.mxu0 %v1117
  %2739 = vmatprep.mubr.bf16.mxu0 %v2544
  %2740 = vmatmul.mubr.bf16.gmra.mrb[0].mxu0 %v2543
  %v2741 = vpop.f32.mrb[0].mxu0
  %v2742 = vadd.f32 %v2694, %v2741
  %v2743 = vpop.f32.mrb[0].mxu0
  %v2744 = vpop.f32.mrb[0].mxu0
  %v2745 = vadd.f32 %v2697, %v2744
  %v2746 = vpop.f32.mrb[0].mxu0
  %2747 = vmatprep.mubr.bf16.mxu0 %v2562
  %2748 = vmatmul.mubr.bf16.gmra.mrb[0].mxu0 %v2561
  %v2749 = vpop.f32.mrb[0].mxu0
  %v2750 = vadd.f32 %v2702, %v2749
  %v2751 = vpop.f32.mrb[0].mxu0
  %v2752 = vpop.f32.mrb[0].mxu0
  %v2753 = vpop.f32.mrb[0].mxu0
  %2754 = vdwg.mxu0
  %2755 = vmatprep.subr.bf16.mxu0 0
  %2756 = vmatpush1.bf16.msra.mxu0 %v1118
  %2757 = vmatprep.subr.bf16.mxu0 0
  %2758 = vmatpush1.bf16.msra.mxu0 %v1119
  %2759 = vmatprep.subr.bf16.mxu0 0
  %2760 = vmatpush1.bf16.msra.mxu0 %v1120
  %2761 = vmatprep.subr.bf16.mxu0 0
  %2762 = vmatpush1.bf16.msra.mxu0 %v1121
  %2763 = vmatprep.subr.bf16.mxu0 0
  %2764 = vmatpush1.bf16.msra.mxu0 %v1122
  %2765 = vmatprep.subr.bf16.mxu0 0
  %2766 = vmatpush1.bf16.msra.mxu0 %v1123
  %2767 = vmatprep.subr.bf16.mxu0 0
  %2768 = vmatpush1.bf16.msra.mxu0 %v1124
  %2769 = vmatprep.subr.bf16.mxu0 0
  %2770 = vmatpush1.bf16.msra.mxu0 %v1125
  %2771 = vmatprep.subr.bf16.mxu0 0
  %2772 = vmatpush1.bf16.msra.mxu0 %v1126
  %2773 = vmatprep.subr.bf16.mxu0 0
  %2774 = vmatpush1.bf16.msra.mxu0 %v1127
  %2775 = vmatprep.subr.bf16.mxu0 0
  %2776 = vmatpush1.bf16.msra.mxu0 %v1128
  %2777 = vmatprep.subr.bf16.mxu0 0
  %2778 = vmatpush1.bf16.msra.mxu0 %v1129
  %2779 = vmatprep.subr.bf16.mxu0 0
  %2780 = vmatpush1.bf16.msra.mxu0 %v1130
  %2781 = vmatprep.subr.bf16.mxu0 0
  %2782 = vmatpush1.bf16.msra.mxu0 %v1131
  %2783 = vmatprep.subr.bf16.mxu0 0
  %2784 = vmatpush1.bf16.msra.mxu0 %v1132
  %2785 = vmatprep.subr.bf16.mxu0 0
  %2786 = vmatpush1.bf16.msra.mxu0 %v1133
  %2787 = vmatprep.mubr.bf16.mxu0 %v2546
  %2788 = vmatmul.mubr.bf16.gmra.mrb[0].mxu0 %v2545
  %v2789 = vpop.f32.mrb[0].mxu0
  %v2790 = vadd.f32 %v2742, %v2789
  %v2791 = vpop.f32.mrb[0].mxu0
  %v2792 = vpop.f32.mrb[0].mxu0
  %v2793 = vadd.f32 %v2745, %v2792
  %v2794 = vpop.f32.mrb[0].mxu0
  %2795 = vmatprep.mubr.bf16.mxu0 %v2564
  %2796 = vmatmul.mubr.bf16.gmra.mrb[0].mxu0 %v2563
  %v2797 = vpop.f32.mrb[0].mxu0
  %v2798 = vadd.f32 %v2750, %v2797
  %v2799 = vpop.f32.mrb[0].mxu0
  %v2800 = vpop.f32.mrb[0].mxu0
  %v2801 = vpop.f32.mrb[0].mxu0
  %2802 = vdwg.mxu0
  %2803 = vmatprep.subr.bf16.mxu0 0
  %2804 = vmatpush1.bf16.msra.mxu0 %v1134
  %2805 = vmatprep.subr.bf16.mxu0 0
  %2806 = vmatpush1.bf16.msra.mxu0 %v1135
  %2807 = vmatprep.subr.bf16.mxu0 0
  %2808 = vmatpush1.bf16.msra.mxu0 %v1136
  %2809 = vmatprep.subr.bf16.mxu0 0
  %2810 = vmatpush1.bf16.msra.mxu0 %v1137
  %2811 = vmatprep.subr.bf16.mxu0 0
  %2812 = vmatpush1.bf16.msra.mxu0 %v1138
  %2813 = vmatprep.subr.bf16.mxu0 0
  %2814 = vmatpush1.bf16.msra.mxu0 %v1139
  %2815 = vmatprep.subr.bf16.mxu0 0
  %2816 = vmatpush1.bf16.msra.mxu0 %v1140
  %2817 = vmatprep.subr.bf16.mxu0 0
  %2818 = vmatpush1.bf16.msra.mxu0 %v1141
  %2819 = vmatprep.subr.bf16.mxu0 0
  %2820 = vmatpush1.bf16.msra.mxu0 %v1142
  %2821 = vmatprep.subr.bf16.mxu0 0
  %2822 = vmatpush1.bf16.msra.mxu0 %v1143
  %2823 = vmatprep.subr.bf16.mxu0 0
  %2824 = vmatpush1.bf16.msra.mxu0 %v1144
  %2825 = vmatprep.subr.bf16.mxu0 0
  %2826 = vmatpush1.bf16.msra.mxu0 %v1145
  %2827 = vmatprep.subr.bf16.mxu0 0
  %2828 = vmatpush1.bf16.msra.mxu0 %v1146
  %2829 = vmatprep.subr.bf16.mxu0 0
  %2830 = vmatpush1.bf16.msra.mxu0 %v1147
  %2831 = vmatprep.subr.bf16.mxu0 0
  %2832 = vmatpush1.bf16.msra.mxu0 %v1148
  %2833 = vmatprep.subr.bf16.mxu0 0
  %2834 = vmatpush1.bf16.msra.mxu0 %v1149
  %2835 = vmatprep.mubr.bf16.mxu0 %v2548
  %2836 = vmatmul.mubr.bf16.gmra.mrb[0].mxu0 %v2547
  %v2837 = vpop.f32.mrb[0].mxu0
  %v2838 = vadd.f32 %v2790, %v2837
  %v2839 = vpop.f32.mrb[0].mxu0
  %v2840 = vpop.f32.mrb[0].mxu0
  %v2841 = vadd.f32 %v2793, %v2840
  %v2842 = vpop.f32.mrb[0].mxu0
  %2843 = vmatprep.mubr.bf16.mxu0 %v2566
  %2844 = vmatmul.mubr.bf16.gmra.mrb[0].mxu0 %v2565
  %v2845 = vpop.f32.mrb[0].mxu0
  %v2846 = vadd.f32 %v2798, %v2845
  %v2847 = vpop.f32.mrb[0].mxu0
  %v2848 = vpop.f32.mrb[0].mxu0
  %v2849 = vpop.f32.mrb[0].mxu0
  %2850 = vdwg.mxu0
  %2851 = vmatprep.subr.bf16.mxu0 0
  %2852 = vmatpush1.bf16.msra.mxu0 %v1150
  %2853 = vmatprep.subr.bf16.mxu0 0
  %2854 = vmatpush1.bf16.msra.mxu0 %v1151
  %2855 = vmatprep.subr.bf16.mxu0 0
  %2856 = vmatpush1.bf16.msra.mxu0 %v1152
  %2857 = vmatprep.subr.bf16.mxu0 0
  %2858 = vmatpush1.bf16.msra.mxu0 %v1153
  %2859 = vmatprep.subr.bf16.mxu0 0
  %2860 = vmatpush1.bf16.msra.mxu0 %v1154
  %2861 = vmatprep.subr.bf16.mxu0 0
  %2862 = vmatpush1.bf16.msra.mxu0 %v1155
  %2863 = vmatprep.subr.bf16.mxu0 0
  %2864 = vmatpush1.bf16.msra.mxu0 %v1156
  %2865 = vmatprep.subr.bf16.mxu0 0
  %2866 = vmatpush1.bf16.msra.mxu0 %v1157
  %2867 = vmatprep.subr.bf16.mxu0 0
  %2868 = vmatpush1.bf16.msra.mxu0 %v1158
  %2869 = vmatprep.subr.bf16.mxu0 0
  %2870 = vmatpush1.bf16.msra.mxu0 %v1159
  %2871 = vmatprep.subr.bf16.mxu0 0
  %2872 = vmatpush1.bf16.msra.mxu0 %v1160
  %2873 = vmatprep.subr.bf16.mxu0 0
  %2874 = vmatpush1.bf16.msra.mxu0 %v1161
  %2875 = vmatprep.subr.bf16.mxu0 0
  %2876 = vmatpush1.bf16.msra.mxu0 %v1162
  %2877 = vmatprep.subr.bf16.mxu0 0
  %2878 = vmatpush1.bf16.msra.mxu0 %v1163
  %2879 = vmatprep.subr.bf16.mxu0 0
  %2880 = vmatpush1.bf16.msra.mxu0 %v1164
  %2881 = vmatprep.subr.bf16.mxu0 0
  %2882 = vmatpush1.bf16.msra.mxu0 %v1165
  %2883 = vmatprep.mubr.bf16.mxu0 %v2550
  %2884 = vmatmul.mubr.bf16.gmra.mrb[0].mxu0 %v2549
  %v2885 = vpop.f32.mrb[0].mxu0
  %v2886 = vadd.f32 %v2838, %v2885
  %v2887 = vpop.f32.mrb[0].mxu0
  %v2888 = vpop.f32.mrb[0].mxu0
  %v2889 = vadd.f32 %v2841, %v2888
  %v2890 = vpop.f32.mrb[0].mxu0
  %2891 = vmatprep.mubr.bf16.mxu0 %v2568
  %2892 = vmatmul.mubr.bf16.gmra.mrb[0].mxu0 %v2567
  %v2893 = vpop.f32.mrb[0].mxu0
  %v2894 = vadd.f32 %v2846, %v2893
  %v2895 = vpop.f32.mrb[0].mxu0
  %v2896 = vpop.f32.mrb[0].mxu0
  %v2897 = vpop.f32.mrb[0].mxu0
  %2898 = vdwg.mxu0
  %2899 = vmatprep.subr.bf16.mxu0 0
  %2900 = vmatpush1.bf16.msra.mxu0 %v1166
  %2901 = vmatprep.subr.bf16.mxu0 0
  %2902 = vmatpush1.bf16.msra.mxu0 %v1167
  %2903 = vmatprep.subr.bf16.mxu0 0
  %2904 = vmatpush1.bf16.msra.mxu0 %v1168
  %2905 = vmatprep.subr.bf16.mxu0 0
  %2906 = vmatpush1.bf16.msra.mxu0 %v1169
  %2907 = vmatprep.subr.bf16.mxu0 0
  %2908 = vmatpush1.bf16.msra.mxu0 %v1170
  %2909 = vmatprep.subr.bf16.mxu0 0
  %2910 = vmatpush1.bf16.msra.mxu0 %v1171
  %2911 = vmatprep.subr.bf16.mxu0 0
  %2912 = vmatpush1.bf16.msra.mxu0 %v1172
  %2913 = vmatprep.subr.bf16.mxu0 0
  %2914 = vmatpush1.bf16.msra.mxu0 %v1173
  %2915 = vmatprep.subr.bf16.mxu0 0
  %2916 = vmatpush1.bf16.msra.mxu0 %v1174
  %2917 = vmatprep.subr.bf16.mxu0 0
  %2918 = vmatpush1.bf16.msra.mxu0 %v1175
  %2919 = vmatprep.subr.bf16.mxu0 0
  %2920 = vmatpush1.bf16.msra.mxu0 %v1176
  %2921 = vmatprep.subr.bf16.mxu0 0
  %2922 = vmatpush1.bf16.msra.mxu0 %v1177
  %2923 = vmatprep.subr.bf16.mxu0 0
  %2924 = vmatpush1.bf16.msra.mxu0 %v1178
  %2925 = vmatprep.subr.bf16.mxu0 0
  %2926 = vmatpush1.bf16.msra.mxu0 %v1179
  %2927 = vmatprep.subr.bf16.mxu0 0
  %2928 = vmatpush1.bf16.msra.mxu0 %v1180
  %2929 = vmatprep.subr.bf16.mxu0 0
  %2930 = vmatpush1.bf16.msra.mxu0 %v1181
  %2931 = vmatprep.mubr.bf16.mxu0 %v2552
  %2932 = vmatmul.mubr.bf16.gmra.mrb[0].mxu0 %v2551
  %v2933 = vpop.f32.mrb[0].mxu0
  %v2934 = vadd.f32 %v2886, %v2933
  %v2935 = vpop.f32.mrb[0].mxu0
  %v2936 = vpop.f32.mrb[0].mxu0
  %v2937 = vadd.f32 %v2889, %v2936
  %v2938 = vpop.f32.mrb[0].mxu0
  %2939 = vmatprep.mubr.bf16.mxu0 %v2570
  %2940 = vmatmul.mubr.bf16.gmra.mrb[0].mxu0 %v2569
  %v2941 = vpop.f32.mrb[0].mxu0
  %v2942 = vadd.f32 %v2894, %v2941
  %v2943 = vpop.f32.mrb[0].mxu0
  %v2944 = vpop.f32.mrb[0].mxu0
  %v2945 = vpop.f32.mrb[0].mxu0
  %2946 = vdwg.mxu0
  %2947 = vmatprep.subr.bf16.mxu0 0
  %2948 = vmatpush1.bf16.msra.mxu0 %v1182
  %2949 = vmatprep.subr.bf16.mxu0 0
  %2950 = vmatpush1.bf16.msra.mxu0 %v1183
  %2951 = vmatprep.subr.bf16.mxu0 0
  %2952 = vmatpush1.bf16.msra.mxu0 %v1184
  %2953 = vmatprep.subr.bf16.mxu0 0
  %2954 = vmatpush1.bf16.msra.mxu0 %v1185
  %2955 = vmatprep.subr.bf16.mxu0 0
  %2956 = vmatpush1.bf16.msra.mxu0 %v1186
  %2957 = vmatprep.subr.bf16.mxu0 0
  %2958 = vmatpush1.bf16.msra.mxu0 %v1187
  %2959 = vmatprep.subr.bf16.mxu0 0
  %2960 = vmatpush1.bf16.msra.mxu0 %v1188
  %2961 = vmatprep.subr.bf16.mxu0 0
  %2962 = vmatpush1.bf16.msra.mxu0 %v1189
  %2963 = vmatprep.subr.bf16.mxu0 0
  %2964 = vmatpush1.bf16.msra.mxu0 %v1190
  %2965 = vmatprep.subr.bf16.mxu0 0
  %2966 = vmatpush1.bf16.msra.mxu0 %v1191
  %2967 = vmatprep.subr.bf16.mxu0 0
  %2968 = vmatpush1.bf16.msra.mxu0 %v1192
  %2969 = vmatprep.subr.bf16.mxu0 0
  %2970 = vmatpush1.bf16.msra.mxu0 %v1193
  %2971 = vmatprep.subr.bf16.mxu0 0
  %2972 = vmatpush1.bf16.msra.mxu0 %v1194
  %2973 = vmatprep.subr.bf16.mxu0 0
  %2974 = vmatpush1.bf16.msra.mxu0 %v1195
  %2975 = vmatprep.subr.bf16.mxu0 0
  %2976 = vmatpush1.bf16.msra.mxu0 %v1196
  %2977 = vmatprep.subr.bf16.mxu0 0
  %2978 = vmatpush1.bf16.msra.mxu0 %v1197
  %2979 = vmatprep.mubr.bf16.mxu0 %v2554
  %2980 = vmatmul.mubr.bf16.gmra.mrb[0].mxu0 %v2553
  %v2981 = vpop.f32.mrb[0].mxu0
  %v2982 = vadd.f32 %v2934, %v2981
  %v2983 = vpop.f32.mrb[0].mxu0
  %v2984 = vpop.f32.mrb[0].mxu0
  %v2985 = vadd.f32 %v2937, %v2984
  %v2986 = vpop.f32.mrb[0].mxu0
  %2987 = vmatprep.mubr.bf16.mxu0 %v2572
  %2988 = vmatmul.mubr.bf16.gmra.mrb[0].mxu0 %v2571
  %v2989 = vpop.f32.mrb[0].mxu0
  %v2990 = vadd.f32 %v2942, %v2989
  %v2991 = vpop.f32.mrb[0].mxu0
  %v2992 = vpop.f32.mrb[0].mxu0
  %v2993 = vpop.f32.mrb[0].mxu0
  %2994 = vdwg.mxu0
  %2995 = vmatprep.subr.bf16.mxu0 0
  %2996 = vmatpush1.bf16.msra.mxu0 %v1198
  %2997 = vmatprep.subr.bf16.mxu0 0
  %2998 = vmatpush1.bf16.msra.mxu0 %v1199
  %2999 = vmatprep.subr.bf16.mxu0 0
  %3000 = vmatpush1.bf16.msra.mxu0 %v1200
  %3001 = vmatprep.subr.bf16.mxu0 0
  %3002 = vmatpush1.bf16.msra.mxu0 %v1201
  %3003 = vmatprep.subr.bf16.mxu0 0
  %3004 = vmatpush1.bf16.msra.mxu0 %v1202
  %3005 = vmatprep.subr.bf16.mxu0 0
  %3006 = vmatpush1.bf16.msra.mxu0 %v1203
  %3007 = vmatprep.subr.bf16.mxu0 0
  %3008 = vmatpush1.bf16.msra.mxu0 %v1204
  %3009 = vmatprep.subr.bf16.mxu0 0
  %3010 = vmatpush1.bf16.msra.mxu0 %v1205
  %3011 = vmatprep.subr.bf16.mxu0 0
  %3012 = vmatpush1.bf16.msra.mxu0 %v1206
  %3013 = vmatprep.subr.bf16.mxu0 0
  %3014 = vmatpush1.bf16.msra.mxu0 %v1207
  %3015 = vmatprep.subr.bf16.mxu0 0
  %3016 = vmatpush1.bf16.msra.mxu0 %v1208
  %3017 = vmatprep.subr.bf16.mxu0 0
  %3018 = vmatpush1.bf16.msra.mxu0 %v1209
  %3019 = vmatprep.subr.bf16.mxu0 0
  %3020 = vmatpush1.bf16.msra.mxu0 %v1210
  %3021 = vmatprep.subr.bf16.mxu0 0
  %3022 = vmatpush1.bf16.msra.mxu0 %v1211
  %3023 = vmatprep.subr.bf16.mxu0 0
  %3024 = vmatpush1.bf16.msra.mxu0 %v1212
  %3025 = vmatprep.subr.bf16.mxu0 0
  %3026 = vmatpush1.bf16.msra.mxu0 %v1213
  %3027 = vmatprep.mubr.bf16.mxu0 %v2556
  %3028 = vmatmul.mubr.bf16.gmra.mrb[0].mxu0 %v2555
  %v3029 = vpop.f32.mrb[0].mxu0
  %v3030 = vadd.f32 %v2982, %v3029
  %v3031 = vpop.f32.mrb[0].mxu0
  %v3032 = vpop.f32.mrb[0].mxu0
  %v3033 = vadd.f32 %v2985, %v3032
  %v3034 = vpop.f32.mrb[0].mxu0
  %3035 = vmatprep.mubr.bf16.mxu0 %v2574
  %3036 = vmatmul.mubr.bf16.gmra.mrb[0].mxu0 %v2573
  %v3037 = vpop.f32.mrb[0].mxu0
  %v3038 = vadd.f32 %v2990, %v3037
  %v3039 = vpop.f32.mrb[0].mxu0
  %v3040 = vpop.f32.mrb[0].mxu0
  %v3041 = vpop.f32.mrb[0].mxu0
  %3042 = vdwg.mxu0
  %v3043 = vmul.f32 %v3030, %v1794
  %v3044 = vmul.f32 %v3033, %v1794
  %v3045 = vmul.f32 %v3038, %v1794
  %v3046 = vadd.f32 %v3043, %v1803
  %v3047 = vadd.f32 %v3044, %v1803
  %v3048 = vadd.f32 %v3045, %v1803
  %v3049 = vmax.f32 %v2427, %v3046
  %v3050 = vmax.f32 %v2428, %v3047
  %v3051 = vmax.f32 %v2429, %v3048
  %s3052 = scalar_lea.vmem %s0, 648
  %v3053 = vld [vmem:[%s3052] sm:$0xff]
  %v3054 = vld [vmem:[%s3052 + $0x8] sm:$0xff]
  %v3055 = vld [vmem:[%s3052 + $0x10] sm:$0xff]
  %v3056 = vld [vmem:[%s3052 + $0x18] sm:$0xff]
  %v3057 = vld [vmem:[%s3052 + $0x20] sm:$0xff]
  %v3058 = vld [vmem:[%s3052 + $0x28] sm:$0xff]
  %v3059 = vld [vmem:[%s3052 + $0x30] sm:$0xff]
  %v3060 = vld [vmem:[%s3052 + $0x38] sm:$0xff]
  %v3061 = vld [vmem:[%s3052 + $0x40] sm:$0xff]
  %v3062 = vld [vmem:[%s3052 + $0x48] sm:$0xff]
  %v3063 = vld [vmem:[%s3052 + $0x50] sm:$0xff]
  %v3064 = vld [vmem:[%s3052 + $0x58] sm:$0xff]
  %v3065 = vld [vmem:[%s3052 + $0x60] sm:$0xff]
  %v3066 = vld [vmem:[%s3052 + $0x68] sm:$0xff]
  %v3067 = vld [vmem:[%s3052 + $0x70] sm:$0xff]
  %v3068 = vld [vmem:[%s3052 + $0x78] sm:$0xff]
  %v3069 = vld [vmem:[%s3052 + $0x80] sm:$0xff]
  %v3070 = vld [vmem:[%s3052 + $0x88] sm:$0xff]
  %v3071 = vld [vmem:[%s3052 + $0x90] sm:$0xff]
  %v3072 = vld [vmem:[%s3052 + $0x98] sm:$0xff]
  %v3073 = vld [vmem:[%s3052 + $0xa0] sm:$0xff]
  %v3074 = vld [vmem:[%s3052 + $0xa8] sm:$0xff]
  %v3075 = vld [vmem:[%s3052 + $0xb0] sm:$0xff]
  %v3076 = vld [vmem:[%s3052 + $0xb8] sm:$0xff]
  %v3077 = vld [vmem:[%s3052 + $0xc0] sm:$0xff]
  %v3078 = vld [vmem:[%s3052 + $0xc8] sm:$0xff]
  %v3079 = vld [vmem:[%s3052 + $0xd0] sm:$0xff]
  %v3107 = vunpack.c.l.b16 %v3053
  %v3108 = vunpack.c.h.b16 %v3053
  %v3109 = vunpack.c.l.b16 %v3054
  %v3110 = vunpack.c.h.b16 %v3054
  %v3111 = vunpack.c.l.b16 %v3055
  %v3112 = vunpack.c.h.b16 %v3055
  %v3113 = vunpack.c.l.b16 %v3056
  %v3114 = vunpack.c.h.b16 %v3056
  %v3115 = vunpack.c.l.b16 %v3057
  %v3116 = vunpack.c.h.b16 %v3057
  %v3117 = vunpack.c.l.b16 %v3058
  %v3118 = vunpack.c.h.b16 %v3058
  %v3119 = vunpack.c.l.b16 %v3059
  %v3120 = vunpack.c.h.b16 %v3059
  %v3121 = vunpack.c.l.b16 %v3060
  %v3122 = vunpack.c.h.b16 %v3060
  %v3123 = vunpack.c.l.b16 %v3061
  %v3124 = vunpack.c.h.b16 %v3061
  %v3125 = vunpack.c.l.b16 %v3062
  %v3126 = vunpack.c.h.b16 %v3062
  %v3127 = vunpack.c.l.b16 %v3063
  %v3128 = vunpack.c.h.b16 %v3063
  %v3129 = vunpack.c.l.b16 %v3064
  %v3130 = vunpack.c.h.b16 %v3064
  %v3131 = vunpack.c.l.b16 %v3065
  %v3132 = vunpack.c.h.b16 %v3065
  %v3133 = vunpack.c.l.b16 %v3066
  %v3134 = vunpack.c.h.b16 %v3066
  %v3135 = vunpack.c.l.b16 %v3067
  %v3136 = vunpack.c.h.b16 %v3067
  %v3137 = vunpack.c.l.b16 %v3068
  %v3138 = vunpack.c.h.b16 %v3068
  %v3139 = vunpack.c.l.b16 %v3069
  %v3140 = vunpack.c.h.b16 %v3069
  %v3141 = vunpack.c.l.b16 %v3070
  %v3142 = vunpack.c.h.b16 %v3070
  %v3143 = vunpack.c.l.b16 %v3071
  %v3144 = vunpack.c.h.b16 %v3071
  %v3145 = vunpack.c.l.b16 %v3072
  %v3146 = vunpack.c.h.b16 %v3072
  %v3147 = vunpack.c.l.b16 %v3073
  %v3148 = vunpack.c.h.b16 %v3073
  %v3149 = vunpack.c.l.b16 %v3074
  %v3150 = vunpack.c.h.b16 %v3074
  %v3151 = vunpack.c.l.b16 %v3075
  %v3152 = vunpack.c.h.b16 %v3075
  %v3153 = vunpack.c.l.b16 %v3076
  %v3154 = vunpack.c.h.b16 %v3076
  %v3155 = vunpack.c.l.b16 %v3077
  %v3156 = vunpack.c.h.b16 %v3077
  %v3157 = vunpack.c.l.b16 %v3078
  %v3158 = vunpack.c.h.b16 %v3078
  %v3159 = vunpack.c.l.b16 %v3079
  %v3160 = vunpack.c.h.b16 %v3079
  %v3161 = vpack.c.b16 %v3125, %v3107
  %v3162 = vpack.c.b16 %v3126, %v3108
  %v3163 = vpack.c.b16 %v3127, %v3109
  %v3164 = vpack.c.b16 %v3128, %v3110
  %v3165 = vpack.c.b16 %v3129, %v3111
  %v3166 = vpack.c.b16 %v3130, %v3112
  %v3167 = vpack.c.b16 %v3131, %v3113
  %v3168 = vpack.c.b16 %v3132, %v3114
  %v3169 = vpack.c.b16 %v3133, %v3115
  %v3170 = vpack.c.b16 %v3134, %v3116
  %v3171 = vpack.c.b16 %v3135, %v3117
  %v3172 = vpack.c.b16 %v3136, %v3118
  %v3173 = vpack.c.b16 %v3137, %v3119
  %v3174 = vpack.c.b16 %v3138, %v3120
  %v3175 = vpack.c.b16 %v3139, %v3121
  %v3176 = vpack.c.b16 %v3140, %v3122
  %v3177 = vpack.c.b16 %v3141, %v3123
  %v3178 = vpack.c.b16 %v3142, %v3124
  %v3179 = vpack.c.b16 %v3143, %v3143
  %v3180 = vpack.c.b16 %v3144, %v3144
  %v3181 = vpack.c.b16 %v3145, %v3145
  %v3182 = vpack.c.b16 %v3146, %v3146
  %v3183 = vpack.c.b16 %v3147, %v3147
  %v3184 = vpack.c.b16 %v3148, %v3148
  %v3185 = vpack.c.b16 %v3149, %v3149
  %v3186 = vpack.c.b16 %v3150, %v3150
  %v3187 = vpack.c.b16 %v3151, %v3151
  %v3188 = vpack.c.b16 %v3152, %v3152
  %v3189 = vpack.c.b16 %v3153, %v3153
  %v3190 = vpack.c.b16 %v3154, %v3154
  %v3191 = vpack.c.b16 %v3155, %v3155
  %v3192 = vpack.c.b16 %v3156, %v3156
  %v3193 = vpack.c.b16 %v3157, %v3157
  %v3194 = vpack.c.b16 %v3158, %v3158
  %v3195 = vpack.c.b16 %v3159, %v3159
  %v3196 = vpack.c.b16 %v3160, %v3160
  %3233 = vmatprep.subr.bf16.mxu0 0
  %3234 = vmatpush1.bf16.msra.mxu0 %v1070
  %3235 = vmatprep.subr.bf16.mxu0 0
  %3236 = vmatpush1.bf16.msra.mxu0 %v1071
  %3237 = vmatprep.subr.bf16.mxu0 0
  %3238 = vmatpush1.bf16.msra.mxu0 %v1072
  %3239 = vmatprep.subr.bf16.mxu0 0
  %3240 = vmatpush1.bf16.msra.mxu0 %v1073
  %3241 = vmatprep.subr.bf16.mxu0 0
  %3242 = vmatpush1.bf16.msra.mxu0 %v1074
  %3243 = vmatprep.subr.bf16.mxu0 0
  %3244 = vmatpush1.bf16.msra.mxu0 %v1075
  %3245 = vmatprep.subr.bf16.mxu0 0
  %3246 = vmatpush1.bf16.msra.mxu0 %v1076
  %3247 = vmatprep.subr.bf16.mxu0 0
  %3248 = vmatpush1.bf16.msra.mxu0 %v1077
  %3249 = vmatprep.subr.bf16.mxu0 0
  %3250 = vmatpush1.bf16.msra.mxu0 %v1078
  %3251 = vmatprep.subr.bf16.mxu0 0
  %3252 = vmatpush1.bf16.msra.mxu0 %v1079
  %3253 = vmatprep.subr.bf16.mxu0 0
  %3254 = vmatpush1.bf16.msra.mxu0 %v1080
  %3255 = vmatprep.subr.bf16.mxu0 0
  %3256 = vmatpush1.bf16.msra.mxu0 %v1081
  %3257 = vmatprep.subr.bf16.mxu0 0
  %3258 = vmatpush1.bf16.msra.mxu0 %v1082
  %3259 = vmatprep.subr.bf16.mxu0 0
  %3260 = vmatpush1.bf16.msra.mxu0 %v1083
  %3261 = vmatprep.subr.bf16.mxu0 0
  %3262 = vmatpush1.bf16.msra.mxu0 %v1084
  %3263 = vmatprep.subr.bf16.mxu0 0
  %3264 = vmatpush1.bf16.msra.mxu0 %v1085
  %3265 = vmatprep.mubr.bf16.mxu0 %v3162
  %3266 = vmatmul.mubr.bf16.gmra.mrb[0].mxu0 %v3161
  %v3267 = vpop.f32.mrb[0].mxu0
  %v3268 = vadd.f32 0.0, %v3267
  %v3269 = vpop.f32.mrb[0].mxu0
  %v3270 = vpop.f32.mrb[0].mxu0
  %v3271 = vadd.f32 0.0, %v3270
  %v3272 = vpop.f32.mrb[0].mxu0
  %3273 = vmatprep.mubr.bf16.mxu0 %v3180
  %3274 = vmatmul.mubr.bf16.gmra.mrb[0].mxu0 %v3179
  %v3275 = vpop.f32.mrb[0].mxu0
  %v3276 = vadd.f32 0.0, %v3275
  %v3277 = vpop.f32.mrb[0].mxu0
  %v3278 = vpop.f32.mrb[0].mxu0
  %v3279 = vpop.f32.mrb[0].mxu0
  %3280 = vdwg.mxu0
  %3281 = vmatprep.subr.bf16.mxu0 0
  %3282 = vmatpush1.bf16.msra.mxu0 %v1086
  %3283 = vmatprep.subr.bf16.mxu0 0
  %3284 = vmatpush1.bf16.msra.mxu0 %v1087
  %3285 = vmatprep.subr.bf16.mxu0 0
  %3286 = vmatpush1.bf16.msra.mxu0 %v1088
  %3287 = vmatprep.subr.bf16.mxu0 0
  %3288 = vmatpush1.bf16.msra.mxu0 %v1089
  %3289 = vmatprep.subr.bf16.mxu0 0
  %3290 = vmatpush1.bf16.msra.mxu0 %v1090
  %3291 = vmatprep.subr.bf16.mxu0 0
  %3292 = vmatpush1.bf16.msra.mxu0 %v1091
  %3293 = vmatprep.subr.bf16.mxu0 0
  %3294 = vmatpush1.bf16.msra.mxu0 %v1092
  %3295 = vmatprep.subr.bf16.mxu0 0
  %3296 = vmatpush1.bf16.msra.mxu0 %v1093
  %3297 = vmatprep.subr.bf16.mxu0 0
  %3298 = vmatpush1.bf16.msra.mxu0 %v1094
  %3299 = vmatprep.subr.bf16.mxu0 0
  %3300 = vmatpush1.bf16.msra.mxu0 %v1095
  %3301 = vmatprep.subr.bf16.mxu0 0
  %3302 = vmatpush1.bf16.msra.mxu0 %v1096
  %3303 = vmatprep.subr.bf16.mxu0 0
  %3304 = vmatpush1.bf16.msra.mxu0 %v1097
  %3305 = vmatprep.subr.bf16.mxu0 0
  %3306 = vmatpush1.bf16.msra.mxu0 %v1098
  %3307 = vmatprep.subr.bf16.mxu0 0
  %3308 = vmatpush1.bf16.msra.mxu0 %v1099
  %3309 = vmatprep.subr.bf16.mxu0 0
  %3310 = vmatpush1.bf16.msra.mxu0 %v1100
  %3311 = vmatprep.subr.bf16.mxu0 0
  %3312 = vmatpush1.bf16.msra.mxu0 %v1101
  %3313 = vmatprep.mubr.bf16.mxu0 %v3164
  %3314 = vmatmul.mubr.bf16.gmra.mrb[0].mxu0 %v3163
  %v3315 = vpop.f32.mrb[0].mxu0
  %v3316 = vadd.f32 %v3268, %v3315
  %v3317 = vpop.f32.mrb[0].mxu0
  %v3318 = vpop.f32.mrb[0].mxu0
  %v3319 = vadd.f32 %v3271, %v3318
  %v3320 = vpop.f32.mrb[0].mxu0
  %3321 = vmatprep.mubr.bf16.mxu0 %v3182
  %3322 = vmatmul.mubr.bf16.gmra.mrb[0].mxu0 %v3181
  %v3323 = vpop.f32.mrb[0].mxu0
  %v3324 = vadd.f32 %v3276, %v3323
  %v3325 = vpop.f32.mrb[0].mxu0
  %v3326 = vpop.f32.mrb[0].mxu0
  %v3327 = vpop.f32.mrb[0].mxu0
  %3328 = vdwg.mxu0
  %3329 = vmatprep.subr.bf16.mxu0 0
  %3330 = vmatpush1.bf16.msra.mxu0 %v1102
  %3331 = vmatprep.subr.bf16.mxu0 0
  %3332 = vmatpush1.bf16.msra.mxu0 %v1103
  %3333 = vmatprep.subr.bf16.mxu0 0
  %3334 = vmatpush1.bf16.msra.mxu0 %v1104
  %3335 = vmatprep.subr.bf16.mxu0 0
  %3336 = vmatpush1.bf16.msra.mxu0 %v1105
  %3337 = vmatprep.subr.bf16.mxu0 0
  %3338 = vmatpush1.bf16.msra.mxu0 %v1106
  %3339 = vmatprep.subr.bf16.mxu0 0
  %3340 = vmatpush1.bf16.msra.mxu0 %v1107
  %3341 = vmatprep.subr.bf16.mxu0 0
  %3342 = vmatpush1.bf16.msra.mxu0 %v1108
  %3343 = vmatprep.subr.bf16.mxu0 0
  %3344 = vmatpush1.bf16.msra.mxu0 %v1109
  %3345 = vmatprep.subr.bf16.mxu0 0
  %3346 = vmatpush1.bf16.msra.mxu0 %v1110
  %3347 = vmatprep.subr.bf16.mxu0 0
  %3348 = vmatpush1.bf16.msra.mxu0 %v1111
  %3349 = vmatprep.subr.bf16.mxu0 0
  %3350 = vmatpush1.bf16.msra.mxu0 %v1112
  %3351 = vmatprep.subr.bf16.mxu0 0
  %3352 = vmatpush1.bf16.msra.mxu0 %v1113
  %3353 = vmatprep.subr.bf16.mxu0 0
  %3354 = vmatpush1.bf16.msra.mxu0 %v1114
  %3355 = vmatprep.subr.bf16.mxu0 0
  %3356 = vmatpush1.bf16.msra.mxu0 %v1115
  %3357 = vmatprep.subr.bf16.mxu0 0
  %3358 = vmatpush1.bf16.msra.mxu0 %v1116
  %3359 = vmatprep.subr.bf16.mxu0 0
  %3360 = vmatpush1.bf16.msra.mxu0 %v1117
  %3361 = vmatprep.mubr.bf16.mxu0 %v3166
  %3362 = vmatmul.mubr.bf16.gmra.mrb[0].mxu0 %v3165
  %v3363 = vpop.f32.mrb[0].mxu0
  %v3364 = vadd.f32 %v3316, %v3363
  %v3365 = vpop.f32.mrb[0].mxu0
  %v3366 = vpop.f32.mrb[0].mxu0
  %v3367 = vadd.f32 %v3319, %v3366
  %v3368 = vpop.f32.mrb[0].mxu0
  %3369 = vmatprep.mubr.bf16.mxu0 %v3184
  %3370 = vmatmul.mubr.bf16.gmra.mrb[0].mxu0 %v3183
  %v3371 = vpop.f32.mrb[0].mxu0
  %v3372 = vadd.f32 %v3324, %v3371
  %v3373 = vpop.f32.mrb[0].mxu0
  %v3374 = vpop.f32.mrb[0].mxu0
  %v3375 = vpop.f32.mrb[0].mxu0
  %3376 = vdwg.mxu0
  %3377 = vmatprep.subr.bf16.mxu0 0
  %3378 = vmatpush1.bf16.msra.mxu0 %v1118
  %3379 = vmatprep.subr.bf16.mxu0 0
  %3380 = vmatpush1.bf16.msra.mxu0 %v1119
  %3381 = vmatprep.subr.bf16.mxu0 0
  %3382 = vmatpush1.bf16.msra.mxu0 %v1120
  %3383 = vmatprep.subr.bf16.mxu0 0
  %3384 = vmatpush1.bf16.msra.mxu0 %v1121
  %3385 = vmatprep.subr.bf16.mxu0 0
  %3386 = vmatpush1.bf16.msra.mxu0 %v1122
  %3387 = vmatprep.subr.bf16.mxu0 0
  %3388 = vmatpush1.bf16.msra.mxu0 %v1123
  %3389 = vmatprep.subr.bf16.mxu0 0
  %3390 = vmatpush1.bf16.msra.mxu0 %v1124
  %3391 = vmatprep.subr.bf16.mxu0 0
  %3392 = vmatpush1.bf16.msra.mxu0 %v1125
  %3393 = vmatprep.subr.bf16.mxu0 0
  %3394 = vmatpush1.bf16.msra.mxu0 %v1126
  %3395 = vmatprep.subr.bf16.mxu0 0
  %3396 = vmatpush1.bf16.msra.mxu0 %v1127
  %3397 = vmatprep.subr.bf16.mxu0 0
  %3398 = vmatpush1.bf16.msra.mxu0 %v1128
  %3399 = vmatprep.subr.bf16.mxu0 0
  %3400 = vmatpush1.bf16.msra.mxu0 %v1129
  %3401 = vmatprep.subr.bf16.mxu0 0
  %3402 = vmatpush1.bf16.msra.mxu0 %v1130
  %3403 = vmatprep.subr.bf16.mxu0 0
  %3404 = vmatpush1.bf16.msra.mxu0 %v1131
  %3405 = vmatprep.subr.bf16.mxu0 0
  %3406 = vmatpush1.bf16.msra.mxu0 %v1132
  %3407 = vmatprep.subr.bf16.mxu0 0
  %3408 = vmatpush1.bf16.msra.mxu0 %v1133
  %3409 = vmatprep.mubr.bf16.mxu0 %v3168
  %3410 = vmatmul.mubr.bf16.gmra.mrb[0].mxu0 %v3167
  %v3411 = vpop.f32.mrb[0].mxu0
  %v3412 = vadd.f32 %v3364, %v3411
  %v3413 = vpop.f32.mrb[0].mxu0
  %v3414 = vpop.f32.mrb[0].mxu0
  %v3415 = vadd.f32 %v3367, %v3414
  %v3416 = vpop.f32.mrb[0].mxu0
  %3417 = vmatprep.mubr.bf16.mxu0 %v3186
  %3418 = vmatmul.mubr.bf16.gmra.mrb[0].mxu0 %v3185
  %v3419 = vpop.f32.mrb[0].mxu0
  %v3420 = vadd.f32 %v3372, %v3419
  %v3421 = vpop.f32.mrb[0].mxu0
  %v3422 = vpop.f32.mrb[0].mxu0
  %v3423 = vpop.f32.mrb[0].mxu0
  %3424 = vdwg.mxu0
  %3425 = vmatprep.subr.bf16.mxu0 0
  %3426 = vmatpush1.bf16.msra.mxu0 %v1134
  %3427 = vmatprep.subr.bf16.mxu0 0
  %3428 = vmatpush1.bf16.msra.mxu0 %v1135
  %3429 = vmatprep.subr.bf16.mxu0 0
  %3430 = vmatpush1.bf16.msra.mxu0 %v1136
  %3431 = vmatprep.subr.bf16.mxu0 0
  %3432 = vmatpush1.bf16.msra.mxu0 %v1137
  %3433 = vmatprep.subr.bf16.mxu0 0
  %3434 = vmatpush1.bf16.msra.mxu0 %v1138
  %3435 = vmatprep.subr.bf16.mxu0 0
  %3436 = vmatpush1.bf16.msra.mxu0 %v1139
  %3437 = vmatprep.subr.bf16.mxu0 0
  %3438 = vmatpush1.bf16.msra.mxu0 %v1140
  %3439 = vmatprep.subr.bf16.mxu0 0
  %3440 = vmatpush1.bf16.msra.mxu0 %v1141
  %3441 = vmatprep.subr.bf16.mxu0 0
  %3442 = vmatpush1.bf16.msra.mxu0 %v1142
  %3443 = vmatprep.subr.bf16.mxu0 0
  %3444 = vmatpush1.bf16.msra.mxu0 %v1143
  %3445 = vmatprep.subr.bf16.mxu0 0
  %3446 = vmatpush1.bf16.msra.mxu0 %v1144
  %3447 = vmatprep.subr.bf16.mxu0 0
  %3448 = vmatpush1.bf16.msra.mxu0 %v1145
  %3449 = vmatprep.subr.bf16.mxu0 0
  %3450 = vmatpush1.bf16.msra.mxu0 %v1146
  %3451 = vmatprep.subr.bf16.mxu0 0
  %3452 = vmatpush1.bf16.msra.mxu0 %v1147
  %3453 = vmatprep.subr.bf16.mxu0 0
  %3454 = vmatpush1.bf16.msra.mxu0 %v1148
  %3455 = vmatprep.subr.bf16.mxu0 0
  %3456 = vmatpush1.bf16.msra.mxu0 %v1149
  %3457 = vmatprep.mubr.bf16.mxu0 %v3170
  %3458 = vmatmul.mubr.bf16.gmra.mrb[0].mxu0 %v3169
  %v3459 = vpop.f32.mrb[0].mxu0
  %v3460 = vadd.f32 %v3412, %v3459
  %v3461 = vpop.f32.mrb[0].mxu0
  %v3462 = vpop.f32.mrb[0].mxu0
  %v3463 = vadd.f32 %v3415, %v3462
  %v3464 = vpop.f32.mrb[0].mxu0
  %3465 = vmatprep.mubr.bf16.mxu0 %v3188
  %3466 = vmatmul.mubr.bf16.gmra.mrb[0].mxu0 %v3187
  %v3467 = vpop.f32.mrb[0].mxu0
  %v3468 = vadd.f32 %v3420, %v3467
  %v3469 = vpop.f32.mrb[0].mxu0
  %v3470 = vpop.f32.mrb[0].mxu0
  %v3471 = vpop.f32.mrb[0].mxu0
  %3472 = vdwg.mxu0
  %3473 = vmatprep.subr.bf16.mxu0 0
  %3474 = vmatpush1.bf16.msra.mxu0 %v1150
  %3475 = vmatprep.subr.bf16.mxu0 0
  %3476 = vmatpush1.bf16.msra.mxu0 %v1151
  %3477 = vmatprep.subr.bf16.mxu0 0
  %3478 = vmatpush1.bf16.msra.mxu0 %v1152
  %3479 = vmatprep.subr.bf16.mxu0 0
  %3480 = vmatpush1.bf16.msra.mxu0 %v1153
  %3481 = vmatprep.subr.bf16.mxu0 0
  %3482 = vmatpush1.bf16.msra.mxu0 %v1154
  %3483 = vmatprep.subr.bf16.mxu0 0
  %3484 = vmatpush1.bf16.msra.mxu0 %v1155
  %3485 = vmatprep.subr.bf16.mxu0 0
  %3486 = vmatpush1.bf16.msra.mxu0 %v1156
  %3487 = vmatprep.subr.bf16.mxu0 0
  %3488 = vmatpush1.bf16.msra.mxu0 %v1157
  %3489 = vmatprep.subr.bf16.mxu0 0
  %3490 = vmatpush1.bf16.msra.mxu0 %v1158
  %3491 = vmatprep.subr.bf16.mxu0 0
  %3492 = vmatpush1.bf16.msra.mxu0 %v1159
  %3493 = vmatprep.subr.bf16.mxu0 0
  %3494 = vmatpush1.bf16.msra.mxu0 %v1160
  %3495 = vmatprep.subr.bf16.mxu0 0
  %3496 = vmatpush1.bf16.msra.mxu0 %v1161
  %3497 = vmatprep.subr.bf16.mxu0 0
  %3498 = vmatpush1.bf16.msra.mxu0 %v1162
  %3499 = vmatprep.subr.bf16.mxu0 0
  %3500 = vmatpush1.bf16.msra.mxu0 %v1163
  %3501 = vmatprep.subr.bf16.mxu0 0
  %3502 = vmatpush1.bf16.msra.mxu0 %v1164
  %3503 = vmatprep.subr.bf16.mxu0 0
  %3504 = vmatpush1.bf16.msra.mxu0 %v1165
  %3505 = vmatprep.mubr.bf16.mxu0 %v3172
  %3506 = vmatmul.mubr.bf16.gmra.mrb[0].mxu0 %v3171
  %v3507 = vpop.f32.mrb[0].mxu0
  %v3508 = vadd.f32 %v3460, %v3507
  %v3509 = vpop.f32.mrb[0].mxu0
  %v3510 = vpop.f32.mrb[0].mxu0
  %v3511 = vadd.f32 %v3463, %v3510
  %v3512 = vpop.f32.mrb[0].mxu0
  %3513 = vmatprep.mubr.bf16.mxu0 %v3190
  %3514 = vmatmul.mubr.bf16.gmra.mrb[0].mxu0 %v3189
  %v3515 = vpop.f32.mrb[0].mxu0
  %v3516 = vadd.f32 %v3468, %v3515
  %v3517 = vpop.f32.mrb[0].mxu0
  %v3518 = vpop.f32.mrb[0].mxu0
  %v3519 = vpop.f32.mrb[0].mxu0
  %3520 = vdwg.mxu0
  %3521 = vmatprep.subr.bf16.mxu0 0
  %3522 = vmatpush1.bf16.msra.mxu0 %v1166
  %3523 = vmatprep.subr.bf16.mxu0 0
  %3524 = vmatpush1.bf16.msra.mxu0 %v1167
  %3525 = vmatprep.subr.bf16.mxu0 0
  %3526 = vmatpush1.bf16.msra.mxu0 %v1168
  %3527 = vmatprep.subr.bf16.mxu0 0
  %3528 = vmatpush1.bf16.msra.mxu0 %v1169
  %3529 = vmatprep.subr.bf16.mxu0 0
  %3530 = vmatpush1.bf16.msra.mxu0 %v1170
  %3531 = vmatprep.subr.bf16.mxu0 0
  %3532 = vmatpush1.bf16.msra.mxu0 %v1171
  %3533 = vmatprep.subr.bf16.mxu0 0
  %3534 = vmatpush1.bf16.msra.mxu0 %v1172
  %3535 = vmatprep.subr.bf16.mxu0 0
  %3536 = vmatpush1.bf16.msra.mxu0 %v1173
  %3537 = vmatprep.subr.bf16.mxu0 0
  %3538 = vmatpush1.bf16.msra.mxu0 %v1174
  %3539 = vmatprep.subr.bf16.mxu0 0
  %3540 = vmatpush1.bf16.msra.mxu0 %v1175
  %3541 = vmatprep.subr.bf16.mxu0 0
  %3542 = vmatpush1.bf16.msra.mxu0 %v1176
  %3543 = vmatprep.subr.bf16.mxu0 0
  %3544 = vmatpush1.bf16.msra.mxu0 %v1177
  %3545 = vmatprep.subr.bf16.mxu0 0
  %3546 = vmatpush1.bf16.msra.mxu0 %v1178
  %3547 = vmatprep.subr.bf16.mxu0 0
  %3548 = vmatpush1.bf16.msra.mxu0 %v1179
  %3549 = vmatprep.subr.bf16.mxu0 0
  %3550 = vmatpush1.bf16.msra.mxu0 %v1180
  %3551 = vmatprep.subr.bf16.mxu0 0
  %3552 = vmatpush1.bf16.msra.mxu0 %v1181
  %3553 = vmatprep.mubr.bf16.mxu0 %v3174
  %3554 = vmatmul.mubr.bf16.gmra.mrb[0].mxu0 %v3173
  %v3555 = vpop.f32.mrb[0].mxu0
  %v3556 = vadd.f32 %v3508, %v3555
  %v3557 = vpop.f32.mrb[0].mxu0
  %v3558 = vpop.f32.mrb[0].mxu0
  %v3559 = vadd.f32 %v3511, %v3558
  %v3560 = vpop.f32.mrb[0].mxu0
  %3561 = vmatprep.mubr.bf16.mxu0 %v3192
  %3562 = vmatmul.mubr.bf16.gmra.mrb[0].mxu0 %v3191
  %v3563 = vpop.f32.mrb[0].mxu0
  %v3564 = vadd.f32 %v3516, %v3563
  %v3565 = vpop.f32.mrb[0].mxu0
  %v3566 = vpop.f32.mrb[0].mxu0
  %v3567 = vpop.f32.mrb[0].mxu0
  %3568 = vdwg.mxu0
  %3569 = vmatprep.subr.bf16.mxu0 0
  %3570 = vmatpush1.bf16.msra.mxu0 %v1182
  %3571 = vmatprep.subr.bf16.mxu0 0
  %3572 = vmatpush1.bf16.msra.mxu0 %v1183
  %3573 = vmatprep.subr.bf16.mxu0 0
  %3574 = vmatpush1.bf16.msra.mxu0 %v1184
  %3575 = vmatprep.subr.bf16.mxu0 0
  %3576 = vmatpush1.bf16.msra.mxu0 %v1185
  %3577 = vmatprep.subr.bf16.mxu0 0
  %3578 = vmatpush1.bf16.msra.mxu0 %v1186
  %3579 = vmatprep.subr.bf16.mxu0 0
  %3580 = vmatpush1.bf16.msra.mxu0 %v1187
  %3581 = vmatprep.subr.bf16.mxu0 0
  %3582 = vmatpush1.bf16.msra.mxu0 %v1188
  %3583 = vmatprep.subr.bf16.mxu0 0
  %3584 = vmatpush1.bf16.msra.mxu0 %v1189
  %3585 = vmatprep.subr.bf16.mxu0 0
  %3586 = vmatpush1.bf16.msra.mxu0 %v1190
  %3587 = vmatprep.subr.bf16.mxu0 0
  %3588 = vmatpush1.bf16.msra.mxu0 %v1191
  %3589 = vmatprep.subr.bf16.mxu0 0
  %3590 = vmatpush1.bf16.msra.mxu0 %v1192
  %3591 = vmatprep.subr.bf16.mxu0 0
  %3592 = vmatpush1.bf16.msra.mxu0 %v1193
  %3593 = vmatprep.subr.bf16.mxu0 0
  %3594 = vmatpush1.bf16.msra.mxu0 %v1194
  %3595 = vmatprep.subr.bf16.mxu0 0
  %3596 = vmatpush1.bf16.msra.mxu0 %v1195
  %3597 = vmatprep.subr.bf16.mxu0 0
  %3598 = vmatpush1.bf16.msra.mxu0 %v1196
  %3599 = vmatprep.subr.bf16.mxu0 0
  %3600 = vmatpush1.bf16.msra.mxu0 %v1197
  %3601 = vmatprep.mubr.bf16.mxu0 %v3176
  %3602 = vmatmul.mubr.bf16.gmra.mrb[0].mxu0 %v3175
  %v3603 = vpop.f32.mrb[0].mxu0
  %v3604 = vadd.f32 %v3556, %v3603
  %v3605 = vpop.f32.mrb[0].mxu0
  %v3606 = vpop.f32.mrb[0].mxu0
  %v3607 = vadd.f32 %v3559, %v3606
  %v3608 = vpop.f32.mrb[0].mxu0
  %3609 = vmatprep.mubr.bf16.mxu0 %v3194
  %3610 = vmatmul.mubr.bf16.gmra.mrb[0].mxu0 %v3193
  %v3611 = vpop.f32.mrb[0].mxu0
  %v3612 = vadd.f32 %v3564, %v3611
  %v3613 = vpop.f32.mrb[0].mxu0
  %v3614 = vpop.f32.mrb[0].mxu0
  %v3615 = vpop.f32.mrb[0].mxu0
  %3616 = vdwg.mxu0
  %3617 = vmatprep.subr.bf16.mxu0 0
  %3618 = vmatpush1.bf16.msra.mxu0 %v1198
  %3619 = vmatprep.subr.bf16.mxu0 0
  %3620 = vmatpush1.bf16.msra.mxu0 %v1199
  %3621 = vmatprep.subr.bf16.mxu0 0
  %3622 = vmatpush1.bf16.msra.mxu0 %v1200
  %3623 = vmatprep.subr.bf16.mxu0 0
  %3624 = vmatpush1.bf16.msra.mxu0 %v1201
  %3625 = vmatprep.subr.bf16.mxu0 0
  %3626 = vmatpush1.bf16.msra.mxu0 %v1202
  %3627 = vmatprep.subr.bf16.mxu0 0
  %3628 = vmatpush1.bf16.msra.mxu0 %v1203
  %3629 = vmatprep.subr.bf16.mxu0 0
  %3630 = vmatpush1.bf16.msra.mxu0 %v1204
  %3631 = vmatprep.subr.bf16.mxu0 0
  %3632 = vmatpush1.bf16.msra.mxu0 %v1205
  %3633 = vmatprep.subr.bf16.mxu0 0
  %3634 = vmatpush1.bf16.msra.mxu0 %v1206
  %3635 = vmatprep.subr.bf16.mxu0 0
  %3636 = vmatpush1.bf16.msra.mxu0 %v1207
  %3637 = vmatprep.subr.bf16.mxu0 0
  %3638 = vmatpush1.bf16.msra.mxu0 %v1208
  %3639 = vmatprep.subr.bf16.mxu0 0
  %3640 = vmatpush1.bf16.msra.mxu0 %v1209
  %3641 = vmatprep.subr.bf16.mxu0 0
  %3642 = vmatpush1.bf16.msra.mxu0 %v1210
  %3643 = vmatprep.subr.bf16.mxu0 0
  %3644 = vmatpush1.bf16.msra.mxu0 %v1211
  %3645 = vmatprep.subr.bf16.mxu0 0
  %3646 = vmatpush1.bf16.msra.mxu0 %v1212
  %3647 = vmatprep.subr.bf16.mxu0 0
  %3648 = vmatpush1.bf16.msra.mxu0 %v1213
  %3649 = vmatprep.mubr.bf16.mxu0 %v3178
  %3650 = vmatmul.mubr.bf16.gmra.mrb[0].mxu0 %v3177
  %v3651 = vpop.f32.mrb[0].mxu0
  %v3652 = vadd.f32 %v3604, %v3651
  %v3653 = vpop.f32.mrb[0].mxu0
  %v3654 = vpop.f32.mrb[0].mxu0
  %v3655 = vadd.f32 %v3607, %v3654
  %v3656 = vpop.f32.mrb[0].mxu0
  %3657 = vmatprep.mubr.bf16.mxu0 %v3196
  %3658 = vmatmul.mubr.bf16.gmra.mrb[0].mxu0 %v3195
  %v3659 = vpop.f32.mrb[0].mxu0
  %v3660 = vadd.f32 %v3612, %v3659
  %v3661 = vpop.f32.mrb[0].mxu0
  %v3662 = vpop.f32.mrb[0].mxu0
  %v3663 = vpop.f32.mrb[0].mxu0
  %3664 = vdwg.mxu0
  %v3665 = vmul.f32 %v3652, %v1794
  %v3666 = vmul.f32 %v3655, %v1794
  %v3667 = vmul.f32 %v3660, %v1794
  %v3668 = vadd.f32 %v3665, %v1803
  %v3669 = vadd.f32 %v3666, %v1803
  %v3670 = vadd.f32 %v3667, %v1803
  %v3671 = vmax.f32 %v3049, %v3668
  %v3672 = vmax.f32 %v3050, %v3669
  %v3673 = vmax.f32 %v3051, %v3670
  %v3674 = vmax.f32 %v3671, 0.0
  %v3675 = vmax.f32 %v3672, 0.0
  %v3676 = vmax.f32 %v3673, 0.0
  %v3677 = vld [vmem:[%s4] sm:$0xff]
  %v3678 = vld [vmem:[%s4 + $0x8] sm:$0xff]
  %v3679 = vld [vmem:[%s4 + $0x10] sm:$0xff]
  %v3680 = vld [vmem:[%s5] sm:$0xff]
  %v3681 = vld [vmem:[%s5 + $0x8] sm:$0xff]
  %v3682 = vld [vmem:[%s5 + $0x10] sm:$0xff]
  %3684 = vset.pattern.permute.xlu0 0
  %3685 = vperm.xlu0 %3684, %v3680
  %v3686 = vpop.permute.xlu0 %3685
  %3689 = vset.pattern.permute.xlu0 0
  %3690 = vperm.xlu0 %3689, %v3681
  %v3691 = vpop.permute.xlu0 %3690
  %3694 = vset.pattern.permute.xlu0 0
  %3695 = vperm.xlu0 %3694, %v3682
  %v3696 = vpop.permute.xlu0 %3695
  %vm3698 = vcmask 195584
  %v3700 = vsel %vm3698, %v3677, 0
  %v3703 = vsel %vm3698, %v3678, 0
  %v3706 = vsel %vm3698, %v3679, 0
  %3708 = vmatprep.subr.mxu0 0.0
  %3709 = vmatpush1.msra.mxu0 %v3674
  %3710 = vmatprep.subr.mxu0 0.0
  %3711 = vmatpush1.msra.mxu0 %v3675
  %3712 = vmatprep.subr.mxu0 0.0
  %3713 = vmatpush1.msra.mxu0 %v3676
  %3714 = vmatprep.subr.mxu0 0.0
  %3715 = vmatpush1.msra.mxu0 0.0
  %3716 = vmatprep.subr.mxu0 0.0
  %3717 = vmatpush1.msra.mxu0 0.0
  %3718 = vmatprep.subr.mxu0 0.0
  %3719 = vmatpush1.msra.mxu0 0.0
  %3720 = vmatprep.subr.mxu0 0.0
  %3721 = vmatpush1.msra.mxu0 0.0
  %3722 = vmatprep.subr.mxu0 0.0
  %3723 = vmatpush1.msra.mxu0 0.0
  %3724 = vmatprep.subr.mxu0 0.0
  %3725 = vmatpush1.msra.mxu0 0.0
  %3726 = vmatprep.subr.mxu0 0.0
  %3727 = vmatpush1.msra.mxu0 0.0
  %3728 = vmatprep.subr.mxu0 0.0
  %3729 = vmatpush1.msra.mxu0 0.0
  %3730 = vmatprep.subr.mxu0 0.0
  %3731 = vmatpush1.msra.mxu0 0.0
  %3732 = vmatprep.subr.mxu0 0.0
  %3733 = vmatpush1.msra.mxu0 0.0
  %3734 = vmatprep.subr.mxu0 0.0
  %3735 = vmatpush1.msra.mxu0 0.0
  %3736 = vmatprep.subr.mxu0 0.0
  %3737 = vmatpush1.msra.mxu0 0.0
  %3738 = vmatprep.subr.mxu0 0.0
  %3739 = vmatpush1.msra.mxu0 0.0
  %3740 = vmatprep.subr.mxu0 0.0
  %3741 = vmatpush1.msra.mxu0 0.0
  %3742 = vmatprep.subr.mxu0 0.0
  %3743 = vmatpush1.msra.mxu0 0.0
  %3744 = vmatprep.subr.mxu0 0.0
  %3745 = vmatpush1.msra.mxu0 0.0
  %3746 = vmatprep.subr.mxu0 0.0
  %3747 = vmatpush1.msra.mxu0 0.0
  %3748 = vmatprep.subr.mxu0 0.0
  %3749 = vmatpush1.msra.mxu0 0.0
  %3750 = vmatprep.subr.mxu0 0.0
  %3751 = vmatpush1.msra.mxu0 0.0
  %3752 = vmatprep.subr.mxu0 0.0
  %3753 = vmatpush1.msra.mxu0 0.0
  %3754 = vmatprep.subr.mxu0 0.0
  %3755 = vmatpush1.msra.mxu0 0.0
  %3756 = vmatprep.subr.mxu0 0.0
  %3757 = vmatpush1.msra.mxu0 0.0
  %3758 = vmatprep.subr.mxu0 0.0
  %3759 = vmatpush1.msra.mxu0 0.0
  %3760 = vmatprep.subr.mxu0 0.0
  %3761 = vmatpush1.msra.mxu0 0.0
  %3762 = vmatprep.subr.mxu0 0.0
  %3763 = vmatpush1.msra.mxu0 0.0
  %3764 = vmatprep.subr.mxu0 0.0
  %3765 = vmatpush1.msra.mxu0 0.0
  %3766 = vmatprep.subr.mxu0 0.0
  %3767 = vmatpush1.msra.mxu0 0.0
  %3768 = vmatprep.subr.mxu0 0.0
  %3769 = vmatpush1.msra.mxu0 0.0
  %3770 = vmatprep.subr.mxu0 0.0
  %3771 = vmatpush1.msra.mxu0 0.0
  %3772 = vmatprep.mubr.f32.mxu0 0.0
  %3773 = vmatmul.mubr.f32.gmra.mrb[0].mxu0 %v3700
  %v3774 = vpop.f32.mrb[0].mxu0
  %v3775 = vadd.f32 %v3686, %v3774
  %v3776 = vpop.f32.mrb[0].mxu0
  %3777 = vmatprep.mubr.f32.mxu0 0.0
  %3778 = vmatmul.mubr.f32.gmra.mrb[0].mxu0 %v3703
  %v3779 = vpop.f32.mrb[0].mxu0
  %v3780 = vadd.f32 %v3691, %v3779
  %v3781 = vpop.f32.mrb[0].mxu0
  %3782 = vmatprep.mubr.f32.mxu0 0.0
  %3783 = vmatmul.mubr.f32.gmra.mrb[0].mxu0 %v3706
  %v3784 = vpop.f32.mrb[0].mxu0
  %v3785 = vadd.f32 %v3696, %v3784
  %v3786 = vpop.f32.mrb[0].mxu0
  %3787 = vdwg.mxu0
  %v3788 = vpack.c.bf16 %v3780, %v3775
  %v3789 = vpack.c.bf16 %v3785, %v3785
  %v3792 = vunpack.c.l.b16 %v3788
  %v3793 = vunpack.c.h.b16 %v3788
  %v3794 = vunpack.c.l.b16 %v3789
  %v3795 = vpack.c.b16 %v3792, %v3792
  %v3796 = vpack.c.b16 %v3793, %v3793
  %v3797 = vpack.c.b16 %v3794, %v3794
  %3801 = vst [vmem:[%s6] sm:$0xf] %v3795
  %3802 = vst [vmem:[%s6 + $0x4] sm:$0xf] %v3796
  %3803 = vst [vmem:[%s6 + $0x8] sm:$0xf] %v3797
  // Predicated region
  $region26: #{attention_forward.5} parent=0 // pred_check
    _
  $region27: #{attention_forward.5} parent=0 // pred_check_branch
    %3805 = sbr.rel (0) target = $region29
  $region28: #{attention_forward.5} parent=0 // pred_region
    _
  $region29: #{attention_forward.5} parent=0 // pred_fallthru
    _
  // Predicated region
  $region30: #{attention_forward.5} parent=0 // pred_check
    _
  $region31: #{attention_forward.5} parent=0 // pred_check_branch
    %3807 = sbr.rel (0) target = $region33
  $region32: #{attention_forward.5} parent=0 // pred_region
    _
  $region33: #{attention_forward.5} parent=0 // pred_fallthru
    _

// kernel: attention_forward.7
$region0: #{attention_forward.7}
  #allocation0 [shape = 'u32[]', space=smem, size = 0x4, offset = 0x4, fixed_abs, tag = 'smem constant byte address 0x4 - core index']
  #allocation1 [shape = 'u32[144,128]{1,0:T(1,128)}', space=vmem, size = 0x12000, scoped, tag = 'internal scratch']
  %s0 = inlined_call_operand.vmem [shape: bf16[4,96,256], index: 0, kind: input, shape index: {}]
  %s1 = inlined_call_operand.vmem [shape: bf16[4,256,8], index: 1, kind: input, shape index: {}]
  %s2 = inlined_call_operand.vmem [shape: f32[1,8], index: 2, kind: input, shape index: {}]
  %s3 = inlined_call_operand.vmem [shape: f32[4,8,96], index: 3, kind: input, shape index: {}]
  %s4 = inlined_call_operand.hbm [shape: f32[8,8], index: 4, kind: output, shape index: {}]
  %s5 = sld [smem:[#allocation0]]
  $region26: #{attention_forward.7} parent=0
    _
  %s7 = ssub.s32 1, %s5
  %s8 = scalar_select 0, %s7, %s5
  $region1: #{attention_forward.7} parent=0
    #allocation2 [shape = 'u8[4096]{0}', space=vmem, size = 0x1000, scoped, tag = 'output window, operand 0, single buffered']
    #allocation3 [shape = 's32[1]{0}', space=sflag, size = 0x4, scoped, tag = 'scoped memory for attention_forward.7']
    %9 = vsyncpa [#allocation3], 0
    // Predicated region
    $region2: #{attention_forward.7} parent=1 // pred_check
      _
    $region3: #{attention_forward.7} parent=1 // pred_check_branch
      %11 = sbr.rel (0) target = $region5
    $region4: #{attention_forward.7} parent=1 // pred_region
      _
    $region5: #{attention_forward.7} parent=1 // pred_fallthru
      _
    // Predicated region
    $region6: #{attention_forward.7} parent=1 // pred_check
      _
    $region7: #{attention_forward.7} parent=1 // pred_check_branch
      %13 = sbr.rel (0) target = $region9
    $region8: #{attention_forward.7} parent=1 // pred_region
      _
    $region9: #{attention_forward.7} parent=1 // pred_fallthru
      _
    // Predicated region
    $region10: #{attention_forward.7} parent=1 // pred_check
      _
    $region11: #{attention_forward.7} parent=1 // pred_check_branch
      %15 = sbr.rel (0) target = $region13
    $region12: #{attention_forward.7} parent=1 // pred_region
      _
    $region13: #{attention_forward.7} parent=1 // pred_fallthru
      _
    // Predicated region
    $region14: #{attention_forward.7} parent=1 // pred_check
      _
    $region15: #{attention_forward.7} parent=1 // pred_check_branch
      %17 = sbr.rel (0) target = $region17
    $region16: #{attention_forward.7} parent=1 // pred_region
      _
    $region17: #{attention_forward.7} parent=1 // pred_fallthru
      _
    %v19 = vld [vmem:[%s2] sm:$0x1]
    %v20 = vld [vmem:[%s0] sm:$0xff]
    %v21 = vld [vmem:[%s0 + $0x8] sm:$0xff]
    %v22 = vld [vmem:[%s0 + $0x10] sm:$0xff]
    %v23 = vld [vmem:[%s0 + $0x18] sm:$0xff]
    %v24 = vld [vmem:[%s0 + $0x20] sm:$0xff]
    %v25 = vld [vmem:[%s0 + $0x28] sm:$0xff]
    %v26 = vld [vmem:[%s0 + $0x30] sm:$0xff]
    %v27 = vld [vmem:[%s0 + $0x38] sm:$0xff]
    %v28 = vld [vmem:[%s0 + $0x40] sm:$0xff]
    %v29 = vld [vmem:[%s0 + $0x48] sm:$0xff]
    %v30 = vld [vmem:[%s0 + $0x50] sm:$0xff]
    %v31 = vld [vmem:[%s0 + $0x58] sm:$0xff]
    %v32 = vld [vmem:[%s1] sm:$0xf]
    %v33 = vld [vmem:[%s1 + $0x4] sm:$0xf]
    %v34 = vld [vmem:[%s1 + $0x8] sm:$0xf]
    %v35 = vld [vmem:[%s1 + $0xc] sm:$0xf]
    %v36 = vld [vmem:[%s1 + $0x10] sm:$0xf]
    %v37 = vld [vmem:[%s1 + $0x14] sm:$0xf]
    %v38 = vld [vmem:[%s1 + $0x18] sm:$0xf]
    %v39 = vld [vmem:[%s1 + $0x1c] sm:$0xf]
    %v40 = vld [vmem:[%s1 + $0x20] sm:$0xf]
    %v41 = vld [vmem:[%s1 + $0x24] sm:$0xf]
    %v42 = vld [vmem:[%s1 + $0x28] sm:$0xf]
    %v43 = vld [vmem:[%s1 + $0x2c] sm:$0xf]
    %v44 = vld [vmem:[%s1 + $0x30] sm:$0xf]
    %v45 = vld [vmem:[%s1 + $0x34] sm:$0xf]
    %v46 = vld [vmem:[%s1 + $0x38] sm:$0xf]
    %v47 = vld [vmem:[%s1 + $0x3c] sm:$0xf]
    %v48 = vld [vmem:[%s1 + $0x40] sm:$0xf]
    %v49 = vld [vmem:[%s1 + $0x44] sm:$0xf]
    %v50 = vld [vmem:[%s1 + $0x48] sm:$0xf]
    %v51 = vld [vmem:[%s1 + $0x4c] sm:$0xf]
    %v52 = vld [vmem:[%s1 + $0x50] sm:$0xf]
    %v53 = vld [vmem:[%s1 + $0x54] sm:$0xf]
    %v54 = vld [vmem:[%s1 + $0x58] sm:$0xf]
    %v55 = vld [vmem:[%s1 + $0x5c] sm:$0xf]
    %v56 = vld [vmem:[%s1 + $0x60] sm:$0xf]
    %v57 = vld [vmem:[%s1 + $0x64] sm:$0xf]
    %v58 = vld [vmem:[%s1 + $0x68] sm:$0xf]
    %v59 = vld [vmem:[%s1 + $0x6c] sm:$0xf]
    %v60 = vld [vmem:[%s1 + $0x70] sm:$0xf]
    %v61 = vld [vmem:[%s1 + $0x74] sm:$0xf]
    %v62 = vld [vmem:[%s1 + $0x78] sm:$0xf]
    %v63 = vld [vmem:[%s1 + $0x7c] sm:$0xf]
    %v65 = vlaneseq
    %v66 = vshrl.u32 %v65, 7
    %v67 = vsub.s32 0, %v66
    %v68 = vrot.slane %v19, %v67
    %v82 = vunpack.c.l.b16 %v20
    %v83 = vunpack.c.h.b16 %v20
    %v84 = vunpack.c.l.b16 %v21
    %v85 = vunpack.c.h.b16 %v21
    %v86 = vunpack.c.l.b16 %v22
    %v87 = vunpack.c.h.b16 %v22
    %v88 = vunpack.c.l.b16 %v23
    %v89 = vunpack.c.h.b16 %v23
    %v90 = vunpack.c.l.b16 %v24
    %v91 = vunpack.c.h.b16 %v24
    %v92 = vunpack.c.l.b16 %v25
    %v93 = vunpack.c.h.b16 %v25
    %v94 = vunpack.c.l.b16 %v26
    %v95 = vunpack.c.h.b16 %v26
    %v96 = vunpack.c.l.b16 %v27
    %v97 = vunpack.c.h.b16 %v27
    %v98 = vunpack.c.l.b16 %v28
    %v99 = vunpack.c.h.b16 %v28
    %v100 = vunpack.c.l.b16 %v29
    %v101 = vunpack.c.h.b16 %v29
    %v102 = vunpack.c.l.b16 %v30
    %v103 = vunpack.c.h.b16 %v30
    %v104 = vunpack.c.l.b16 %v31
    %v105 = vunpack.c.h.b16 %v31
    %v106 = vpack.c.b16 %v84, %v82
    %v107 = vpack.c.b16 %v85, %v83
    %v108 = vpack.c.b16 %v88, %v86
    %v109 = vpack.c.b16 %v89, %v87
    %v110 = vpack.c.b16 %v92, %v90
    %v111 = vpack.c.b16 %v93, %v91
    %v112 = vpack.c.b16 %v96, %v94
    %v113 = vpack.c.b16 %v97, %v95
    %v114 = vpack.c.b16 %v100, %v98
    %v115 = vpack.c.b16 %v101, %v99
    %v116 = vpack.c.b16 %v104, %v102
    %v117 = vpack.c.b16 %v105, %v103
    %v162 = vunpack.c.l.b16 %v32
    %v163 = vunpack.c.l.b16 %v33
    %v164 = vunpack.c.l.b16 %v34
    %v165 = vunpack.c.l.b16 %v35
    %v166 = vunpack.c.l.b16 %v36
    %v167 = vunpack.c.l.b16 %v37
    %v168 = vunpack.c.l.b16 %v38
    %v169 = vunpack.c.l.b16 %v39
    %v170 = vunpack.c.l.b16 %v40
    %v171 = vunpack.c.l.b16 %v41
    %v172 = vunpack.c.l.b16 %v42
    %v173 = vunpack.c.l.b16 %v43
    %v174 = vunpack.c.l.b16 %v44
    %v175 = vunpack.c.l.b16 %v45
    %v176 = vunpack.c.l.b16 %v46
    %v177 = vunpack.c.l.b16 %v47
    %v178 = vunpack.c.l.b16 %v48
    %v179 = vunpack.c.l.b16 %v49
    %v180 = vunpack.c.l.b16 %v50
    %v181 = vunpack.c.l.b16 %v51
    %v182 = vunpack.c.l.b16 %v52
    %v183 = vunpack.c.l.b16 %v53
    %v184 = vunpack.c.l.b16 %v54
    %v185 = vunpack.c.l.b16 %v55
    %v186 = vunpack.c.l.b16 %v56
    %v187 = vunpack.c.l.b16 %v57
    %v188 = vunpack.c.l.b16 %v58
    %v189 = vunpack.c.l.b16 %v59
    %v190 = vunpack.c.l.b16 %v60
    %v191 = vunpack.c.l.b16 %v61
    %v192 = vunpack.c.l.b16 %v62
    %v193 = vunpack.c.l.b16 %v63
    %v194 = vpack.c.b16 %v163, %v162
    %v195 = vpack.c.b16 %v165, %v164
    %v196 = vpack.c.b16 %v167, %v166
    %v197 = vpack.c.b16 %v169, %v168
    %v198 = vpack.c.b16 %v171, %v170
    %v199 = vpack.c.b16 %v173, %v172
    %v200 = vpack.c.b16 %v175, %v174
    %v201 = vpack.c.b16 %v177, %v176
    %v202 = vpack.c.b16 %v179, %v178
    %v203 = vpack.c.b16 %v181, %v180
    %v204 = vpack.c.b16 %v183, %v182
    %v205 = vpack.c.b16 %v185, %v184
    %v206 = vpack.c.b16 %v187, %v186
    %v207 = vpack.c.b16 %v189, %v188
    %v208 = vpack.c.b16 %v191, %v190
    %v209 = vpack.c.b16 %v193, %v192
    %226 = vmatprep.subr.bf16.mxu0 0
    %227 = vmatpush1.bf16.msra.mxu0 %v194
    %228 = vmatprep.subr.bf16.mxu0 0
    %229 = vmatpush1.bf16.msra.mxu0 %v195
    %230 = vmatprep.subr.bf16.mxu0 0
    %231 = vmatpush1.bf16.msra.mxu0 %v196
    %232 = vmatprep.subr.bf16.mxu0 0
    %233 = vmatpush1.bf16.msra.mxu0 %v197
    %234 = vmatprep.subr.bf16.mxu0 0
    %235 = vmatpush1.bf16.msra.mxu0 %v198
    %236 = vmatprep.subr.bf16.mxu0 0
    %237 = vmatpush1.bf16.msra.mxu0 %v199
    %238 = vmatprep.subr.bf16.mxu0 0
    %239 = vmatpush1.bf16.msra.mxu0 %v200
    %240 = vmatprep.subr.bf16.mxu0 0
    %241 = vmatpush1.bf16.msra.mxu0 %v201
    %242 = vmatprep.subr.bf16.mxu0 0
    %243 = vmatpush1.bf16.msra.mxu0 %v202
    %244 = vmatprep.subr.bf16.mxu0 0
    %245 = vmatpush1.bf16.msra.mxu0 %v203
    %246 = vmatprep.subr.bf16.mxu0 0
    %247 = vmatpush1.bf16.msra.mxu0 %v204
    %248 = vmatprep.subr.bf16.mxu0 0
    %249 = vmatpush1.bf16.msra.mxu0 %v205
    %250 = vmatprep.subr.bf16.mxu0 0
    %251 = vmatpush1.bf16.msra.mxu0 %v206
    %252 = vmatprep.subr.bf16.mxu0 0
    %253 = vmatpush1.bf16.msra.mxu0 %v207
    %254 = vmatprep.subr.bf16.mxu0 0
    %255 = vmatpush1.bf16.msra.mxu0 %v208
    %256 = vmatprep.subr.bf16.mxu0 0
    %257 = vmatpush1.bf16.msra.mxu0 %v209
    %258 = vmatprep.mubr.bf16.mxu0 %v107
    %259 = vmatmul.mubr.bf16.gmra.mrb[0].mxu0 %v106
    %v260 = vpop.f32.mrb[0].mxu0
    %v261 = vadd.f32 %v68, %v260
    %v262 = vpop.f32.mrb[0].mxu0
    %v263 = vpop.f32.mrb[0].mxu0
    %v264 = vadd.f32 %v68, %v263
    %v265 = vpop.f32.mrb[0].mxu0
    %266 = vmatprep.mubr.bf16.mxu0 %v109
    %267 = vmatmul.mubr.bf16.gmra.mrb[0].mxu0 %v108
    %v268 = vpop.f32.mrb[0].mxu0
    %v269 = vadd.f32 %v68, %v268
    %v270 = vpop.f32.mrb[0].mxu0
    %v271 = vpop.f32.mrb[0].mxu0
    %v272 = vadd.f32 %v68, %v271
    %v273 = vpop.f32.mrb[0].mxu0
    %274 = vmatprep.mubr.bf16.mxu0 %v111
    %275 = vmatmul.mubr.bf16.gmra.mrb[0].mxu0 %v110
    %v276 = vpop.f32.mrb[0].mxu0
    %v277 = vadd.f32 %v68, %v276
    %v278 = vpop.f32.mrb[0].mxu0
    %v279 = vpop.f32.mrb[0].mxu0
    %v280 = vadd.f32 %v68, %v279
    %v281 = vpop.f32.mrb[0].mxu0
    %282 = vmatprep.mubr.bf16.mxu0 %v113
    %283 = vmatmul.mubr.bf16.gmra.mrb[0].mxu0 %v112
    %v284 = vpop.f32.mrb[0].mxu0
    %v285 = vadd.f32 %v68, %v284
    %v286 = vpop.f32.mrb[0].mxu0
    %v287 = vpop.f32.mrb[0].mxu0
    %v288 = vadd.f32 %v68, %v287
    %v289 = vpop.f32.mrb[0].mxu0
    %290 = vmatprep.mubr.bf16.mxu0 %v115
    %291 = vmatmul.mubr.bf16.gmra.mrb[0].mxu0 %v114
    %v292 = vpop.f32.mrb[0].mxu0
    %v293 = vadd.f32 %v68, %v292
    %v294 = vpop.f32.mrb[0].mxu0
    %v295 = vpop.f32.mrb[0].mxu0
    %v296 = vadd.f32 %v68, %v295
    %v297 = vpop.f32.mrb[0].mxu0
    %298 = vmatprep.mubr.bf16.mxu0 %v117
    %299 = vmatmul.mubr.bf16.gmra.mrb[0].mxu0 %v116
    %v300 = vpop.f32.mrb[0].mxu0
    %v301 = vadd.f32 %v68, %v300
    %v302 = vpop.f32.mrb[0].mxu0
    %v303 = vpop.f32.mrb[0].mxu0
    %v304 = vadd.f32 %v68, %v303
    %v305 = vpop.f32.mrb[0].mxu0
    %306 = vdwg.mxu0
    %v307 = vxor.u32 %v261, 2147483648
    %v308 = vxor.u32 %v264, 2147483648
    %v309 = vxor.u32 %v269, 2147483648
    %v310 = vxor.u32 %v272, 2147483648
    %v311 = vxor.u32 %v277, 2147483648
    %v312 = vxor.u32 %v280, 2147483648
    %v313 = vxor.u32 %v285, 2147483648
    %v314 = vxor.u32 %v288, 2147483648
    %v315 = vxor.u32 %v293, 2147483648
    %v316 = vxor.u32 %v296, 2147483648
    %v317 = vxor.u32 %v301, 2147483648
    %v318 = vxor.u32 %v304, 2147483648
    %v319 = vmul.f32 %v307, 1.442695
    %v320 = vpow.pop %v319
    %v321 = vmul.f32 %v308, 1.442695
    %v322 = vpow.pop %v321
    %v323 = vmul.f32 %v309, 1.442695
    %v324 = vpow.pop %v323
    %v325 = vmul.f32 %v310, 1.442695
    %v326 = vpow.pop %v325
    %v327 = vmul.f32 %v311, 1.442695
    %v328 = vpow.pop %v327
    %v329 = vmul.f32 %v312, 1.442695
    %v330 = vpow.pop %v329
    %v331 = vmul.f32 %v313, 1.442695
    %v332 = vpow.pop %v331
    %v333 = vmul.f32 %v314, 1.442695
    %v334 = vpow.pop %v333
    %v335 = vmul.f32 %v315, 1.442695
    %v336 = vpow.pop %v335
    %v337 = vmul.f32 %v316, 1.442695
    %v338 = vpow.pop %v337
    %v339 = vmul.f32 %v317, 1.442695
    %v340 = vpow.pop %v339
    %v341 = vmul.f32 %v318, 1.442695
    %v342 = vpow.pop %v341
    %v343 = vadd.f32 %v320, 1.0
    %v344 = vadd.f32 %v322, 1.0
    %v345 = vadd.f32 %v324, 1.0
    %v346 = vadd.f32 %v326, 1.0
    %v347 = vadd.f32 %v328, 1.0
    %v348 = vadd.f32 %v330, 1.0
    %v349 = vadd.f32 %v332, 1.0
    %v350 = vadd.f32 %v334, 1.0
    %v351 = vadd.f32 %v336, 1.0
    %v352 = vadd.f32 %v338, 1.0
    %v353 = vadd.f32 %v340, 1.0
    %v354 = vadd.f32 %v342, 1.0
    %v355 = vrcp.pop %v343
    %v356 = vmul.f32 1.0, %v355
    %v357 = vrcp.pop %v344
    %v358 = vmul.f32 1.0, %v357
    %v359 = vrcp.pop %v345
    %v360 = vmul.f32 1.0, %v359
    %v361 = vrcp.pop %v346
    %v362 = vmul.f32 1.0, %v361
    %v363 = vrcp.pop %v347
    %v364 = vmul.f32 1.0, %v363
    %v365 = vrcp.pop %v348
    %v366 = vmul.f32 1.0, %v365
    %v367 = vrcp.pop %v349
    %v368 = vmul.f32 1.0, %v367
    %v369 = vrcp.pop %v350
    %v370 = vmul.f32 1.0, %v369
    %v371 = vrcp.pop %v351
    %v372 = vmul.f32 1.0, %v371
    %v373 = vrcp.pop %v352
    %v374 = vmul.f32 1.0, %v373
    %v375 = vrcp.pop %v353
    %v376 = vmul.f32 1.0, %v375
    %v377 = vrcp.pop %v354
    %v378 = vmul.f32 1.0, %v377
    %v379 = vld [vmem:[%s3] sm:$0xff]
    %s380 = scalar_lea.vmem %s0, 96
    %v381 = vld [vmem:[%s380] sm:$0xff]
    %v382 = vld [vmem:[%s380 + $0x8] sm:$0xff]
    %v383 = vld [vmem:[%s380 + $0x10] sm:$0xff]
    %v384 = vld [vmem:[%s380 + $0x18] sm:$0xff]
    %v385 = vld [vmem:[%s380 + $0x20] sm:$0xff]
    %v386 = vld [vmem:[%s380 + $0x28] sm:$0xff]
    %v387 = vld [vmem:[%s380 + $0x30] sm:$0xff]
    %v388 = vld [vmem:[%s380 + $0x38] sm:$0xff]
    %v389 = vld [vmem:[%s380 + $0x40] sm:$0xff]
    %v390 = vld [vmem:[%s380 + $0x48] sm:$0xff]
    %v391 = vld [vmem:[%s380 + $0x50] sm:$0xff]
    %v392 = vld [vmem:[%s380 + $0x58] sm:$0xff]
    %s393 = scalar_lea.vmem %s1, 128
    %v394 = vld [vmem:[%s393] sm:$0xf]
    %v395 = vld [vmem:[%s393 + $0x4] sm:$0xf]
    %v396 = vld [vmem:[%s393 + $0x8] sm:$0xf]
    %v397 = vld [vmem:[%s393 + $0xc] sm:$0xf]
    %v398 = vld [vmem:[%s393 + $0x10] sm:$0xf]
    %v399 = vld [vmem:[%s393 + $0x14] sm:$0xf]
    %v400 = vld [vmem:[%s393 + $0x18] sm:$0xf]
    %v401 = vld [vmem:[%s393 + $0x1c] sm:$0xf]
    %v402 = vld [vmem:[%s393 + $0x20] sm:$0xf]
    %v403 = vld [vmem:[%s393 + $0x24] sm:$0xf]
    %v404 = vld [vmem:[%s393 + $0x28] sm:$0xf]
    %v405 = vld [vmem:[%s393 + $0x2c] sm:$0xf]
    %v406 = vld [vmem:[%s393 + $0x30] sm:$0xf]
    %v407 = vld [vmem:[%s393 + $0x34] sm:$0xf]
    %v408 = vld [vmem:[%s393 + $0x38] sm:$0xf]
    %v409 = vld [vmem:[%s393 + $0x3c] sm:$0xf]
    %v410 = vld [vmem:[%s393 + $0x40] sm:$0xf]
    %v411 = vld [vmem:[%s393 + $0x44] sm:$0xf]
    %v412 = vld [vmem:[%s393 + $0x48] sm:$0xf]
    %v413 = vld [vmem:[%s393 + $0x4c] sm:$0xf]
    %v414 = vld [vmem:[%s393 + $0x50] sm:$0xf]
    %v415 = vld [vmem:[%s393 + $0x54] sm:$0xf]
    %v416 = vld [vmem:[%s393 + $0x58] sm:$0xf]
    %v417 = vld [vmem:[%s393 + $0x5c] sm:$0xf]
    %v418 = vld [vmem:[%s393 + $0x60] sm:$0xf]
    %v419 = vld [vmem:[%s393 + $0x64] sm:$0xf]
    %v420 = vld [vmem:[%s393 + $0x68] sm:$0xf]
    %v421 = vld [vmem:[%s393 + $0x6c] sm:$0xf]
    %v422 = vld [vmem:[%s393 + $0x70] sm:$0xf]
    %v423 = vld [vmem:[%s393 + $0x74] sm:$0xf]
    %v424 = vld [vmem:[%s393 + $0x78] sm:$0xf]
    %v425 = vld [vmem:[%s393 + $0x7c] sm:$0xf]
    %v438 = vunpack.c.l.b16 %v381
    %v439 = vunpack.c.h.b16 %v381
    %v440 = vunpack.c.l.b16 %v382
    %v441 = vunpack.c.h.b16 %v382
    %v442 = vunpack.c.l.b16 %v383
    %v443 = vunpack.c.h.b16 %v383
    %v444 = vunpack.c.l.b16 %v384
    %v445 = vunpack.c.h.b16 %v384
    %v446 = vunpack.c.l.b16 %v385
    %v447 = vunpack.c.h.b16 %v385
    %v448 = vunpack.c.l.b16 %v386
    %v449 = vunpack.c.h.b16 %v386
    %v450 = vunpack.c.l.b16 %v387
    %v451 = vunpack.c.h.b16 %v387
    %v452 = vunpack.c.l.b16 %v388
    %v453 = vunpack.c.h.b16 %v388
    %v454 = vunpack.c.l.b16 %v389
    %v455 = vunpack.c.h.b16 %v389
    %v456 = vunpack.c.l.b16 %v390
    %v457 = vunpack.c.h.b16 %v390
    %v458 = vunpack.c.l.b16 %v391
    %v459 = vunpack.c.h.b16 %v391
    %v460 = vunpack.c.l.b16 %v392
    %v461 = vunpack.c.h.b16 %v392
    %v462 = vpack.c.b16 %v440, %v438
    %v463 = vpack.c.b16 %v441, %v439
    %v464 = vpack.c.b16 %v444, %v442
    %v465 = vpack.c.b16 %v445, %v443
    %v466 = vpack.c.b16 %v448, %v446
    %v467 = vpack.c.b16 %v449, %v447
    %v468 = vpack.c.b16 %v452, %v450
    %v469 = vpack.c.b16 %v453, %v451
    %v470 = vpack.c.b16 %v456, %v454
    %v471 = vpack.c.b16 %v457, %v455
    %v472 = vpack.c.b16 %v460, %v458
    %v473 = vpack.c.b16 %v461, %v459
    %v518 = vunpack.c.l.b16 %v394
    %v519 = vunpack.c.l.b16 %v395
    %v520 = vunpack.c.l.b16 %v396
    %v521 = vunpack.c.l.b16 %v397
    %v522 = vunpack.c.l.b16 %v398
    %v523 = vunpack.c.l.b16 %v399
    %v524 = vunpack.c.l.b16 %v400
    %v525 = vunpack.c.l.b16 %v401
    %v526 = vunpack.c.l.b16 %v402
    %v527 = vunpack.c.l.b16 %v403
    %v528 = vunpack.c.l.b16 %v404
    %v529 = vunpack.c.l.b16 %v405
    %v530 = vunpack.c.l.b16 %v406
    %v531 = vunpack.c.l.b16 %v407
    %v532 = vunpack.c.l.b16 %v408
    %v533 = vunpack.c.l.b16 %v409
    %v534 = vunpack.c.l.b16 %v410
    %v535 = vunpack.c.l.b16 %v411
    %v536 = vunpack.c.l.b16 %v412
    %v537 = vunpack.c.l.b16 %v413
    %v538 = vunpack.c.l.b16 %v414
    %v539 = vunpack.c.l.b16 %v415
    %v540 = vunpack.c.l.b16 %v416
    %v541 = vunpack.c.l.b16 %v417
    %v542 = vunpack.c.l.b16 %v418
    %v543 = vunpack.c.l.b16 %v419
    %v544 = vunpack.c.l.b16 %v420
    %v545 = vunpack.c.l.b16 %v421
    %v546 = vunpack.c.l.b16 %v422
    %v547 = vunpack.c.l.b16 %v423
    %v548 = vunpack.c.l.b16 %v424
    %v549 = vunpack.c.l.b16 %v425
    %v550 = vpack.c.b16 %v519, %v518
    %v551 = vpack.c.b16 %v521, %v520
    %v552 = vpack.c.b16 %v523, %v522
    %v553 = vpack.c.b16 %v525, %v524
    %v554 = vpack.c.b16 %v527, %v526
    %v555 = vpack.c.b16 %v529, %v528
    %v556 = vpack.c.b16 %v531, %v530
    %v557 = vpack.c.b16 %v533, %v532
    %v558 = vpack.c.b16 %v535, %v534
    %v559 = vpack.c.b16 %v537, %v536
    %v560 = vpack.c.b16 %v539, %v538
    %v561 = vpack.c.b16 %v541, %v540
    %v562 = vpack.c.b16 %v543, %v542
    %v563 = vpack.c.b16 %v545, %v544
    %v564 = vpack.c.b16 %v547, %v546
    %v565 = vpack.c.b16 %v549, %v548
    %582 = vmatprep.subr.bf16.mxu0 0
    %583 = vmatpush1.bf16.msra.mxu0 %v550
    %584 = vmatprep.subr.bf16.mxu0 0
    %585 = vmatpush1.bf16.msra.mxu0 %v551
    %586 = vmatprep.subr.bf16.mxu0 0
    %587 = vmatpush1.bf16.msra.mxu0 %v552
    %588 = vmatprep.subr.bf16.mxu0 0
    %589 = vmatpush1.bf16.msra.mxu0 %v553
    %590 = vmatprep.subr.bf16.mxu0 0
    %591 = vmatpush1.bf16.msra.mxu0 %v554
    %592 = vmatprep.subr.bf16.mxu0 0
    %593 = vmatpush1.bf16.msra.mxu0 %v555
    %594 = vmatprep.subr.bf16.mxu0 0
    %595 = vmatpush1.bf16.msra.mxu0 %v556
    %596 = vmatprep.subr.bf16.mxu0 0
    %597 = vmatpush1.bf16.msra.mxu0 %v557
    %598 = vmatprep.subr.bf16.mxu0 0
    %599 = vmatpush1.bf16.msra.mxu0 %v558
    %600 = vmatprep.subr.bf16.mxu0 0
    %601 = vmatpush1.bf16.msra.mxu0 %v559
    %602 = vmatprep.subr.bf16.mxu0 0
    %603 = vmatpush1.bf16.msra.mxu0 %v560
    %604 = vmatprep.subr.bf16.mxu0 0
    %605 = vmatpush1.bf16.msra.mxu0 %v561
    %606 = vmatprep.subr.bf16.mxu0 0
    %607 = vmatpush1.bf16.msra.mxu0 %v562
    %608 = vmatprep.subr.bf16.mxu0 0
    %609 = vmatpush1.bf16.msra.mxu0 %v563
    %610 = vmatprep.subr.bf16.mxu0 0
    %611 = vmatpush1.bf16.msra.mxu0 %v564
    %612 = vmatprep.subr.bf16.mxu0 0
    %613 = vmatpush1.bf16.msra.mxu0 %v565
    %614 = vmatprep.mubr.bf16.mxu0 %v463
    %615 = vmatmul.mubr.bf16.gmra.mrb[0].mxu0 %v462
    %v616 = vpop.f32.mrb[0].mxu0
    %v617 = vadd.f32 %v68, %v616
    %v618 = vpop.f32.mrb[0].mxu0
    %v619 = vpop.f32.mrb[0].mxu0
    %v620 = vadd.f32 %v68, %v619
    %v621 = vpop.f32.mrb[0].mxu0
    %622 = vmatprep.mubr.bf16.mxu0 %v465
    %623 = vmatmul.mubr.bf16.gmra.mrb[0].mxu0 %v464
    %v624 = vpop.f32.mrb[0].mxu0
    %v625 = vadd.f32 %v68, %v624
    %v626 = vpop.f32.mrb[0].mxu0
    %v627 = vpop.f32.mrb[0].mxu0
    %v628 = vadd.f32 %v68, %v627
    %v629 = vpop.f32.mrb[0].mxu0
    %630 = vmatprep.mubr.bf16.mxu0 %v467
    %631 = vmatmul.mubr.bf16.gmra.mrb[0].mxu0 %v466
    %v632 = vpop.f32.mrb[0].mxu0
    %v633 = vadd.f32 %v68, %v632
    %v634 = vpop.f32.mrb[0].mxu0
    %v635 = vpop.f32.mrb[0].mxu0
    %v636 = vadd.f32 %v68, %v635
    %v637 = vpop.f32.mrb[0].mxu0
    %638 = vmatprep.mubr.bf16.mxu0 %v469
    %639 = vmatmul.mubr.bf16.gmra.mrb[0].mxu0 %v468
    %v640 = vpop.f32.mrb[0].mxu0
    %v641 = vadd.f32 %v68, %v640
    %v642 = vpop.f32.mrb[0].mxu0
    %v643 = vpop.f32.mrb[0].mxu0
    %v644 = vadd.f32 %v68, %v643
    %v645 = vpop.f32.mrb[0].mxu0
    %646 = vmatprep.mubr.bf16.mxu0 %v471
    %647 = vmatmul.mubr.bf16.gmra.mrb[0].mxu0 %v470
    %v648 = vpop.f32.mrb[0].mxu0
    %v649 = vadd.f32 %v68, %v648
    %v650 = vpop.f32.mrb[0].mxu0
    %v651 = vpop.f32.mrb[0].mxu0
    %v652 = vadd.f32 %v68, %v651
    %v653 = vpop.f32.mrb[0].mxu0
    %654 = vmatprep.mubr.bf16.mxu0 %v473
    %655 = vmatmul.mubr.bf16.gmra.mrb[0].mxu0 %v472
    %v656 = vpop.f32.mrb[0].mxu0
    %v657 = vadd.f32 %v68, %v656
    %v658 = vpop.f32.mrb[0].mxu0
    %v659 = vpop.f32.mrb[0].mxu0
    %v660 = vadd.f32 %v68, %v659
    %v661 = vpop.f32.mrb[0].mxu0
    %662 = vdwg.mxu0
    %v663 = vxor.u32 %v617, 2147483648
    %v664 = vxor.u32 %v620, 2147483648
    %v665 = vxor.u32 %v625, 2147483648
    %v666 = vxor.u32 %v628, 2147483648
    %v667 = vxor.u32 %v633, 2147483648
    %v668 = vxor.u32 %v636, 2147483648
    %v669 = vxor.u32 %v641, 2147483648
    %v670 = vxor.u32 %v644, 2147483648
    %v671 = vxor.u32 %v649, 2147483648
    %v672 = vxor.u32 %v652, 2147483648
    %v673 = vxor.u32 %v657, 2147483648
    %v674 = vxor.u32 %v660, 2147483648
    %v675 = vmul.f32 %v663, 1.442695
    %v676 = vpow.pop %v675
    %v677 = vmul.f32 %v664, 1.442695
    %v678 = vpow.pop %v677
    %v679 = vmul.f32 %v665, 1.442695
    %v680 = vpow.pop %v679
    %v681 = vmul.f32 %v666, 1.442695
    %v682 = vpow.pop %v681
    %v683 = vmul.f32 %v667, 1.442695
    %v684 = vpow.pop %v683
    %v685 = vmul.f32 %v668, 1.442695
    %v686 = vpow.pop %v685
    %v687 = vmul.f32 %v669, 1.442695
    %v688 = vpow.pop %v687
    %v689 = vmul.f32 %v670, 1.442695
    %v690 = vpow.pop %v689
    %v691 = vmul.f32 %v671, 1.442695
    %v692 = vpow.pop %v691
    %v693 = vmul.f32 %v672, 1.442695
    %v694 = vpow.pop %v693
    %v695 = vmul.f32 %v673, 1.442695
    %v696 = vpow.pop %v695
    %v697 = vmul.f32 %v674, 1.442695
    %v698 = vpow.pop %v697
    %v699 = vadd.f32 %v676, 1.0
    %v700 = vadd.f32 %v678, 1.0
    %v701 = vadd.f32 %v680, 1.0
    %v702 = vadd.f32 %v682, 1.0
    %v703 = vadd.f32 %v684, 1.0
    %v704 = vadd.f32 %v686, 1.0
    %v705 = vadd.f32 %v688, 1.0
    %v706 = vadd.f32 %v690, 1.0
    %v707 = vadd.f32 %v692, 1.0
    %v708 = vadd.f32 %v694, 1.0
    %v709 = vadd.f32 %v696, 1.0
    %v710 = vadd.f32 %v698, 1.0
    %v711 = vrcp.pop %v699
    %v712 = vmul.f32 1.0, %v711
    %v713 = vrcp.pop %v700
    %v714 = vmul.f32 1.0, %v713
    %v715 = vrcp.pop %v701
    %v716 = vmul.f32 1.0, %v715
    %v717 = vrcp.pop %v702
    %v718 = vmul.f32 1.0, %v717
    %v719 = vrcp.pop %v703
    %v720 = vmul.f32 1.0, %v719
    %v721 = vrcp.pop %v704
    %v722 = vmul.f32 1.0, %v721
    %v723 = vrcp.pop %v705
    %v724 = vmul.f32 1.0, %v723
    %v725 = vrcp.pop %v706
    %v726 = vmul.f32 1.0, %v725
    %v727 = vrcp.pop %v707
    %v728 = vmul.f32 1.0, %v727
    %v729 = vrcp.pop %v708
    %v730 = vmul.f32 1.0, %v729
    %v731 = vrcp.pop %v709
    %v732 = vmul.f32 1.0, %v731
    %v733 = vrcp.pop %v710
    %v734 = vmul.f32 1.0, %v733
    %s735 = scalar_lea.vmem %s3, 8
    %v736 = vld [vmem:[%s735] sm:$0xff]
    %vm737 = vcmask 785408
    %v739 = vsel %vm737, %v736, 0
    %741 = vmatprep.subr.mxu0 0.0
    %742 = vmatpush1.msra.mxu0 %v712
    %743 = vmatprep.subr.mxu0 0.0
    %744 = vmatpush1.msra.mxu0 %v714
    %745 = vmatprep.subr.mxu0 0.0
    %746 = vmatpush1.msra.mxu0 %v716
    %747 = vmatprep.subr.mxu0 0.0
    %748 = vmatpush1.msra.mxu0 %v718
    %749 = vmatprep.subr.mxu0 0.0
    %750 = vmatpush1.msra.mxu0 %v720
    %751 = vmatprep.subr.mxu0 0.0
    %752 = vmatpush1.msra.mxu0 %v722
    %753 = vmatprep.subr.mxu0 0.0
    %754 = vmatpush1.msra.mxu0 %v724
    %755 = vmatprep.subr.mxu0 0.0
    %756 = vmatpush1.msra.mxu0 %v726
    %757 = vmatprep.subr.mxu0 0.0
    %758 = vmatpush1.msra.mxu0 %v728
    %759 = vmatprep.subr.mxu0 0.0
    %760 = vmatpush1.msra.mxu0 %v730
    %761 = vmatprep.subr.mxu0 0.0
    %762 = vmatpush1.msra.mxu0 %v732
    %763 = vmatprep.subr.mxu0 0.0
    %764 = vmatpush1.msra.mxu0 %v734
    %765 = vmatprep.subr.mxu0 0.0
    %766 = vmatpush1.msra.mxu0 0.0
    %767 = vmatprep.subr.mxu0 0.0
    %768 = vmatpush1.msra.mxu0 0.0
    %769 = vmatprep.subr.mxu0 0.0
    %770 = vmatpush1.msra.mxu0 0.0
    %771 = vmatprep.subr.mxu0 0.0
    %772 = vmatpush1.msra.mxu0 0.0
    %773 = vmatprep.subr.mxu0 0.0
    %774 = vmatpush1.msra.mxu0 0.0
    %775 = vmatprep.subr.mxu0 0.0
    %776 = vmatpush1.msra.mxu0 0.0
    %777 = vmatprep.subr.mxu0 0.0
    %778 = vmatpush1.msra.mxu0 0.0
    %779 = vmatprep.subr.mxu0 0.0
    %780 = vmatpush1.msra.mxu0 0.0
    %781 = vmatprep.subr.mxu0 0.0
    %782 = vmatpush1.msra.mxu0 0.0
    %783 = vmatprep.subr.mxu0 0.0
    %784 = vmatpush1.msra.mxu0 0.0
    %785 = vmatprep.subr.mxu0 0.0
    %786 = vmatpush1.msra.mxu0 0.0
    %787 = vmatprep.subr.mxu0 0.0
    %788 = vmatpush1.msra.mxu0 0.0
    %789 = vmatprep.subr.mxu0 0.0
    %790 = vmatpush1.msra.mxu0 0.0
    %791 = vmatprep.subr.mxu0 0.0
    %792 = vmatpush1.msra.mxu0 0.0
    %793 = vmatprep.subr.mxu0 0.0
    %794 = vmatpush1.msra.mxu0 0.0
    %795 = vmatprep.subr.mxu0 0.0
    %796 = vmatpush1.msra.mxu0 0.0
    %797 = vmatprep.subr.mxu0 0.0
    %798 = vmatpush1.msra.mxu0 0.0
    %799 = vmatprep.subr.mxu0 0.0
    %800 = vmatpush1.msra.mxu0 0.0
    %801 = vmatprep.subr.mxu0 0.0
    %802 = vmatpush1.msra.mxu0 0.0
    %803 = vmatprep.subr.mxu0 0.0
    %804 = vmatpush1.msra.mxu0 0.0
    %805 = vmatprep.mubr.f32.mxu0 0.0
    %806 = vmatmul.mubr.f32.gmra.mrb[0].mxu0 %v739
    %v807 = vpop.f32.mrb[0].mxu0
    %v808 = vadd.f32 0.0, %v807
    %v809 = vpop.f32.mrb[0].mxu0
    %810 = vdwg.mxu0
    %v812 = vsel %vm737, %v379, 0
    %814 = vmatprep.subr.mxu0 0.0
    %815 = vmatpush1.msra.mxu0 %v356
    %816 = vmatprep.subr.mxu0 0.0
    %817 = vmatpush1.msra.mxu0 %v358
    %818 = vmatprep.subr.mxu0 0.0
    %819 = vmatpush1.msra.mxu0 %v360
    %820 = vmatprep.subr.mxu0 0.0
    %821 = vmatpush1.msra.mxu0 %v362
    %822 = vmatprep.subr.mxu0 0.0
    %823 = vmatpush1.msra.mxu0 %v364
    %824 = vmatprep.subr.mxu0 0.0
    %825 = vmatpush1.msra.mxu0 %v366
    %826 = vmatprep.subr.mxu0 0.0
    %827 = vmatpush1.msra.mxu0 %v368
    %828 = vmatprep.subr.mxu0 0.0
    %829 = vmatpush1.msra.mxu0 %v370
    %830 = vmatprep.subr.mxu0 0.0
    %831 = vmatpush1.msra.mxu0 %v372
    %832 = vmatprep.subr.mxu0 0.0
    %833 = vmatpush1.msra.mxu0 %v374
    %834 = vmatprep.subr.mxu0 0.0
    %835 = vmatpush1.msra.mxu0 %v376
    %836 = vmatprep.subr.mxu0 0.0
    %837 = vmatpush1.msra.mxu0 %v378
    %838 = vmatprep.subr.mxu0 0.0
    %839 = vmatpush1.msra.mxu0 0.0
    %840 = vmatprep.subr.mxu0 0.0
    %841 = vmatpush1.msra.mxu0 0.0
    %842 = vmatprep.subr.mxu0 0.0
    %843 = vmatpush1.msra.mxu0 0.0
    %844 = vmatprep.subr.mxu0 0.0
    %845 = vmatpush1.msra.mxu0 0.0
    %846 = vmatprep.subr.mxu0 0.0
    %847 = vmatpush1.msra.mxu0 0.0
    %848 = vmatprep.subr.mxu0 0.0
    %849 = vmatpush1.msra.mxu0 0.0
    %850 = vmatprep.subr.mxu0 0.0
    %851 = vmatpush1.msra.mxu0 0.0
    %852 = vmatprep.subr.mxu0 0.0
    %853 = vmatpush1.msra.mxu0 0.0
    %854 = vmatprep.subr.mxu0 0.0
    %855 = vmatpush1.msra.mxu0 0.0
    %856 = vmatprep.subr.mxu0 0.0
    %857 = vmatpush1.msra.mxu0 0.0
    %858 = vmatprep.subr.mxu0 0.0
    %859 = vmatpush1.msra.mxu0 0.0
    %860 = vmatprep.subr.mxu0 0.0
    %861 = vmatpush1.msra.mxu0 0.0
    %862 = vmatprep.subr.mxu0 0.0
    %863 = vmatpush1.msra.mxu0 0.0
    %864 = vmatprep.subr.mxu0 0.0
    %865 = vmatpush1.msra.mxu0 0.0
    %866 = vmatprep.subr.mxu0 0.0
    %867 = vmatpush1.msra.mxu0 0.0
    %868 = vmatprep.subr.mxu0 0.0
    %869 = vmatpush1.msra.mxu0 0.0
    %870 = vmatprep.subr.mxu0 0.0
    %871 = vmatpush1.msra.mxu0 0.0
    %872 = vmatprep.subr.mxu0 0.0
    %873 = vmatpush1.msra.mxu0 0.0
    %874 = vmatprep.subr.mxu0 0.0
    %875 = vmatpush1.msra.mxu0 0.0
    %876 = vmatprep.subr.mxu0 0.0
    %877 = vmatpush1.msra.mxu0 0.0
    %878 = vmatprep.mubr.f32.mxu0 0.0
    %879 = vmatmul.mubr.f32.gmra.mrb[0].mxu0 %v812
    %v880 = vpop.f32.mrb[0].mxu0
    %v881 = vadd.f32 %v808, %v880
    %v882 = vpop.f32.mrb[0].mxu0
    %883 = vdwg.mxu0
    %s884 = scalar_lea.vmem %s0, 192
    %v885 = vld [vmem:[%s884] sm:$0xff]
    %v886 = vld [vmem:[%s884 + $0x8] sm:$0xff]
    %v887 = vld [vmem:[%s884 + $0x10] sm:$0xff]
    %v888 = vld [vmem:[%s884 + $0x18] sm:$0xff]
    %v889 = vld [vmem:[%s884 + $0x20] sm:$0xff]
    %v890 = vld [vmem:[%s884 + $0x28] sm:$0xff]
    %v891 = vld [vmem:[%s884 + $0x30] sm:$0xff]
    %v892 = vld [vmem:[%s884 + $0x38] sm:$0xff]
    %v893 = vld [vmem:[%s884 + $0x40] sm:$0xff]
    %v894 = vld [vmem:[%s884 + $0x48] sm:$0xff]
    %v895 = vld [vmem:[%s884 + $0x50] sm:$0xff]
    %v896 = vld [vmem:[%s884 + $0x58] sm:$0xff]
    %s897 = scalar_lea.vmem %s1, 256
    %v898 = vld [vmem:[%s897] sm:$0xf]
    %v899 = vld [vmem:[%s897 + $0x4] sm:$0xf]
    %v900 = vld [vmem:[%s897 + $0x8] sm:$0xf]
    %v901 = vld [vmem:[%s897 + $0xc] sm:$0xf]
    %v902 = vld [vmem:[%s897 + $0x10] sm:$0xf]
    %v903 = vld [vmem:[%s897 + $0x14] sm:$0xf]
    %v904 = vld [vmem:[%s897 + $0x18] sm:$0xf]
    %v905 = vld [vmem:[%s897 + $0x1c] sm:$0xf]
    %v906 = vld [vmem:[%s897 + $0x20] sm:$0xf]
    %v907 = vld [vmem:[%s897 + $0x24] sm:$0xf]
    %v908 = vld [vmem:[%s897 + $0x28] sm:$0xf]
    %v909 = vld [vmem:[%s897 + $0x2c] sm:$0xf]
    %v910 = vld [vmem:[%s897 + $0x30] sm:$0xf]
    %v911 = vld [vmem:[%s897 + $0x34] sm:$0xf]
    %v912 = vld [vmem:[%s897 + $0x38] sm:$0xf]
    %v913 = vld [vmem:[%s897 + $0x3c] sm:$0xf]
    %v914 = vld [vmem:[%s897 + $0x40] sm:$0xf]
    %v915 = vld [vmem:[%s897 + $0x44] sm:$0xf]
    %v916 = vld [vmem:[%s897 + $0x48] sm:$0xf]
    %v917 = vld [vmem:[%s897 + $0x4c] sm:$0xf]
    %v918 = vld [vmem:[%s897 + $0x50] sm:$0xf]
    %v919 = vld [vmem:[%s897 + $0x54] sm:$0xf]
    %v920 = vld [vmem:[%s897 + $0x58] sm:$0xf]
    %v921 = vld [vmem:[%s897 + $0x5c] sm:$0xf]
    %v922 = vld [vmem:[%s897 + $0x60] sm:$0xf]
    %v923 = vld [vmem:[%s897 + $0x64] sm:$0xf]
    %v924 = vld [vmem:[%s897 + $0x68] sm:$0xf]
    %v925 = vld [vmem:[%s897 + $0x6c] sm:$0xf]
    %v926 = vld [vmem:[%s897 + $0x70] sm:$0xf]
    %v927 = vld [vmem:[%s897 + $0x74] sm:$0xf]
    %v928 = vld [vmem:[%s897 + $0x78] sm:$0xf]
    %v929 = vld [vmem:[%s897 + $0x7c] sm:$0xf]
    %v942 = vunpack.c.l.b16 %v885
    %v943 = vunpack.c.h.b16 %v885
    %v944 = vunpack.c.l.b16 %v886
    %v945 = vunpack.c.h.b16 %v886
    %v946 = vunpack.c.l.b16 %v887
    %v947 = vunpack.c.h.b16 %v887
    %v948 = vunpack.c.l.b16 %v888
    %v949 = vunpack.c.h.b16 %v888
    %v950 = vunpack.c.l.b16 %v889
    %v951 = vunpack.c.h.b16 %v889
    %v952 = vunpack.c.l.b16 %v890
    %v953 = vunpack.c.h.b16 %v890
    %v954 = vunpack.c.l.b16 %v891
    %v955 = vunpack.c.h.b16 %v891
    %v956 = vunpack.c.l.b16 %v892
    %v957 = vunpack.c.h.b16 %v892
    %v958 = vunpack.c.l.b16 %v893
    %v959 = vunpack.c.h.b16 %v893
    %v960 = vunpack.c.l.b16 %v894
    %v961 = vunpack.c.h.b16 %v894
    %v962 = vunpack.c.l.b16 %v895
    %v963 = vunpack.c.h.b16 %v895
    %v964 = vunpack.c.l.b16 %v896
    %v965 = vunpack.c.h.b16 %v896
    %v966 = vpack.c.b16 %v944, %v942
    %v967 = vpack.c.b16 %v945, %v943
    %v968 = vpack.c.b16 %v948, %v946
    %v969 = vpack.c.b16 %v949, %v947
    %v970 = vpack.c.b16 %v952, %v950
    %v971 = vpack.c.b16 %v953, %v951
    %v972 = vpack.c.b16 %v956, %v954
    %v973 = vpack.c.b16 %v957, %v955
    %v974 = vpack.c.b16 %v960, %v958
    %v975 = vpack.c.b16 %v961, %v959
    %v976 = vpack.c.b16 %v964, %v962
    %v977 = vpack.c.b16 %v965, %v963
    %v1022 = vunpack.c.l.b16 %v898
    %v1023 = vunpack.c.l.b16 %v899
    %v1024 = vunpack.c.l.b16 %v900
    %v1025 = vunpack.c.l.b16 %v901
    %v1026 = vunpack.c.l.b16 %v902
    %v1027 = vunpack.c.l.b16 %v903
    %v1028 = vunpack.c.l.b16 %v904
    %v1029 = vunpack.c.l.b16 %v905
    %v1030 = vunpack.c.l.b16 %v906
    %v1031 = vunpack.c.l.b16 %v907
    %v1032 = vunpack.c.l.b16 %v908
    %v1033 = vunpack.c.l.b16 %v909
    %v1034 = vunpack.c.l.b16 %v910
    %v1035 = vunpack.c.l.b16 %v911
    %v1036 = vunpack.c.l.b16 %v912
    %v1037 = vunpack.c.l.b16 %v913
    %v1038 = vunpack.c.l.b16 %v914
    %v1039 = vunpack.c.l.b16 %v915
    %v1040 = vunpack.c.l.b16 %v916
    %v1041 = vunpack.c.l.b16 %v917
    %v1042 = vunpack.c.l.b16 %v918
    %v1043 = vunpack.c.l.b16 %v919
    %v1044 = vunpack.c.l.b16 %v920
    %v1045 = vunpack.c.l.b16 %v921
    %v1046 = vunpack.c.l.b16 %v922
    %v1047 = vunpack.c.l.b16 %v923
    %v1048 = vunpack.c.l.b16 %v924
    %v1049 = vunpack.c.l.b16 %v925
    %v1050 = vunpack.c.l.b16 %v926
    %v1051 = vunpack.c.l.b16 %v927
    %v1052 = vunpack.c.l.b16 %v928
    %v1053 = vunpack.c.l.b16 %v929
    %v1054 = vpack.c.b16 %v1023, %v1022
    %v1055 = vpack.c.b16 %v1025, %v1024
    %v1056 = vpack.c.b16 %v1027, %v1026
    %v1057 = vpack.c.b16 %v1029, %v1028
    %v1058 = vpack.c.b16 %v1031, %v1030
    %v1059 = vpack.c.b16 %v1033, %v1032
    %v1060 = vpack.c.b16 %v1035, %v1034
    %v1061 = vpack.c.b16 %v1037, %v1036
    %v1062 = vpack.c.b16 %v1039, %v1038
    %v1063 = vpack.c.b16 %v1041, %v1040
    %v1064 = vpack.c.b16 %v1043, %v1042
    %v1065 = vpack.c.b16 %v1045, %v1044
    %v1066 = vpack.c.b16 %v1047, %v1046
    %v1067 = vpack.c.b16 %v1049, %v1048
    %v1068 = vpack.c.b16 %v1051, %v1050
    %v1069 = vpack.c.b16 %v1053, %v1052
    %1086 = vmatprep.subr.bf16.mxu0 0
    %1087 = vmatpush1.bf16.msra.mxu0 %v1054
    %1088 = vmatprep.subr.bf16.mxu0 0
    %1089 = vmatpush1.bf16.msra.mxu0 %v1055
    %1090 = vmatprep.subr.bf16.mxu0 0
    %1091 = vmatpush1.bf16.msra.mxu0 %v1056
    %1092 = vmatprep.subr.bf16.mxu0 0
    %1093 = vmatpush1.bf16.msra.mxu0 %v1057
    %1094 = vmatprep.subr.bf16.mxu0 0
    %1095 = vmatpush1.bf16.msra.mxu0 %v1058
    %1096 = vmatprep.subr.bf16.mxu0 0
    %1097 = vmatpush1.bf16.msra.mxu0 %v1059
    %1098 = vmatprep.subr.bf16.mxu0 0
    %1099 = vmatpush1.bf16.msra.mxu0 %v1060
    %1100 = vmatprep.subr.bf16.mxu0 0
    %1101 = vmatpush1.bf16.msra.mxu0 %v1061
    %1102 = vmatprep.subr.bf16.mxu0 0
    %1103 = vmatpush1.bf16.msra.mxu0 %v1062
    %1104 = vmatprep.subr.bf16.mxu0 0
    %1105 = vmatpush1.bf16.msra.mxu0 %v1063
    %1106 = vmatprep.subr.bf16.mxu0 0
    %1107 = vmatpush1.bf16.msra.mxu0 %v1064
    %1108 = vmatprep.subr.bf16.mxu0 0
    %1109 = vmatpush1.bf16.msra.mxu0 %v1065
    %1110 = vmatprep.subr.bf16.mxu0 0
    %1111 = vmatpush1.bf16.msra.mxu0 %v1066
    %1112 = vmatprep.subr.bf16.mxu0 0
    %1113 = vmatpush1.bf16.msra.mxu0 %v1067
    %1114 = vmatprep.subr.bf16.mxu0 0
    %1115 = vmatpush1.bf16.msra.mxu0 %v1068
    %1116 = vmatprep.subr.bf16.mxu0 0
    %1117 = vmatpush1.bf16.msra.mxu0 %v1069
    %1118 = vmatprep.mubr.bf16.mxu0 %v967
    %1119 = vmatmul.mubr.bf16.gmra.mrb[0].mxu0 %v966
    %v1120 = vpop.f32.mrb[0].mxu0
    %v1121 = vadd.f32 %v68, %v1120
    %v1122 = vpop.f32.mrb[0].mxu0
    %v1123 = vpop.f32.mrb[0].mxu0
    %v1124 = vadd.f32 %v68, %v1123
    %v1125 = vpop.f32.mrb[0].mxu0
    %1126 = vmatprep.mubr.bf16.mxu0 %v969
    %1127 = vmatmul.mubr.bf16.gmra.mrb[0].mxu0 %v968
    %v1128 = vpop.f32.mrb[0].mxu0
    %v1129 = vadd.f32 %v68, %v1128
    %v1130 = vpop.f32.mrb[0].mxu0
    %v1131 = vpop.f32.mrb[0].mxu0
    %v1132 = vadd.f32 %v68, %v1131
    %v1133 = vpop.f32.mrb[0].mxu0
    %1134 = vmatprep.mubr.bf16.mxu0 %v971
    %1135 = vmatmul.mubr.bf16.gmra.mrb[0].mxu0 %v970
    %v1136 = vpop.f32.mrb[0].mxu0
    %v1137 = vadd.f32 %v68, %v1136
    %v1138 = vpop.f32.mrb[0].mxu0
    %v1139 = vpop.f32.mrb[0].mxu0
    %v1140 = vadd.f32 %v68, %v1139
    %v1141 = vpop.f32.mrb[0].mxu0
    %1142 = vmatprep.mubr.bf16.mxu0 %v973
    %1143 = vmatmul.mubr.bf16.gmra.mrb[0].mxu0 %v972
    %v1144 = vpop.f32.mrb[0].mxu0
    %v1145 = vadd.f32 %v68, %v1144
    %v1146 = vpop.f32.mrb[0].mxu0
    %v1147 = vpop.f32.mrb[0].mxu0
    %v1148 = vadd.f32 %v68, %v1147
    %v1149 = vpop.f32.mrb[0].mxu0
    %1150 = vmatprep.mubr.bf16.mxu0 %v975
    %1151 = vmatmul.mubr.bf16.gmra.mrb[0].mxu0 %v974
    %v1152 = vpop.f32.mrb[0].mxu0
    %v1153 = vadd.f32 %v68, %v1152
    %v1154 = vpop.f32.mrb[0].mxu0
    %v1155 = vpop.f32.mrb[0].mxu0
    %v1156 = vadd.f32 %v68, %v1155
    %v1157 = vpop.f32.mrb[0].mxu0
    %1158 = vmatprep.mubr.bf16.mxu0 %v977
    %1159 = vmatmul.mubr.bf16.gmra.mrb[0].mxu0 %v976
    %v1160 = vpop.f32.mrb[0].mxu0
    %v1161 = vadd.f32 %v68, %v1160
    %v1162 = vpop.f32.mrb[0].mxu0
    %v1163 = vpop.f32.mrb[0].mxu0
    %v1164 = vadd.f32 %v68, %v1163
    %v1165 = vpop.f32.mrb[0].mxu0
    %1166 = vdwg.mxu0
    %v1167 = vxor.u32 %v1121, 2147483648
    %v1168 = vxor.u32 %v1124, 2147483648
    %v1169 = vxor.u32 %v1129, 2147483648
    %v1170 = vxor.u32 %v1132, 2147483648
    %v1171 = vxor.u32 %v1137, 2147483648
    %v1172 = vxor.u32 %v1140, 2147483648
    %v1173 = vxor.u32 %v1145, 2147483648
    %v1174 = vxor.u32 %v1148, 2147483648
    %v1175 = vxor.u32 %v1153, 2147483648
    %v1176 = vxor.u32 %v1156, 2147483648
    %v1177 = vxor.u32 %v1161, 2147483648
    %v1178 = vxor.u32 %v1164, 2147483648
    %v1179 = vmul.f32 %v1167, 1.442695
    %v1180 = vpow.pop %v1179
    %v1181 = vmul.f32 %v1168, 1.442695
    %v1182 = vpow.pop %v1181
    %v1183 = vmul.f32 %v1169, 1.442695
    %v1184 = vpow.pop %v1183
    %v1185 = vmul.f32 %v1170, 1.442695
    %v1186 = vpow.pop %v1185
    %v1187 = vmul.f32 %v1171, 1.442695
    %v1188 = vpow.pop %v1187
    %v1189 = vmul.f32 %v1172, 1.442695
    %v1190 = vpow.pop %v1189
    %v1191 = vmul.f32 %v1173, 1.442695
    %v1192 = vpow.pop %v1191
    %v1193 = vmul.f32 %v1174, 1.442695
    %v1194 = vpow.pop %v1193
    %v1195 = vmul.f32 %v1175, 1.442695
    %v1196 = vpow.pop %v1195
    %v1197 = vmul.f32 %v1176, 1.442695
    %v1198 = vpow.pop %v1197
    %v1199 = vmul.f32 %v1177, 1.442695
    %v1200 = vpow.pop %v1199
    %v1201 = vmul.f32 %v1178, 1.442695
    %v1202 = vpow.pop %v1201
    %v1203 = vadd.f32 %v1180, 1.0
    %v1204 = vadd.f32 %v1182, 1.0
    %v1205 = vadd.f32 %v1184, 1.0
    %v1206 = vadd.f32 %v1186, 1.0
    %v1207 = vadd.f32 %v1188, 1.0
    %v1208 = vadd.f32 %v1190, 1.0
    %v1209 = vadd.f32 %v1192, 1.0
    %v1210 = vadd.f32 %v1194, 1.0
    %v1211 = vadd.f32 %v1196, 1.0
    %v1212 = vadd.f32 %v1198, 1.0
    %v1213 = vadd.f32 %v1200, 1.0
    %v1214 = vadd.f32 %v1202, 1.0
    %v1215 = vrcp.pop %v1203
    %v1216 = vmul.f32 1.0, %v1215
    %v1217 = vrcp.pop %v1204
    %v1218 = vmul.f32 1.0, %v1217
    %v1219 = vrcp.pop %v1205
    %v1220 = vmul.f32 1.0, %v1219
    %v1221 = vrcp.pop %v1206
    %v1222 = vmul.f32 1.0, %v1221
    %v1223 = vrcp.pop %v1207
    %v1224 = vmul.f32 1.0, %v1223
    %v1225 = vrcp.pop %v1208
    %v1226 = vmul.f32 1.0, %v1225
    %v1227 = vrcp.pop %v1209
    %v1228 = vmul.f32 1.0, %v1227
    %v1229 = vrcp.pop %v1210
    %v1230 = vmul.f32 1.0, %v1229
    %v1231 = vrcp.pop %v1211
    %v1232 = vmul.f32 1.0, %v1231
    %v1233 = vrcp.pop %v1212
    %v1234 = vmul.f32 1.0, %v1233
    %v1235 = vrcp.pop %v1213
    %v1236 = vmul.f32 1.0, %v1235
    %v1237 = vrcp.pop %v1214
    %v1238 = vmul.f32 1.0, %v1237
    %s1239 = scalar_lea.vmem %s3, 16
    %v1240 = vld [vmem:[%s1239] sm:$0xff]
    %v1242 = vsel %vm737, %v1240, 0
    %1244 = vmatprep.subr.mxu0 0.0
    %1245 = vmatpush1.msra.mxu0 %v1216
    %1246 = vmatprep.subr.mxu0 0.0
    %1247 = vmatpush1.msra.mxu0 %v1218
    %1248 = vmatprep.subr.mxu0 0.0
    %1249 = vmatpush1.msra.mxu0 %v1220
    %1250 = vmatprep.subr.mxu0 0.0
    %1251 = vmatpush1.msra.mxu0 %v1222
    %1252 = vmatprep.subr.mxu0 0.0
    %1253 = vmatpush1.msra.mxu0 %v1224
    %1254 = vmatprep.subr.mxu0 0.0
    %1255 = vmatpush1.msra.mxu0 %v1226
    %1256 = vmatprep.subr.mxu0 0.0
    %1257 = vmatpush1.msra.mxu0 %v1228
    %1258 = vmatprep.subr.mxu0 0.0
    %1259 = vmatpush1.msra.mxu0 %v1230
    %1260 = vmatprep.subr.mxu0 0.0
    %1261 = vmatpush1.msra.mxu0 %v1232
    %1262 = vmatprep.subr.mxu0 0.0
    %1263 = vmatpush1.msra.mxu0 %v1234
    %1264 = vmatprep.subr.mxu0 0.0
    %1265 = vmatpush1.msra.mxu0 %v1236
    %1266 = vmatprep.subr.mxu0 0.0
    %1267 = vmatpush1.msra.mxu0 %v1238
    %1268 = vmatprep.subr.mxu0 0.0
    %1269 = vmatpush1.msra.mxu0 0.0
    %1270 = vmatprep.subr.mxu0 0.0
    %1271 = vmatpush1.msra.mxu0 0.0
    %1272 = vmatprep.subr.mxu0 0.0
    %1273 = vmatpush1.msra.mxu0 0.0
    %1274 = vmatprep.subr.mxu0 0.0
    %1275 = vmatpush1.msra.mxu0 0.0
    %1276 = vmatprep.subr.mxu0 0.0
    %1277 = vmatpush1.msra.mxu0 0.0
    %1278 = vmatprep.subr.mxu0 0.0
    %1279 = vmatpush1.msra.mxu0 0.0
    %1280 = vmatprep.subr.mxu0 0.0
    %1281 = vmatpush1.msra.mxu0 0.0
    %1282 = vmatprep.subr.mxu0 0.0
    %1283 = vmatpush1.msra.mxu0 0.0
    %1284 = vmatprep.subr.mxu0 0.0
    %1285 = vmatpush1.msra.mxu0 0.0
    %1286 = vmatprep.subr.mxu0 0.0
    %1287 = vmatpush1.msra.mxu0 0.0
    %1288 = vmatprep.subr.mxu0 0.0
    %1289 = vmatpush1.msra.mxu0 0.0
    %1290 = vmatprep.subr.mxu0 0.0
    %1291 = vmatpush1.msra.mxu0 0.0
    %1292 = vmatprep.subr.mxu0 0.0
    %1293 = vmatpush1.msra.mxu0 0.0
    %1294 = vmatprep.subr.mxu0 0.0
    %1295 = vmatpush1.msra.mxu0 0.0
    %1296 = vmatprep.subr.mxu0 0.0
    %1297 = vmatpush1.msra.mxu0 0.0
    %1298 = vmatprep.subr.mxu0 0.0
    %1299 = vmatpush1.msra.mxu0 0.0
    %1300 = vmatprep.subr.mxu0 0.0
    %1301 = vmatpush1.msra.mxu0 0.0
    %1302 = vmatprep.subr.mxu0 0.0
    %1303 = vmatpush1.msra.mxu0 0.0
    %1304 = vmatprep.subr.mxu0 0.0
    %1305 = vmatpush1.msra.mxu0 0.0
    %1306 = vmatprep.subr.mxu0 0.0
    %1307 = vmatpush1.msra.mxu0 0.0
    %1308 = vmatprep.mubr.f32.mxu0 0.0
    %1309 = vmatmul.mubr.f32.gmra.mrb[0].mxu0 %v1242
    %v1310 = vpop.f32.mrb[0].mxu0
    %v1311 = vadd.f32 0.0, %v1310
    %v1312 = vpop.f32.mrb[0].mxu0
    %1313 = vdwg.mxu0
    %v1314 = vadd.f32 %v881, %v1311
    %s1315 = scalar_lea.vmem %s0, 288
    %v1316 = vld [vmem:[%s1315] sm:$0xff]
    %v1317 = vld [vmem:[%s1315 + $0x8] sm:$0xff]
    %v1318 = vld [vmem:[%s1315 + $0x10] sm:$0xff]
    %v1319 = vld [vmem:[%s1315 + $0x18] sm:$0xff]
    %v1320 = vld [vmem:[%s1315 + $0x20] sm:$0xff]
    %v1321 = vld [vmem:[%s1315 + $0x28] sm:$0xff]
    %v1322 = vld [vmem:[%s1315 + $0x30] sm:$0xff]
    %v1323 = vld [vmem:[%s1315 + $0x38] sm:$0xff]
    %v1324 = vld [vmem:[%s1315 + $0x40] sm:$0xff]
    %v1325 = vld [vmem:[%s1315 + $0x48] sm:$0xff]
    %v1326 = vld [vmem:[%s1315 + $0x50] sm:$0xff]
    %v1327 = vld [vmem:[%s1315 + $0x58] sm:$0xff]
    %s1328 = scalar_lea.vmem %s1, 384
    %v1329 = vld [vmem:[%s1328] sm:$0xf]
    %v1330 = vld [vmem:[%s1328 + $0x4] sm:$0xf]
    %v1331 = vld [vmem:[%s1328 + $0x8] sm:$0xf]
    %v1332 = vld [vmem:[%s1328 + $0xc] sm:$0xf]
    %v1333 = vld [vmem:[%s1328 + $0x10] sm:$0xf]
    %v1334 = vld [vmem:[%s1328 + $0x14] sm:$0xf]
    %v1335 = vld [vmem:[%s1328 + $0x18] sm:$0xf]
    %v1336 = vld [vmem:[%s1328 + $0x1c] sm:$0xf]
    %v1337 = vld [vmem:[%s1328 + $0x20] sm:$0xf]
    %v1338 = vld [vmem:[%s1328 + $0x24] sm:$0xf]
    %v1339 = vld [vmem:[%s1328 + $0x28] sm:$0xf]
    %v1340 = vld [vmem:[%s1328 + $0x2c] sm:$0xf]
    %v1341 = vld [vmem:[%s1328 + $0x30] sm:$0xf]
    %v1342 = vld [vmem:[%s1328 + $0x34] sm:$0xf]
    %v1343 = vld [vmem:[%s1328 + $0x38] sm:$0xf]
    %v1344 = vld [vmem:[%s1328 + $0x3c] sm:$0xf]
    %v1345 = vld [vmem:[%s1328 + $0x40] sm:$0xf]
    %v1346 = vld [vmem:[%s1328 + $0x44] sm:$0xf]
    %v1347 = vld [vmem:[%s1328 + $0x48] sm:$0xf]
    %v1348 = vld [vmem:[%s1328 + $0x4c] sm:$0xf]
    %v1349 = vld [vmem:[%s1328 + $0x50] sm:$0xf]
    %v1350 = vld [vmem:[%s1328 + $0x54] sm:$0xf]
    %v1351 = vld [vmem:[%s1328 + $0x58] sm:$0xf]
    %v1352 = vld [vmem:[%s1328 + $0x5c] sm:$0xf]
    %v1353 = vld [vmem:[%s1328 + $0x60] sm:$0xf]
    %v1354 = vld [vmem:[%s1328 + $0x64] sm:$0xf]
    %v1355 = vld [vmem:[%s1328 + $0x68] sm:$0xf]
    %v1356 = vld [vmem:[%s1328 + $0x6c] sm:$0xf]
    %v1357 = vld [vmem:[%s1328 + $0x70] sm:$0xf]
    %v1358 = vld [vmem:[%s1328 + $0x74] sm:$0xf]
    %v1359 = vld [vmem:[%s1328 + $0x78] sm:$0xf]
    %v1360 = vld [vmem:[%s1328 + $0x7c] sm:$0xf]
    %v1373 = vunpack.c.l.b16 %v1316
    %v1374 = vunpack.c.h.b16 %v1316
    %v1375 = vunpack.c.l.b16 %v1317
    %v1376 = vunpack.c.h.b16 %v1317
    %v1377 = vunpack.c.l.b16 %v1318
    %v1378 = vunpack.c.h.b16 %v1318
    %v1379 = vunpack.c.l.b16 %v1319
    %v1380 = vunpack.c.h.b16 %v1319
    %v1381 = vunpack.c.l.b16 %v1320
    %v1382 = vunpack.c.h.b16 %v1320
    %v1383 = vunpack.c.l.b16 %v1321
    %v1384 = vunpack.c.h.b16 %v1321
    %v1385 = vunpack.c.l.b16 %v1322
    %v1386 = vunpack.c.h.b16 %v1322
    %v1387 = vunpack.c.l.b16 %v1323
    %v1388 = vunpack.c.h.b16 %v1323
    %v1389 = vunpack.c.l.b16 %v1324
    %v1390 = vunpack.c.h.b16 %v1324
    %v1391 = vunpack.c.l.b16 %v1325
    %v1392 = vunpack.c.h.b16 %v1325
    %v1393 = vunpack.c.l.b16 %v1326
    %v1394 = vunpack.c.h.b16 %v1326
    %v1395 = vunpack.c.l.b16 %v1327
    %v1396 = vunpack.c.h.b16 %v1327
    %v1397 = vpack.c.b16 %v1375, %v1373
    %v1398 = vpack.c.b16 %v1376, %v1374
    %v1399 = vpack.c.b16 %v1379, %v1377
    %v1400 = vpack.c.b16 %v1380, %v1378
    %v1401 = vpack.c.b16 %v1383, %v1381
    %v1402 = vpack.c.b16 %v1384, %v1382
    %v1403 = vpack.c.b16 %v1387, %v1385
    %v1404 = vpack.c.b16 %v1388, %v1386
    %v1405 = vpack.c.b16 %v1391, %v1389
    %v1406 = vpack.c.b16 %v1392, %v1390
    %v1407 = vpack.c.b16 %v1395, %v1393
    %v1408 = vpack.c.b16 %v1396, %v1394
    %v1453 = vunpack.c.l.b16 %v1329
    %v1454 = vunpack.c.l.b16 %v1330
    %v1455 = vunpack.c.l.b16 %v1331
    %v1456 = vunpack.c.l.b16 %v1332
    %v1457 = vunpack.c.l.b16 %v1333
    %v1458 = vunpack.c.l.b16 %v1334
    %v1459 = vunpack.c.l.b16 %v1335
    %v1460 = vunpack.c.l.b16 %v1336
    %v1461 = vunpack.c.l.b16 %v1337
    %v1462 = vunpack.c.l.b16 %v1338
    %v1463 = vunpack.c.l.b16 %v1339
    %v1464 = vunpack.c.l.b16 %v1340
    %v1465 = vunpack.c.l.b16 %v1341
    %v1466 = vunpack.c.l.b16 %v1342
    %v1467 = vunpack.c.l.b16 %v1343
    %v1468 = vunpack.c.l.b16 %v1344
    %v1469 = vunpack.c.l.b16 %v1345
    %v1470 = vunpack.c.l.b16 %v1346
    %v1471 = vunpack.c.l.b16 %v1347
    %v1472 = vunpack.c.l.b16 %v1348
    %v1473 = vunpack.c.l.b16 %v1349
    %v1474 = vunpack.c.l.b16 %v1350
    %v1475 = vunpack.c.l.b16 %v1351
    %v1476 = vunpack.c.l.b16 %v1352
    %v1477 = vunpack.c.l.b16 %v1353
    %v1478 = vunpack.c.l.b16 %v1354
    %v1479 = vunpack.c.l.b16 %v1355
    %v1480 = vunpack.c.l.b16 %v1356
    %v1481 = vunpack.c.l.b16 %v1357
    %v1482 = vunpack.c.l.b16 %v1358
    %v1483 = vunpack.c.l.b16 %v1359
    %v1484 = vunpack.c.l.b16 %v1360
    %v1485 = vpack.c.b16 %v1454, %v1453
    %v1486 = vpack.c.b16 %v1456, %v1455
    %v1487 = vpack.c.b16 %v1458, %v1457
    %v1488 = vpack.c.b16 %v1460, %v1459
    %v1489 = vpack.c.b16 %v1462, %v1461
    %v1490 = vpack.c.b16 %v1464, %v1463
    %v1491 = vpack.c.b16 %v1466, %v1465
    %v1492 = vpack.c.b16 %v1468, %v1467
    %v1493 = vpack.c.b16 %v1470, %v1469
    %v1494 = vpack.c.b16 %v1472, %v1471
    %v1495 = vpack.c.b16 %v1474, %v1473
    %v1496 = vpack.c.b16 %v1476, %v1475
    %v1497 = vpack.c.b16 %v1478, %v1477
    %v1498 = vpack.c.b16 %v1480, %v1479
    %v1499 = vpack.c.b16 %v1482, %v1481
    %v1500 = vpack.c.b16 %v1484, %v1483
    %1517 = vmatprep.subr.bf16.mxu0 0
    %1518 = vmatpush1.bf16.msra.mxu0 %v1485
    %1519 = vmatprep.subr.bf16.mxu0 0
    %1520 = vmatpush1.bf16.msra.mxu0 %v1486
    %1521 = vmatprep.subr.bf16.mxu0 0
    %1522 = vmatpush1.bf16.msra.mxu0 %v1487
    %1523 = vmatprep.subr.bf16.mxu0 0
    %1524 = vmatpush1.bf16.msra.mxu0 %v1488
    %1525 = vmatprep.subr.bf16.mxu0 0
    %1526 = vmatpush1.bf16.msra.mxu0 %v1489
    %1527 = vmatprep.subr.bf16.mxu0 0
    %1528 = vmatpush1.bf16.msra.mxu0 %v1490
    %1529 = vmatprep.subr.bf16.mxu0 0
    %1530 = vmatpush1.bf16.msra.mxu0 %v1491
    %1531 = vmatprep.subr.bf16.mxu0 0
    %1532 = vmatpush1.bf16.msra.mxu0 %v1492
    %1533 = vmatprep.subr.bf16.mxu0 0
    %1534 = vmatpush1.bf16.msra.mxu0 %v1493
    %1535 = vmatprep.subr.bf16.mxu0 0
    %1536 = vmatpush1.bf16.msra.mxu0 %v1494
    %1537 = vmatprep.subr.bf16.mxu0 0
    %1538 = vmatpush1.bf16.msra.mxu0 %v1495
    %1539 = vmatprep.subr.bf16.mxu0 0
    %1540 = vmatpush1.bf16.msra.mxu0 %v1496
    %1541 = vmatprep.subr.bf16.mxu0 0
    %1542 = vmatpush1.bf16.msra.mxu0 %v1497
    %1543 = vmatprep.subr.bf16.mxu0 0
    %1544 = vmatpush1.bf16.msra.mxu0 %v1498
    %1545 = vmatprep.subr.bf16.mxu0 0
    %1546 = vmatpush1.bf16.msra.mxu0 %v1499
    %1547 = vmatprep.subr.bf16.mxu0 0
    %1548 = vmatpush1.bf16.msra.mxu0 %v1500
    %1549 = vmatprep.mubr.bf16.mxu0 %v1398
    %1550 = vmatmul.mubr.bf16.gmra.mrb[0].mxu0 %v1397
    %v1551 = vpop.f32.mrb[0].mxu0
    %v1552 = vadd.f32 %v68, %v1551
    %v1553 = vpop.f32.mrb[0].mxu0
    %v1554 = vpop.f32.mrb[0].mxu0
    %v1555 = vadd.f32 %v68, %v1554
    %v1556 = vpop.f32.mrb[0].mxu0
    %1557 = vmatprep.mubr.bf16.mxu0 %v1400
    %1558 = vmatmul.mubr.bf16.gmra.mrb[0].mxu0 %v1399
    %v1559 = vpop.f32.mrb[0].mxu0
    %v1560 = vadd.f32 %v68, %v1559
    %v1561 = vpop.f32.mrb[0].mxu0
    %v1562 = vpop.f32.mrb[0].mxu0
    %v1563 = vadd.f32 %v68, %v1562
    %v1564 = vpop.f32.mrb[0].mxu0
    %1565 = vmatprep.mubr.bf16.mxu0 %v1402
    %1566 = vmatmul.mubr.bf16.gmra.mrb[0].mxu0 %v1401
    %v1567 = vpop.f32.mrb[0].mxu0
    %v1568 = vadd.f32 %v68, %v1567
    %v1569 = vpop.f32.mrb[0].mxu0
    %v1570 = vpop.f32.mrb[0].mxu0
    %v1571 = vadd.f32 %v68, %v1570
    %v1572 = vpop.f32.mrb[0].mxu0
    %1573 = vmatprep.mubr.bf16.mxu0 %v1404
    %1574 = vmatmul.mubr.bf16.gmra.mrb[0].mxu0 %v1403
    %v1575 = vpop.f32.mrb[0].mxu0
    %v1576 = vadd.f32 %v68, %v1575
    %v1577 = vpop.f32.mrb[0].mxu0
    %v1578 = vpop.f32.mrb[0].mxu0
    %v1579 = vadd.f32 %v68, %v1578
    %v1580 = vpop.f32.mrb[0].mxu0
    %1581 = vmatprep.mubr.bf16.mxu0 %v1406
    %1582 = vmatmul.mubr.bf16.gmra.mrb[0].mxu0 %v1405
    %v1583 = vpop.f32.mrb[0].mxu0
    %v1584 = vadd.f32 %v68, %v1583
    %v1585 = vpop.f32.mrb[0].mxu0
    %v1586 = vpop.f32.mrb[0].mxu0
    %v1587 = vadd.f32 %v68, %v1586
    %v1588 = vpop.f32.mrb[0].mxu0
    %1589 = vmatprep.mubr.bf16.mxu0 %v1408
    %1590 = vmatmul.mubr.bf16.gmra.mrb[0].mxu0 %v1407
    %v1591 = vpop.f32.mrb[0].mxu0
    %v1592 = vadd.f32 %v68, %v1591
    %v1593 = vpop.f32.mrb[0].mxu0
    %v1594 = vpop.f32.mrb[0].mxu0
    %v1595 = vadd.f32 %v68, %v1594
    %v1596 = vpop.f32.mrb[0].mxu0
    %1597 = vdwg.mxu0
    %v1598 = vxor.u32 %v1552, 2147483648
    %v1599 = vxor.u32 %v1555, 2147483648
    %v1600 = vxor.u32 %v1560, 2147483648
    %v1601 = vxor.u32 %v1563, 2147483648
    %v1602 = vxor.u32 %v1568, 2147483648
    %v1603 = vxor.u32 %v1571, 2147483648
    %v1604 = vxor.u32 %v1576, 2147483648
    %v1605 = vxor.u32 %v1579, 2147483648
    %v1606 = vxor.u32 %v1584, 2147483648
    %v1607 = vxor.u32 %v1587, 2147483648
    %v1608 = vxor.u32 %v1592, 2147483648
    %v1609 = vxor.u32 %v1595, 2147483648
    %v1610 = vmul.f32 %v1598, 1.442695
    %v1611 = vpow.pop %v1610
    %v1612 = vmul.f32 %v1599, 1.442695
    %v1613 = vpow.pop %v1612
    %v1614 = vmul.f32 %v1600, 1.442695
    %v1615 = vpow.pop %v1614
    %v1616 = vmul.f32 %v1601, 1.442695
    %v1617 = vpow.pop %v1616
    %v1618 = vmul.f32 %v1602, 1.442695
    %v1619 = vpow.pop %v1618
    %v1620 = vmul.f32 %v1603, 1.442695
    %v1621 = vpow.pop %v1620
    %v1622 = vmul.f32 %v1604, 1.442695
    %v1623 = vpow.pop %v1622
    %v1624 = vmul.f32 %v1605, 1.442695
    %v1625 = vpow.pop %v1624
    %v1626 = vmul.f32 %v1606, 1.442695
    %v1627 = vpow.pop %v1626
    %v1628 = vmul.f32 %v1607, 1.442695
    %v1629 = vpow.pop %v1628
    %v1630 = vmul.f32 %v1608, 1.442695
    %v1631 = vpow.pop %v1630
    %v1632 = vmul.f32 %v1609, 1.442695
    %v1633 = vpow.pop %v1632
    %v1634 = vadd.f32 %v1611, 1.0
    %v1635 = vadd.f32 %v1613, 1.0
    %v1636 = vadd.f32 %v1615, 1.0
    %v1637 = vadd.f32 %v1617, 1.0
    %v1638 = vadd.f32 %v1619, 1.0
    %v1639 = vadd.f32 %v1621, 1.0
    %v1640 = vadd.f32 %v1623, 1.0
    %v1641 = vadd.f32 %v1625, 1.0
    %v1642 = vadd.f32 %v1627, 1.0
    %v1643 = vadd.f32 %v1629, 1.0
    %v1644 = vadd.f32 %v1631, 1.0
    %v1645 = vadd.f32 %v1633, 1.0
    %v1646 = vrcp.pop %v1634
    %v1647 = vmul.f32 1.0, %v1646
    %v1648 = vrcp.pop %v1635
    %v1649 = vmul.f32 1.0, %v1648
    %v1650 = vrcp.pop %v1636
    %v1651 = vmul.f32 1.0, %v1650
    %v1652 = vrcp.pop %v1637
    %v1653 = vmul.f32 1.0, %v1652
    %v1654 = vrcp.pop %v1638
    %v1655 = vmul.f32 1.0, %v1654
    %v1656 = vrcp.pop %v1639
    %v1657 = vmul.f32 1.0, %v1656
    %v1658 = vrcp.pop %v1640
    %v1659 = vmul.f32 1.0, %v1658
    %v1660 = vrcp.pop %v1641
    %v1661 = vmul.f32 1.0, %v1660
    %v1662 = vrcp.pop %v1642
    %v1663 = vmul.f32 1.0, %v1662
    %v1664 = vrcp.pop %v1643
    %v1665 = vmul.f32 1.0, %v1664
    %v1666 = vrcp.pop %v1644
    %v1667 = vmul.f32 1.0, %v1666
    %v1668 = vrcp.pop %v1645
    %v1669 = vmul.f32 1.0, %v1668
    %s1670 = scalar_lea.vmem %s3, 24
    %v1671 = vld [vmem:[%s1670] sm:$0xff]
    %v1673 = vsel %vm737, %v1671, 0
    %1675 = vmatprep.subr.mxu0 0.0
    %1676 = vmatpush1.msra.mxu0 %v1647
    %1677 = vmatprep.subr.mxu0 0.0
    %1678 = vmatpush1.msra.mxu0 %v1649
    %1679 = vmatprep.subr.mxu0 0.0
    %1680 = vmatpush1.msra.mxu0 %v1651
    %1681 = vmatprep.subr.mxu0 0.0
    %1682 = vmatpush1.msra.mxu0 %v1653
    %1683 = vmatprep.subr.mxu0 0.0
    %1684 = vmatpush1.msra.mxu0 %v1655
    %1685 = vmatprep.subr.mxu0 0.0
    %1686 = vmatpush1.msra.mxu0 %v1657
    %1687 = vmatprep.subr.mxu0 0.0
    %1688 = vmatpush1.msra.mxu0 %v1659
    %1689 = vmatprep.subr.mxu0 0.0
    %1690 = vmatpush1.msra.mxu0 %v1661
    %1691 = vmatprep.subr.mxu0 0.0
    %1692 = vmatpush1.msra.mxu0 %v1663
    %1693 = vmatprep.subr.mxu0 0.0
    %1694 = vmatpush1.msra.mxu0 %v1665
    %1695 = vmatprep.subr.mxu0 0.0
    %1696 = vmatpush1.msra.mxu0 %v1667
    %1697 = vmatprep.subr.mxu0 0.0
    %1698 = vmatpush1.msra.mxu0 %v1669
    %1699 = vmatprep.subr.mxu0 0.0
    %1700 = vmatpush1.msra.mxu0 0.0
    %1701 = vmatprep.subr.mxu0 0.0
    %1702 = vmatpush1.msra.mxu0 0.0
    %1703 = vmatprep.subr.mxu0 0.0
    %1704 = vmatpush1.msra.mxu0 0.0
    %1705 = vmatprep.subr.mxu0 0.0
    %1706 = vmatpush1.msra.mxu0 0.0
    %1707 = vmatprep.subr.mxu0 0.0
    %1708 = vmatpush1.msra.mxu0 0.0
    %1709 = vmatprep.subr.mxu0 0.0
    %1710 = vmatpush1.msra.mxu0 0.0
    %1711 = vmatprep.subr.mxu0 0.0
    %1712 = vmatpush1.msra.mxu0 0.0
    %1713 = vmatprep.subr.mxu0 0.0
    %1714 = vmatpush1.msra.mxu0 0.0
    %1715 = vmatprep.subr.mxu0 0.0
    %1716 = vmatpush1.msra.mxu0 0.0
    %1717 = vmatprep.subr.mxu0 0.0
    %1718 = vmatpush1.msra.mxu0 0.0
    %1719 = vmatprep.subr.mxu0 0.0
    %1720 = vmatpush1.msra.mxu0 0.0
    %1721 = vmatprep.subr.mxu0 0.0
    %1722 = vmatpush1.msra.mxu0 0.0
    %1723 = vmatprep.subr.mxu0 0.0
    %1724 = vmatpush1.msra.mxu0 0.0
    %1725 = vmatprep.subr.mxu0 0.0
    %1726 = vmatpush1.msra.mxu0 0.0
    %1727 = vmatprep.subr.mxu0 0.0
    %1728 = vmatpush1.msra.mxu0 0.0
    %1729 = vmatprep.subr.mxu0 0.0
    %1730 = vmatpush1.msra.mxu0 0.0
    %1731 = vmatprep.subr.mxu0 0.0
    %1732 = vmatpush1.msra.mxu0 0.0
    %1733 = vmatprep.subr.mxu0 0.0
    %1734 = vmatpush1.msra.mxu0 0.0
    %1735 = vmatprep.subr.mxu0 0.0
    %1736 = vmatpush1.msra.mxu0 0.0
    %1737 = vmatprep.subr.mxu0 0.0
    %1738 = vmatpush1.msra.mxu0 0.0
    %1739 = vmatprep.mubr.f32.mxu0 0.0
    %1740 = vmatmul.mubr.f32.gmra.mrb[0].mxu0 %v1673
    %v1741 = vpop.f32.mrb[0].mxu0
    %v1742 = vadd.f32 0.0, %v1741
    %v1743 = vpop.f32.mrb[0].mxu0
    %1744 = vdwg.mxu0
    %v1745 = vadd.f32 %v1314, %v1742
    %vm1746 = vcmask 64512
    %1747 = vst.msk [vmem:[#allocation2] sm:$0xff] %vm1746, %v1745
    // Predicated region
    $region18: #{attention_forward.7} parent=1 // pred_check
      _
    $region19: #{attention_forward.7} parent=1 // pred_check_branch
      %1749 = sbr.rel (0) target = $region21
    $region20: #{attention_forward.7} parent=1 // pred_region
      %s1751 = ssub.s32 128, 128
      %1752 = vsyncadd [#allocation3], %s1751
      %s1754 = sshll.u32 [#allocation2], 4
      %s1755 = int_to_ptr.vmem [resolvable:$true] %s1754
      %1757 = dma.vmem_to_hbm [thread:$0]  %s1755, 128, %s4, [#allocation3]
    $region21: #{attention_forward.7} parent=1 // pred_fallthru
      _
    // Predicated region
    $region22: #{attention_forward.7} parent=1 // pred_check
      _
    $region23: #{attention_forward.7} parent=1 // pred_check_branch
      %1759 = sbr.rel (0) target = $region25
    $region24: #{attention_forward.7} parent=1 // pred_region
      %1760 = dma.done [#allocation3], 128
    $region25: #{attention_forward.7} parent=1 // pred_fallthru
      _
    %1761 = vsyncpa [#allocation3], 1

</llo_original>
